<compile_context>
chip_gen: v5e
topology: v5e:2x2
jax: 0.10.0
libtpu: 0.0.40
codegen_flags: <defaults>
</compile_context>

<pallas_src>
import functools

import jax
import jax.numpy as jnp
from jax import lax
from jax.experimental import pallas as pl
from jax.experimental.pallas import tpu as pltpu


def _round_up(x, m):
    return ((x + m - 1) // m) * m


def _row_plan(M, cap=512):
    """Pick (row_tile, padded_rows).  Prefers no padding (blocks equal to the full
    array are legal even when not multiples of 8); when M is comfortably splittable,
    use 2 tiles so a v7x megacore can shard across both TensorCores."""
    if M <= cap:
        if M >= 32 and M % 16 == 0:
            return M // 2, M          # two parallel tiles, each a multiple of 8 rows
        return M, M                   # single full block (block == full dims)
    for tm in (512, 384, 256, 192, 128, 96, 64, 48, 32, 24, 16, 8):
        if tm <= cap and M % tm == 0:
            return tm, M
    return cap, _round_up(M, cap)     # fallback: pad (sliced off by the caller)


# ----------------------------- Pallas kernels ------------------------------

def _fused_mm_kernel(*refs, pre_ln, post_ln, act, has_res, eps):
    """[pre-LN] -> x @ w + b -> [GELU] -> [+ residual] -> [post-LN] -> store.

    Ref order: x, (ln_g, ln_b)?, w, b, (res)?, (pln_g, pln_b)?, out.
    Matmul operands are bf16 (MXU fast path); LN / bias / GELU / residual math is f32.
    """
    it = iter(refs)
    x_ref = next(it)
    if pre_ln:
        g_ref, b_ref = next(it), next(it)
    w_ref, bias_ref = next(it), next(it)
    res_ref = next(it) if has_res else None
    if post_ln:
        pg_ref, pb_ref = next(it), next(it)
    o_ref = next(it)

    x = x_ref[...].astype(jnp.float32)
    if pre_ln:
        mu = jnp.mean(x, axis=-1, keepdims=True)
        xc = x - mu
        var = jnp.mean(xc * xc, axis=-1, keepdims=True)
        x = (xc * lax.rsqrt(var + eps) * g_ref[...].astype(jnp.float32)
             + b_ref[...].astype(jnp.float32))
    acc = jnp.dot(x.astype(jnp.bfloat16), w_ref[...].astype(jnp.bfloat16),
                  preferred_element_type=jnp.float32)
    acc = acc + bias_ref[...].astype(jnp.float32)
    if act == "gelu":  # exact (erf) GELU, matching torch.nn.GELU default
        acc = 0.5 * acc * (1.0 + lax.erf(acc * 0.7071067811865475))
    if has_res:
        acc = acc + res_ref[...].astype(jnp.float32)
    if post_ln:
        mu = jnp.mean(acc, axis=-1, keepdims=True)
        xc = acc - mu
        var = jnp.mean(xc * xc, axis=-1, keepdims=True)
        acc = (xc * lax.rsqrt(var + eps) * pg_ref[...].astype(jnp.float32)
               + pb_ref[...].astype(jnp.float32))
    o_ref[...] = acc.astype(o_ref.dtype)


def fused_matmul(x, w, b, *, pre_ln=None, post_ln=None, act=None, residual=None,
                 out_dtype=jnp.bfloat16, eps=1e-5):
    """(M,K) @ (K,N) + b with optional fused pre-LN / GELU / residual / post-LN."""
    M, K = x.shape
    N = w.shape[1]
    tm, Mpad = _row_plan(M)
    if Mpad != M:
        x = jnp.pad(x, ((0, Mpad - M), (0, 0)))
        if residual is not None:
            residual = jnp.pad(residual, ((0, Mpad - M), (0, 0)))

    inputs = [x]
    in_specs = [pl.BlockSpec((tm, K), lambda i: (i, 0))]
    if pre_ln is not None:
        g, gb = pre_ln
        inputs += [g.reshape(1, K), gb.reshape(1, K)]
        in_specs += [pl.BlockSpec((1, K), lambda i: (0, 0))] * 2
    inputs += [w.astype(jnp.bfloat16), b.reshape(1, N).astype(jnp.float32)]
    in_specs += [pl.BlockSpec((K, N), lambda i: (0, 0)),
                 pl.BlockSpec((1, N), lambda i: (0, 0))]
    if residual is not None:
        inputs.append(residual)
        in_specs.append(pl.BlockSpec((tm, N), lambda i: (i, 0)))
    if post_ln is not None:
        g, gb = post_ln
        inputs += [g.reshape(1, N), gb.reshape(1, N)]
        in_specs += [pl.BlockSpec((1, N), lambda i: (0, 0))] * 2

    out = pl.pallas_call(
        functools.partial(_fused_mm_kernel, pre_ln=pre_ln is not None,
                          post_ln=post_ln is not None, act=act,
                          has_res=residual is not None, eps=eps),
        out_shape=jax.ShapeDtypeStruct((Mpad, N), out_dtype),
        grid_spec=pltpu.PrefetchScalarGridSpec(
            num_scalar_prefetch=0,
            grid=(Mpad // tm,),
            in_specs=in_specs,
            out_specs=pl.BlockSpec((tm, N), lambda i: (i, 0))),
        compiler_params=pltpu.CompilerParams(dimension_semantics=("parallel",)),
    )(*inputs)
    return out[:M] if Mpad != M else out


def _attn_kernel(q_ref, k_ref, v_ref, o_ref, *, scale):
    # All heads of one batch element per grid step: refs are (1, H, N, d).
    q = (q_ref[0].astype(jnp.float32) * scale).astype(jnp.bfloat16)   # fold scale into q
    k = k_ref[0].astype(jnp.bfloat16)
    v = v_ref[0].astype(jnp.bfloat16)
    s = jnp.einsum("hqd,hkd->hqk", q, k, preferred_element_type=jnp.float32)
    s = s - jnp.max(s, axis=-1, keepdims=True)
    e = jnp.exp(s)
    p = e * pl.reciprocal(jnp.sum(e, axis=-1, keepdims=True), approx=True)
    o = jnp.einsum("hqk,hkd->hqd", p.astype(jnp.bfloat16), v,
                   preferred_element_type=jnp.float32)
    o_ref[0] = o.astype(o_ref.dtype)


def mha_attention(q, k, v, scale):
    """q,k,v: (B, H, N, d) -> (B, H, N, d); grid over batch, all heads per step."""
    B, H, N, d = q.shape
    return pl.pallas_call(
        functools.partial(_attn_kernel, scale=scale),
        out_shape=jax.ShapeDtypeStruct((B, H, N, d), jnp.bfloat16),
        grid_spec=pltpu.PrefetchScalarGridSpec(
            num_scalar_prefetch=0,
            grid=(B,),
            in_specs=[pl.BlockSpec((1, H, N, d), lambda i: (i, 0, 0, 0))] * 3,
            out_specs=pl.BlockSpec((1, H, N, d), lambda i: (i, 0, 0, 0))),
        compiler_params=pltpu.CompilerParams(dimension_semantics=("parallel",)),
    )(q, k, v)


# ------------------------------- model glue --------------------------------

def _extract_patches_nchw(x, p):
    """Non-overlapping pxp patches of a NCHW image -> (B*Hp*Wp, C*p*p), cols (c,kh,kw)."""
    B, C, H, W = x.shape
    Hp, Wp = H // p, W // p
    t = x.reshape(B, C, Hp, p, Wp, p).transpose(0, 2, 4, 1, 3, 5)
    return t.reshape(B * Hp * Wp, C * p * p), (Hp, Wp)


def _extract_patches_nhwc(x, p):
    """Same as above for NHWC activations (stages 2-4 stay channels-last)."""
    B, H, W, C = x.shape
    Hp, Wp = H // p, W // p
    t = x.reshape(B, Hp, p, Wp, p, C).transpose(0, 1, 3, 5, 2, 4)
    return t.reshape(B * Hp * Wp, C * p * p), (Hp, Wp)


def _bilinear_sample_nhwc(x, off_y, off_x, k, stride):
    """Deformable-conv sampling.  x: (B,H,W,C); off_*: (B,Ho,Wo,k*k).  Returns
    (B*Ho*Wo, C*k*k), rows ordered (b,ho,wo), cols (c,kh,kw); zero outside the image."""
    B, H, W, C = x.shape
    Ho, Wo = H // stride, W // stride
    kk = k * k
    ker_y = jnp.repeat(jnp.arange(k), k).astype(jnp.float32)
    ker_x = jnp.tile(jnp.arange(k), k).astype(jnp.float32)
    base_y = (jnp.arange(Ho) * stride).astype(jnp.float32)
    base_x = (jnp.arange(Wo) * stride).astype(jnp.float32)
    py = base_y[None, :, None, None] + ker_y[None, None, None, :] + off_y
    px = base_x[None, None, :, None] + ker_x[None, None, None, :] + off_x
    y0 = jnp.floor(py)
    x0 = jnp.floor(px)
    ly = py - y0
    lx = px - x0
    x_flat = x.reshape(B, H * W, C)

    # TODO(synk): the data-dependent bilinear gather stays in plain JAX (XLA gather);
    # a Pallas row-gather via scalar-prefetched corner indices is the remaining big win.
    def gather(yi, xi):
        yi = yi.astype(jnp.int32)
        xi = xi.astype(jnp.int32)
        valid = (yi >= 0) & (yi < H) & (xi >= 0) & (xi < W)
        yc = jnp.clip(yi, 0, H - 1)
        xc = jnp.clip(xi, 0, W - 1)
        idx = (yc * W + xc).reshape(B, Ho * Wo * kk)
        v = jnp.take_along_axis(x_flat, idx[:, :, None], axis=1)   # (B, Ho*Wo*kk, C)
        v = v.reshape(B, Ho, Wo, kk, C).astype(jnp.float32)
        return v * valid[..., None].astype(jnp.float32)

    val = (gather(y0, x0) * ((1.0 - ly) * (1.0 - lx))[..., None]
           + gather(y0, x0 + 1.0) * ((1.0 - ly) * lx)[..., None]
           + gather(y0 + 1.0, x0) * (ly * (1.0 - lx))[..., None]
           + gather(y0 + 1.0, x0 + 1.0) * (ly * lx)[..., None])    # (B,Ho,Wo,kk,C)
    return val.transpose(0, 1, 2, 4, 3).reshape(B * Ho * Wo, C * kk)


def patch_embed_std(x_nchw, prm, patch):
    """PatchEmbed: strided conv (as matmul) with the trailing LayerNorm fused in."""
    patches, (Hp, Wp) = _extract_patches_nchw(x_nchw, patch)
    y = fused_matmul(patches, prm["w"], prm["b"], post_ln=(prm["ln_g"], prm["ln_b"]))
    return y, (Hp, Wp)                              # (B*Hp*Wp, D) bf16


def deform_patch_embed(x_bhwc, prm, patch=2, eps=1e-5):
    """DeformablePatchEmbed_GELU: zero-init offset conv -> deformable bilinear
    sampling -> conv matmul with eval-mode BatchNorm2d folded in -> fused GELU."""
    B, H, W, C = x_bhwc.shape
    patches, (Ho, Wo) = _extract_patches_nhwc(x_bhwc, patch)
    off = fused_matmul(patches, prm["off_w"], prm["off_b"], out_dtype=jnp.float32)
    off = off.reshape(B, Ho, Wo, patch * patch, 2)
    sampled = _bilinear_sample_nhwc(x_bhwc, off[..., 0], off[..., 1], patch, patch)
    s = prm["bn_g"] / jnp.sqrt(prm["bn_var"] + eps)   # fold eval BatchNorm2d into the conv
    w = prm["w"] * s[None, :]
    b = prm["b"] * s + prm["bn_b"] - prm["bn_mean"] * s
    y = fused_matmul(sampled, w, b, act="gelu")
    return y, (Ho, Wo)                              # (B*Ho*Wo, D) bf16


def mlp_block(x2, prm):
    """x2: (M, D) residual stream.  LN+fc1+GELU fused; fc2+bias+residual fused."""
    h = fused_matmul(x2, prm["fc1_w"], prm["fc1_b"],
                     pre_ln=(prm["ln2_g"], prm["ln2_b"]), act="gelu")
    return fused_matmul(h, prm["fc2_w"], prm["fc2_b"], residual=x2)


def vit_block(x2, prm, B, N, num_heads):
    D = x2.shape[-1]
    hd = D // num_heads
    qkv = fused_matmul(x2, prm["qkv_w"], prm["qkv_b"],
                       pre_ln=(prm["ln1_g"], prm["ln1_b"]))            # (B*N, 3D)
    qkv = qkv.reshape(B, N, 3, num_heads, hd).transpose(2, 0, 3, 1, 4)  # (3,B,H,N,d)
    o = mha_attention(qkv[0], qkv[1], qkv[2], hd ** -0.5)               # (B,H,N,d)
    o = o.transpose(0, 2, 1, 3).reshape(B * N, D)
    x2 = fused_matmul(o, prm["proj_w"], prm["proj_b"], residual=x2)     # attn residual
    return mlp_block(x2, prm)                                           # MLP residual


def lit_forward(params, x_nchw, cfg):
    B = x_nchw.shape[0]

    def add_pos(x2, pos, n_tok):
        D = x2.shape[-1]
        return (x2.reshape(B, n_tok, D) + pos.astype(x2.dtype)).reshape(B * n_tok, D)

    # stage 1: PatchEmbed + MLP-only blocks
    x, (H, W) = patch_embed_std(x_nchw, params["pe1"], cfg["patch_size"])
    x = add_pos(x, params["pos1"], H * W)
    for prm in params["blocks1"]:
        x = mlp_block(x, prm)
    # stage 2: deformable patch embed + MLP-only blocks
    x = x.reshape(B, H, W, -1)
    x, (H, W) = deform_patch_embed(x, params["pe2"], 2)
    x = add_pos(x, params["pos2"], H * W)
    for prm in params["blocks2"]:
        x = mlp_block(x, prm)
    # stage 3: deformable patch embed + ViT blocks
    x = x.reshape(B, H, W, -1)
    x, (H, W) = deform_patch_embed(x, params["pe3"], 2)
    x = add_pos(x, params["pos3"], H * W)
    for prm in params["blocks3"]:
        x = vit_block(x, prm, B, H * W, cfg["num_heads"][2])
    # stage 4: deformable patch embed + cls token + ViT blocks
    x = x.reshape(B, H, W, -1)
    x, (H, W) = deform_patch_embed(x, params["pe4"], 2)
    D = x.shape[-1]
    x = x.reshape(B, H * W, D)
    cls = jnp.broadcast_to(params["cls"].astype(x.dtype), (B, 1, D))
    x = jnp.concatenate([cls, x], axis=1) + params["pos4"].astype(x.dtype)
    N = H * W + 1
    x = x.reshape(B * N, D)
    for prm in params["blocks4"]:
        x = vit_block(x, prm, B, N, cfg["num_heads"][3])
    # final LayerNorm is row-wise -> apply it only to the cls rows, fused into the head
    cls_rows = x.reshape(B, N, D)[:, 0]
    return fused_matmul(cls_rows, params["head_w"], params["head_b"],
                        pre_ln=(params["norm_g"], params["norm_b"]),
                        out_dtype=jnp.float32)


# --------------------------- deterministic params --------------------------

def init_params(key, cfg):
    ks = iter(jax.random.split(key, 512))

    def tn(shape, std=0.02):
        return std * jax.random.truncated_normal(next(ks), -2.0, 2.0, shape, jnp.float32)

    def zeros(shape):
        return jnp.zeros(shape, jnp.float32)

    def ones(shape):
        return jnp.ones(shape, jnp.float32)

    ed, mr, depths = cfg["embed_dims"], cfg["mlp_ratios"], cfg["depths"]
    C_in, ps, img = cfg["in_chans"], cfg["patch_size"], cfg["img_size"]

    def mlp_prm(d, hidden):
        return dict(ln2_g=ones((d,)), ln2_b=zeros((d,)),
                    fc1_w=tn((d, hidden)), fc1_b=zeros((hidden,)),
                    fc2_w=tn((hidden, d)), fc2_b=zeros((d,)))

    def vit_prm(d, hidden):
        prm = mlp_prm(d, hidden)
        prm.update(ln1_g=ones((d,)), ln1_b=zeros((d,)),
                   qkv_w=tn((d, 3 * d)), qkv_b=zeros((3 * d,)),  # qkv_bias=False (zero bias)
                   proj_w=tn((d, d)), proj_b=zeros((d,)))
        return prm

    def dpe_prm(cin, cout, k=2):
        return dict(off_w=zeros((cin * k * k, 2 * k * k)),  # offset conv zero-init (DCN convention)
                    off_b=zeros((2 * k * k,)),
                    w=tn((cin * k * k, cout)), b=zeros((cout,)),
                    bn_g=ones((cout,)), bn_b=zeros((cout,)),
                    bn_mean=zeros((cout,)), bn_var=ones((cout,)))

    p = {}
    p["pe1"] = dict(w=tn((C_in * ps * ps, ed[0])), b=zeros((ed[0],)),
                    ln_g=ones((ed[0],)), ln_b=zeros((ed[0],)))
    p["pos1"] = tn((1, (img // ps) ** 2, ed[0]))
    p["blocks1"] = [mlp_prm(ed[0], ed[0] * mr[0]) for _ in range(depths[0])]
    p["pe2"] = dpe_prm(ed[0], ed[1])
    p["pos2"] = tn((1, (img // 8) ** 2, ed[1]))
    p["blocks2"] = [mlp_prm(ed[1], ed[1] * mr[1]) for _ in range(depths[1])]
    p["pe3"] = dpe_prm(ed[1], ed[2])
    p["pos3"] = tn((1, (img // 16) ** 2, ed[2]))
    p["blocks3"] = [vit_prm(ed[2], ed[2] * mr[2]) for _ in range(depths[2])]
    p["pe4"] = dpe_prm(ed[2], ed[3])
    p["pos4"] = tn((1, (img // 32) ** 2 + 1, ed[3]))
    p["blocks4"] = [vit_prm(ed[3], ed[3] * mr[3]) for _ in range(depths[3])]
    p["cls"] = tn((1, 1, ed[3]))
    p["norm_g"] = ones((ed[3],))
    p["norm_b"] = zeros((ed[3],))
    p["head_w"] = tn((ed[3], cfg["num_classes"]))
    p["head_b"] = zeros((cfg["num_classes"],))
    return p


if __name__ == "__main__":
    cfg = dict(img_size=32, patch_size=4, in_chans=3, num_classes=10,
               embed_dims=[16, 32, 64, 128], num_heads=[1, 2, 4, 8],
               mlp_ratios=[4, 4, 4, 4], depths=[2, 2, 2, 2])
    key = jax.random.PRNGKey(0)
    pkey, xkey = jax.random.split(key)
    params = init_params(pkey, cfg)
    x = jax.random.normal(xkey, (2, cfg["in_chans"], cfg["img_size"], cfg["img_size"]),
                          jnp.float32)
    fwd = jax.jit(functools.partial(lit_forward, cfg=cfg))
    logits = jax.block_until_ready(fwd(params, x))
    assert logits.shape == (2, cfg["num_classes"])
    assert bool(jnp.all(jnp.isfinite(logits)))
    print("KERNEL_OK")
</pallas_src>

<mosaic_0001>
module attributes {stable_mosaic.version = 11 : i64} {
  func.func @_fused_mm_kernel(%arg0: i32, %arg1: memref<64x48xf32, #tpu.memory_space<vmem>>, %arg2: memref<48x16xbf16, #tpu.memory_space<vmem>>, %arg3: memref<1x16xf32, #tpu.memory_space<vmem>>, %arg4: memref<1x16xf32, #tpu.memory_space<vmem>>, %arg5: memref<1x16xf32, #tpu.memory_space<vmem>>, %arg6: memref<64x16xbf16, #tpu.memory_space<vmem>>) attributes {dimension_semantics = [#tpu.dimension_semantics<parallel>], iteration_bounds = array<i64: 2>, scalar_prefetch = 0 : i64, scratch_operands = 0 : i64, tpu.core_type = #tpu.core_type<tc>, window_params = [{transform_indices = @transform_0, window_bounds = array<i64: 64, 48>}, {pipeline_mode = #tpu.pipeline_mode<synchronous>, transform_indices = @transform_1, window_bounds = array<i64: 48, 16>}, {pipeline_mode = #tpu.pipeline_mode<synchronous>, transform_indices = @transform_2, window_bounds = array<i64: 1, 16>}, {pipeline_mode = #tpu.pipeline_mode<synchronous>, transform_indices = @transform_3, window_bounds = array<i64: 1, 16>}, {pipeline_mode = #tpu.pipeline_mode<synchronous>, transform_indices = @transform_4, window_bounds = array<i64: 1, 16>}, {transform_indices = @transform_5, window_bounds = array<i64: 64, 16>}]} {
    %c0 = arith.constant 0 : index
    %c0_0 = arith.constant 0 : index
    %0 = vector.load %arg1[%c0, %c0_0] : memref<64x48xf32, #tpu.memory_space<vmem>>, vector<64x48xf32>
    %1 = arith.truncf %0 : vector<64x48xf32> to vector<64x48xbf16>
    %c0_1 = arith.constant 0 : index
    %c0_2 = arith.constant 0 : index
    %2 = vector.load %arg2[%c0_1, %c0_2] : memref<48x16xbf16, #tpu.memory_space<vmem>>, vector<48x16xbf16>
    %cst = arith.constant dense<0.000000e+00> : vector<64x16xf32>
    %3 = tpu.matmul %1, %2, %cst {dimension_numbers = #tpu.dot_dimension_numbers<[1], [0], [0], [1], [0, 0, 1, 1], [], []>} : vector<64x48xbf16>, vector<48x16xbf16>, vector<64x16xf32> -> vector<64x16xf32>
    %c0_3 = arith.constant 0 : index
    %c0_4 = arith.constant 0 : index
    %4 = vector.load %arg3[%c0_3, %c0_4] : memref<1x16xf32, #tpu.memory_space<vmem>>, vector<1x16xf32>
    %5 = vector.broadcast %4 : vector<1x16xf32> to vector<64x16xf32>
    %6 = arith.addf %3, %5 : vector<64x16xf32>
    %cst_5 = arith.constant dense<0.000000e+00> : vector<64xf32>
    %7 = vector.multi_reduction <add>, %6, %cst_5 [1] : vector<64x16xf32> to vector<64xf32>
    %8 = vector.shape_cast %7 : vector<64xf32> to vector<64x1xf32>
    %cst_6 = arith.constant 1.600000e+01 : f32
    %9 = vector.broadcast %cst_6 : f32 to vector<64x1xf32>
    %10 = arith.divf %8, %9 : vector<64x1xf32>
    %11 = vector.broadcast %10 : vector<64x1xf32> to vector<64x16xf32>
    %12 = arith.subf %6, %11 : vector<64x16xf32>
    %13 = arith.mulf %12, %12 : vector<64x16xf32>
    %cst_7 = arith.constant dense<0.000000e+00> : vector<64xf32>
    %14 = vector.multi_reduction <add>, %13, %cst_7 [1] : vector<64x16xf32> to vector<64xf32>
    %15 = vector.shape_cast %14 : vector<64xf32> to vector<64x1xf32>
    %cst_8 = arith.constant 1.600000e+01 : f32
    %16 = vector.broadcast %cst_8 : f32 to vector<64x1xf32>
    %17 = arith.divf %15, %16 : vector<64x1xf32>
    %cst_9 = arith.constant 9.99999974E-6 : f32
    %18 = vector.broadcast %cst_9 : f32 to vector<64x1xf32>
    %19 = arith.addf %17, %18 : vector<64x1xf32>
    %20 = math.rsqrt %19 : vector<64x1xf32>
    %21 = vector.broadcast %20 : vector<64x1xf32> to vector<64x16xf32>
    %22 = arith.mulf %12, %21 : vector<64x16xf32>
    %c0_10 = arith.constant 0 : index
    %c0_11 = arith.constant 0 : index
    %23 = vector.load %arg4[%c0_10, %c0_11] : memref<1x16xf32, #tpu.memory_space<vmem>>, vector<1x16xf32>
    %24 = vector.broadcast %23 : vector<1x16xf32> to vector<64x16xf32>
    %25 = arith.mulf %22, %24 : vector<64x16xf32>
    %c0_12 = arith.constant 0 : index
    %c0_13 = arith.constant 0 : index
    %26 = vector.load %arg5[%c0_12, %c0_13] : memref<1x16xf32, #tpu.memory_space<vmem>>, vector<1x16xf32>
    %27 = vector.broadcast %26 : vector<1x16xf32> to vector<64x16xf32>
    %28 = arith.addf %25, %27 : vector<64x16xf32>
    %29 = arith.truncf %28 : vector<64x16xf32> to vector<64x16xbf16>
    %c0_14 = arith.constant 0 : index
    %c0_15 = arith.constant 0 : index
    %30 = vector.load %arg6[%c0_14, %c0_15] : memref<64x16xbf16, #tpu.memory_space<vmem>>, vector<64x16xbf16>
    tpu.vector_store %arg6[%c0_14, %c0_15], %29 {strides = array<i32>} : memref<64x16xbf16, #tpu.memory_space<vmem>>, vector<64x16xbf16>,
    return
  }
  func.func @transform_0(%arg0: i32) -> (i32, i32) {
    %c0_i32 = arith.constant 0 : i32
    %c0_i32_0 = arith.constant 0 : i32
    return %arg0, %c0_i32 : i32, i32
  }
  func.func @transform_1(%arg0: i32) -> (i32, i32) {
    %c0_i32 = arith.constant 0 : i32
    %c0_i32_0 = arith.constant 0 : i32
    %c0_i32_1 = arith.constant 0 : i32
    return %c0_i32, %c0_i32_0 : i32, i32
  }
  func.func @transform_2(%arg0: i32) -> (i32, i32) {
    %c0_i32 = arith.constant 0 : i32
    %c0_i32_0 = arith.constant 0 : i32
    %c0_i32_1 = arith.constant 0 : i32
    return %c0_i32, %c0_i32_0 : i32, i32
  }
  func.func @transform_3(%arg0: i32) -> (i32, i32) {
    %c0_i32 = arith.constant 0 : i32
    %c0_i32_0 = arith.constant 0 : i32
    %c0_i32_1 = arith.constant 0 : i32
    return %c0_i32, %c0_i32_0 : i32, i32
  }
  func.func @transform_4(%arg0: i32) -> (i32, i32) {
    %c0_i32 = arith.constant 0 : i32
    %c0_i32_0 = arith.constant 0 : i32
    %c0_i32_1 = arith.constant 0 : i32
    return %c0_i32, %c0_i32_0 : i32, i32
  }
  func.func @transform_5(%arg0: i32) -> (i32, i32) {
    %c0_i32 = arith.constant 0 : i32
    %c0_i32_0 = arith.constant 0 : i32
    return %arg0, %c0_i32 : i32, i32
  }
}

module attributes {stable_mosaic.version = 11 : i64} {
  func.func @_fused_mm_kernel(%arg0: i32, %arg1: memref<64x16xbf16, #tpu.memory_space<vmem>>, %arg2: memref<1x16xf32, #tpu.memory_space<vmem>>, %arg3: memref<1x16xf32, #tpu.memory_space<vmem>>, %arg4: memref<16x64xbf16, #tpu.memory_space<vmem>>, %arg5: memref<1x64xf32, #tpu.memory_space<vmem>>, %arg6: memref<64x64xbf16, #tpu.memory_space<vmem>>) attributes {dimension_semantics = [#tpu.dimension_semantics<parallel>], iteration_bounds = array<i64: 2>, scalar_prefetch = 0 : i64, scratch_operands = 0 : i64, tpu.core_type = #tpu.core_type<tc>, window_params = [{transform_indices = @transform_0, window_bounds = array<i64: 64, 16>}, {pipeline_mode = #tpu.pipeline_mode<synchronous>, transform_indices = @transform_1, window_bounds = array<i64: 1, 16>}, {pipeline_mode = #tpu.pipeline_mode<synchronous>, transform_indices = @transform_2, window_bounds = array<i64: 1, 16>}, {pipeline_mode = #tpu.pipeline_mode<synchronous>, transform_indices = @transform_3, window_bounds = array<i64: 16, 64>}, {pipeline_mode = #tpu.pipeline_mode<synchronous>, transform_indices = @transform_4, window_bounds = array<i64: 1, 64>}, {transform_indices = @transform_5, window_bounds = array<i64: 64, 64>}]} {
    %c0 = arith.constant 0 : index
    %c0_0 = arith.constant 0 : index
    %0 = vector.load %arg1[%c0, %c0_0] : memref<64x16xbf16, #tpu.memory_space<vmem>>, vector<64x16xbf16>
    %1 = arith.extf %0 : vector<64x16xbf16> to vector<64x16xf32>
    %cst = arith.constant dense<0.000000e+00> : vector<64xf32>
    %2 = vector.multi_reduction <add>, %1, %cst [1] : vector<64x16xf32> to vector<64xf32>
    %3 = vector.shape_cast %2 : vector<64xf32> to vector<64x1xf32>
    %cst_1 = arith.constant 1.600000e+01 : f32
    %4 = vector.broadcast %cst_1 : f32 to vector<64x1xf32>
    %5 = arith.divf %3, %4 : vector<64x1xf32>
    %6 = vector.broadcast %5 : vector<64x1xf32> to vector<64x16xf32>
    %7 = arith.subf %1, %6 : vector<64x16xf32>
    %8 = arith.mulf %7, %7 : vector<64x16xf32>
    %cst_2 = arith.constant dense<0.000000e+00> : vector<64xf32>
    %9 = vector.multi_reduction <add>, %8, %cst_2 [1] : vector<64x16xf32> to vector<64xf32>
    %10 = vector.shape_cast %9 : vector<64xf32> to vector<64x1xf32>
    %cst_3 = arith.constant 1.600000e+01 : f32
    %11 = vector.broadcast %cst_3 : f32 to vector<64x1xf32>
    %12 = arith.divf %10, %11 : vector<64x1xf32>
    %cst_4 = arith.constant 9.99999974E-6 : f32
    %13 = vector.broadcast %cst_4 : f32 to vector<64x1xf32>
    %14 = arith.addf %12, %13 : vector<64x1xf32>
    %15 = math.rsqrt %14 : vector<64x1xf32>
    %16 = vector.broadcast %15 : vector<64x1xf32> to vector<64x16xf32>
    %17 = arith.mulf %7, %16 : vector<64x16xf32>
    %c0_5 = arith.constant 0 : index
    %c0_6 = arith.constant 0 : index
    %18 = vector.load %arg2[%c0_5, %c0_6] : memref<1x16xf32, #tpu.memory_space<vmem>>, vector<1x16xf32>
    %19 = vector.broadcast %18 : vector<1x16xf32> to vector<64x16xf32>
    %20 = arith.mulf %17, %19 : vector<64x16xf32>
    %c0_7 = arith.constant 0 : index
    %c0_8 = arith.constant 0 : index
    %21 = vector.load %arg3[%c0_7, %c0_8] : memref<1x16xf32, #tpu.memory_space<vmem>>, vector<1x16xf32>
    %22 = vector.broadcast %21 : vector<1x16xf32> to vector<64x16xf32>
    %23 = arith.addf %20, %22 : vector<64x16xf32>
    %24 = arith.truncf %23 : vector<64x16xf32> to vector<64x16xbf16>
    %c0_9 = arith.constant 0 : index
    %c0_10 = arith.constant 0 : index
    %25 = vector.load %arg4[%c0_9, %c0_10] : memref<16x64xbf16, #tpu.memory_space<vmem>>, vector<16x64xbf16>
    %cst_11 = arith.constant dense<0.000000e+00> : vector<64x64xf32>
    %26 = tpu.matmul %24, %25, %cst_11 {dimension_numbers = #tpu.dot_dimension_numbers<[1], [0], [0], [1], [0, 0, 1, 1], [], []>} : vector<64x16xbf16>, vector<16x64xbf16>, vector<64x64xf32> -> vector<64x64xf32>
    %c0_12 = arith.constant 0 : index
    %c0_13 = arith.constant 0 : index
    %27 = vector.load %arg5[%c0_12, %c0_13] : memref<1x64xf32, #tpu.memory_space<vmem>>, vector<1x64xf32>
    %28 = vector.broadcast %27 : vector<1x64xf32> to vector<64x64xf32>
    %29 = arith.addf %26, %28 : vector<64x64xf32>
    %cst_14 = arith.constant 5.000000e-01 : f32
    %30 = vector.broadcast %cst_14 : f32 to vector<64x64xf32>
    %31 = arith.mulf %30, %29 : vector<64x64xf32>
    %cst_15 = arith.constant 0.707106769 : f32
    %32 = vector.broadcast %cst_15 : f32 to vector<64x64xf32>
    %33 = arith.mulf %29, %32 : vector<64x64xf32>
    %34 = math.erf %33 : vector<64x64xf32>
    %cst_16 = arith.constant 1.000000e+00 : f32
    %35 = vector.broadcast %cst_16 : f32 to vector<64x64xf32>
    %36 = arith.addf %35, %34 : vector<64x64xf32>
    %37 = arith.mulf %31, %36 : vector<64x64xf32>
    %38 = arith.truncf %37 : vector<64x64xf32> to vector<64x64xbf16>
    %c0_17 = arith.constant 0 : index
    %c0_18 = arith.constant 0 : index
    %39 = vector.load %arg6[%c0_17, %c0_18] : memref<64x64xbf16, #tpu.memory_space<vmem>>, vector<64x64xbf16>
    tpu.vector_store %arg6[%c0_17, %c0_18], %38 {strides = array<i32>} : memref<64x64xbf16, #tpu.memory_space<vmem>>, vector<64x64xbf16>,
    return
  }
  func.func @transform_0(%arg0: i32) -> (i32, i32) {
    %c0_i32 = arith.constant 0 : i32
    %c0_i32_0 = arith.constant 0 : i32
    return %arg0, %c0_i32 : i32, i32
  }
  func.func @transform_1(%arg0: i32) -> (i32, i32) {
    %c0_i32 = arith.constant 0 : i32
    %c0_i32_0 = arith.constant 0 : i32
    %c0_i32_1 = arith.constant 0 : i32
    return %c0_i32, %c0_i32_0 : i32, i32
  }
  func.func @transform_2(%arg0: i32) -> (i32, i32) {
    %c0_i32 = arith.constant 0 : i32
    %c0_i32_0 = arith.constant 0 : i32
    %c0_i32_1 = arith.constant 0 : i32
    return %c0_i32, %c0_i32_0 : i32, i32
  }
  func.func @transform_3(%arg0: i32) -> (i32, i32) {
    %c0_i32 = arith.constant 0 : i32
    %c0_i32_0 = arith.constant 0 : i32
    %c0_i32_1 = arith.constant 0 : i32
    return %c0_i32, %c0_i32_0 : i32, i32
  }
  func.func @transform_4(%arg0: i32) -> (i32, i32) {
    %c0_i32 = arith.constant 0 : i32
    %c0_i32_0 = arith.constant 0 : i32
    %c0_i32_1 = arith.constant 0 : i32
    return %c0_i32, %c0_i32_0 : i32, i32
  }
  func.func @transform_5(%arg0: i32) -> (i32, i32) {
    %c0_i32 = arith.constant 0 : i32
    %c0_i32_0 = arith.constant 0 : i32
    return %arg0, %c0_i32 : i32, i32
  }
}

module attributes {stable_mosaic.version = 11 : i64} {
  func.func @_fused_mm_kernel(%arg0: i32, %arg1: memref<64x64xbf16, #tpu.memory_space<vmem>>, %arg2: memref<64x16xbf16, #tpu.memory_space<vmem>>, %arg3: memref<1x16xf32, #tpu.memory_space<vmem>>, %arg4: memref<64x16xbf16, #tpu.memory_space<vmem>>, %arg5: memref<64x16xbf16, #tpu.memory_space<vmem>>) attributes {dimension_semantics = [#tpu.dimension_semantics<parallel>], iteration_bounds = array<i64: 2>, scalar_prefetch = 0 : i64, scratch_operands = 0 : i64, tpu.core_type = #tpu.core_type<tc>, window_params = [{transform_indices = @transform_0, window_bounds = array<i64: 64, 64>}, {pipeline_mode = #tpu.pipeline_mode<synchronous>, transform_indices = @transform_1, window_bounds = array<i64: 64, 16>}, {pipeline_mode = #tpu.pipeline_mode<synchronous>, transform_indices = @transform_2, window_bounds = array<i64: 1, 16>}, {transform_indices = @transform_3, window_bounds = array<i64: 64, 16>}, {transform_indices = @transform_4, window_bounds = array<i64: 64, 16>}]} {
    %c0 = arith.constant 0 : index
    %c0_0 = arith.constant 0 : index
    %0 = vector.load %arg1[%c0, %c0_0] : memref<64x64xbf16, #tpu.memory_space<vmem>>, vector<64x64xbf16>
    %1 = arith.extf %0 : vector<64x64xbf16> to vector<64x64xf32>
    %2 = arith.truncf %1 : vector<64x64xf32> to vector<64x64xbf16>
    %c0_1 = arith.constant 0 : index
    %c0_2 = arith.constant 0 : index
    %3 = vector.load %arg2[%c0_1, %c0_2] : memref<64x16xbf16, #tpu.memory_space<vmem>>, vector<64x16xbf16>
    %cst = arith.constant dense<0.000000e+00> : vector<64x16xf32>
    %4 = tpu.matmul %2, %3, %cst {dimension_numbers = #tpu.dot_dimension_numbers<[1], [0], [0], [1], [0, 0, 1, 1], [], []>} : vector<64x64xbf16>, vector<64x16xbf16>, vector<64x16xf32> -> vector<64x16xf32>
    %c0_3 = arith.constant 0 : index
    %c0_4 = arith.constant 0 : index
    %5 = vector.load %arg3[%c0_3, %c0_4] : memref<1x16xf32, #tpu.memory_space<vmem>>, vector<1x16xf32>
    %6 = vector.broadcast %5 : vector<1x16xf32> to vector<64x16xf32>
    %7 = arith.addf %4, %6 : vector<64x16xf32>
    %c0_5 = arith.constant 0 : index
    %c0_6 = arith.constant 0 : index
    %8 = vector.load %arg4[%c0_5, %c0_6] : memref<64x16xbf16, #tpu.memory_space<vmem>>, vector<64x16xbf16>
    %9 = arith.extf %8 : vector<64x16xbf16> to vector<64x16xf32>
    %10 = arith.addf %7, %9 : vector<64x16xf32>
    %11 = arith.truncf %10 : vector<64x16xf32> to vector<64x16xbf16>
    %c0_7 = arith.constant 0 : index
    %c0_8 = arith.constant 0 : index
    %12 = vector.load %arg5[%c0_7, %c0_8] : memref<64x16xbf16, #tpu.memory_space<vmem>>, vector<64x16xbf16>
    tpu.vector_store %arg5[%c0_7, %c0_8], %11 {strides = array<i32>} : memref<64x16xbf16, #tpu.memory_space<vmem>>, vector<64x16xbf16>,
    return
  }
  func.func @transform_0(%arg0: i32) -> (i32, i32) {
    %c0_i32 = arith.constant 0 : i32
    %c0_i32_0 = arith.constant 0 : i32
    return %arg0, %c0_i32 : i32, i32
  }
  func.func @transform_1(%arg0: i32) -> (i32, i32) {
    %c0_i32 = arith.constant 0 : i32
    %c0_i32_0 = arith.constant 0 : i32
    %c0_i32_1 = arith.constant 0 : i32
    return %c0_i32, %c0_i32_0 : i32, i32
  }
  func.func @transform_2(%arg0: i32) -> (i32, i32) {
    %c0_i32 = arith.constant 0 : i32
    %c0_i32_0 = arith.constant 0 : i32
    %c0_i32_1 = arith.constant 0 : i32
    return %c0_i32, %c0_i32_0 : i32, i32
  }
  func.func @transform_3(%arg0: i32) -> (i32, i32) {
    %c0_i32 = arith.constant 0 : i32
    %c0_i32_0 = arith.constant 0 : i32
    return %arg0, %c0_i32 : i32, i32
  }
  func.func @transform_4(%arg0: i32) -> (i32, i32) {
    %c0_i32 = arith.constant 0 : i32
    %c0_i32_0 = arith.constant 0 : i32
    return %arg0, %c0_i32 : i32, i32
  }
}

module attributes {stable_mosaic.version = 11 : i64} {
  func.func @_fused_mm_kernel(%arg0: i32, %arg1: memref<16x64xbf16, #tpu.memory_space<vmem>>, %arg2: memref<64x8xbf16, #tpu.memory_space<vmem>>, %arg3: memref<1x8xf32, #tpu.memory_space<vmem>>, %arg4: memref<16x8xf32, #tpu.memory_space<vmem>>) attributes {dimension_semantics = [#tpu.dimension_semantics<parallel>], iteration_bounds = array<i64: 2>, scalar_prefetch = 0 : i64, scratch_operands = 0 : i64, tpu.core_type = #tpu.core_type<tc>, window_params = [{transform_indices = @transform_0, window_bounds = array<i64: 16, 64>}, {pipeline_mode = #tpu.pipeline_mode<synchronous>, transform_indices = @transform_1, window_bounds = array<i64: 64, 8>}, {pipeline_mode = #tpu.pipeline_mode<synchronous>, transform_indices = @transform_2, window_bounds = array<i64: 1, 8>}, {transform_indices = @transform_3, window_bounds = array<i64: 16, 8>}]} {
    %c0 = arith.constant 0 : index
    %c0_0 = arith.constant 0 : index
    %0 = vector.load %arg1[%c0, %c0_0] : memref<16x64xbf16, #tpu.memory_space<vmem>>, vector<16x64xbf16>
    %1 = arith.extf %0 : vector<16x64xbf16> to vector<16x64xf32>
    %2 = arith.truncf %1 : vector<16x64xf32> to vector<16x64xbf16>
    %c0_1 = arith.constant 0 : index
    %c0_2 = arith.constant 0 : index
    %3 = vector.load %arg2[%c0_1, %c0_2] : memref<64x8xbf16, #tpu.memory_space<vmem>>, vector<64x8xbf16>
    %cst = arith.constant dense<0.000000e+00> : vector<16x8xf32>
    %4 = tpu.matmul %2, %3, %cst {dimension_numbers = #tpu.dot_dimension_numbers<[1], [0], [0], [1], [0, 0, 1, 1], [], []>} : vector<16x64xbf16>, vector<64x8xbf16>, vector<16x8xf32> -> vector<16x8xf32>
    %c0_3 = arith.constant 0 : index
    %c0_4 = arith.constant 0 : index
    %5 = vector.load %arg3[%c0_3, %c0_4] : memref<1x8xf32, #tpu.memory_space<vmem>>, vector<1x8xf32>
    %6 = vector.broadcast %5 : vector<1x8xf32> to vector<16x8xf32>
    %7 = arith.addf %4, %6 : vector<16x8xf32>
    %c0_5 = arith.constant 0 : index
    %c0_6 = arith.constant 0 : index
    %8 = vector.load %arg4[%c0_5, %c0_6] : memref<16x8xf32, #tpu.memory_space<vmem>>, vector<16x8xf32>
    tpu.vector_store %arg4[%c0_5, %c0_6], %7 {strides = array<i32>} : memref<16x8xf32, #tpu.memory_space<vmem>>, vector<16x8xf32>,
    return
  }
  func.func @transform_0(%arg0: i32) -> (i32, i32) {
    %c0_i32 = arith.constant 0 : i32
    %c0_i32_0 = arith.constant 0 : i32
    return %arg0, %c0_i32 : i32, i32
  }
  func.func @transform_1(%arg0: i32) -> (i32, i32) {
    %c0_i32 = arith.constant 0 : i32
    %c0_i32_0 = arith.constant 0 : i32
    %c0_i32_1 = arith.constant 0 : i32
    return %c0_i32, %c0_i32_0 : i32, i32
  }
  func.func @transform_2(%arg0: i32) -> (i32, i32) {
    %c0_i32 = arith.constant 0 : i32
    %c0_i32_0 = arith.constant 0 : i32
    %c0_i32_1 = arith.constant 0 : i32
    return %c0_i32, %c0_i32_0 : i32, i32
  }
  func.func @transform_3(%arg0: i32) -> (i32, i32) {
    %c0_i32 = arith.constant 0 : i32
    %c0_i32_0 = arith.constant 0 : i32
    return %arg0, %c0_i32 : i32, i32
  }
}

module attributes {stable_mosaic.version = 11 : i64} {
  func.func @_fused_mm_kernel(%arg0: i32, %arg1: memref<16x64xf32, #tpu.memory_space<vmem>>, %arg2: memref<64x32xbf16, #tpu.memory_space<vmem>>, %arg3: memref<1x32xf32, #tpu.memory_space<vmem>>, %arg4: memref<16x32xbf16, #tpu.memory_space<vmem>>) attributes {dimension_semantics = [#tpu.dimension_semantics<parallel>], iteration_bounds = array<i64: 2>, scalar_prefetch = 0 : i64, scratch_operands = 0 : i64, tpu.core_type = #tpu.core_type<tc>, window_params = [{transform_indices = @transform_0, window_bounds = array<i64: 16, 64>}, {pipeline_mode = #tpu.pipeline_mode<synchronous>, transform_indices = @transform_1, window_bounds = array<i64: 64, 32>}, {pipeline_mode = #tpu.pipeline_mode<synchronous>, transform_indices = @transform_2, window_bounds = array<i64: 1, 32>}, {transform_indices = @transform_3, window_bounds = array<i64: 16, 32>}]} {
    %c0 = arith.constant 0 : index
    %c0_0 = arith.constant 0 : index
    %0 = vector.load %arg1[%c0, %c0_0] : memref<16x64xf32, #tpu.memory_space<vmem>>, vector<16x64xf32>
    %1 = arith.truncf %0 : vector<16x64xf32> to vector<16x64xbf16>
    %c0_1 = arith.constant 0 : index
    %c0_2 = arith.constant 0 : index
    %2 = vector.load %arg2[%c0_1, %c0_2] : memref<64x32xbf16, #tpu.memory_space<vmem>>, vector<64x32xbf16>
    %cst = arith.constant dense<0.000000e+00> : vector<16x32xf32>
    %3 = tpu.matmul %1, %2, %cst {dimension_numbers = #tpu.dot_dimension_numbers<[1], [0], [0], [1], [0, 0, 1, 1], [], []>} : vector<16x64xbf16>, vector<64x32xbf16>, vector<16x32xf32> -> vector<16x32xf32>
    %c0_3 = arith.constant 0 : index
    %c0_4 = arith.constant 0 : index
    %4 = vector.load %arg3[%c0_3, %c0_4] : memref<1x32xf32, #tpu.memory_space<vmem>>, vector<1x32xf32>
    %5 = vector.broadcast %4 : vector<1x32xf32> to vector<16x32xf32>
    %6 = arith.addf %3, %5 : vector<16x32xf32>
    %cst_5 = arith.constant 5.000000e-01 : f32
    %7 = vector.broadcast %cst_5 : f32 to vector<16x32xf32>
    %8 = arith.mulf %7, %6 : vector<16x32xf32>
    %cst_6 = arith.constant 0.707106769 : f32
    %9 = vector.broadcast %cst_6 : f32 to vector<16x32xf32>
    %10 = arith.mulf %6, %9 : vector<16x32xf32>
    %11 = math.erf %10 : vector<16x32xf32>
    %cst_7 = arith.constant 1.000000e+00 : f32
    %12 = vector.broadcast %cst_7 : f32 to vector<16x32xf32>
    %13 = arith.addf %12, %11 : vector<16x32xf32>
    %14 = arith.mulf %8, %13 : vector<16x32xf32>
    %15 = arith.truncf %14 : vector<16x32xf32> to vector<16x32xbf16>
    %c0_8 = arith.constant 0 : index
    %c0_9 = arith.constant 0 : index
    %16 = vector.load %arg4[%c0_8, %c0_9] : memref<16x32xbf16, #tpu.memory_space<vmem>>, vector<16x32xbf16>
    tpu.vector_store %arg4[%c0_8, %c0_9], %15 {strides = array<i32>} : memref<16x32xbf16, #tpu.memory_space<vmem>>, vector<16x32xbf16>,
    return
  }
  func.func @transform_0(%arg0: i32) -> (i32, i32) {
    %c0_i32 = arith.constant 0 : i32
    %c0_i32_0 = arith.constant 0 : i32
    return %arg0, %c0_i32 : i32, i32
  }
  func.func @transform_1(%arg0: i32) -> (i32, i32) {
    %c0_i32 = arith.constant 0 : i32
    %c0_i32_0 = arith.constant 0 : i32
    %c0_i32_1 = arith.constant 0 : i32
    return %c0_i32, %c0_i32_0 : i32, i32
  }
  func.func @transform_2(%arg0: i32) -> (i32, i32) {
    %c0_i32 = arith.constant 0 : i32
    %c0_i32_0 = arith.constant 0 : i32
    %c0_i32_1 = arith.constant 0 : i32
    return %c0_i32, %c0_i32_0 : i32, i32
  }
  func.func @transform_3(%arg0: i32) -> (i32, i32) {
    %c0_i32 = arith.constant 0 : i32
    %c0_i32_0 = arith.constant 0 : i32
    return %arg0, %c0_i32 : i32, i32
  }
}

module attributes {stable_mosaic.version = 11 : i64} {
  func.func @_fused_mm_kernel(%arg0: i32, %arg1: memref<16x32xbf16, #tpu.memory_space<vmem>>, %arg2: memref<1x32xf32, #tpu.memory_space<vmem>>, %arg3: memref<1x32xf32, #tpu.memory_space<vmem>>, %arg4: memref<32x128xbf16, #tpu.memory_space<vmem>>, %arg5: memref<1x128xf32, #tpu.memory_space<vmem>>, %arg6: memref<16x128xbf16, #tpu.memory_space<vmem>>) attributes {dimension_semantics = [#tpu.dimension_semantics<parallel>], iteration_bounds = array<i64: 2>, scalar_prefetch = 0 : i64, scratch_operands = 0 : i64, tpu.core_type = #tpu.core_type<tc>, window_params = [{transform_indices = @transform_0, window_bounds = array<i64: 16, 32>}, {pipeline_mode = #tpu.pipeline_mode<synchronous>, transform_indices = @transform_1, window_bounds = array<i64: 1, 32>}, {pipeline_mode = #tpu.pipeline_mode<synchronous>, transform_indices = @transform_2, window_bounds = array<i64: 1, 32>}, {pipeline_mode = #tpu.pipeline_mode<synchronous>, transform_indices = @transform_3, window_bounds = array<i64: 32, 128>}, {pipeline_mode = #tpu.pipeline_mode<synchronous>, transform_indices = @transform_4, window_bounds = array<i64: 1, 128>}, {transform_indices = @transform_5, window_bounds = array<i64: 16, 128>}]} {
    %c0 = arith.constant 0 : index
    %c0_0 = arith.constant 0 : index
    %0 = vector.load %arg1[%c0, %c0_0] : memref<16x32xbf16, #tpu.memory_space<vmem>>, vector<16x32xbf16>
    %1 = arith.extf %0 : vector<16x32xbf16> to vector<16x32xf32>
    %cst = arith.constant dense<0.000000e+00> : vector<16xf32>
    %2 = vector.multi_reduction <add>, %1, %cst [1] : vector<16x32xf32> to vector<16xf32>
    %3 = vector.shape_cast %2 : vector<16xf32> to vector<16x1xf32>
    %cst_1 = arith.constant 3.200000e+01 : f32
    %4 = vector.broadcast %cst_1 : f32 to vector<16x1xf32>
    %5 = arith.divf %3, %4 : vector<16x1xf32>
    %6 = vector.broadcast %5 : vector<16x1xf32> to vector<16x32xf32>
    %7 = arith.subf %1, %6 : vector<16x32xf32>
    %8 = arith.mulf %7, %7 : vector<16x32xf32>
    %cst_2 = arith.constant dense<0.000000e+00> : vector<16xf32>
    %9 = vector.multi_reduction <add>, %8, %cst_2 [1] : vector<16x32xf32> to vector<16xf32>
    %10 = vector.shape_cast %9 : vector<16xf32> to vector<16x1xf32>
    %cst_3 = arith.constant 3.200000e+01 : f32
    %11 = vector.broadcast %cst_3 : f32 to vector<16x1xf32>
    %12 = arith.divf %10, %11 : vector<16x1xf32>
    %cst_4 = arith.constant 9.99999974E-6 : f32
    %13 = vector.broadcast %cst_4 : f32 to vector<16x1xf32>
    %14 = arith.addf %12, %13 : vector<16x1xf32>
    %15 = math.rsqrt %14 : vector<16x1xf32>
    %16 = vector.broadcast %15 : vector<16x1xf32> to vector<16x32xf32>
    %17 = arith.mulf %7, %16 : vector<16x32xf32>
    %c0_5 = arith.constant 0 : index
    %c0_6 = arith.constant 0 : index
    %18 = vector.load %arg2[%c0_5, %c0_6] : memref<1x32xf32, #tpu.memory_space<vmem>>, vector<1x32xf32>
    %19 = vector.broadcast %18 : vector<1x32xf32> to vector<16x32xf32>
    %20 = arith.mulf %17, %19 : vector<16x32xf32>
    %c0_7 = arith.constant 0 : index
    %c0_8 = arith.constant 0 : index
    %21 = vector.load %arg3[%c0_7, %c0_8] : memref<1x32xf32, #tpu.memory_space<vmem>>, vector<1x32xf32>
    %22 = vector.broadcast %21 : vector<1x32xf32> to vector<16x32xf32>
    %23 = arith.addf %20, %22 : vector<16x32xf32>
    %24 = arith.truncf %23 : vector<16x32xf32> to vector<16x32xbf16>
    %c0_9 = arith.constant 0 : index
    %c0_10 = arith.constant 0 : index
    %25 = vector.load %arg4[%c0_9, %c0_10] : memref<32x128xbf16, #tpu.memory_space<vmem>>, vector<32x128xbf16>
    %cst_11 = arith.constant dense<0.000000e+00> : vector<16x128xf32>
    %26 = tpu.matmul %24, %25, %cst_11 {dimension_numbers = #tpu.dot_dimension_numbers<[1], [0], [0], [1], [0, 0, 1, 1], [], []>} : vector<16x32xbf16>, vector<32x128xbf16>, vector<16x128xf32> -> vector<16x128xf32>
    %c0_12 = arith.constant 0 : index
    %c0_13 = arith.constant 0 : index
    %27 = vector.load %arg5[%c0_12, %c0_13] : memref<1x128xf32, #tpu.memory_space<vmem>>, vector<1x128xf32>
    %28 = vector.broadcast %27 : vector<1x128xf32> to vector<16x128xf32>
    %29 = arith.addf %26, %28 : vector<16x128xf32>
    %cst_14 = arith.constant 5.000000e-01 : f32
    %30 = vector.broadcast %cst_14 : f32 to vector<16x128xf32>
    %31 = arith.mulf %30, %29 : vector<16x128xf32>
    %cst_15 = arith.constant 0.707106769 : f32
    %32 = vector.broadcast %cst_15 : f32 to vector<16x128xf32>
    %33 = arith.mulf %29, %32 : vector<16x128xf32>
    %34 = math.erf %33 : vector<16x128xf32>
    %cst_16 = arith.constant 1.000000e+00 : f32
    %35 = vector.broadcast %cst_16 : f32 to vector<16x128xf32>
    %36 = arith.addf %35, %34 : vector<16x128xf32>
    %37 = arith.mulf %31, %36 : vector<16x128xf32>
    %38 = arith.truncf %37 : vector<16x128xf32> to vector<16x128xbf16>
    %c0_17 = arith.constant 0 : index
    %c0_18 = arith.constant 0 : index
    %39 = vector.load %arg6[%c0_17, %c0_18] : memref<16x128xbf16, #tpu.memory_space<vmem>>, vector<16x128xbf16>
    tpu.vector_store %arg6[%c0_17, %c0_18], %38 {strides = array<i32>} : memref<16x128xbf16, #tpu.memory_space<vmem>>, vector<16x128xbf16>,
    return
  }
  func.func @transform_0(%arg0: i32) -> (i32, i32) {
    %c0_i32 = arith.constant 0 : i32
    %c0_i32_0 = arith.constant 0 : i32
    return %arg0, %c0_i32 : i32, i32
  }
  func.func @transform_1(%arg0: i32) -> (i32, i32) {
    %c0_i32 = arith.constant 0 : i32
    %c0_i32_0 = arith.constant 0 : i32
    %c0_i32_1 = arith.constant 0 : i32
    return %c0_i32, %c0_i32_0 : i32, i32
  }
  func.func @transform_2(%arg0: i32) -> (i32, i32) {
    %c0_i32 = arith.constant 0 : i32
    %c0_i32_0 = arith.constant 0 : i32
    %c0_i32_1 = arith.constant 0 : i32
    return %c0_i32, %c0_i32_0 : i32, i32
  }
  func.func @transform_3(%arg0: i32) -> (i32, i32) {
    %c0_i32 = arith.constant 0 : i32
    %c0_i32_0 = arith.constant 0 : i32
    %c0_i32_1 = arith.constant 0 : i32
    return %c0_i32, %c0_i32_0 : i32, i32
  }
  func.func @transform_4(%arg0: i32) -> (i32, i32) {
    %c0_i32 = arith.constant 0 : i32
    %c0_i32_0 = arith.constant 0 : i32
    %c0_i32_1 = arith.constant 0 : i32
    return %c0_i32, %c0_i32_0 : i32, i32
  }
  func.func @transform_5(%arg0: i32) -> (i32, i32) {
    %c0_i32 = arith.constant 0 : i32
    %c0_i32_0 = arith.constant 0 : i32
    return %arg0, %c0_i32 : i32, i32
  }
}

module attributes {stable_mosaic.version = 11 : i64} {
  func.func @_fused_mm_kernel(%arg0: i32, %arg1: memref<16x128xbf16, #tpu.memory_space<vmem>>, %arg2: memref<128x32xbf16, #tpu.memory_space<vmem>>, %arg3: memref<1x32xf32, #tpu.memory_space<vmem>>, %arg4: memref<16x32xbf16, #tpu.memory_space<vmem>>, %arg5: memref<16x32xbf16, #tpu.memory_space<vmem>>) attributes {dimension_semantics = [#tpu.dimension_semantics<parallel>], iteration_bounds = array<i64: 2>, scalar_prefetch = 0 : i64, scratch_operands = 0 : i64, tpu.core_type = #tpu.core_type<tc>, window_params = [{transform_indices = @transform_0, window_bounds = array<i64: 16, 128>}, {pipeline_mode = #tpu.pipeline_mode<synchronous>, transform_indices = @transform_1, window_bounds = array<i64: 128, 32>}, {pipeline_mode = #tpu.pipeline_mode<synchronous>, transform_indices = @transform_2, window_bounds = array<i64: 1, 32>}, {transform_indices = @transform_3, window_bounds = array<i64: 16, 32>}, {transform_indices = @transform_4, window_bounds = array<i64: 16, 32>}]} {
    %c0 = arith.constant 0 : index
    %c0_0 = arith.constant 0 : index
    %0 = vector.load %arg1[%c0, %c0_0] : memref<16x128xbf16, #tpu.memory_space<vmem>>, vector<16x128xbf16>
    %1 = arith.extf %0 : vector<16x128xbf16> to vector<16x128xf32>
    %2 = arith.truncf %1 : vector<16x128xf32> to vector<16x128xbf16>
    %c0_1 = arith.constant 0 : index
    %c0_2 = arith.constant 0 : index
    %3 = vector.load %arg2[%c0_1, %c0_2] : memref<128x32xbf16, #tpu.memory_space<vmem>>, vector<128x32xbf16>
    %cst = arith.constant dense<0.000000e+00> : vector<16x32xf32>
    %4 = tpu.matmul %2, %3, %cst {dimension_numbers = #tpu.dot_dimension_numbers<[1], [0], [0], [1], [0, 0, 1, 1], [], []>} : vector<16x128xbf16>, vector<128x32xbf16>, vector<16x32xf32> -> vector<16x32xf32>
    %c0_3 = arith.constant 0 : index
    %c0_4 = arith.constant 0 : index
    %5 = vector.load %arg3[%c0_3, %c0_4] : memref<1x32xf32, #tpu.memory_space<vmem>>, vector<1x32xf32>
    %6 = vector.broadcast %5 : vector<1x32xf32> to vector<16x32xf32>
    %7 = arith.addf %4, %6 : vector<16x32xf32>
    %c0_5 = arith.constant 0 : index
    %c0_6 = arith.constant 0 : index
    %8 = vector.load %arg4[%c0_5, %c0_6] : memref<16x32xbf16, #tpu.memory_space<vmem>>, vector<16x32xbf16>
    %9 = arith.extf %8 : vector<16x32xbf16> to vector<16x32xf32>
    %10 = arith.addf %7, %9 : vector<16x32xf32>
    %11 = arith.truncf %10 : vector<16x32xf32> to vector<16x32xbf16>
    %c0_7 = arith.constant 0 : index
    %c0_8 = arith.constant 0 : index
    %12 = vector.load %arg5[%c0_7, %c0_8] : memref<16x32xbf16, #tpu.memory_space<vmem>>, vector<16x32xbf16>
    tpu.vector_store %arg5[%c0_7, %c0_8], %11 {strides = array<i32>} : memref<16x32xbf16, #tpu.memory_space<vmem>>, vector<16x32xbf16>,
    return
  }
  func.func @transform_0(%arg0: i32) -> (i32, i32) {
    %c0_i32 = arith.constant 0 : i32
    %c0_i32_0 = arith.constant 0 : i32
    return %arg0, %c0_i32 : i32, i32
  }
  func.func @transform_1(%arg0: i32) -> (i32, i32) {
    %c0_i32 = arith.constant 0 : i32
    %c0_i32_0 = arith.constant 0 : i32
    %c0_i32_1 = arith.constant 0 : i32
    return %c0_i32, %c0_i32_0 : i32, i32
  }
  func.func @transform_2(%arg0: i32) -> (i32, i32) {
    %c0_i32 = arith.constant 0 : i32
    %c0_i32_0 = arith.constant 0 : i32
    %c0_i32_1 = arith.constant 0 : i32
    return %c0_i32, %c0_i32_0 : i32, i32
  }
  func.func @transform_3(%arg0: i32) -> (i32, i32) {
    %c0_i32 = arith.constant 0 : i32
    %c0_i32_0 = arith.constant 0 : i32
    return %arg0, %c0_i32 : i32, i32
  }
  func.func @transform_4(%arg0: i32) -> (i32, i32) {
    %c0_i32 = arith.constant 0 : i32
    %c0_i32_0 = arith.constant 0 : i32
    return %arg0, %c0_i32 : i32, i32
  }
}

module attributes {stable_mosaic.version = 11 : i64} {
  func.func @_fused_mm_kernel(%arg0: i32, %arg1: memref<8x128xbf16, #tpu.memory_space<vmem>>, %arg2: memref<128x8xbf16, #tpu.memory_space<vmem>>, %arg3: memref<1x8xf32, #tpu.memory_space<vmem>>, %arg4: memref<8x8xf32, #tpu.memory_space<vmem>>) attributes {dimension_semantics = [#tpu.dimension_semantics<parallel>], iteration_bounds = array<i64: 1>, scalar_prefetch = 0 : i64, scratch_operands = 0 : i64, tpu.core_type = #tpu.core_type<tc>, window_params = [{transform_indices = @transform_0, window_bounds = array<i64: 8, 128>}, {pipeline_mode = #tpu.pipeline_mode<synchronous>, transform_indices = @transform_1, window_bounds = array<i64: 128, 8>}, {pipeline_mode = #tpu.pipeline_mode<synchronous>, transform_indices = @transform_2, window_bounds = array<i64: 1, 8>}, {transform_indices = @transform_3, window_bounds = array<i64: 8, 8>}]} {
    %c0 = arith.constant 0 : index
    %c0_0 = arith.constant 0 : index
    %0 = vector.load %arg1[%c0, %c0_0] : memref<8x128xbf16, #tpu.memory_space<vmem>>, vector<8x128xbf16>
    %1 = arith.extf %0 : vector<8x128xbf16> to vector<8x128xf32>
    %2 = arith.truncf %1 : vector<8x128xf32> to vector<8x128xbf16>
    %c0_1 = arith.constant 0 : index
    %c0_2 = arith.constant 0 : index
    %3 = vector.load %arg2[%c0_1, %c0_2] : memref<128x8xbf16, #tpu.memory_space<vmem>>, vector<128x8xbf16>
    %cst = arith.constant dense<0.000000e+00> : vector<8x8xf32>
    %4 = tpu.matmul %2, %3, %cst {dimension_numbers = #tpu.dot_dimension_numbers<[1], [0], [0], [1], [0, 0, 1, 1], [], []>} : vector<8x128xbf16>, vector<128x8xbf16>, vector<8x8xf32> -> vector<8x8xf32>
    %c0_3 = arith.constant 0 : index
    %c0_4 = arith.constant 0 : index
    %5 = vector.load %arg3[%c0_3, %c0_4] : memref<1x8xf32, #tpu.memory_space<vmem>>, vector<1x8xf32>
    %6 = vector.broadcast %5 : vector<1x8xf32> to vector<8x8xf32>
    %7 = arith.addf %4, %6 : vector<8x8xf32>
    %c0_5 = arith.constant 0 : index
    %c0_6 = arith.constant 0 : index
    %8 = vector.load %arg4[%c0_5, %c0_6] : memref<8x8xf32, #tpu.memory_space<vmem>>, vector<8x8xf32>
    tpu.vector_store %arg4[%c0_5, %c0_6], %7 {strides = array<i32>} : memref<8x8xf32, #tpu.memory_space<vmem>>, vector<8x8xf32>,
    return
  }
  func.func @transform_0(%arg0: i32) -> (i32, i32) {
    %c0_i32 = arith.constant 0 : i32
    %c0_i32_0 = arith.constant 0 : i32
    return %arg0, %c0_i32 : i32, i32
  }
  func.func @transform_1(%arg0: i32) -> (i32, i32) {
    %c0_i32 = arith.constant 0 : i32
    %c0_i32_0 = arith.constant 0 : i32
    %c0_i32_1 = arith.constant 0 : i32
    return %c0_i32, %c0_i32_0 : i32, i32
  }
  func.func @transform_2(%arg0: i32) -> (i32, i32) {
    %c0_i32 = arith.constant 0 : i32
    %c0_i32_0 = arith.constant 0 : i32
    %c0_i32_1 = arith.constant 0 : i32
    return %c0_i32, %c0_i32_0 : i32, i32
  }
  func.func @transform_3(%arg0: i32) -> (i32, i32) {
    %c0_i32 = arith.constant 0 : i32
    %c0_i32_0 = arith.constant 0 : i32
    return %arg0, %c0_i32 : i32, i32
  }
}

module attributes {stable_mosaic.version = 11 : i64} {
  func.func @_fused_mm_kernel(%arg0: i32, %arg1: memref<8x128xf32, #tpu.memory_space<vmem>>, %arg2: memref<128x64xbf16, #tpu.memory_space<vmem>>, %arg3: memref<1x64xf32, #tpu.memory_space<vmem>>, %arg4: memref<8x64xbf16, #tpu.memory_space<vmem>>) attributes {dimension_semantics = [#tpu.dimension_semantics<parallel>], iteration_bounds = array<i64: 1>, scalar_prefetch = 0 : i64, scratch_operands = 0 : i64, tpu.core_type = #tpu.core_type<tc>, window_params = [{transform_indices = @transform_0, window_bounds = array<i64: 8, 128>}, {pipeline_mode = #tpu.pipeline_mode<synchronous>, transform_indices = @transform_1, window_bounds = array<i64: 128, 64>}, {pipeline_mode = #tpu.pipeline_mode<synchronous>, transform_indices = @transform_2, window_bounds = array<i64: 1, 64>}, {transform_indices = @transform_3, window_bounds = array<i64: 8, 64>}]} {
    %c0 = arith.constant 0 : index
    %c0_0 = arith.constant 0 : index
    %0 = vector.load %arg1[%c0, %c0_0] : memref<8x128xf32, #tpu.memory_space<vmem>>, vector<8x128xf32>
    %1 = arith.truncf %0 : vector<8x128xf32> to vector<8x128xbf16>
    %c0_1 = arith.constant 0 : index
    %c0_2 = arith.constant 0 : index
    %2 = vector.load %arg2[%c0_1, %c0_2] : memref<128x64xbf16, #tpu.memory_space<vmem>>, vector<128x64xbf16>
    %cst = arith.constant dense<0.000000e+00> : vector<8x64xf32>
    %3 = tpu.matmul %1, %2, %cst {dimension_numbers = #tpu.dot_dimension_numbers<[1], [0], [0], [1], [0, 0, 1, 1], [], []>} : vector<8x128xbf16>, vector<128x64xbf16>, vector<8x64xf32> -> vector<8x64xf32>
    %c0_3 = arith.constant 0 : index
    %c0_4 = arith.constant 0 : index
    %4 = vector.load %arg3[%c0_3, %c0_4] : memref<1x64xf32, #tpu.memory_space<vmem>>, vector<1x64xf32>
    %5 = vector.broadcast %4 : vector<1x64xf32> to vector<8x64xf32>
    %6 = arith.addf %3, %5 : vector<8x64xf32>
    %cst_5 = arith.constant 5.000000e-01 : f32
    %7 = vector.broadcast %cst_5 : f32 to vector<8x64xf32>
    %8 = arith.mulf %7, %6 : vector<8x64xf32>
    %cst_6 = arith.constant 0.707106769 : f32
    %9 = vector.broadcast %cst_6 : f32 to vector<8x64xf32>
    %10 = arith.mulf %6, %9 : vector<8x64xf32>
    %11 = math.erf %10 : vector<8x64xf32>
    %cst_7 = arith.constant 1.000000e+00 : f32
    %12 = vector.broadcast %cst_7 : f32 to vector<8x64xf32>
    %13 = arith.addf %12, %11 : vector<8x64xf32>
    %14 = arith.mulf %8, %13 : vector<8x64xf32>
    %15 = arith.truncf %14 : vector<8x64xf32> to vector<8x64xbf16>
    %c0_8 = arith.constant 0 : index
    %c0_9 = arith.constant 0 : index
    %16 = vector.load %arg4[%c0_8, %c0_9] : memref<8x64xbf16, #tpu.memory_space<vmem>>, vector<8x64xbf16>
    tpu.vector_store %arg4[%c0_8, %c0_9], %15 {strides = array<i32>} : memref<8x64xbf16, #tpu.memory_space<vmem>>, vector<8x64xbf16>,
    return
  }
  func.func @transform_0(%arg0: i32) -> (i32, i32) {
    %c0_i32 = arith.constant 0 : i32
    %c0_i32_0 = arith.constant 0 : i32
    return %arg0, %c0_i32 : i32, i32
  }
  func.func @transform_1(%arg0: i32) -> (i32, i32) {
    %c0_i32 = arith.constant 0 : i32
    %c0_i32_0 = arith.constant 0 : i32
    %c0_i32_1 = arith.constant 0 : i32
    return %c0_i32, %c0_i32_0 : i32, i32
  }
  func.func @transform_2(%arg0: i32) -> (i32, i32) {
    %c0_i32 = arith.constant 0 : i32
    %c0_i32_0 = arith.constant 0 : i32
    %c0_i32_1 = arith.constant 0 : i32
    return %c0_i32, %c0_i32_0 : i32, i32
  }
  func.func @transform_3(%arg0: i32) -> (i32, i32) {
    %c0_i32 = arith.constant 0 : i32
    %c0_i32_0 = arith.constant 0 : i32
    return %arg0, %c0_i32 : i32, i32
  }
}

module attributes {stable_mosaic.version = 11 : i64} {
  func.func @_fused_mm_kernel(%arg0: i32, %arg1: memref<8x64xbf16, #tpu.memory_space<vmem>>, %arg2: memref<1x64xf32, #tpu.memory_space<vmem>>, %arg3: memref<1x64xf32, #tpu.memory_space<vmem>>, %arg4: memref<64x192xbf16, #tpu.memory_space<vmem>>, %arg5: memref<1x192xf32, #tpu.memory_space<vmem>>, %arg6: memref<8x192xbf16, #tpu.memory_space<vmem>>) attributes {dimension_semantics = [#tpu.dimension_semantics<parallel>], iteration_bounds = array<i64: 1>, scalar_prefetch = 0 : i64, scratch_operands = 0 : i64, tpu.core_type = #tpu.core_type<tc>, window_params = [{transform_indices = @transform_0, window_bounds = array<i64: 8, 64>}, {pipeline_mode = #tpu.pipeline_mode<synchronous>, transform_indices = @transform_1, window_bounds = array<i64: 1, 64>}, {pipeline_mode = #tpu.pipeline_mode<synchronous>, transform_indices = @transform_2, window_bounds = array<i64: 1, 64>}, {pipeline_mode = #tpu.pipeline_mode<synchronous>, transform_indices = @transform_3, window_bounds = array<i64: 64, 192>}, {pipeline_mode = #tpu.pipeline_mode<synchronous>, transform_indices = @transform_4, window_bounds = array<i64: 1, 192>}, {transform_indices = @transform_5, window_bounds = array<i64: 8, 192>}]} {
    %c0 = arith.constant 0 : index
    %c0_0 = arith.constant 0 : index
    %0 = vector.load %arg1[%c0, %c0_0] : memref<8x64xbf16, #tpu.memory_space<vmem>>, vector<8x64xbf16>
    %1 = arith.extf %0 : vector<8x64xbf16> to vector<8x64xf32>
    %cst = arith.constant dense<0.000000e+00> : vector<8xf32>
    %2 = vector.multi_reduction <add>, %1, %cst [1] : vector<8x64xf32> to vector<8xf32>
    %3 = vector.shape_cast %2 : vector<8xf32> to vector<8x1xf32>
    %cst_1 = arith.constant 6.400000e+01 : f32
    %4 = vector.broadcast %cst_1 : f32 to vector<8x1xf32>
    %5 = arith.divf %3, %4 : vector<8x1xf32>
    %6 = vector.broadcast %5 : vector<8x1xf32> to vector<8x64xf32>
    %7 = arith.subf %1, %6 : vector<8x64xf32>
    %8 = arith.mulf %7, %7 : vector<8x64xf32>
    %cst_2 = arith.constant dense<0.000000e+00> : vector<8xf32>
    %9 = vector.multi_reduction <add>, %8, %cst_2 [1] : vector<8x64xf32> to vector<8xf32>
    %10 = vector.shape_cast %9 : vector<8xf32> to vector<8x1xf32>
    %cst_3 = arith.constant 6.400000e+01 : f32
    %11 = vector.broadcast %cst_3 : f32 to vector<8x1xf32>
    %12 = arith.divf %10, %11 : vector<8x1xf32>
    %cst_4 = arith.constant 9.99999974E-6 : f32
    %13 = vector.broadcast %cst_4 : f32 to vector<8x1xf32>
    %14 = arith.addf %12, %13 : vector<8x1xf32>
    %15 = math.rsqrt %14 : vector<8x1xf32>
    %16 = vector.broadcast %15 : vector<8x1xf32> to vector<8x64xf32>
    %17 = arith.mulf %7, %16 : vector<8x64xf32>
    %c0_5 = arith.constant 0 : index
    %c0_6 = arith.constant 0 : index
    %18 = vector.load %arg2[%c0_5, %c0_6] : memref<1x64xf32, #tpu.memory_space<vmem>>, vector<1x64xf32>
    %19 = vector.broadcast %18 : vector<1x64xf32> to vector<8x64xf32>
    %20 = arith.mulf %17, %19 : vector<8x64xf32>
    %c0_7 = arith.constant 0 : index
    %c0_8 = arith.constant 0 : index
    %21 = vector.load %arg3[%c0_7, %c0_8] : memref<1x64xf32, #tpu.memory_space<vmem>>, vector<1x64xf32>
    %22 = vector.broadcast %21 : vector<1x64xf32> to vector<8x64xf32>
    %23 = arith.addf %20, %22 : vector<8x64xf32>
    %24 = arith.truncf %23 : vector<8x64xf32> to vector<8x64xbf16>
    %c0_9 = arith.constant 0 : index
    %c0_10 = arith.constant 0 : index
    %25 = vector.load %arg4[%c0_9, %c0_10] : memref<64x192xbf16, #tpu.memory_space<vmem>>, vector<64x192xbf16>
    %cst_11 = arith.constant dense<0.000000e+00> : vector<8x192xf32>
    %26 = tpu.matmul %24, %25, %cst_11 {dimension_numbers = #tpu.dot_dimension_numbers<[1], [0], [0], [1], [0, 0, 1, 1], [], []>} : vector<8x64xbf16>, vector<64x192xbf16>, vector<8x192xf32> -> vector<8x192xf32>
    %c0_12 = arith.constant 0 : index
    %c0_13 = arith.constant 0 : index
    %27 = vector.load %arg5[%c0_12, %c0_13] : memref<1x192xf32, #tpu.memory_space<vmem>>, vector<1x192xf32>
    %28 = vector.broadcast %27 : vector<1x192xf32> to vector<8x192xf32>
    %29 = arith.addf %26, %28 : vector<8x192xf32>
    %30 = arith.truncf %29 : vector<8x192xf32> to vector<8x192xbf16>
    %c0_14 = arith.constant 0 : index
    %c0_15 = arith.constant 0 : index
    %31 = vector.load %arg6[%c0_14, %c0_15] : memref<8x192xbf16, #tpu.memory_space<vmem>>, vector<8x192xbf16>
    tpu.vector_store %arg6[%c0_14, %c0_15], %30 {strides = array<i32>} : memref<8x192xbf16, #tpu.memory_space<vmem>>, vector<8x192xbf16>,
    return
  }
  func.func @transform_0(%arg0: i32) -> (i32, i32) {
    %c0_i32 = arith.constant 0 : i32
    %c0_i32_0 = arith.constant 0 : i32
    return %arg0, %c0_i32 : i32, i32
  }
  func.func @transform_1(%arg0: i32) -> (i32, i32) {
    %c0_i32 = arith.constant 0 : i32
    %c0_i32_0 = arith.constant 0 : i32
    %c0_i32_1 = arith.constant 0 : i32
    return %c0_i32, %c0_i32_0 : i32, i32
  }
  func.func @transform_2(%arg0: i32) -> (i32, i32) {
    %c0_i32 = arith.constant 0 : i32
    %c0_i32_0 = arith.constant 0 : i32
    %c0_i32_1 = arith.constant 0 : i32
    return %c0_i32, %c0_i32_0 : i32, i32
  }
  func.func @transform_3(%arg0: i32) -> (i32, i32) {
    %c0_i32 = arith.constant 0 : i32
    %c0_i32_0 = arith.constant 0 : i32
    %c0_i32_1 = arith.constant 0 : i32
    return %c0_i32, %c0_i32_0 : i32, i32
  }
  func.func @transform_4(%arg0: i32) -> (i32, i32) {
    %c0_i32 = arith.constant 0 : i32
    %c0_i32_0 = arith.constant 0 : i32
    %c0_i32_1 = arith.constant 0 : i32
    return %c0_i32, %c0_i32_0 : i32, i32
  }
  func.func @transform_5(%arg0: i32) -> (i32, i32) {
    %c0_i32 = arith.constant 0 : i32
    %c0_i32_0 = arith.constant 0 : i32
    return %arg0, %c0_i32 : i32, i32
  }
}

module attributes {stable_mosaic.version = 11 : i64} {
  func.func @_attn_kernel(%arg0: i32, %arg1: memref<1x4x4x16xbf16, #tpu.memory_space<vmem>>, %arg2: memref<1x4x4x16xbf16, #tpu.memory_space<vmem>>, %arg3: memref<1x4x4x16xbf16, #tpu.memory_space<vmem>>, %arg4: memref<1x4x4x16xbf16, #tpu.memory_space<vmem>>) attributes {dimension_semantics = [#tpu.dimension_semantics<parallel>], iteration_bounds = array<i64: 2>, scalar_prefetch = 0 : i64, scratch_operands = 0 : i64, tpu.core_type = #tpu.core_type<tc>, window_params = [{transform_indices = @transform_0, window_bounds = array<i64: 1, 4, 4, 16>}, {transform_indices = @transform_1, window_bounds = array<i64: 1, 4, 4, 16>}, {transform_indices = @transform_2, window_bounds = array<i64: 1, 4, 4, 16>}, {transform_indices = @transform_3, window_bounds = array<i64: 1, 4, 4, 16>}]} {
    %c0 = arith.constant 0 : index
    %c0_0 = arith.constant 0 : index
    %c0_1 = arith.constant 0 : index
    %c0_2 = arith.constant 0 : index
    %0 = vector.load %arg1[%c0, %c0_0, %c0_1, %c0_2] : memref<1x4x4x16xbf16, #tpu.memory_space<vmem>>, vector<1x4x4x16xbf16>
    %1 = vector.shape_cast %0 : vector<1x4x4x16xbf16> to vector<4x4x16xbf16>
    %2 = arith.extf %1 : vector<4x4x16xbf16> to vector<4x4x16xf32>
    %cst = arith.constant 2.500000e-01 : f32
    %3 = vector.broadcast %cst : f32 to vector<4x4x16xf32>
    %4 = arith.mulf %2, %3 : vector<4x4x16xf32>
    %5 = arith.truncf %4 : vector<4x4x16xf32> to vector<4x4x16xbf16>
    %c0_3 = arith.constant 0 : index
    %c0_4 = arith.constant 0 : index
    %c0_5 = arith.constant 0 : index
    %c0_6 = arith.constant 0 : index
    %6 = vector.load %arg2[%c0_3, %c0_4, %c0_5, %c0_6] : memref<1x4x4x16xbf16, #tpu.memory_space<vmem>>, vector<1x4x4x16xbf16>
    %7 = vector.shape_cast %6 : vector<1x4x4x16xbf16> to vector<4x4x16xbf16>
    %c0_7 = arith.constant 0 : index
    %c0_8 = arith.constant 0 : index
    %c0_9 = arith.constant 0 : index
    %c0_10 = arith.constant 0 : index
    %8 = vector.load %arg3[%c0_7, %c0_8, %c0_9, %c0_10] : memref<1x4x4x16xbf16, #tpu.memory_space<vmem>>, vector<1x4x4x16xbf16>
    %9 = vector.shape_cast %8 : vector<1x4x4x16xbf16> to vector<4x4x16xbf16>
    "tpu.trace_start"() <{level = 10 : i32, message = "hqd,hkd->hqk"}> : () -> ()
    %cst_11 = arith.constant dense<0.000000e+00> : vector<4x4x4xf32>
    %10 = tpu.matmul %5, %7, %cst_11 {dimension_numbers = #tpu.dot_dimension_numbers<[2], [2], [1], [1], [0, 0, 0, 1, 1, 1], [0], [0]>} : vector<4x4x16xbf16>, vector<4x4x16xbf16>, vector<4x4x4xf32> -> vector<4x4x4xf32>
    "tpu.trace_stop"() : () -> ()
    %cst_12 = arith.constant dense<0xFF800000> : vector<4x4xf32>
    %11 = vector.multi_reduction <maximumf>, %10, %cst_12 [2] : vector<4x4x4xf32> to vector<4x4xf32>
    %12 = vector.shape_cast %11 : vector<4x4xf32> to vector<4x4x1xf32>
    %13 = vector.broadcast %12 : vector<4x4x1xf32> to vector<4x4x4xf32>
    %14 = arith.subf %10, %13 : vector<4x4x4xf32>
    %15 = math.exp %14 : vector<4x4x4xf32>
    %cst_13 = arith.constant dense<0.000000e+00> : vector<4x4xf32>
    %16 = vector.multi_reduction <add>, %15, %cst_13 [2] : vector<4x4x4xf32> to vector<4x4xf32>
    %17 = vector.shape_cast %16 : vector<4x4xf32> to vector<4x4x1xf32>
    %18 = tpu.reciprocal %17 {approx = true} : vector<4x4x1xf32> -> vector<4x4x1xf32>
    %19 = vector.broadcast %18 : vector<4x4x1xf32> to vector<4x4x4xf32>
    %20 = arith.mulf %15, %19 : vector<4x4x4xf32>
    %21 = arith.truncf %20 : vector<4x4x4xf32> to vector<4x4x4xbf16>
    "tpu.trace_start"() <{level = 10 : i32, message = "hqk,hkd->hqd"}> : () -> ()
    %cst_14 = arith.constant dense<0.000000e+00> : vector<4x4x16xf32>
    %22 = tpu.matmul %21, %9, %cst_14 {dimension_numbers = #tpu.dot_dimension_numbers<[2], [1], [1], [2], [0, 0, 0, 1, 1, 2], [0], [0]>} : vector<4x4x4xbf16>, vector<4x4x16xbf16>, vector<4x4x16xf32> -> vector<4x4x16xf32>
    "tpu.trace_stop"() : () -> ()
    %23 = arith.truncf %22 : vector<4x4x16xf32> to vector<4x4x16xbf16>
    %c0_15 = arith.constant 0 : index
    %c0_16 = arith.constant 0 : index
    %c0_17 = arith.constant 0 : index
    %c0_18 = arith.constant 0 : index
    %24 = vector.load %arg4[%c0_15, %c0_16, %c0_17, %c0_18] : memref<1x4x4x16xbf16, #tpu.memory_space<vmem>>, vector<1x4x4x16xbf16>
    %25 = vector.shape_cast %24 : vector<1x4x4x16xbf16> to vector<4x4x16xbf16>
    %26 = vector.shape_cast %23 : vector<4x4x16xbf16> to vector<1x4x4x16xbf16>
    tpu.vector_store %arg4[%c0_15, %c0_16, %c0_17, %c0_18], %26 {strides = array<i32>} : memref<1x4x4x16xbf16, #tpu.memory_space<vmem>>, vector<1x4x4x16xbf16>,
    return
  }
  func.func @transform_0(%arg0: i32) -> (i32, i32, i32, i32) {
    %c0_i32 = arith.constant 0 : i32
    %c0_i32_0 = arith.constant 0 : i32
    %c0_i32_1 = arith.constant 0 : i32
    %c0_i32_2 = arith.constant 0 : i32
    return %arg0, %c0_i32, %c0_i32_0, %c0_i32_1 : i32, i32, i32, i32
  }
  func.func @transform_1(%arg0: i32) -> (i32, i32, i32, i32) {
    %c0_i32 = arith.constant 0 : i32
    %c0_i32_0 = arith.constant 0 : i32
    %c0_i32_1 = arith.constant 0 : i32
    %c0_i32_2 = arith.constant 0 : i32
    return %arg0, %c0_i32, %c0_i32_0, %c0_i32_1 : i32, i32, i32, i32
  }
  func.func @transform_2(%arg0: i32) -> (i32, i32, i32, i32) {
    %c0_i32 = arith.constant 0 : i32
    %c0_i32_0 = arith.constant 0 : i32
    %c0_i32_1 = arith.constant 0 : i32
    %c0_i32_2 = arith.constant 0 : i32
    return %arg0, %c0_i32, %c0_i32_0, %c0_i32_1 : i32, i32, i32, i32
  }
  func.func @transform_3(%arg0: i32) -> (i32, i32, i32, i32) {
    %c0_i32 = arith.constant 0 : i32
    %c0_i32_0 = arith.constant 0 : i32
    %c0_i32_1 = arith.constant 0 : i32
    %c0_i32_2 = arith.constant 0 : i32
    return %arg0, %c0_i32, %c0_i32_0, %c0_i32_1 : i32, i32, i32, i32
  }
}

module attributes {stable_mosaic.version = 11 : i64} {
  func.func @_fused_mm_kernel(%arg0: i32, %arg1: memref<8x64xbf16, #tpu.memory_space<vmem>>, %arg2: memref<64x64xbf16, #tpu.memory_space<vmem>>, %arg3: memref<1x64xf32, #tpu.memory_space<vmem>>, %arg4: memref<8x64xbf16, #tpu.memory_space<vmem>>, %arg5: memref<8x64xbf16, #tpu.memory_space<vmem>>) attributes {dimension_semantics = [#tpu.dimension_semantics<parallel>], iteration_bounds = array<i64: 1>, scalar_prefetch = 0 : i64, scratch_operands = 0 : i64, tpu.core_type = #tpu.core_type<tc>, window_params = [{transform_indices = @transform_0, window_bounds = array<i64: 8, 64>}, {pipeline_mode = #tpu.pipeline_mode<synchronous>, transform_indices = @transform_1, window_bounds = array<i64: 64, 64>}, {pipeline_mode = #tpu.pipeline_mode<synchronous>, transform_indices = @transform_2, window_bounds = array<i64: 1, 64>}, {transform_indices = @transform_3, window_bounds = array<i64: 8, 64>}, {transform_indices = @transform_4, window_bounds = array<i64: 8, 64>}]} {
    %c0 = arith.constant 0 : index
    %c0_0 = arith.constant 0 : index
    %0 = vector.load %arg1[%c0, %c0_0] : memref<8x64xbf16, #tpu.memory_space<vmem>>, vector<8x64xbf16>
    %1 = arith.extf %0 : vector<8x64xbf16> to vector<8x64xf32>
    %2 = arith.truncf %1 : vector<8x64xf32> to vector<8x64xbf16>
    %c0_1 = arith.constant 0 : index
    %c0_2 = arith.constant 0 : index
    %3 = vector.load %arg2[%c0_1, %c0_2] : memref<64x64xbf16, #tpu.memory_space<vmem>>, vector<64x64xbf16>
    %cst = arith.constant dense<0.000000e+00> : vector<8x64xf32>
    %4 = tpu.matmul %2, %3, %cst {dimension_numbers = #tpu.dot_dimension_numbers<[1], [0], [0], [1], [0, 0, 1, 1], [], []>} : vector<8x64xbf16>, vector<64x64xbf16>, vector<8x64xf32> -> vector<8x64xf32>
    %c0_3 = arith.constant 0 : index
    %c0_4 = arith.constant 0 : index
    %5 = vector.load %arg3[%c0_3, %c0_4] : memref<1x64xf32, #tpu.memory_space<vmem>>, vector<1x64xf32>
    %6 = vector.broadcast %5 : vector<1x64xf32> to vector<8x64xf32>
    %7 = arith.addf %4, %6 : vector<8x64xf32>
    %c0_5 = arith.constant 0 : index
    %c0_6 = arith.constant 0 : index
    %8 = vector.load %arg4[%c0_5, %c0_6] : memref<8x64xbf16, #tpu.memory_space<vmem>>, vector<8x64xbf16>
    %9 = arith.extf %8 : vector<8x64xbf16> to vector<8x64xf32>
    %10 = arith.addf %7, %9 : vector<8x64xf32>
    %11 = arith.truncf %10 : vector<8x64xf32> to vector<8x64xbf16>
    %c0_7 = arith.constant 0 : index
    %c0_8 = arith.constant 0 : index
    %12 = vector.load %arg5[%c0_7, %c0_8] : memref<8x64xbf16, #tpu.memory_space<vmem>>, vector<8x64xbf16>
    tpu.vector_store %arg5[%c0_7, %c0_8], %11 {strides = array<i32>} : memref<8x64xbf16, #tpu.memory_space<vmem>>, vector<8x64xbf16>,
    return
  }
  func.func @transform_0(%arg0: i32) -> (i32, i32) {
    %c0_i32 = arith.constant 0 : i32
    %c0_i32_0 = arith.constant 0 : i32
    return %arg0, %c0_i32 : i32, i32
  }
  func.func @transform_1(%arg0: i32) -> (i32, i32) {
    %c0_i32 = arith.constant 0 : i32
    %c0_i32_0 = arith.constant 0 : i32
    %c0_i32_1 = arith.constant 0 : i32
    return %c0_i32, %c0_i32_0 : i32, i32
  }
  func.func @transform_2(%arg0: i32) -> (i32, i32) {
    %c0_i32 = arith.constant 0 : i32
    %c0_i32_0 = arith.constant 0 : i32
    %c0_i32_1 = arith.constant 0 : i32
    return %c0_i32, %c0_i32_0 : i32, i32
  }
  func.func @transform_3(%arg0: i32) -> (i32, i32) {
    %c0_i32 = arith.constant 0 : i32
    %c0_i32_0 = arith.constant 0 : i32
    return %arg0, %c0_i32 : i32, i32
  }
  func.func @transform_4(%arg0: i32) -> (i32, i32) {
    %c0_i32 = arith.constant 0 : i32
    %c0_i32_0 = arith.constant 0 : i32
    return %arg0, %c0_i32 : i32, i32
  }
}

module attributes {stable_mosaic.version = 11 : i64} {
  func.func @_fused_mm_kernel(%arg0: i32, %arg1: memref<8x64xbf16, #tpu.memory_space<vmem>>, %arg2: memref<1x64xf32, #tpu.memory_space<vmem>>, %arg3: memref<1x64xf32, #tpu.memory_space<vmem>>, %arg4: memref<64x256xbf16, #tpu.memory_space<vmem>>, %arg5: memref<1x256xf32, #tpu.memory_space<vmem>>, %arg6: memref<8x256xbf16, #tpu.memory_space<vmem>>) attributes {dimension_semantics = [#tpu.dimension_semantics<parallel>], iteration_bounds = array<i64: 1>, scalar_prefetch = 0 : i64, scratch_operands = 0 : i64, tpu.core_type = #tpu.core_type<tc>, window_params = [{transform_indices = @transform_0, window_bounds = array<i64: 8, 64>}, {pipeline_mode = #tpu.pipeline_mode<synchronous>, transform_indices = @transform_1, window_bounds = array<i64: 1, 64>}, {pipeline_mode = #tpu.pipeline_mode<synchronous>, transform_indices = @transform_2, window_bounds = array<i64: 1, 64>}, {pipeline_mode = #tpu.pipeline_mode<synchronous>, transform_indices = @transform_3, window_bounds = array<i64: 64, 256>}, {pipeline_mode = #tpu.pipeline_mode<synchronous>, transform_indices = @transform_4, window_bounds = array<i64: 1, 256>}, {transform_indices = @transform_5, window_bounds = array<i64: 8, 256>}]} {
    %c0 = arith.constant 0 : index
    %c0_0 = arith.constant 0 : index
    %0 = vector.load %arg1[%c0, %c0_0] : memref<8x64xbf16, #tpu.memory_space<vmem>>, vector<8x64xbf16>
    %1 = arith.extf %0 : vector<8x64xbf16> to vector<8x64xf32>
    %cst = arith.constant dense<0.000000e+00> : vector<8xf32>
    %2 = vector.multi_reduction <add>, %1, %cst [1] : vector<8x64xf32> to vector<8xf32>
    %3 = vector.shape_cast %2 : vector<8xf32> to vector<8x1xf32>
    %cst_1 = arith.constant 6.400000e+01 : f32
    %4 = vector.broadcast %cst_1 : f32 to vector<8x1xf32>
    %5 = arith.divf %3, %4 : vector<8x1xf32>
    %6 = vector.broadcast %5 : vector<8x1xf32> to vector<8x64xf32>
    %7 = arith.subf %1, %6 : vector<8x64xf32>
    %8 = arith.mulf %7, %7 : vector<8x64xf32>
    %cst_2 = arith.constant dense<0.000000e+00> : vector<8xf32>
    %9 = vector.multi_reduction <add>, %8, %cst_2 [1] : vector<8x64xf32> to vector<8xf32>
    %10 = vector.shape_cast %9 : vector<8xf32> to vector<8x1xf32>
    %cst_3 = arith.constant 6.400000e+01 : f32
    %11 = vector.broadcast %cst_3 : f32 to vector<8x1xf32>
    %12 = arith.divf %10, %11 : vector<8x1xf32>
    %cst_4 = arith.constant 9.99999974E-6 : f32
    %13 = vector.broadcast %cst_4 : f32 to vector<8x1xf32>
    %14 = arith.addf %12, %13 : vector<8x1xf32>
    %15 = math.rsqrt %14 : vector<8x1xf32>
    %16 = vector.broadcast %15 : vector<8x1xf32> to vector<8x64xf32>
    %17 = arith.mulf %7, %16 : vector<8x64xf32>
    %c0_5 = arith.constant 0 : index
    %c0_6 = arith.constant 0 : index
    %18 = vector.load %arg2[%c0_5, %c0_6] : memref<1x64xf32, #tpu.memory_space<vmem>>, vector<1x64xf32>
    %19 = vector.broadcast %18 : vector<1x64xf32> to vector<8x64xf32>
    %20 = arith.mulf %17, %19 : vector<8x64xf32>
    %c0_7 = arith.constant 0 : index
    %c0_8 = arith.constant 0 : index
    %21 = vector.load %arg3[%c0_7, %c0_8] : memref<1x64xf32, #tpu.memory_space<vmem>>, vector<1x64xf32>
    %22 = vector.broadcast %21 : vector<1x64xf32> to vector<8x64xf32>
    %23 = arith.addf %20, %22 : vector<8x64xf32>
    %24 = arith.truncf %23 : vector<8x64xf32> to vector<8x64xbf16>
    %c0_9 = arith.constant 0 : index
    %c0_10 = arith.constant 0 : index
    %25 = vector.load %arg4[%c0_9, %c0_10] : memref<64x256xbf16, #tpu.memory_space<vmem>>, vector<64x256xbf16>
    %cst_11 = arith.constant dense<0.000000e+00> : vector<8x256xf32>
    %26 = tpu.matmul %24, %25, %cst_11 {dimension_numbers = #tpu.dot_dimension_numbers<[1], [0], [0], [1], [0, 0, 1, 1], [], []>} : vector<8x64xbf16>, vector<64x256xbf16>, vector<8x256xf32> -> vector<8x256xf32>
    %c0_12 = arith.constant 0 : index
    %c0_13 = arith.constant 0 : index
    %27 = vector.load %arg5[%c0_12, %c0_13] : memref<1x256xf32, #tpu.memory_space<vmem>>, vector<1x256xf32>
    %28 = vector.broadcast %27 : vector<1x256xf32> to vector<8x256xf32>
    %29 = arith.addf %26, %28 : vector<8x256xf32>
    %cst_14 = arith.constant 5.000000e-01 : f32
    %30 = vector.broadcast %cst_14 : f32 to vector<8x256xf32>
    %31 = arith.mulf %30, %29 : vector<8x256xf32>
    %cst_15 = arith.constant 0.707106769 : f32
    %32 = vector.broadcast %cst_15 : f32 to vector<8x256xf32>
    %33 = arith.mulf %29, %32 : vector<8x256xf32>
    %34 = math.erf %33 : vector<8x256xf32>
    %cst_16 = arith.constant 1.000000e+00 : f32
    %35 = vector.broadcast %cst_16 : f32 to vector<8x256xf32>
    %36 = arith.addf %35, %34 : vector<8x256xf32>
    %37 = arith.mulf %31, %36 : vector<8x256xf32>
    %38 = arith.truncf %37 : vector<8x256xf32> to vector<8x256xbf16>
    %c0_17 = arith.constant 0 : index
    %c0_18 = arith.constant 0 : index
    %39 = vector.load %arg6[%c0_17, %c0_18] : memref<8x256xbf16, #tpu.memory_space<vmem>>, vector<8x256xbf16>
    tpu.vector_store %arg6[%c0_17, %c0_18], %38 {strides = array<i32>} : memref<8x256xbf16, #tpu.memory_space<vmem>>, vector<8x256xbf16>,
    return
  }
  func.func @transform_0(%arg0: i32) -> (i32, i32) {
    %c0_i32 = arith.constant 0 : i32
    %c0_i32_0 = arith.constant 0 : i32
    return %arg0, %c0_i32 : i32, i32
  }
  func.func @transform_1(%arg0: i32) -> (i32, i32) {
    %c0_i32 = arith.constant 0 : i32
    %c0_i32_0 = arith.constant 0 : i32
    %c0_i32_1 = arith.constant 0 : i32
    return %c0_i32, %c0_i32_0 : i32, i32
  }
  func.func @transform_2(%arg0: i32) -> (i32, i32) {
    %c0_i32 = arith.constant 0 : i32
    %c0_i32_0 = arith.constant 0 : i32
    %c0_i32_1 = arith.constant 0 : i32
    return %c0_i32, %c0_i32_0 : i32, i32
  }
  func.func @transform_3(%arg0: i32) -> (i32, i32) {
    %c0_i32 = arith.constant 0 : i32
    %c0_i32_0 = arith.constant 0 : i32
    %c0_i32_1 = arith.constant 0 : i32
    return %c0_i32, %c0_i32_0 : i32, i32
  }
  func.func @transform_4(%arg0: i32) -> (i32, i32) {
    %c0_i32 = arith.constant 0 : i32
    %c0_i32_0 = arith.constant 0 : i32
    %c0_i32_1 = arith.constant 0 : i32
    return %c0_i32, %c0_i32_0 : i32, i32
  }
  func.func @transform_5(%arg0: i32) -> (i32, i32) {
    %c0_i32 = arith.constant 0 : i32
    %c0_i32_0 = arith.constant 0 : i32
    return %arg0, %c0_i32 : i32, i32
  }
}

module attributes {stable_mosaic.version = 11 : i64} {
  func.func @_fused_mm_kernel(%arg0: i32, %arg1: memref<8x256xbf16, #tpu.memory_space<vmem>>, %arg2: memref<256x64xbf16, #tpu.memory_space<vmem>>, %arg3: memref<1x64xf32, #tpu.memory_space<vmem>>, %arg4: memref<8x64xbf16, #tpu.memory_space<vmem>>, %arg5: memref<8x64xbf16, #tpu.memory_space<vmem>>) attributes {dimension_semantics = [#tpu.dimension_semantics<parallel>], iteration_bounds = array<i64: 1>, scalar_prefetch = 0 : i64, scratch_operands = 0 : i64, tpu.core_type = #tpu.core_type<tc>, window_params = [{transform_indices = @transform_0, window_bounds = array<i64: 8, 256>}, {pipeline_mode = #tpu.pipeline_mode<synchronous>, transform_indices = @transform_1, window_bounds = array<i64: 256, 64>}, {pipeline_mode = #tpu.pipeline_mode<synchronous>, transform_indices = @transform_2, window_bounds = array<i64: 1, 64>}, {transform_indices = @transform_3, window_bounds = array<i64: 8, 64>}, {transform_indices = @transform_4, window_bounds = array<i64: 8, 64>}]} {
    %c0 = arith.constant 0 : index
    %c0_0 = arith.constant 0 : index
    %0 = vector.load %arg1[%c0, %c0_0] : memref<8x256xbf16, #tpu.memory_space<vmem>>, vector<8x256xbf16>
    %1 = arith.extf %0 : vector<8x256xbf16> to vector<8x256xf32>
    %2 = arith.truncf %1 : vector<8x256xf32> to vector<8x256xbf16>
    %c0_1 = arith.constant 0 : index
    %c0_2 = arith.constant 0 : index
    %3 = vector.load %arg2[%c0_1, %c0_2] : memref<256x64xbf16, #tpu.memory_space<vmem>>, vector<256x64xbf16>
    %cst = arith.constant dense<0.000000e+00> : vector<8x64xf32>
    %4 = tpu.matmul %2, %3, %cst {dimension_numbers = #tpu.dot_dimension_numbers<[1], [0], [0], [1], [0, 0, 1, 1], [], []>} : vector<8x256xbf16>, vector<256x64xbf16>, vector<8x64xf32> -> vector<8x64xf32>
    %c0_3 = arith.constant 0 : index
    %c0_4 = arith.constant 0 : index
    %5 = vector.load %arg3[%c0_3, %c0_4] : memref<1x64xf32, #tpu.memory_space<vmem>>, vector<1x64xf32>
    %6 = vector.broadcast %5 : vector<1x64xf32> to vector<8x64xf32>
    %7 = arith.addf %4, %6 : vector<8x64xf32>
    %c0_5 = arith.constant 0 : index
    %c0_6 = arith.constant 0 : index
    %8 = vector.load %arg4[%c0_5, %c0_6] : memref<8x64xbf16, #tpu.memory_space<vmem>>, vector<8x64xbf16>
    %9 = arith.extf %8 : vector<8x64xbf16> to vector<8x64xf32>
    %10 = arith.addf %7, %9 : vector<8x64xf32>
    %11 = arith.truncf %10 : vector<8x64xf32> to vector<8x64xbf16>
    %c0_7 = arith.constant 0 : index
    %c0_8 = arith.constant 0 : index
    %12 = vector.load %arg5[%c0_7, %c0_8] : memref<8x64xbf16, #tpu.memory_space<vmem>>, vector<8x64xbf16>
    tpu.vector_store %arg5[%c0_7, %c0_8], %11 {strides = array<i32>} : memref<8x64xbf16, #tpu.memory_space<vmem>>, vector<8x64xbf16>,
    return
  }
  func.func @transform_0(%arg0: i32) -> (i32, i32) {
    %c0_i32 = arith.constant 0 : i32
    %c0_i32_0 = arith.constant 0 : i32
    return %arg0, %c0_i32 : i32, i32
  }
  func.func @transform_1(%arg0: i32) -> (i32, i32) {
    %c0_i32 = arith.constant 0 : i32
    %c0_i32_0 = arith.constant 0 : i32
    %c0_i32_1 = arith.constant 0 : i32
    return %c0_i32, %c0_i32_0 : i32, i32
  }
  func.func @transform_2(%arg0: i32) -> (i32, i32) {
    %c0_i32 = arith.constant 0 : i32
    %c0_i32_0 = arith.constant 0 : i32
    %c0_i32_1 = arith.constant 0 : i32
    return %c0_i32, %c0_i32_0 : i32, i32
  }
  func.func @transform_3(%arg0: i32) -> (i32, i32) {
    %c0_i32 = arith.constant 0 : i32
    %c0_i32_0 = arith.constant 0 : i32
    return %arg0, %c0_i32 : i32, i32
  }
  func.func @transform_4(%arg0: i32) -> (i32, i32) {
    %c0_i32 = arith.constant 0 : i32
    %c0_i32_0 = arith.constant 0 : i32
    return %arg0, %c0_i32 : i32, i32
  }
}

module attributes {stable_mosaic.version = 11 : i64} {
  func.func @_fused_mm_kernel(%arg0: i32, %arg1: memref<2x256xbf16, #tpu.memory_space<vmem>>, %arg2: memref<256x8xbf16, #tpu.memory_space<vmem>>, %arg3: memref<1x8xf32, #tpu.memory_space<vmem>>, %arg4: memref<2x8xf32, #tpu.memory_space<vmem>>) attributes {dimension_semantics = [#tpu.dimension_semantics<parallel>], iteration_bounds = array<i64: 1>, scalar_prefetch = 0 : i64, scratch_operands = 0 : i64, tpu.core_type = #tpu.core_type<tc>, window_params = [{transform_indices = @transform_0, window_bounds = array<i64: 2, 256>}, {pipeline_mode = #tpu.pipeline_mode<synchronous>, transform_indices = @transform_1, window_bounds = array<i64: 256, 8>}, {pipeline_mode = #tpu.pipeline_mode<synchronous>, transform_indices = @transform_2, window_bounds = array<i64: 1, 8>}, {transform_indices = @transform_3, window_bounds = array<i64: 2, 8>}]} {
    %c0 = arith.constant 0 : index
    %c0_0 = arith.constant 0 : index
    %0 = vector.load %arg1[%c0, %c0_0] : memref<2x256xbf16, #tpu.memory_space<vmem>>, vector<2x256xbf16>
    %1 = arith.extf %0 : vector<2x256xbf16> to vector<2x256xf32>
    %2 = arith.truncf %1 : vector<2x256xf32> to vector<2x256xbf16>
    %c0_1 = arith.constant 0 : index
    %c0_2 = arith.constant 0 : index
    %3 = vector.load %arg2[%c0_1, %c0_2] : memref<256x8xbf16, #tpu.memory_space<vmem>>, vector<256x8xbf16>
    %cst = arith.constant dense<0.000000e+00> : vector<2x8xf32>
    %4 = tpu.matmul %2, %3, %cst {dimension_numbers = #tpu.dot_dimension_numbers<[1], [0], [0], [1], [0, 0, 1, 1], [], []>} : vector<2x256xbf16>, vector<256x8xbf16>, vector<2x8xf32> -> vector<2x8xf32>
    %c0_3 = arith.constant 0 : index
    %c0_4 = arith.constant 0 : index
    %5 = vector.load %arg3[%c0_3, %c0_4] : memref<1x8xf32, #tpu.memory_space<vmem>>, vector<1x8xf32>
    %6 = vector.broadcast %5 : vector<1x8xf32> to vector<2x8xf32>
    %7 = arith.addf %4, %6 : vector<2x8xf32>
    %c0_5 = arith.constant 0 : index
    %c0_6 = arith.constant 0 : index
    %8 = vector.load %arg4[%c0_5, %c0_6] : memref<2x8xf32, #tpu.memory_space<vmem>>, vector<2x8xf32>
    tpu.vector_store %arg4[%c0_5, %c0_6], %7 {strides = array<i32>} : memref<2x8xf32, #tpu.memory_space<vmem>>, vector<2x8xf32>,
    return
  }
  func.func @transform_0(%arg0: i32) -> (i32, i32) {
    %c0_i32 = arith.constant 0 : i32
    %c0_i32_0 = arith.constant 0 : i32
    return %arg0, %c0_i32 : i32, i32
  }
  func.func @transform_1(%arg0: i32) -> (i32, i32) {
    %c0_i32 = arith.constant 0 : i32
    %c0_i32_0 = arith.constant 0 : i32
    %c0_i32_1 = arith.constant 0 : i32
    return %c0_i32, %c0_i32_0 : i32, i32
  }
  func.func @transform_2(%arg0: i32) -> (i32, i32) {
    %c0_i32 = arith.constant 0 : i32
    %c0_i32_0 = arith.constant 0 : i32
    %c0_i32_1 = arith.constant 0 : i32
    return %c0_i32, %c0_i32_0 : i32, i32
  }
  func.func @transform_3(%arg0: i32) -> (i32, i32) {
    %c0_i32 = arith.constant 0 : i32
    %c0_i32_0 = arith.constant 0 : i32
    return %arg0, %c0_i32 : i32, i32
  }
}

module attributes {stable_mosaic.version = 11 : i64} {
  func.func @_fused_mm_kernel(%arg0: i32, %arg1: memref<2x256xf32, #tpu.memory_space<vmem>>, %arg2: memref<256x128xbf16, #tpu.memory_space<vmem>>, %arg3: memref<1x128xf32, #tpu.memory_space<vmem>>, %arg4: memref<2x128xbf16, #tpu.memory_space<vmem>>) attributes {dimension_semantics = [#tpu.dimension_semantics<parallel>], iteration_bounds = array<i64: 1>, scalar_prefetch = 0 : i64, scratch_operands = 0 : i64, tpu.core_type = #tpu.core_type<tc>, window_params = [{transform_indices = @transform_0, window_bounds = array<i64: 2, 256>}, {pipeline_mode = #tpu.pipeline_mode<synchronous>, transform_indices = @transform_1, window_bounds = array<i64: 256, 128>}, {pipeline_mode = #tpu.pipeline_mode<synchronous>, transform_indices = @transform_2, window_bounds = array<i64: 1, 128>}, {transform_indices = @transform_3, window_bounds = array<i64: 2, 128>}]} {
    %c0 = arith.constant 0 : index
    %c0_0 = arith.constant 0 : index
    %0 = vector.load %arg1[%c0, %c0_0] : memref<2x256xf32, #tpu.memory_space<vmem>>, vector<2x256xf32>
    %1 = arith.truncf %0 : vector<2x256xf32> to vector<2x256xbf16>
    %c0_1 = arith.constant 0 : index
    %c0_2 = arith.constant 0 : index
    %2 = vector.load %arg2[%c0_1, %c0_2] : memref<256x128xbf16, #tpu.memory_space<vmem>>, vector<256x128xbf16>
    %cst = arith.constant dense<0.000000e+00> : vector<2x128xf32>
    %3 = tpu.matmul %1, %2, %cst {dimension_numbers = #tpu.dot_dimension_numbers<[1], [0], [0], [1], [0, 0, 1, 1], [], []>} : vector<2x256xbf16>, vector<256x128xbf16>, vector<2x128xf32> -> vector<2x128xf32>
    %c0_3 = arith.constant 0 : index
    %c0_4 = arith.constant 0 : index
    %4 = vector.load %arg3[%c0_3, %c0_4] : memref<1x128xf32, #tpu.memory_space<vmem>>, vector<1x128xf32>
    %5 = vector.broadcast %4 : vector<1x128xf32> to vector<2x128xf32>
    %6 = arith.addf %3, %5 : vector<2x128xf32>
    %cst_5 = arith.constant 5.000000e-01 : f32
    %7 = vector.broadcast %cst_5 : f32 to vector<2x128xf32>
    %8 = arith.mulf %7, %6 : vector<2x128xf32>
    %cst_6 = arith.constant 0.707106769 : f32
    %9 = vector.broadcast %cst_6 : f32 to vector<2x128xf32>
    %10 = arith.mulf %6, %9 : vector<2x128xf32>
    %11 = math.erf %10 : vector<2x128xf32>
    %cst_7 = arith.constant 1.000000e+00 : f32
    %12 = vector.broadcast %cst_7 : f32 to vector<2x128xf32>
    %13 = arith.addf %12, %11 : vector<2x128xf32>
    %14 = arith.mulf %8, %13 : vector<2x128xf32>
    %15 = arith.truncf %14 : vector<2x128xf32> to vector<2x128xbf16>
    %c0_8 = arith.constant 0 : index
    %c0_9 = arith.constant 0 : index
    %16 = vector.load %arg4[%c0_8, %c0_9] : memref<2x128xbf16, #tpu.memory_space<vmem>>, vector<2x128xbf16>
    tpu.vector_store %arg4[%c0_8, %c0_9], %15 {strides = array<i32>} : memref<2x128xbf16, #tpu.memory_space<vmem>>, vector<2x128xbf16>,
    return
  }
  func.func @transform_0(%arg0: i32) -> (i32, i32) {
    %c0_i32 = arith.constant 0 : i32
    %c0_i32_0 = arith.constant 0 : i32
    return %arg0, %c0_i32 : i32, i32
  }
  func.func @transform_1(%arg0: i32) -> (i32, i32) {
    %c0_i32 = arith.constant 0 : i32
    %c0_i32_0 = arith.constant 0 : i32
    %c0_i32_1 = arith.constant 0 : i32
    return %c0_i32, %c0_i32_0 : i32, i32
  }
  func.func @transform_2(%arg0: i32) -> (i32, i32) {
    %c0_i32 = arith.constant 0 : i32
    %c0_i32_0 = arith.constant 0 : i32
    %c0_i32_1 = arith.constant 0 : i32
    return %c0_i32, %c0_i32_0 : i32, i32
  }
  func.func @transform_3(%arg0: i32) -> (i32, i32) {
    %c0_i32 = arith.constant 0 : i32
    %c0_i32_0 = arith.constant 0 : i32
    return %arg0, %c0_i32 : i32, i32
  }
}

module attributes {stable_mosaic.version = 11 : i64} {
  func.func @_fused_mm_kernel(%arg0: i32, %arg1: memref<4x128xbf16, #tpu.memory_space<vmem>>, %arg2: memref<1x128xf32, #tpu.memory_space<vmem>>, %arg3: memref<1x128xf32, #tpu.memory_space<vmem>>, %arg4: memref<128x384xbf16, #tpu.memory_space<vmem>>, %arg5: memref<1x384xf32, #tpu.memory_space<vmem>>, %arg6: memref<4x384xbf16, #tpu.memory_space<vmem>>) attributes {dimension_semantics = [#tpu.dimension_semantics<parallel>], iteration_bounds = array<i64: 1>, scalar_prefetch = 0 : i64, scratch_operands = 0 : i64, tpu.core_type = #tpu.core_type<tc>, window_params = [{transform_indices = @transform_0, window_bounds = array<i64: 4, 128>}, {pipeline_mode = #tpu.pipeline_mode<synchronous>, transform_indices = @transform_1, window_bounds = array<i64: 1, 128>}, {pipeline_mode = #tpu.pipeline_mode<synchronous>, transform_indices = @transform_2, window_bounds = array<i64: 1, 128>}, {pipeline_mode = #tpu.pipeline_mode<synchronous>, transform_indices = @transform_3, window_bounds = array<i64: 128, 384>}, {pipeline_mode = #tpu.pipeline_mode<synchronous>, transform_indices = @transform_4, window_bounds = array<i64: 1, 384>}, {transform_indices = @transform_5, window_bounds = array<i64: 4, 384>}]} {
    %c0 = arith.constant 0 : index
    %c0_0 = arith.constant 0 : index
    %0 = vector.load %arg1[%c0, %c0_0] : memref<4x128xbf16, #tpu.memory_space<vmem>>, vector<4x128xbf16>
    %1 = arith.extf %0 : vector<4x128xbf16> to vector<4x128xf32>
    %cst = arith.constant dense<0.000000e+00> : vector<4xf32>
    %2 = vector.multi_reduction <add>, %1, %cst [1] : vector<4x128xf32> to vector<4xf32>
    %3 = vector.shape_cast %2 : vector<4xf32> to vector<4x1xf32>
    %cst_1 = arith.constant 1.280000e+02 : f32
    %4 = vector.broadcast %cst_1 : f32 to vector<4x1xf32>
    %5 = arith.divf %3, %4 : vector<4x1xf32>
    %6 = vector.broadcast %5 : vector<4x1xf32> to vector<4x128xf32>
    %7 = arith.subf %1, %6 : vector<4x128xf32>
    %8 = arith.mulf %7, %7 : vector<4x128xf32>
    %cst_2 = arith.constant dense<0.000000e+00> : vector<4xf32>
    %9 = vector.multi_reduction <add>, %8, %cst_2 [1] : vector<4x128xf32> to vector<4xf32>
    %10 = vector.shape_cast %9 : vector<4xf32> to vector<4x1xf32>
    %cst_3 = arith.constant 1.280000e+02 : f32
    %11 = vector.broadcast %cst_3 : f32 to vector<4x1xf32>
    %12 = arith.divf %10, %11 : vector<4x1xf32>
    %cst_4 = arith.constant 9.99999974E-6 : f32
    %13 = vector.broadcast %cst_4 : f32 to vector<4x1xf32>
    %14 = arith.addf %12, %13 : vector<4x1xf32>
    %15 = math.rsqrt %14 : vector<4x1xf32>
    %16 = vector.broadcast %15 : vector<4x1xf32> to vector<4x128xf32>
    %17 = arith.mulf %7, %16 : vector<4x128xf32>
    %c0_5 = arith.constant 0 : index
    %c0_6 = arith.constant 0 : index
    %18 = vector.load %arg2[%c0_5, %c0_6] : memref<1x128xf32, #tpu.memory_space<vmem>>, vector<1x128xf32>
    %19 = vector.broadcast %18 : vector<1x128xf32> to vector<4x128xf32>
    %20 = arith.mulf %17, %19 : vector<4x128xf32>
    %c0_7 = arith.constant 0 : index
    %c0_8 = arith.constant 0 : index
    %21 = vector.load %arg3[%c0_7, %c0_8] : memref<1x128xf32, #tpu.memory_space<vmem>>, vector<1x128xf32>
    %22 = vector.broadcast %21 : vector<1x128xf32> to vector<4x128xf32>
    %23 = arith.addf %20, %22 : vector<4x128xf32>
    %24 = arith.truncf %23 : vector<4x128xf32> to vector<4x128xbf16>
    %c0_9 = arith.constant 0 : index
    %c0_10 = arith.constant 0 : index
    %25 = vector.load %arg4[%c0_9, %c0_10] : memref<128x384xbf16, #tpu.memory_space<vmem>>, vector<128x384xbf16>
    %cst_11 = arith.constant dense<0.000000e+00> : vector<4x384xf32>
    %26 = tpu.matmul %24, %25, %cst_11 {dimension_numbers = #tpu.dot_dimension_numbers<[1], [0], [0], [1], [0, 0, 1, 1], [], []>} : vector<4x128xbf16>, vector<128x384xbf16>, vector<4x384xf32> -> vector<4x384xf32>
    %c0_12 = arith.constant 0 : index
    %c0_13 = arith.constant 0 : index
    %27 = vector.load %arg5[%c0_12, %c0_13] : memref<1x384xf32, #tpu.memory_space<vmem>>, vector<1x384xf32>
    %28 = vector.broadcast %27 : vector<1x384xf32> to vector<4x384xf32>
    %29 = arith.addf %26, %28 : vector<4x384xf32>
    %30 = arith.truncf %29 : vector<4x384xf32> to vector<4x384xbf16>
    %c0_14 = arith.constant 0 : index
    %c0_15 = arith.constant 0 : index
    %31 = vector.load %arg6[%c0_14, %c0_15] : memref<4x384xbf16, #tpu.memory_space<vmem>>, vector<4x384xbf16>
    tpu.vector_store %arg6[%c0_14, %c0_15], %30 {strides = array<i32>} : memref<4x384xbf16, #tpu.memory_space<vmem>>, vector<4x384xbf16>,
    return
  }
  func.func @transform_0(%arg0: i32) -> (i32, i32) {
    %c0_i32 = arith.constant 0 : i32
    %c0_i32_0 = arith.constant 0 : i32
    return %arg0, %c0_i32 : i32, i32
  }
  func.func @transform_1(%arg0: i32) -> (i32, i32) {
    %c0_i32 = arith.constant 0 : i32
    %c0_i32_0 = arith.constant 0 : i32
    %c0_i32_1 = arith.constant 0 : i32
    return %c0_i32, %c0_i32_0 : i32, i32
  }
  func.func @transform_2(%arg0: i32) -> (i32, i32) {
    %c0_i32 = arith.constant 0 : i32
    %c0_i32_0 = arith.constant 0 : i32
    %c0_i32_1 = arith.constant 0 : i32
    return %c0_i32, %c0_i32_0 : i32, i32
  }
  func.func @transform_3(%arg0: i32) -> (i32, i32) {
    %c0_i32 = arith.constant 0 : i32
    %c0_i32_0 = arith.constant 0 : i32
    %c0_i32_1 = arith.constant 0 : i32
    return %c0_i32, %c0_i32_0 : i32, i32
  }
  func.func @transform_4(%arg0: i32) -> (i32, i32) {
    %c0_i32 = arith.constant 0 : i32
    %c0_i32_0 = arith.constant 0 : i32
    %c0_i32_1 = arith.constant 0 : i32
    return %c0_i32, %c0_i32_0 : i32, i32
  }
  func.func @transform_5(%arg0: i32) -> (i32, i32) {
    %c0_i32 = arith.constant 0 : i32
    %c0_i32_0 = arith.constant 0 : i32
    return %arg0, %c0_i32 : i32, i32
  }
}

module attributes {stable_mosaic.version = 11 : i64} {
  func.func @_attn_kernel(%arg0: i32, %arg1: memref<1x8x2x16xbf16, #tpu.memory_space<vmem>>, %arg2: memref<1x8x2x16xbf16, #tpu.memory_space<vmem>>, %arg3: memref<1x8x2x16xbf16, #tpu.memory_space<vmem>>, %arg4: memref<1x8x2x16xbf16, #tpu.memory_space<vmem>>) attributes {dimension_semantics = [#tpu.dimension_semantics<parallel>], iteration_bounds = array<i64: 2>, scalar_prefetch = 0 : i64, scratch_operands = 0 : i64, tpu.core_type = #tpu.core_type<tc>, window_params = [{transform_indices = @transform_0, window_bounds = array<i64: 1, 8, 2, 16>}, {transform_indices = @transform_1, window_bounds = array<i64: 1, 8, 2, 16>}, {transform_indices = @transform_2, window_bounds = array<i64: 1, 8, 2, 16>}, {transform_indices = @transform_3, window_bounds = array<i64: 1, 8, 2, 16>}]} {
    %c0 = arith.constant 0 : index
    %c0_0 = arith.constant 0 : index
    %c0_1 = arith.constant 0 : index
    %c0_2 = arith.constant 0 : index
    %0 = vector.load %arg1[%c0, %c0_0, %c0_1, %c0_2] : memref<1x8x2x16xbf16, #tpu.memory_space<vmem>>, vector<1x8x2x16xbf16>
    %1 = vector.shape_cast %0 : vector<1x8x2x16xbf16> to vector<8x2x16xbf16>
    %2 = arith.extf %1 : vector<8x2x16xbf16> to vector<8x2x16xf32>
    %cst = arith.constant 2.500000e-01 : f32
    %3 = vector.broadcast %cst : f32 to vector<8x2x16xf32>
    %4 = arith.mulf %2, %3 : vector<8x2x16xf32>
    %5 = arith.truncf %4 : vector<8x2x16xf32> to vector<8x2x16xbf16>
    %c0_3 = arith.constant 0 : index
    %c0_4 = arith.constant 0 : index
    %c0_5 = arith.constant 0 : index
    %c0_6 = arith.constant 0 : index
    %6 = vector.load %arg2[%c0_3, %c0_4, %c0_5, %c0_6] : memref<1x8x2x16xbf16, #tpu.memory_space<vmem>>, vector<1x8x2x16xbf16>
    %7 = vector.shape_cast %6 : vector<1x8x2x16xbf16> to vector<8x2x16xbf16>
    %c0_7 = arith.constant 0 : index
    %c0_8 = arith.constant 0 : index
    %c0_9 = arith.constant 0 : index
    %c0_10 = arith.constant 0 : index
    %8 = vector.load %arg3[%c0_7, %c0_8, %c0_9, %c0_10] : memref<1x8x2x16xbf16, #tpu.memory_space<vmem>>, vector<1x8x2x16xbf16>
    %9 = vector.shape_cast %8 : vector<1x8x2x16xbf16> to vector<8x2x16xbf16>
    "tpu.trace_start"() <{level = 10 : i32, message = "hqd,hkd->hqk"}> : () -> ()
    %cst_11 = arith.constant dense<0.000000e+00> : vector<8x2x2xf32>
    %10 = tpu.matmul %5, %7, %cst_11 {dimension_numbers = #tpu.dot_dimension_numbers<[2], [2], [1], [1], [0, 0, 0, 1, 1, 1], [0], [0]>} : vector<8x2x16xbf16>, vector<8x2x16xbf16>, vector<8x2x2xf32> -> vector<8x2x2xf32>
    "tpu.trace_stop"() : () -> ()
    %cst_12 = arith.constant dense<0xFF800000> : vector<8x2xf32>
    %11 = vector.multi_reduction <maximumf>, %10, %cst_12 [2] : vector<8x2x2xf32> to vector<8x2xf32>
    %12 = vector.shape_cast %11 : vector<8x2xf32> to vector<8x2x1xf32>
    %13 = vector.broadcast %12 : vector<8x2x1xf32> to vector<8x2x2xf32>
    %14 = arith.subf %10, %13 : vector<8x2x2xf32>
    %15 = math.exp %14 : vector<8x2x2xf32>
    %cst_13 = arith.constant dense<0.000000e+00> : vector<8x2xf32>
    %16 = vector.multi_reduction <add>, %15, %cst_13 [2] : vector<8x2x2xf32> to vector<8x2xf32>
    %17 = vector.shape_cast %16 : vector<8x2xf32> to vector<8x2x1xf32>
    %18 = tpu.reciprocal %17 {approx = true} : vector<8x2x1xf32> -> vector<8x2x1xf32>
    %19 = vector.broadcast %18 : vector<8x2x1xf32> to vector<8x2x2xf32>
    %20 = arith.mulf %15, %19 : vector<8x2x2xf32>
    %21 = arith.truncf %20 : vector<8x2x2xf32> to vector<8x2x2xbf16>
    "tpu.trace_start"() <{level = 10 : i32, message = "hqk,hkd->hqd"}> : () -> ()
    %cst_14 = arith.constant dense<0.000000e+00> : vector<8x2x16xf32>
    %22 = tpu.matmul %21, %9, %cst_14 {dimension_numbers = #tpu.dot_dimension_numbers<[2], [1], [1], [2], [0, 0, 0, 1, 1, 2], [0], [0]>} : vector<8x2x2xbf16>, vector<8x2x16xbf16>, vector<8x2x16xf32> -> vector<8x2x16xf32>
    "tpu.trace_stop"() : () -> ()
    %23 = arith.truncf %22 : vector<8x2x16xf32> to vector<8x2x16xbf16>
    %c0_15 = arith.constant 0 : index
    %c0_16 = arith.constant 0 : index
    %c0_17 = arith.constant 0 : index
    %c0_18 = arith.constant 0 : index
    %24 = vector.load %arg4[%c0_15, %c0_16, %c0_17, %c0_18] : memref<1x8x2x16xbf16, #tpu.memory_space<vmem>>, vector<1x8x2x16xbf16>
    %25 = vector.shape_cast %24 : vector<1x8x2x16xbf16> to vector<8x2x16xbf16>
    %26 = vector.shape_cast %23 : vector<8x2x16xbf16> to vector<1x8x2x16xbf16>
    tpu.vector_store %arg4[%c0_15, %c0_16, %c0_17, %c0_18], %26 {strides = array<i32>} : memref<1x8x2x16xbf16, #tpu.memory_space<vmem>>, vector<1x8x2x16xbf16>,
    return
  }
  func.func @transform_0(%arg0: i32) -> (i32, i32, i32, i32) {
    %c0_i32 = arith.constant 0 : i32
    %c0_i32_0 = arith.constant 0 : i32
    %c0_i32_1 = arith.constant 0 : i32
    %c0_i32_2 = arith.constant 0 : i32
    return %arg0, %c0_i32, %c0_i32_0, %c0_i32_1 : i32, i32, i32, i32
  }
  func.func @transform_1(%arg0: i32) -> (i32, i32, i32, i32) {
    %c0_i32 = arith.constant 0 : i32
    %c0_i32_0 = arith.constant 0 : i32
    %c0_i32_1 = arith.constant 0 : i32
    %c0_i32_2 = arith.constant 0 : i32
    return %arg0, %c0_i32, %c0_i32_0, %c0_i32_1 : i32, i32, i32, i32
  }
  func.func @transform_2(%arg0: i32) -> (i32, i32, i32, i32) {
    %c0_i32 = arith.constant 0 : i32
    %c0_i32_0 = arith.constant 0 : i32
    %c0_i32_1 = arith.constant 0 : i32
    %c0_i32_2 = arith.constant 0 : i32
    return %arg0, %c0_i32, %c0_i32_0, %c0_i32_1 : i32, i32, i32, i32
  }
  func.func @transform_3(%arg0: i32) -> (i32, i32, i32, i32) {
    %c0_i32 = arith.constant 0 : i32
    %c0_i32_0 = arith.constant 0 : i32
    %c0_i32_1 = arith.constant 0 : i32
    %c0_i32_2 = arith.constant 0 : i32
    return %arg0, %c0_i32, %c0_i32_0, %c0_i32_1 : i32, i32, i32, i32
  }
}

module attributes {stable_mosaic.version = 11 : i64} {
  func.func @_fused_mm_kernel(%arg0: i32, %arg1: memref<4x128xbf16, #tpu.memory_space<vmem>>, %arg2: memref<128x128xbf16, #tpu.memory_space<vmem>>, %arg3: memref<1x128xf32, #tpu.memory_space<vmem>>, %arg4: memref<4x128xbf16, #tpu.memory_space<vmem>>, %arg5: memref<4x128xbf16, #tpu.memory_space<vmem>>) attributes {dimension_semantics = [#tpu.dimension_semantics<parallel>], iteration_bounds = array<i64: 1>, scalar_prefetch = 0 : i64, scratch_operands = 0 : i64, tpu.core_type = #tpu.core_type<tc>, window_params = [{transform_indices = @transform_0, window_bounds = array<i64: 4, 128>}, {pipeline_mode = #tpu.pipeline_mode<synchronous>, transform_indices = @transform_1, window_bounds = array<i64: 128, 128>}, {pipeline_mode = #tpu.pipeline_mode<synchronous>, transform_indices = @transform_2, window_bounds = array<i64: 1, 128>}, {transform_indices = @transform_3, window_bounds = array<i64: 4, 128>}, {transform_indices = @transform_4, window_bounds = array<i64: 4, 128>}]} {
    %c0 = arith.constant 0 : index
    %c0_0 = arith.constant 0 : index
    %0 = vector.load %arg1[%c0, %c0_0] : memref<4x128xbf16, #tpu.memory_space<vmem>>, vector<4x128xbf16>
    %1 = arith.extf %0 : vector<4x128xbf16> to vector<4x128xf32>
    %2 = arith.truncf %1 : vector<4x128xf32> to vector<4x128xbf16>
    %c0_1 = arith.constant 0 : index
    %c0_2 = arith.constant 0 : index
    %3 = vector.load %arg2[%c0_1, %c0_2] : memref<128x128xbf16, #tpu.memory_space<vmem>>, vector<128x128xbf16>
    %cst = arith.constant dense<0.000000e+00> : vector<4x128xf32>
    %4 = tpu.matmul %2, %3, %cst {dimension_numbers = #tpu.dot_dimension_numbers<[1], [0], [0], [1], [0, 0, 1, 1], [], []>} : vector<4x128xbf16>, vector<128x128xbf16>, vector<4x128xf32> -> vector<4x128xf32>
    %c0_3 = arith.constant 0 : index
    %c0_4 = arith.constant 0 : index
    %5 = vector.load %arg3[%c0_3, %c0_4] : memref<1x128xf32, #tpu.memory_space<vmem>>, vector<1x128xf32>
    %6 = vector.broadcast %5 : vector<1x128xf32> to vector<4x128xf32>
    %7 = arith.addf %4, %6 : vector<4x128xf32>
    %c0_5 = arith.constant 0 : index
    %c0_6 = arith.constant 0 : index
    %8 = vector.load %arg4[%c0_5, %c0_6] : memref<4x128xbf16, #tpu.memory_space<vmem>>, vector<4x128xbf16>
    %9 = arith.extf %8 : vector<4x128xbf16> to vector<4x128xf32>
    %10 = arith.addf %7, %9 : vector<4x128xf32>
    %11 = arith.truncf %10 : vector<4x128xf32> to vector<4x128xbf16>
    %c0_7 = arith.constant 0 : index
    %c0_8 = arith.constant 0 : index
    %12 = vector.load %arg5[%c0_7, %c0_8] : memref<4x128xbf16, #tpu.memory_space<vmem>>, vector<4x128xbf16>
    tpu.vector_store %arg5[%c0_7, %c0_8], %11 {strides = array<i32>} : memref<4x128xbf16, #tpu.memory_space<vmem>>, vector<4x128xbf16>,
    return
  }
  func.func @transform_0(%arg0: i32) -> (i32, i32) {
    %c0_i32 = arith.constant 0 : i32
    %c0_i32_0 = arith.constant 0 : i32
    return %arg0, %c0_i32 : i32, i32
  }
  func.func @transform_1(%arg0: i32) -> (i32, i32) {
    %c0_i32 = arith.constant 0 : i32
    %c0_i32_0 = arith.constant 0 : i32
    %c0_i32_1 = arith.constant 0 : i32
    return %c0_i32, %c0_i32_0 : i32, i32
  }
  func.func @transform_2(%arg0: i32) -> (i32, i32) {
    %c0_i32 = arith.constant 0 : i32
    %c0_i32_0 = arith.constant 0 : i32
    %c0_i32_1 = arith.constant 0 : i32
    return %c0_i32, %c0_i32_0 : i32, i32
  }
  func.func @transform_3(%arg0: i32) -> (i32, i32) {
    %c0_i32 = arith.constant 0 : i32
    %c0_i32_0 = arith.constant 0 : i32
    return %arg0, %c0_i32 : i32, i32
  }
  func.func @transform_4(%arg0: i32) -> (i32, i32) {
    %c0_i32 = arith.constant 0 : i32
    %c0_i32_0 = arith.constant 0 : i32
    return %arg0, %c0_i32 : i32, i32
  }
}

module attributes {stable_mosaic.version = 11 : i64} {
  func.func @_fused_mm_kernel(%arg0: i32, %arg1: memref<4x128xbf16, #tpu.memory_space<vmem>>, %arg2: memref<1x128xf32, #tpu.memory_space<vmem>>, %arg3: memref<1x128xf32, #tpu.memory_space<vmem>>, %arg4: memref<128x512xbf16, #tpu.memory_space<vmem>>, %arg5: memref<1x512xf32, #tpu.memory_space<vmem>>, %arg6: memref<4x512xbf16, #tpu.memory_space<vmem>>) attributes {dimension_semantics = [#tpu.dimension_semantics<parallel>], iteration_bounds = array<i64: 1>, scalar_prefetch = 0 : i64, scratch_operands = 0 : i64, tpu.core_type = #tpu.core_type<tc>, window_params = [{transform_indices = @transform_0, window_bounds = array<i64: 4, 128>}, {pipeline_mode = #tpu.pipeline_mode<synchronous>, transform_indices = @transform_1, window_bounds = array<i64: 1, 128>}, {pipeline_mode = #tpu.pipeline_mode<synchronous>, transform_indices = @transform_2, window_bounds = array<i64: 1, 128>}, {pipeline_mode = #tpu.pipeline_mode<synchronous>, transform_indices = @transform_3, window_bounds = array<i64: 128, 512>}, {pipeline_mode = #tpu.pipeline_mode<synchronous>, transform_indices = @transform_4, window_bounds = array<i64: 1, 512>}, {transform_indices = @transform_5, window_bounds = array<i64: 4, 512>}]} {
    %c0 = arith.constant 0 : index
    %c0_0 = arith.constant 0 : index
    %0 = vector.load %arg1[%c0, %c0_0] : memref<4x128xbf16, #tpu.memory_space<vmem>>, vector<4x128xbf16>
    %1 = arith.extf %0 : vector<4x128xbf16> to vector<4x128xf32>
    %cst = arith.constant dense<0.000000e+00> : vector<4xf32>
    %2 = vector.multi_reduction <add>, %1, %cst [1] : vector<4x128xf32> to vector<4xf32>
    %3 = vector.shape_cast %2 : vector<4xf32> to vector<4x1xf32>
    %cst_1 = arith.constant 1.280000e+02 : f32
    %4 = vector.broadcast %cst_1 : f32 to vector<4x1xf32>
    %5 = arith.divf %3, %4 : vector<4x1xf32>
    %6 = vector.broadcast %5 : vector<4x1xf32> to vector<4x128xf32>
    %7 = arith.subf %1, %6 : vector<4x128xf32>
    %8 = arith.mulf %7, %7 : vector<4x128xf32>
    %cst_2 = arith.constant dense<0.000000e+00> : vector<4xf32>
    %9 = vector.multi_reduction <add>, %8, %cst_2 [1] : vector<4x128xf32> to vector<4xf32>
    %10 = vector.shape_cast %9 : vector<4xf32> to vector<4x1xf32>
    %cst_3 = arith.constant 1.280000e+02 : f32
    %11 = vector.broadcast %cst_3 : f32 to vector<4x1xf32>
    %12 = arith.divf %10, %11 : vector<4x1xf32>
    %cst_4 = arith.constant 9.99999974E-6 : f32
    %13 = vector.broadcast %cst_4 : f32 to vector<4x1xf32>
    %14 = arith.addf %12, %13 : vector<4x1xf32>
    %15 = math.rsqrt %14 : vector<4x1xf32>
    %16 = vector.broadcast %15 : vector<4x1xf32> to vector<4x128xf32>
    %17 = arith.mulf %7, %16 : vector<4x128xf32>
    %c0_5 = arith.constant 0 : index
    %c0_6 = arith.constant 0 : index
    %18 = vector.load %arg2[%c0_5, %c0_6] : memref<1x128xf32, #tpu.memory_space<vmem>>, vector<1x128xf32>
    %19 = vector.broadcast %18 : vector<1x128xf32> to vector<4x128xf32>
    %20 = arith.mulf %17, %19 : vector<4x128xf32>
    %c0_7 = arith.constant 0 : index
    %c0_8 = arith.constant 0 : index
    %21 = vector.load %arg3[%c0_7, %c0_8] : memref<1x128xf32, #tpu.memory_space<vmem>>, vector<1x128xf32>
    %22 = vector.broadcast %21 : vector<1x128xf32> to vector<4x128xf32>
    %23 = arith.addf %20, %22 : vector<4x128xf32>
    %24 = arith.truncf %23 : vector<4x128xf32> to vector<4x128xbf16>
    %c0_9 = arith.constant 0 : index
    %c0_10 = arith.constant 0 : index
    %25 = vector.load %arg4[%c0_9, %c0_10] : memref<128x512xbf16, #tpu.memory_space<vmem>>, vector<128x512xbf16>
    %cst_11 = arith.constant dense<0.000000e+00> : vector<4x512xf32>
    %26 = tpu.matmul %24, %25, %cst_11 {dimension_numbers = #tpu.dot_dimension_numbers<[1], [0], [0], [1], [0, 0, 1, 1], [], []>} : vector<4x128xbf16>, vector<128x512xbf16>, vector<4x512xf32> -> vector<4x512xf32>
    %c0_12 = arith.constant 0 : index
    %c0_13 = arith.constant 0 : index
    %27 = vector.load %arg5[%c0_12, %c0_13] : memref<1x512xf32, #tpu.memory_space<vmem>>, vector<1x512xf32>
    %28 = vector.broadcast %27 : vector<1x512xf32> to vector<4x512xf32>
    %29 = arith.addf %26, %28 : vector<4x512xf32>
    %cst_14 = arith.constant 5.000000e-01 : f32
    %30 = vector.broadcast %cst_14 : f32 to vector<4x512xf32>
    %31 = arith.mulf %30, %29 : vector<4x512xf32>
    %cst_15 = arith.constant 0.707106769 : f32
    %32 = vector.broadcast %cst_15 : f32 to vector<4x512xf32>
    %33 = arith.mulf %29, %32 : vector<4x512xf32>
    %34 = math.erf %33 : vector<4x512xf32>
    %cst_16 = arith.constant 1.000000e+00 : f32
    %35 = vector.broadcast %cst_16 : f32 to vector<4x512xf32>
    %36 = arith.addf %35, %34 : vector<4x512xf32>
    %37 = arith.mulf %31, %36 : vector<4x512xf32>
    %38 = arith.truncf %37 : vector<4x512xf32> to vector<4x512xbf16>
    %c0_17 = arith.constant 0 : index
    %c0_18 = arith.constant 0 : index
    %39 = vector.load %arg6[%c0_17, %c0_18] : memref<4x512xbf16, #tpu.memory_space<vmem>>, vector<4x512xbf16>
    tpu.vector_store %arg6[%c0_17, %c0_18], %38 {strides = array<i32>} : memref<4x512xbf16, #tpu.memory_space<vmem>>, vector<4x512xbf16>,
    return
  }
  func.func @transform_0(%arg0: i32) -> (i32, i32) {
    %c0_i32 = arith.constant 0 : i32
    %c0_i32_0 = arith.constant 0 : i32
    return %arg0, %c0_i32 : i32, i32
  }
  func.func @transform_1(%arg0: i32) -> (i32, i32) {
    %c0_i32 = arith.constant 0 : i32
    %c0_i32_0 = arith.constant 0 : i32
    %c0_i32_1 = arith.constant 0 : i32
    return %c0_i32, %c0_i32_0 : i32, i32
  }
  func.func @transform_2(%arg0: i32) -> (i32, i32) {
    %c0_i32 = arith.constant 0 : i32
    %c0_i32_0 = arith.constant 0 : i32
    %c0_i32_1 = arith.constant 0 : i32
    return %c0_i32, %c0_i32_0 : i32, i32
  }
  func.func @transform_3(%arg0: i32) -> (i32, i32) {
    %c0_i32 = arith.constant 0 : i32
    %c0_i32_0 = arith.constant 0 : i32
    %c0_i32_1 = arith.constant 0 : i32
    return %c0_i32, %c0_i32_0 : i32, i32
  }
  func.func @transform_4(%arg0: i32) -> (i32, i32) {
    %c0_i32 = arith.constant 0 : i32
    %c0_i32_0 = arith.constant 0 : i32
    %c0_i32_1 = arith.constant 0 : i32
    return %c0_i32, %c0_i32_0 : i32, i32
  }
  func.func @transform_5(%arg0: i32) -> (i32, i32) {
    %c0_i32 = arith.constant 0 : i32
    %c0_i32_0 = arith.constant 0 : i32
    return %arg0, %c0_i32 : i32, i32
  }
}

module attributes {stable_mosaic.version = 11 : i64} {
  func.func @_fused_mm_kernel(%arg0: i32, %arg1: memref<4x512xbf16, #tpu.memory_space<vmem>>, %arg2: memref<512x128xbf16, #tpu.memory_space<vmem>>, %arg3: memref<1x128xf32, #tpu.memory_space<vmem>>, %arg4: memref<4x128xbf16, #tpu.memory_space<vmem>>, %arg5: memref<4x128xbf16, #tpu.memory_space<vmem>>) attributes {dimension_semantics = [#tpu.dimension_semantics<parallel>], iteration_bounds = array<i64: 1>, scalar_prefetch = 0 : i64, scratch_operands = 0 : i64, tpu.core_type = #tpu.core_type<tc>, window_params = [{transform_indices = @transform_0, window_bounds = array<i64: 4, 512>}, {pipeline_mode = #tpu.pipeline_mode<synchronous>, transform_indices = @transform_1, window_bounds = array<i64: 512, 128>}, {pipeline_mode = #tpu.pipeline_mode<synchronous>, transform_indices = @transform_2, window_bounds = array<i64: 1, 128>}, {transform_indices = @transform_3, window_bounds = array<i64: 4, 128>}, {transform_indices = @transform_4, window_bounds = array<i64: 4, 128>}]} {
    %c0 = arith.constant 0 : index
    %c0_0 = arith.constant 0 : index
    %0 = vector.load %arg1[%c0, %c0_0] : memref<4x512xbf16, #tpu.memory_space<vmem>>, vector<4x512xbf16>
    %1 = arith.extf %0 : vector<4x512xbf16> to vector<4x512xf32>
    %2 = arith.truncf %1 : vector<4x512xf32> to vector<4x512xbf16>
    %c0_1 = arith.constant 0 : index
    %c0_2 = arith.constant 0 : index
    %3 = vector.load %arg2[%c0_1, %c0_2] : memref<512x128xbf16, #tpu.memory_space<vmem>>, vector<512x128xbf16>
    %cst = arith.constant dense<0.000000e+00> : vector<4x128xf32>
    %4 = tpu.matmul %2, %3, %cst {dimension_numbers = #tpu.dot_dimension_numbers<[1], [0], [0], [1], [0, 0, 1, 1], [], []>} : vector<4x512xbf16>, vector<512x128xbf16>, vector<4x128xf32> -> vector<4x128xf32>
    %c0_3 = arith.constant 0 : index
    %c0_4 = arith.constant 0 : index
    %5 = vector.load %arg3[%c0_3, %c0_4] : memref<1x128xf32, #tpu.memory_space<vmem>>, vector<1x128xf32>
    %6 = vector.broadcast %5 : vector<1x128xf32> to vector<4x128xf32>
    %7 = arith.addf %4, %6 : vector<4x128xf32>
    %c0_5 = arith.constant 0 : index
    %c0_6 = arith.constant 0 : index
    %8 = vector.load %arg4[%c0_5, %c0_6] : memref<4x128xbf16, #tpu.memory_space<vmem>>, vector<4x128xbf16>
    %9 = arith.extf %8 : vector<4x128xbf16> to vector<4x128xf32>
    %10 = arith.addf %7, %9 : vector<4x128xf32>
    %11 = arith.truncf %10 : vector<4x128xf32> to vector<4x128xbf16>
    %c0_7 = arith.constant 0 : index
    %c0_8 = arith.constant 0 : index
    %12 = vector.load %arg5[%c0_7, %c0_8] : memref<4x128xbf16, #tpu.memory_space<vmem>>, vector<4x128xbf16>
    tpu.vector_store %arg5[%c0_7, %c0_8], %11 {strides = array<i32>} : memref<4x128xbf16, #tpu.memory_space<vmem>>, vector<4x128xbf16>,
    return
  }
  func.func @transform_0(%arg0: i32) -> (i32, i32) {
    %c0_i32 = arith.constant 0 : i32
    %c0_i32_0 = arith.constant 0 : i32
    return %arg0, %c0_i32 : i32, i32
  }
  func.func @transform_1(%arg0: i32) -> (i32, i32) {
    %c0_i32 = arith.constant 0 : i32
    %c0_i32_0 = arith.constant 0 : i32
    %c0_i32_1 = arith.constant 0 : i32
    return %c0_i32, %c0_i32_0 : i32, i32
  }
  func.func @transform_2(%arg0: i32) -> (i32, i32) {
    %c0_i32 = arith.constant 0 : i32
    %c0_i32_0 = arith.constant 0 : i32
    %c0_i32_1 = arith.constant 0 : i32
    return %c0_i32, %c0_i32_0 : i32, i32
  }
  func.func @transform_3(%arg0: i32) -> (i32, i32) {
    %c0_i32 = arith.constant 0 : i32
    %c0_i32_0 = arith.constant 0 : i32
    return %arg0, %c0_i32 : i32, i32
  }
  func.func @transform_4(%arg0: i32) -> (i32, i32) {
    %c0_i32 = arith.constant 0 : i32
    %c0_i32_0 = arith.constant 0 : i32
    return %arg0, %c0_i32 : i32, i32
  }
}

module attributes {stable_mosaic.version = 11 : i64} {
  func.func @_fused_mm_kernel(%arg0: i32, %arg1: memref<2x128xbf16, #tpu.memory_space<vmem>>, %arg2: memref<1x128xf32, #tpu.memory_space<vmem>>, %arg3: memref<1x128xf32, #tpu.memory_space<vmem>>, %arg4: memref<128x10xbf16, #tpu.memory_space<vmem>>, %arg5: memref<1x10xf32, #tpu.memory_space<vmem>>, %arg6: memref<2x10xf32, #tpu.memory_space<vmem>>) attributes {dimension_semantics = [#tpu.dimension_semantics<parallel>], iteration_bounds = array<i64: 1>, scalar_prefetch = 0 : i64, scratch_operands = 0 : i64, tpu.core_type = #tpu.core_type<tc>, window_params = [{transform_indices = @transform_0, window_bounds = array<i64: 2, 128>}, {pipeline_mode = #tpu.pipeline_mode<synchronous>, transform_indices = @transform_1, window_bounds = array<i64: 1, 128>}, {pipeline_mode = #tpu.pipeline_mode<synchronous>, transform_indices = @transform_2, window_bounds = array<i64: 1, 128>}, {pipeline_mode = #tpu.pipeline_mode<synchronous>, transform_indices = @transform_3, window_bounds = array<i64: 128, 10>}, {pipeline_mode = #tpu.pipeline_mode<synchronous>, transform_indices = @transform_4, window_bounds = array<i64: 1, 10>}, {transform_indices = @transform_5, window_bounds = array<i64: 2, 10>}]} {
    %c0 = arith.constant 0 : index
    %c0_0 = arith.constant 0 : index
    %0 = vector.load %arg1[%c0, %c0_0] : memref<2x128xbf16, #tpu.memory_space<vmem>>, vector<2x128xbf16>
    %1 = arith.extf %0 : vector<2x128xbf16> to vector<2x128xf32>
    %cst = arith.constant dense<0.000000e+00> : vector<2xf32>
    %2 = vector.multi_reduction <add>, %1, %cst [1] : vector<2x128xf32> to vector<2xf32>
    %3 = vector.shape_cast %2 : vector<2xf32> to vector<2x1xf32>
    %cst_1 = arith.constant 1.280000e+02 : f32
    %4 = vector.broadcast %cst_1 : f32 to vector<2x1xf32>
    %5 = arith.divf %3, %4 : vector<2x1xf32>
    %6 = vector.broadcast %5 : vector<2x1xf32> to vector<2x128xf32>
    %7 = arith.subf %1, %6 : vector<2x128xf32>
    %8 = arith.mulf %7, %7 : vector<2x128xf32>
    %cst_2 = arith.constant dense<0.000000e+00> : vector<2xf32>
    %9 = vector.multi_reduction <add>, %8, %cst_2 [1] : vector<2x128xf32> to vector<2xf32>
    %10 = vector.shape_cast %9 : vector<2xf32> to vector<2x1xf32>
    %cst_3 = arith.constant 1.280000e+02 : f32
    %11 = vector.broadcast %cst_3 : f32 to vector<2x1xf32>
    %12 = arith.divf %10, %11 : vector<2x1xf32>
    %cst_4 = arith.constant 9.99999974E-6 : f32
    %13 = vector.broadcast %cst_4 : f32 to vector<2x1xf32>
    %14 = arith.addf %12, %13 : vector<2x1xf32>
    %15 = math.rsqrt %14 : vector<2x1xf32>
    %16 = vector.broadcast %15 : vector<2x1xf32> to vector<2x128xf32>
    %17 = arith.mulf %7, %16 : vector<2x128xf32>
    %c0_5 = arith.constant 0 : index
    %c0_6 = arith.constant 0 : index
    %18 = vector.load %arg2[%c0_5, %c0_6] : memref<1x128xf32, #tpu.memory_space<vmem>>, vector<1x128xf32>
    %19 = vector.broadcast %18 : vector<1x128xf32> to vector<2x128xf32>
    %20 = arith.mulf %17, %19 : vector<2x128xf32>
    %c0_7 = arith.constant 0 : index
    %c0_8 = arith.constant 0 : index
    %21 = vector.load %arg3[%c0_7, %c0_8] : memref<1x128xf32, #tpu.memory_space<vmem>>, vector<1x128xf32>
    %22 = vector.broadcast %21 : vector<1x128xf32> to vector<2x128xf32>
    %23 = arith.addf %20, %22 : vector<2x128xf32>
    %24 = arith.truncf %23 : vector<2x128xf32> to vector<2x128xbf16>
    %c0_9 = arith.constant 0 : index
    %c0_10 = arith.constant 0 : index
    %25 = vector.load %arg4[%c0_9, %c0_10] : memref<128x10xbf16, #tpu.memory_space<vmem>>, vector<128x10xbf16>
    %cst_11 = arith.constant dense<0.000000e+00> : vector<2x10xf32>
    %26 = tpu.matmul %24, %25, %cst_11 {dimension_numbers = #tpu.dot_dimension_numbers<[1], [0], [0], [1], [0, 0, 1, 1], [], []>} : vector<2x128xbf16>, vector<128x10xbf16>, vector<2x10xf32> -> vector<2x10xf32>
    %c0_12 = arith.constant 0 : index
    %c0_13 = arith.constant 0 : index
    %27 = vector.load %arg5[%c0_12, %c0_13] : memref<1x10xf32, #tpu.memory_space<vmem>>, vector<1x10xf32>
    %28 = vector.broadcast %27 : vector<1x10xf32> to vector<2x10xf32>
    %29 = arith.addf %26, %28 : vector<2x10xf32>
    %c0_14 = arith.constant 0 : index
    %c0_15 = arith.constant 0 : index
    %30 = vector.load %arg6[%c0_14, %c0_15] : memref<2x10xf32, #tpu.memory_space<vmem>>, vector<2x10xf32>
    tpu.vector_store %arg6[%c0_14, %c0_15], %29 {strides = array<i32>} : memref<2x10xf32, #tpu.memory_space<vmem>>, vector<2x10xf32>,
    return
  }
  func.func @transform_0(%arg0: i32) -> (i32, i32) {
    %c0_i32 = arith.constant 0 : i32
    %c0_i32_0 = arith.constant 0 : i32
    return %arg0, %c0_i32 : i32, i32
  }
  func.func @transform_1(%arg0: i32) -> (i32, i32) {
    %c0_i32 = arith.constant 0 : i32
    %c0_i32_0 = arith.constant 0 : i32
    %c0_i32_1 = arith.constant 0 : i32
    return %c0_i32, %c0_i32_0 : i32, i32
  }
  func.func @transform_2(%arg0: i32) -> (i32, i32) {
    %c0_i32 = arith.constant 0 : i32
    %c0_i32_0 = arith.constant 0 : i32
    %c0_i32_1 = arith.constant 0 : i32
    return %c0_i32, %c0_i32_0 : i32, i32
  }
  func.func @transform_3(%arg0: i32) -> (i32, i32) {
    %c0_i32 = arith.constant 0 : i32
    %c0_i32_0 = arith.constant 0 : i32
    %c0_i32_1 = arith.constant 0 : i32
    return %c0_i32, %c0_i32_0 : i32, i32
  }
  func.func @transform_4(%arg0: i32) -> (i32, i32) {
    %c0_i32 = arith.constant 0 : i32
    %c0_i32_0 = arith.constant 0 : i32
    %c0_i32_1 = arith.constant 0 : i32
    return %c0_i32, %c0_i32_0 : i32, i32
  }
  func.func @transform_5(%arg0: i32) -> (i32, i32) {
    %c0_i32 = arith.constant 0 : i32
    %c0_i32_0 = arith.constant 0 : i32
    return %arg0, %c0_i32 : i32, i32
  }
}

</mosaic_0001>

<llo_original>
// kernel: lit_forward.37
$region0: #{lit_forward.37}
  #allocation0 [shape = 'u32[]', space=smem, size = 0x4, offset = 0x4, fixed_abs, tag = 'smem constant byte address 0x4 - core index']
  #allocation1 [shape = 'u32[72,128]{1,0:T(1,128)}', space=vmem, size = 0x9000, scoped, tag = 'internal scratch']
  %s0 = inlined_call_operand.vmem [shape: bf16[128,16], index: 0, kind: input, shape index: {}]
  %s1 = inlined_call_operand.vmem [shape: f32[1,16], index: 1, kind: input, shape index: {}]
  %s2 = inlined_call_operand.vmem [shape: f32[1,16], index: 2, kind: input, shape index: {}]
  %s3 = inlined_call_operand.vmem [shape: bf16[16,64], index: 3, kind: input, shape index: {}]
  %s4 = inlined_call_operand.vmem [shape: f32[1,64], index: 4, kind: input, shape index: {}]
  %s5 = inlined_call_operand.vmem [shape: bf16[128,64], index: 5, kind: output, shape index: {}]
  %s6 = sld [smem:[#allocation0]]
  $region53: #{lit_forward.37} parent=0
    _
  %s8 = ssub.s32 1, %s6
  %s9 = scalar_select 0, %s8, %s6
  loop: start=0, step=1, limit=4
  $region2: #{lit_forward.37} parent=0 // loop_pre_header
    _
  $region3: #{lit_forward.37} parent=0 // loop_header
    %s11 = sphi 0, %s15
    %p12 = scmp.ge.s32.totalorder %s11, 4
    %s21 = sphi 0, %s23
    %s24 = sphi 0, %s21
    %s25 = sphi 0, %s24
    %s41 = sphi 0, %s25
    %s45 = sphi 0, %s45
    %s47 = sphi 0, %s45
    %s48 = sphi 0, %s47
    %s62 = sphi 0, %s48
    %s66 = sphi 0, %s66
    %s68 = sphi 0, %s66
    %s69 = sphi 0, %s68
    %s83 = sphi 0, %s69
    %s87 = sphi 0, %s87
    %s89 = sphi 0, %s87
    %s90 = sphi 0, %s89
    %s104 = sphi 0, %s90
    %s108 = sphi 0, %s108
    %s110 = sphi 0, %s108
    %s111 = sphi 0, %s110
    %s125 = sphi 0, %s111
    %s131 = sphi 0, %s133
    %s134 = sphi 0, %s131
    %s135 = sphi 0, %s134
    %s151 = sphi 0, %s135
  $region4: #{lit_forward.37} parent=0 // loop_header_branch
    %14 = sbr.rel (%p12) target = $region8
  $region5: #{lit_forward.37} parent=0 // loop_body
    %s16 = ssub.s32 %s11, 1
    %s17 = ssub.s32 %s11, 2
    %s18 = sadd.s32 %s11, 1
    %s19 = ssub.s32 %s11, %s18
    %p20 = scmp.eq.s32.totalorder %s19, 0
    %s22 = sadd.s32 %s21, 1
    %s23 = scalar_select %p20, %s21, %s22
    %p26 = pneg %p20
    %p27 = scmp.eq.s32.totalorder %s11, 1
    %p28 = por %p26, %p27
    %p29 = scmp.ne.s32.totalorder %s21, %s24
    %p30 = scmp.eq.s32.totalorder %s11, 0
    %p31 = por %p29, %p30
    %p32 = scmp.ne.s32.totalorder %s21, %s24
    %p33 = scmp.eq.s32.totalorder %s16, 1
    %p34 = por %p32, %p33
    %p35 = scmp.ne.s32.totalorder %s24, %s25
    %p36 = scmp.eq.s32.totalorder %s16, 0
    %p37 = por %p35, %p36
    %p38 = scmp.ne.s32.totalorder %s24, %s25
    %p39 = scmp.eq.s32.totalorder %s17, 1
    %p40 = por %p38, %p39
    %p42 = scmp.ne.s32.totalorder %s25, %s41
    %p43 = scmp.eq.s32.totalorder %s17, 0
    %p44 = por %p42, %p43
    %s46 = sadd.s32 %s45, 1
    %p49 = scmp.eq.s32.totalorder %s11, 1
    %p50 = scmp.ne.s32.totalorder %s45, %s47
    %p51 = scmp.eq.s32.totalorder %s11, 0
    %p52 = por %p50, %p51
    %p53 = scmp.ne.s32.totalorder %s45, %s47
    %p54 = scmp.eq.s32.totalorder %s16, 1
    %p55 = por %p53, %p54
    %p56 = scmp.ne.s32.totalorder %s47, %s48
    %p57 = scmp.eq.s32.totalorder %s16, 0
    %p58 = por %p56, %p57
    %p59 = scmp.ne.s32.totalorder %s47, %s48
    %p60 = scmp.eq.s32.totalorder %s17, 1
    %p61 = por %p59, %p60
    %p63 = scmp.ne.s32.totalorder %s48, %s62
    %p64 = scmp.eq.s32.totalorder %s17, 0
    %p65 = por %p63, %p64
    %s67 = sadd.s32 %s66, 1
    %p70 = scmp.eq.s32.totalorder %s11, 1
    %p71 = scmp.ne.s32.totalorder %s66, %s68
    %p72 = scmp.eq.s32.totalorder %s11, 0
    %p73 = por %p71, %p72
    %p74 = scmp.ne.s32.totalorder %s66, %s68
    %p75 = scmp.eq.s32.totalorder %s16, 1
    %p76 = por %p74, %p75
    %p77 = scmp.ne.s32.totalorder %s68, %s69
    %p78 = scmp.eq.s32.totalorder %s16, 0
    %p79 = por %p77, %p78
    %p80 = scmp.ne.s32.totalorder %s68, %s69
    %p81 = scmp.eq.s32.totalorder %s17, 1
    %p82 = por %p80, %p81
    %p84 = scmp.ne.s32.totalorder %s69, %s83
    %p85 = scmp.eq.s32.totalorder %s17, 0
    %p86 = por %p84, %p85
    %s88 = sadd.s32 %s87, 1
    %p91 = scmp.eq.s32.totalorder %s11, 1
    %p92 = scmp.ne.s32.totalorder %s87, %s89
    %p93 = scmp.eq.s32.totalorder %s11, 0
    %p94 = por %p92, %p93
    %p95 = scmp.ne.s32.totalorder %s87, %s89
    %p96 = scmp.eq.s32.totalorder %s16, 1
    %p97 = por %p95, %p96
    %p98 = scmp.ne.s32.totalorder %s89, %s90
    %p99 = scmp.eq.s32.totalorder %s16, 0
    %p100 = por %p98, %p99
    %p101 = scmp.ne.s32.totalorder %s89, %s90
    %p102 = scmp.eq.s32.totalorder %s17, 1
    %p103 = por %p101, %p102
    %p105 = scmp.ne.s32.totalorder %s90, %s104
    %p106 = scmp.eq.s32.totalorder %s17, 0
    %p107 = por %p105, %p106
    %s109 = sadd.s32 %s108, 1
    %p112 = scmp.eq.s32.totalorder %s11, 1
    %p113 = scmp.ne.s32.totalorder %s108, %s110
    %p114 = scmp.eq.s32.totalorder %s11, 0
    %p115 = por %p113, %p114
    %p116 = scmp.ne.s32.totalorder %s108, %s110
    %p117 = scmp.eq.s32.totalorder %s16, 1
    %p118 = por %p116, %p117
    %p119 = scmp.ne.s32.totalorder %s110, %s111
    %p120 = scmp.eq.s32.totalorder %s16, 0
    %p121 = por %p119, %p120
    %p122 = scmp.ne.s32.totalorder %s110, %s111
    %p123 = scmp.eq.s32.totalorder %s17, 1
    %p124 = por %p122, %p123
    %p126 = scmp.ne.s32.totalorder %s111, %s125
    %p127 = scmp.eq.s32.totalorder %s17, 0
    %p128 = por %p126, %p127
    %s129 = ssub.s32 %s11, %s18
    %p130 = scmp.eq.s32.totalorder %s129, 0
    %s132 = sadd.s32 %s131, 1
    %s133 = scalar_select %p130, %s131, %s132
    %p136 = pneg %p130
    %p137 = scmp.eq.s32.totalorder %s11, 1
    %p138 = por %p136, %p137
    %p139 = scmp.ne.s32.totalorder %s131, %s134
    %p140 = scmp.eq.s32.totalorder %s11, 0
    %p141 = por %p139, %p140
    %p142 = scmp.ne.s32.totalorder %s131, %s134
    %p143 = scmp.eq.s32.totalorder %s16, 1
    %p144 = por %p142, %p143
    %p145 = scmp.ne.s32.totalorder %s134, %s135
    %p146 = scmp.eq.s32.totalorder %s16, 0
    %p147 = por %p145, %p146
    %p148 = scmp.ne.s32.totalorder %s134, %s135
    %p149 = scmp.eq.s32.totalorder %s17, 1
    %p150 = por %p148, %p149
    %p152 = scmp.ne.s32.totalorder %s135, %s151
    %p153 = scmp.eq.s32.totalorder %s17, 0
    %p154 = por %p152, %p153
    %p155 = scmp.le.s32.totalorder 1, %s11
    %p156 = scmp.lt.s32.totalorder %s11, 3
    %p157 = pnand %p155, %p156
    %p158 = pneg %p157
    // Predicated region
    $region9: #{lit_forward.37} parent=5 // pred_check
      _
    $region10: #{lit_forward.37} parent=5 // pred_check_branch
      %160 = sbr.rel (%p157) target = $region12
    $region11: #{lit_forward.37} parent=5 // pred_region
      %s161 = ssub.s32 %s11, 1
      // Predicated region
      $region13: #{lit_forward.37} parent=11 // pred_check
        %p162 = pneg %p58
      $region14: #{lit_forward.37} parent=11 // pred_check_branch
        %164 = sbr.rel (%p162) target = $region16
      $region15: #{lit_forward.37} parent=11 // pred_region
        _
      $region16: #{lit_forward.37} parent=11 // pred_fallthru
        _
      // Predicated region
      $region17: #{lit_forward.37} parent=11 // pred_check
        %p165 = pneg %p79
      $region18: #{lit_forward.37} parent=11 // pred_check_branch
        %167 = sbr.rel (%p165) target = $region20
      $region19: #{lit_forward.37} parent=11 // pred_region
        _
      $region20: #{lit_forward.37} parent=11 // pred_fallthru
        _
      // Predicated region
      $region21: #{lit_forward.37} parent=11 // pred_check
        %p168 = pneg %p100
      $region22: #{lit_forward.37} parent=11 // pred_check_branch
        %170 = sbr.rel (%p168) target = $region24
      $region23: #{lit_forward.37} parent=11 // pred_region
        _
      $region24: #{lit_forward.37} parent=11 // pred_fallthru
        _
      // Predicated region
      $region25: #{lit_forward.37} parent=11 // pred_check
        %p171 = pneg %p121
      $region26: #{lit_forward.37} parent=11 // pred_check_branch
        %173 = sbr.rel (%p171) target = $region28
      $region27: #{lit_forward.37} parent=11 // pred_region
        _
      $region28: #{lit_forward.37} parent=11 // pred_fallthru
        _
    $region12: #{lit_forward.37} parent=5 // pred_fallthru
      _
    %p174 = scmp.lt.s32.totalorder %s11, 2
    // Predicated region
    $region29: #{lit_forward.37} parent=5 // pred_check
      %p175 = pneg %p174
    $region30: #{lit_forward.37} parent=5 // pred_check_branch
      %177 = sbr.rel (%p175) target = $region32
    $region31: #{lit_forward.37} parent=5 // pred_region
      // Predicated region
      $region33: #{lit_forward.37} parent=31 // pred_check
        %p178 = pneg %p31
      $region34: #{lit_forward.37} parent=31 // pred_check_branch
        %180 = sbr.rel (%p178) target = $region36
      $region35: #{lit_forward.37} parent=31 // pred_region
        %s181 = smul.u32 8, %s11
        %p182 = scmp.lt.s32.totalorder %s181, 15
        %s183 = scalar_select %p182, %s181, 15
        %s184 = smul.addr %s183, 4
        %s185 = scalar_lea.vmem %s0, %s184
        %s186 = smul.u32 8, %s11
      $region36: #{lit_forward.37} parent=31 // pred_fallthru
        _
    $region32: #{lit_forward.37} parent=5 // pred_fallthru
      _
    %p187 = scmp.le.s32.totalorder 1, %s11
    %p188 = scmp.lt.s32.totalorder %s11, 3
    %p189 = pnand %p187, %p188
    %p190 = pneg %p189
    // Predicated region
    $region37: #{lit_forward.37} parent=5 // pred_check
      _
    $region38: #{lit_forward.37} parent=5 // pred_check_branch
      %192 = sbr.rel (%p189) target = $region40
    $region39: #{lit_forward.37} parent=5 // pred_region
      %s193 = ssub.s32 %s11, 1
      %s194 = smul.u32 8, %s16
      %p195 = scmp.lt.s32.totalorder %s194, 15
      %s196 = scalar_select %p195, %s194, 15
      %s197 = smul.addr %s196, 4
      %s198 = scalar_lea.vmem %s0, %s197
      %p199 = pneg %p37
      %p200 = pneg %p34
      %p201 = pneg %p58
      %p202 = pneg %p55
      %p203 = pneg %p79
      %p204 = pneg %p76
      %p205 = pneg %p100
      %p206 = pneg %p97
      %p207 = pneg %p121
      %p208 = pneg %p118
      %p209 = pneg %p147
      %p210 = pneg %p144
      %s211 = smul.u32 8, %s16
      %p212 = scmp.lt.s32.totalorder %s211, 15
      %s213 = scalar_select %p212, %s211, 15
      %s214 = smul.addr %s213, 4
      %s215 = scalar_lea.vmem %s5, %s214
      %s216 = smul.u32 8, %s16
      %p217 = scmp.lt.s32.totalorder %s216, 15
      %s218 = scalar_select %p217, %s216, 15
      %s219 = smul.addr %s218, 4
      %s220 = scalar_lea.vmem %s0, %s219
      %s221 = smul.u32 8, %s16
      %s222 = smul.u32 8, %s16
      %p223 = scmp.lt.s32.totalorder %s222, 15
      %s224 = scalar_select %p223, %s222, 15
      %s225 = smul.addr %s224, 4
      %s226 = scalar_lea.vmem %s5, %s225
      %s227 = smul.u32 8, %s16
      %v229 = vld [vmem:[%s220] sm:$0xf]
      %v230 = vld [vmem:[%s220 + $0x4] sm:$0xf]
      %v231 = vld [vmem:[%s220 + $0x8] sm:$0xf]
      %v232 = vld [vmem:[%s220 + $0xc] sm:$0xf]
      %v233 = vld [vmem:[%s220 + $0x10] sm:$0xf]
      %v234 = vld [vmem:[%s220 + $0x14] sm:$0xf]
      %v235 = vld [vmem:[%s220 + $0x18] sm:$0xf]
      %v236 = vld [vmem:[%s220 + $0x1c] sm:$0xf]
      %v237 = vunpack.c.l.bf16 %v229
      %v238 = vunpack.c.l.bf16 %v230
      %v239 = vunpack.c.l.bf16 %v231
      %v240 = vunpack.c.l.bf16 %v232
      %v241 = vunpack.c.l.bf16 %v233
      %v242 = vunpack.c.l.bf16 %v234
      %v243 = vunpack.c.l.bf16 %v235
      %v244 = vunpack.c.l.bf16 %v236
      %vm245 = vcmask 130048
      %v246 = vsel %vm245, %v237, 0.0
      %247 = vadd.xlane.f32.xlu0 %v246
      %v248 = vpop.xlane.xlu0 %247
      %v249 = vsel %vm245, %v238, 0.0
      %250 = vadd.xlane.f32.xlu0 %v249
      %v251 = vpop.xlane.xlu0 %250
      %v252 = vsel %vm245, %v239, 0.0
      %253 = vadd.xlane.f32.xlu0 %v252
      %v254 = vpop.xlane.xlu0 %253
      %v255 = vsel %vm245, %v240, 0.0
      %256 = vadd.xlane.f32.xlu0 %v255
      %v257 = vpop.xlane.xlu0 %256
      %v258 = vsel %vm245, %v241, 0.0
      %259 = vadd.xlane.f32.xlu0 %v258
      %v260 = vpop.xlane.xlu0 %259
      %v261 = vsel %vm245, %v242, 0.0
      %262 = vadd.xlane.f32.xlu0 %v261
      %v263 = vpop.xlane.xlu0 %262
      %v264 = vsel %vm245, %v243, 0.0
      %265 = vadd.xlane.f32.xlu0 %v264
      %v266 = vpop.xlane.xlu0 %265
      %v267 = vsel %vm245, %v244, 0.0
      %268 = vadd.xlane.f32.xlu0 %v267
      %v269 = vpop.xlane.xlu0 %268
      %v270 = vrcp.pop 16.0
      %v271 = vmul.f32 16.0, %v270
      %v272 = vsub.f32 1.0, %v271
      %v273 = vmul.f32 %v270, %v272
      %v274 = vadd.f32 %v270, %v273
      %vm275 = vweird.f32 %v270
      %v276 = vsel %vm275, %v270, %v274
      %v277 = vmul.f32 %v248, %v276
      %v278 = vmul.f32 %v251, %v276
      %v279 = vmul.f32 %v254, %v276
      %v280 = vmul.f32 %v257, %v276
      %v281 = vmul.f32 %v260, %v276
      %v282 = vmul.f32 %v263, %v276
      %v283 = vmul.f32 %v266, %v276
      %v284 = vmul.f32 %v269, %v276
      %v285 = vsub.f32 %v237, %v277
      %v286 = vsub.f32 %v238, %v278
      %v287 = vsub.f32 %v239, %v279
      %v288 = vsub.f32 %v240, %v280
      %v289 = vsub.f32 %v241, %v281
      %v290 = vsub.f32 %v242, %v282
      %v291 = vsub.f32 %v243, %v283
      %v292 = vsub.f32 %v244, %v284
      %v293 = vmul.f32 %v285, %v285
      %v294 = vmul.f32 %v286, %v286
      %v295 = vmul.f32 %v287, %v287
      %v296 = vmul.f32 %v288, %v288
      %v297 = vmul.f32 %v289, %v289
      %v298 = vmul.f32 %v290, %v290
      %v299 = vmul.f32 %v291, %v291
      %v300 = vmul.f32 %v292, %v292
      %v301 = vsel %vm245, %v293, 0.0
      %302 = vadd.xlane.f32.xlu0 %v301
      %v303 = vpop.xlane.xlu0 %302
      %v304 = vsel %vm245, %v294, 0.0
      %305 = vadd.xlane.f32.xlu0 %v304
      %v306 = vpop.xlane.xlu0 %305
      %v307 = vsel %vm245, %v295, 0.0
      %308 = vadd.xlane.f32.xlu0 %v307
      %v309 = vpop.xlane.xlu0 %308
      %v310 = vsel %vm245, %v296, 0.0
      %311 = vadd.xlane.f32.xlu0 %v310
      %v312 = vpop.xlane.xlu0 %311
      %v313 = vsel %vm245, %v297, 0.0
      %314 = vadd.xlane.f32.xlu0 %v313
      %v315 = vpop.xlane.xlu0 %314
      %v316 = vsel %vm245, %v298, 0.0
      %317 = vadd.xlane.f32.xlu0 %v316
      %v318 = vpop.xlane.xlu0 %317
      %v319 = vsel %vm245, %v299, 0.0
      %320 = vadd.xlane.f32.xlu0 %v319
      %v321 = vpop.xlane.xlu0 %320
      %v322 = vsel %vm245, %v300, 0.0
      %323 = vadd.xlane.f32.xlu0 %v322
      %v324 = vpop.xlane.xlu0 %323
      %v325 = vmul.f32 %v303, %v276
      %v326 = vmul.f32 %v306, %v276
      %v327 = vmul.f32 %v309, %v276
      %v328 = vmul.f32 %v312, %v276
      %v329 = vmul.f32 %v315, %v276
      %v330 = vmul.f32 %v318, %v276
      %v331 = vmul.f32 %v321, %v276
      %v332 = vmul.f32 %v324, %v276
      %v333 = vadd.f32 %v325, 1e-05
      %v334 = vadd.f32 %v326, 1e-05
      %v335 = vadd.f32 %v327, 1e-05
      %v336 = vadd.f32 %v328, 1e-05
      %v337 = vadd.f32 %v329, 1e-05
      %v338 = vadd.f32 %v330, 1e-05
      %v339 = vadd.f32 %v331, 1e-05
      %v340 = vadd.f32 %v332, 1e-05
      %v341 = vrsqrt.pop %v333
      %v342 = vmul.f32 %v341, %v333
      %v343 = vmul.f32 %v342, %v341
      %v344 = vmul.f32 0.5, %v343
      %v345 = vsub.f32 1.5, %v344
      %v346 = vmul.f32 %v341, %v345
      %vm347 = vweird.f32 %v333
      %vm348 = vweird.f32 %v341
      %vm349 = vmor %vm347, %vm348
      %v350 = vsel %vm349, %v341, %v346
      %v351 = vrsqrt.pop %v334
      %v352 = vmul.f32 %v351, %v334
      %v353 = vmul.f32 %v352, %v351
      %v354 = vmul.f32 0.5, %v353
      %v355 = vsub.f32 1.5, %v354
      %v356 = vmul.f32 %v351, %v355
      %vm357 = vweird.f32 %v334
      %vm358 = vweird.f32 %v351
      %vm359 = vmor %vm357, %vm358
      %v360 = vsel %vm359, %v351, %v356
      %v361 = vrsqrt.pop %v335
      %v362 = vmul.f32 %v361, %v335
      %v363 = vmul.f32 %v362, %v361
      %v364 = vmul.f32 0.5, %v363
      %v365 = vsub.f32 1.5, %v364
      %v366 = vmul.f32 %v361, %v365
      %vm367 = vweird.f32 %v335
      %vm368 = vweird.f32 %v361
      %vm369 = vmor %vm367, %vm368
      %v370 = vsel %vm369, %v361, %v366
      %v371 = vrsqrt.pop %v336
      %v372 = vmul.f32 %v371, %v336
      %v373 = vmul.f32 %v372, %v371
      %v374 = vmul.f32 0.5, %v373
      %v375 = vsub.f32 1.5, %v374
      %v376 = vmul.f32 %v371, %v375
      %vm377 = vweird.f32 %v336
      %vm378 = vweird.f32 %v371
      %vm379 = vmor %vm377, %vm378
      %v380 = vsel %vm379, %v371, %v376
      %v381 = vrsqrt.pop %v337
      %v382 = vmul.f32 %v381, %v337
      %v383 = vmul.f32 %v382, %v381
      %v384 = vmul.f32 0.5, %v383
      %v385 = vsub.f32 1.5, %v384
      %v386 = vmul.f32 %v381, %v385
      %vm387 = vweird.f32 %v337
      %vm388 = vweird.f32 %v381
      %vm389 = vmor %vm387, %vm388
      %v390 = vsel %vm389, %v381, %v386
      %v391 = vrsqrt.pop %v338
      %v392 = vmul.f32 %v391, %v338
      %v393 = vmul.f32 %v392, %v391
      %v394 = vmul.f32 0.5, %v393
      %v395 = vsub.f32 1.5, %v394
      %v396 = vmul.f32 %v391, %v395
      %vm397 = vweird.f32 %v338
      %vm398 = vweird.f32 %v391
      %vm399 = vmor %vm397, %vm398
      %v400 = vsel %vm399, %v391, %v396
      %v401 = vrsqrt.pop %v339
      %v402 = vmul.f32 %v401, %v339
      %v403 = vmul.f32 %v402, %v401
      %v404 = vmul.f32 0.5, %v403
      %v405 = vsub.f32 1.5, %v404
      %v406 = vmul.f32 %v401, %v405
      %vm407 = vweird.f32 %v339
      %vm408 = vweird.f32 %v401
      %vm409 = vmor %vm407, %vm408
      %v410 = vsel %vm409, %v401, %v406
      %v411 = vrsqrt.pop %v340
      %v412 = vmul.f32 %v411, %v340
      %v413 = vmul.f32 %v412, %v411
      %v414 = vmul.f32 0.5, %v413
      %v415 = vsub.f32 1.5, %v414
      %v416 = vmul.f32 %v411, %v415
      %vm417 = vweird.f32 %v340
      %vm418 = vweird.f32 %v411
      %vm419 = vmor %vm417, %vm418
      %v420 = vsel %vm419, %v411, %v416
      %v421 = vmul.f32 %v285, %v350
      %v422 = vmul.f32 %v286, %v360
      %v423 = vmul.f32 %v287, %v370
      %v424 = vmul.f32 %v288, %v380
      %v425 = vmul.f32 %v289, %v390
      %v426 = vmul.f32 %v290, %v400
      %v427 = vmul.f32 %v291, %v410
      %v428 = vmul.f32 %v292, %v420
      %v429 = vld [vmem:[%s1] sm:$0x1]
      %v431 = vperm.slane %v429, 0
      %v433 = vmul.f32 %v421, %v431
      %v434 = vmul.f32 %v422, %v431
      %v435 = vmul.f32 %v423, %v431
      %v436 = vmul.f32 %v424, %v431
      %v437 = vmul.f32 %v425, %v431
      %v438 = vmul.f32 %v426, %v431
      %v439 = vmul.f32 %v427, %v431
      %v440 = vmul.f32 %v428, %v431
      %v441 = vld [vmem:[%s2] sm:$0x1]
      %v443 = vperm.slane %v441, 0
      %v445 = vadd.f32 %v433, %v443
      %v446 = vadd.f32 %v434, %v443
      %v447 = vadd.f32 %v435, %v443
      %v448 = vadd.f32 %v436, %v443
      %v449 = vadd.f32 %v437, %v443
      %v450 = vadd.f32 %v438, %v443
      %v451 = vadd.f32 %v439, %v443
      %v452 = vadd.f32 %v440, %v443
      %v453 = vpack.c.bf16 %v446, %v445
      %v454 = vpack.c.bf16 %v448, %v447
      %v455 = vpack.c.bf16 %v450, %v449
      %v456 = vpack.c.bf16 %v452, %v451
      %v457 = vld [vmem:[%s3] sm:$0xf]
      %v458 = vld [vmem:[%s3 + $0x4] sm:$0xf]
      %v459 = vld [vmem:[%s4] sm:$0x1]
      %v461 = vperm.slane %v459, 0
      %v465 = vunpack.c.l.b16 %v457
      %v466 = vunpack.c.l.b16 %v458
      %v467 = vpack.c.b16 %v466, %v465
      %v470 = vsel %vm245, %v453, 0
      %v473 = vsel %vm245, %v454, 0
      %v476 = vsel %vm245, %v455, 0
      %v479 = vsel %vm245, %v456, 0
      %481 = vmatpush.bf16.msra.mxu0 0
      %482 = vmatpush.bf16.msra.mxu0 0
      %483 = vmatpush.bf16.msra.mxu0 0
      %484 = vmatpush.bf16.msra.mxu0 0
      %485 = vmatpush.bf16.msra.mxu0 0
      %486 = vmatpush.bf16.msra.mxu0 0
      %487 = vmatpush.bf16.msra.mxu0 0
      %488 = vmatpush.bf16.msra.mxu0 %v467
      %489 = vmatmul.bf16.gmra.mxu0 %v470
      %v490 = vpop.f32.mrf.mxu0
      %v491 = vadd.f32 %v461, %v490
      %v492 = vpop.f32.mrf.mxu0
      %v493 = vadd.f32 %v461, %v492
      %494 = vmatmul.bf16.gmra.mxu0 %v473
      %v495 = vpop.f32.mrf.mxu0
      %v496 = vadd.f32 %v461, %v495
      %v497 = vpop.f32.mrf.mxu0
      %v498 = vadd.f32 %v461, %v497
      %499 = vmatmul.bf16.gmra.mxu0 %v476
      %v500 = vpop.f32.mrf.mxu0
      %v501 = vadd.f32 %v461, %v500
      %v502 = vpop.f32.mrf.mxu0
      %v503 = vadd.f32 %v461, %v502
      %504 = vmatmul.bf16.gmra.mxu0 %v479
      %v505 = vpop.f32.mrf.mxu0
      %v506 = vadd.f32 %v461, %v505
      %v507 = vpop.f32.mrf.mxu0
      %v508 = vadd.f32 %v461, %v507
      %509 = vdwg.mxu0
      %v510 = vmul.f32 %v491, 0.5
      %v511 = vmul.f32 %v493, 0.5
      %v512 = vmul.f32 %v496, 0.5
      %v513 = vmul.f32 %v498, 0.5
      %v514 = vmul.f32 %v501, 0.5
      %v515 = vmul.f32 %v503, 0.5
      %v516 = vmul.f32 %v506, 0.5
      %v517 = vmul.f32 %v508, 0.5
      %v518 = vmul.f32 %v491, 0.70710677
      %v519 = vmul.f32 %v493, 0.70710677
      %v520 = vmul.f32 %v496, 0.70710677
      %v521 = vmul.f32 %v498, 0.70710677
      %v522 = vmul.f32 %v501, 0.70710677
      %v523 = vmul.f32 %v503, 0.70710677
      %v524 = vmul.f32 %v506, 0.70710677
      %v525 = vmul.f32 %v508, 0.70710677
      %v526 = vmul.f32 %v518, %v518
      %v527 = vmin.f32 16.0, %v526
      %v528 = vmul.f32 %v527, 2.1237322e-06
      %v529 = vadd.f32 %v528, 0.00028619796
      %v530 = vmul.f32 %v527, %v529
      %v531 = vadd.f32 %v530, 0.0036580483
      %v532 = vmul.f32 %v527, %v531
      %v533 = vadd.f32 %v532, 0.05243302
      %v534 = vmul.f32 %v527, %v533
      %v535 = vadd.f32 %v534, 0.18741608
      %v536 = vmul.f32 %v527, %v535
      %v537 = vadd.f32 %v536, 1.1283791
      %v538 = vmul.f32 %v518, %v537
      %v539 = vmul.f32 %v527, 3.8918573e-05
      %v540 = vadd.f32 %v539, 0.001143296
      %v541 = vmul.f32 %v527, %v540
      %v542 = vadd.f32 %v541, 0.014752088
      %v543 = vmul.f32 %v527, %v542
      %v544 = vadd.f32 %v543, 0.112945676
      %v545 = vmul.f32 %v527, %v544
      %v546 = vadd.f32 %v545, 0.4994258
      %v547 = vmul.f32 %v527, %v546
      %v548 = vadd.f32 %v547, 1.0
      %v549 = vrcp.pop %v548
      %v550 = vmul.f32 %v548, %v549
      %v551 = vsub.f32 1.0, %v550
      %v552 = vmul.f32 %v549, %v551
      %v553 = vadd.f32 %v549, %v552
      %vm554 = vweird.f32 %v548
      %vm555 = vweird.f32 %v549
      %vm556 = vmor %vm554, %vm555
      %v557 = vsel %vm556, %v549, %v553
      %v558 = vand.u32 2147483647, %v548
      %vm559 = vcmp.eq.f32.partialorder %v558, 8.507059e+37
      %v560 = vand.u32 %v548, 2147483648
      %v561 = vor.u32 1.1754944e-38, %v560
      %v562 = vsel %vm559, %v561, %v557
      %v563 = vmul.f32 %v538, %v562
      %v564 = vmin.f32 %v563, 1.0
      %v565 = vmax.f32 %v564, -1.0
      %v566 = vmul.f32 %v519, %v519
      %v567 = vmin.f32 16.0, %v566
      %v568 = vmul.f32 %v567, 2.1237322e-06
      %v569 = vadd.f32 %v568, 0.00028619796
      %v570 = vmul.f32 %v567, %v569
      %v571 = vadd.f32 %v570, 0.0036580483
      %v572 = vmul.f32 %v567, %v571
      %v573 = vadd.f32 %v572, 0.05243302
      %v574 = vmul.f32 %v567, %v573
      %v575 = vadd.f32 %v574, 0.18741608
      %v576 = vmul.f32 %v567, %v575
      %v577 = vadd.f32 %v576, 1.1283791
      %v578 = vmul.f32 %v519, %v577
      %v579 = vmul.f32 %v567, 3.8918573e-05
      %v580 = vadd.f32 %v579, 0.001143296
      %v581 = vmul.f32 %v567, %v580
      %v582 = vadd.f32 %v581, 0.014752088
      %v583 = vmul.f32 %v567, %v582
      %v584 = vadd.f32 %v583, 0.112945676
      %v585 = vmul.f32 %v567, %v584
      %v586 = vadd.f32 %v585, 0.4994258
      %v587 = vmul.f32 %v567, %v586
      %v588 = vadd.f32 %v587, 1.0
      %v589 = vrcp.pop %v588
      %v590 = vmul.f32 %v588, %v589
      %v591 = vsub.f32 1.0, %v590
      %v592 = vmul.f32 %v589, %v591
      %v593 = vadd.f32 %v589, %v592
      %vm594 = vweird.f32 %v588
      %vm595 = vweird.f32 %v589
      %vm596 = vmor %vm594, %vm595
      %v597 = vsel %vm596, %v589, %v593
      %v598 = vand.u32 2147483647, %v588
      %vm599 = vcmp.eq.f32.partialorder %v598, 8.507059e+37
      %v600 = vand.u32 %v588, 2147483648
      %v601 = vor.u32 1.1754944e-38, %v600
      %v602 = vsel %vm599, %v601, %v597
      %v603 = vmul.f32 %v578, %v602
      %v604 = vmin.f32 %v603, 1.0
      %v605 = vmax.f32 %v604, -1.0
      %v606 = vmul.f32 %v520, %v520
      %v607 = vmin.f32 16.0, %v606
      %v608 = vmul.f32 %v607, 2.1237322e-06
      %v609 = vadd.f32 %v608, 0.00028619796
      %v610 = vmul.f32 %v607, %v609
      %v611 = vadd.f32 %v610, 0.0036580483
      %v612 = vmul.f32 %v607, %v611
      %v613 = vadd.f32 %v612, 0.05243302
      %v614 = vmul.f32 %v607, %v613
      %v615 = vadd.f32 %v614, 0.18741608
      %v616 = vmul.f32 %v607, %v615
      %v617 = vadd.f32 %v616, 1.1283791
      %v618 = vmul.f32 %v520, %v617
      %v619 = vmul.f32 %v607, 3.8918573e-05
      %v620 = vadd.f32 %v619, 0.001143296
      %v621 = vmul.f32 %v607, %v620
      %v622 = vadd.f32 %v621, 0.014752088
      %v623 = vmul.f32 %v607, %v622
      %v624 = vadd.f32 %v623, 0.112945676
      %v625 = vmul.f32 %v607, %v624
      %v626 = vadd.f32 %v625, 0.4994258
      %v627 = vmul.f32 %v607, %v626
      %v628 = vadd.f32 %v627, 1.0
      %v629 = vrcp.pop %v628
      %v630 = vmul.f32 %v628, %v629
      %v631 = vsub.f32 1.0, %v630
      %v632 = vmul.f32 %v629, %v631
      %v633 = vadd.f32 %v629, %v632
      %vm634 = vweird.f32 %v628
      %vm635 = vweird.f32 %v629
      %vm636 = vmor %vm634, %vm635
      %v637 = vsel %vm636, %v629, %v633
      %v638 = vand.u32 2147483647, %v628
      %vm639 = vcmp.eq.f32.partialorder %v638, 8.507059e+37
      %v640 = vand.u32 %v628, 2147483648
      %v641 = vor.u32 1.1754944e-38, %v640
      %v642 = vsel %vm639, %v641, %v637
      %v643 = vmul.f32 %v618, %v642
      %v644 = vmin.f32 %v643, 1.0
      %v645 = vmax.f32 %v644, -1.0
      %v646 = vmul.f32 %v521, %v521
      %v647 = vmin.f32 16.0, %v646
      %v648 = vmul.f32 %v647, 2.1237322e-06
      %v649 = vadd.f32 %v648, 0.00028619796
      %v650 = vmul.f32 %v647, %v649
      %v651 = vadd.f32 %v650, 0.0036580483
      %v652 = vmul.f32 %v647, %v651
      %v653 = vadd.f32 %v652, 0.05243302
      %v654 = vmul.f32 %v647, %v653
      %v655 = vadd.f32 %v654, 0.18741608
      %v656 = vmul.f32 %v647, %v655
      %v657 = vadd.f32 %v656, 1.1283791
      %v658 = vmul.f32 %v521, %v657
      %v659 = vmul.f32 %v647, 3.8918573e-05
      %v660 = vadd.f32 %v659, 0.001143296
      %v661 = vmul.f32 %v647, %v660
      %v662 = vadd.f32 %v661, 0.014752088
      %v663 = vmul.f32 %v647, %v662
      %v664 = vadd.f32 %v663, 0.112945676
      %v665 = vmul.f32 %v647, %v664
      %v666 = vadd.f32 %v665, 0.4994258
      %v667 = vmul.f32 %v647, %v666
      %v668 = vadd.f32 %v667, 1.0
      %v669 = vrcp.pop %v668
      %v670 = vmul.f32 %v668, %v669
      %v671 = vsub.f32 1.0, %v670
      %v672 = vmul.f32 %v669, %v671
      %v673 = vadd.f32 %v669, %v672
      %vm674 = vweird.f32 %v668
      %vm675 = vweird.f32 %v669
      %vm676 = vmor %vm674, %vm675
      %v677 = vsel %vm676, %v669, %v673
      %v678 = vand.u32 2147483647, %v668
      %vm679 = vcmp.eq.f32.partialorder %v678, 8.507059e+37
      %v680 = vand.u32 %v668, 2147483648
      %v681 = vor.u32 1.1754944e-38, %v680
      %v682 = vsel %vm679, %v681, %v677
      %v683 = vmul.f32 %v658, %v682
      %v684 = vmin.f32 %v683, 1.0
      %v685 = vmax.f32 %v684, -1.0
      %v686 = vmul.f32 %v522, %v522
      %v687 = vmin.f32 16.0, %v686
      %v688 = vmul.f32 %v687, 2.1237322e-06
      %v689 = vadd.f32 %v688, 0.00028619796
      %v690 = vmul.f32 %v687, %v689
      %v691 = vadd.f32 %v690, 0.0036580483
      %v692 = vmul.f32 %v687, %v691
      %v693 = vadd.f32 %v692, 0.05243302
      %v694 = vmul.f32 %v687, %v693
      %v695 = vadd.f32 %v694, 0.18741608
      %v696 = vmul.f32 %v687, %v695
      %v697 = vadd.f32 %v696, 1.1283791
      %v698 = vmul.f32 %v522, %v697
      %v699 = vmul.f32 %v687, 3.8918573e-05
      %v700 = vadd.f32 %v699, 0.001143296
      %v701 = vmul.f32 %v687, %v700
      %v702 = vadd.f32 %v701, 0.014752088
      %v703 = vmul.f32 %v687, %v702
      %v704 = vadd.f32 %v703, 0.112945676
      %v705 = vmul.f32 %v687, %v704
      %v706 = vadd.f32 %v705, 0.4994258
      %v707 = vmul.f32 %v687, %v706
      %v708 = vadd.f32 %v707, 1.0
      %v709 = vrcp.pop %v708
      %v710 = vmul.f32 %v708, %v709
      %v711 = vsub.f32 1.0, %v710
      %v712 = vmul.f32 %v709, %v711
      %v713 = vadd.f32 %v709, %v712
      %vm714 = vweird.f32 %v708
      %vm715 = vweird.f32 %v709
      %vm716 = vmor %vm714, %vm715
      %v717 = vsel %vm716, %v709, %v713
      %v718 = vand.u32 2147483647, %v708
      %vm719 = vcmp.eq.f32.partialorder %v718, 8.507059e+37
      %v720 = vand.u32 %v708, 2147483648
      %v721 = vor.u32 1.1754944e-38, %v720
      %v722 = vsel %vm719, %v721, %v717
      %v723 = vmul.f32 %v698, %v722
      %v724 = vmin.f32 %v723, 1.0
      %v725 = vmax.f32 %v724, -1.0
      %v726 = vmul.f32 %v523, %v523
      %v727 = vmin.f32 16.0, %v726
      %v728 = vmul.f32 %v727, 2.1237322e-06
      %v729 = vadd.f32 %v728, 0.00028619796
      %v730 = vmul.f32 %v727, %v729
      %v731 = vadd.f32 %v730, 0.0036580483
      %v732 = vmul.f32 %v727, %v731
      %v733 = vadd.f32 %v732, 0.05243302
      %v734 = vmul.f32 %v727, %v733
      %v735 = vadd.f32 %v734, 0.18741608
      %v736 = vmul.f32 %v727, %v735
      %v737 = vadd.f32 %v736, 1.1283791
      %v738 = vmul.f32 %v523, %v737
      %v739 = vmul.f32 %v727, 3.8918573e-05
      %v740 = vadd.f32 %v739, 0.001143296
      %v741 = vmul.f32 %v727, %v740
      %v742 = vadd.f32 %v741, 0.014752088
      %v743 = vmul.f32 %v727, %v742
      %v744 = vadd.f32 %v743, 0.112945676
      %v745 = vmul.f32 %v727, %v744
      %v746 = vadd.f32 %v745, 0.4994258
      %v747 = vmul.f32 %v727, %v746
      %v748 = vadd.f32 %v747, 1.0
      %v749 = vrcp.pop %v748
      %v750 = vmul.f32 %v748, %v749
      %v751 = vsub.f32 1.0, %v750
      %v752 = vmul.f32 %v749, %v751
      %v753 = vadd.f32 %v749, %v752
      %vm754 = vweird.f32 %v748
      %vm755 = vweird.f32 %v749
      %vm756 = vmor %vm754, %vm755
      %v757 = vsel %vm756, %v749, %v753
      %v758 = vand.u32 2147483647, %v748
      %vm759 = vcmp.eq.f32.partialorder %v758, 8.507059e+37
      %v760 = vand.u32 %v748, 2147483648
      %v761 = vor.u32 1.1754944e-38, %v760
      %v762 = vsel %vm759, %v761, %v757
      %v763 = vmul.f32 %v738, %v762
      %v764 = vmin.f32 %v763, 1.0
      %v765 = vmax.f32 %v764, -1.0
      %v766 = vmul.f32 %v524, %v524
      %v767 = vmin.f32 16.0, %v766
      %v768 = vmul.f32 %v767, 2.1237322e-06
      %v769 = vadd.f32 %v768, 0.00028619796
      %v770 = vmul.f32 %v767, %v769
      %v771 = vadd.f32 %v770, 0.0036580483
      %v772 = vmul.f32 %v767, %v771
      %v773 = vadd.f32 %v772, 0.05243302
      %v774 = vmul.f32 %v767, %v773
      %v775 = vadd.f32 %v774, 0.18741608
      %v776 = vmul.f32 %v767, %v775
      %v777 = vadd.f32 %v776, 1.1283791
      %v778 = vmul.f32 %v524, %v777
      %v779 = vmul.f32 %v767, 3.8918573e-05
      %v780 = vadd.f32 %v779, 0.001143296
      %v781 = vmul.f32 %v767, %v780
      %v782 = vadd.f32 %v781, 0.014752088
      %v783 = vmul.f32 %v767, %v782
      %v784 = vadd.f32 %v783, 0.112945676
      %v785 = vmul.f32 %v767, %v784
      %v786 = vadd.f32 %v785, 0.4994258
      %v787 = vmul.f32 %v767, %v786
      %v788 = vadd.f32 %v787, 1.0
      %v789 = vrcp.pop %v788
      %v790 = vmul.f32 %v788, %v789
      %v791 = vsub.f32 1.0, %v790
      %v792 = vmul.f32 %v789, %v791
      %v793 = vadd.f32 %v789, %v792
      %vm794 = vweird.f32 %v788
      %vm795 = vweird.f32 %v789
      %vm796 = vmor %vm794, %vm795
      %v797 = vsel %vm796, %v789, %v793
      %v798 = vand.u32 2147483647, %v788
      %vm799 = vcmp.eq.f32.partialorder %v798, 8.507059e+37
      %v800 = vand.u32 %v788, 2147483648
      %v801 = vor.u32 1.1754944e-38, %v800
      %v802 = vsel %vm799, %v801, %v797
      %v803 = vmul.f32 %v778, %v802
      %v804 = vmin.f32 %v803, 1.0
      %v805 = vmax.f32 %v804, -1.0
      %v806 = vmul.f32 %v525, %v525
      %v807 = vmin.f32 16.0, %v806
      %v808 = vmul.f32 %v807, 2.1237322e-06
      %v809 = vadd.f32 %v808, 0.00028619796
      %v810 = vmul.f32 %v807, %v809
      %v811 = vadd.f32 %v810, 0.0036580483
      %v812 = vmul.f32 %v807, %v811
      %v813 = vadd.f32 %v812, 0.05243302
      %v814 = vmul.f32 %v807, %v813
      %v815 = vadd.f32 %v814, 0.18741608
      %v816 = vmul.f32 %v807, %v815
      %v817 = vadd.f32 %v816, 1.1283791
      %v818 = vmul.f32 %v525, %v817
      %v819 = vmul.f32 %v807, 3.8918573e-05
      %v820 = vadd.f32 %v819, 0.001143296
      %v821 = vmul.f32 %v807, %v820
      %v822 = vadd.f32 %v821, 0.014752088
      %v823 = vmul.f32 %v807, %v822
      %v824 = vadd.f32 %v823, 0.112945676
      %v825 = vmul.f32 %v807, %v824
      %v826 = vadd.f32 %v825, 0.4994258
      %v827 = vmul.f32 %v807, %v826
      %v828 = vadd.f32 %v827, 1.0
      %v829 = vrcp.pop %v828
      %v830 = vmul.f32 %v828, %v829
      %v831 = vsub.f32 1.0, %v830
      %v832 = vmul.f32 %v829, %v831
      %v833 = vadd.f32 %v829, %v832
      %vm834 = vweird.f32 %v828
      %vm835 = vweird.f32 %v829
      %vm836 = vmor %vm834, %vm835
      %v837 = vsel %vm836, %v829, %v833
      %v838 = vand.u32 2147483647, %v828
      %vm839 = vcmp.eq.f32.partialorder %v838, 8.507059e+37
      %v840 = vand.u32 %v828, 2147483648
      %v841 = vor.u32 1.1754944e-38, %v840
      %v842 = vsel %vm839, %v841, %v837
      %v843 = vmul.f32 %v818, %v842
      %v844 = vmin.f32 %v843, 1.0
      %v845 = vmax.f32 %v844, -1.0
      %v846 = vadd.f32 %v565, 1.0
      %v847 = vadd.f32 %v605, 1.0
      %v848 = vadd.f32 %v645, 1.0
      %v849 = vadd.f32 %v685, 1.0
      %v850 = vadd.f32 %v725, 1.0
      %v851 = vadd.f32 %v765, 1.0
      %v852 = vadd.f32 %v805, 1.0
      %v853 = vadd.f32 %v845, 1.0
      %v854 = vmul.f32 %v510, %v846
      %v855 = vmul.f32 %v511, %v847
      %v856 = vmul.f32 %v512, %v848
      %v857 = vmul.f32 %v513, %v849
      %v858 = vmul.f32 %v514, %v850
      %v859 = vmul.f32 %v515, %v851
      %v860 = vmul.f32 %v516, %v852
      %v861 = vmul.f32 %v517, %v853
      %v862 = vpack.c.bf16 %v854, %v854
      %v863 = vpack.c.bf16 %v855, %v855
      %v864 = vpack.c.bf16 %v856, %v856
      %v865 = vpack.c.bf16 %v857, %v857
      %v866 = vpack.c.bf16 %v858, %v858
      %v867 = vpack.c.bf16 %v859, %v859
      %v868 = vpack.c.bf16 %v860, %v860
      %v869 = vpack.c.bf16 %v861, %v861
      %vm870 = vcmask 519168
      %871 = vst.msk [vmem:[%s226] sm:$0xf] %vm870, %v862
      %872 = vst.msk [vmem:[%s226 + $0x4] sm:$0xf] %vm870, %v863
      %873 = vst.msk [vmem:[%s226 + $0x8] sm:$0xf] %vm870, %v864
      %874 = vst.msk [vmem:[%s226 + $0xc] sm:$0xf] %vm870, %v865
      %875 = vst.msk [vmem:[%s226 + $0x10] sm:$0xf] %vm870, %v866
      %876 = vst.msk [vmem:[%s226 + $0x14] sm:$0xf] %vm870, %v867
      %877 = vst.msk [vmem:[%s226 + $0x18] sm:$0xf] %vm870, %v868
      %878 = vst.msk [vmem:[%s226 + $0x1c] sm:$0xf] %vm870, %v869
      %s879 = smul.u32 8, %s16
      %p880 = scmp.lt.s32.totalorder %s879, 15
      %s881 = scalar_select %p880, %s879, 15
      %s882 = smul.addr %s881, 4
      %s883 = scalar_lea.vmem %s5, %s882
      // Predicated region
      $region41: #{lit_forward.37} parent=39 // pred_check
        %p884 = pneg %p144
      $region42: #{lit_forward.37} parent=39 // pred_check_branch
        %886 = sbr.rel (%p884) target = $region44
      $region43: #{lit_forward.37} parent=39 // pred_region
        %s887 = smul.u32 8, %s16
      $region44: #{lit_forward.37} parent=39 // pred_fallthru
        _
    $region40: #{lit_forward.37} parent=5 // pred_fallthru
      _
    %p888 = scmp.le.s32.totalorder 2, %s11
    // Predicated region
    $region45: #{lit_forward.37} parent=5 // pred_check
      %p889 = pneg %p888
    $region46: #{lit_forward.37} parent=5 // pred_check_branch
      %891 = sbr.rel (%p889) target = $region48
    $region47: #{lit_forward.37} parent=5 // pred_region
      %s892 = ssub.s32 %s11, 2
      // Predicated region
      $region49: #{lit_forward.37} parent=47 // pred_check
        %p893 = pneg %p150
      $region50: #{lit_forward.37} parent=47 // pred_check_branch
        %895 = sbr.rel (%p893) target = $region52
      $region51: #{lit_forward.37} parent=47 // pred_region
        %s896 = smul.u32 8, %s17
        %p897 = scmp.lt.s32.totalorder %s896, 15
        %s898 = scalar_select %p897, %s896, 15
        %s899 = smul.addr %s898, 4
        %s900 = scalar_lea.vmem %s5, %s899
      $region52: #{lit_forward.37} parent=47 // pred_fallthru
        _
    $region48: #{lit_forward.37} parent=5 // pred_fallthru
      _
  $region6: #{lit_forward.37} parent=0 // loop_footer
    %s15 = sadd.s32 1, %s11
  $region7: #{lit_forward.37} parent=0 // loop_footer_branch
    %10 = sbr.rel target = $region3
  $region8: #{lit_forward.37} parent=0 // loop_exit
    _

// kernel: lit_forward.36
$region0: #{lit_forward.36}
  #allocation0 [shape = 'u32[]', space=smem, size = 0x4, offset = 0x4, fixed_abs, tag = 'smem constant byte address 0x4 - core index']
  #allocation1 [shape = 'u32[72,128]{1,0:T(1,128)}', space=vmem, size = 0x9000, scoped, tag = 'internal scratch']
  %s0 = inlined_call_operand.vmem [shape: f32[128,48], index: 0, kind: input, shape index: {}]
  %s1 = inlined_call_operand.vmem [shape: bf16[48,16], index: 1, kind: input, shape index: {}]
  %s2 = inlined_call_operand.vmem [shape: f32[1,16], index: 2, kind: input, shape index: {}]
  %s3 = inlined_call_operand.vmem [shape: f32[1,16], index: 3, kind: input, shape index: {}]
  %s4 = inlined_call_operand.vmem [shape: f32[1,16], index: 4, kind: input, shape index: {}]
  %s5 = inlined_call_operand.vmem [shape: bf16[128,16], index: 5, kind: output, shape index: {}]
  %s6 = sld [smem:[#allocation0]]
  $region53: #{lit_forward.36} parent=0
    _
  %s8 = ssub.s32 1, %s6
  %s9 = scalar_select 0, %s8, %s6
  loop: start=0, step=1, limit=4
  $region2: #{lit_forward.36} parent=0 // loop_pre_header
    _
  $region3: #{lit_forward.36} parent=0 // loop_header
    %s11 = sphi 0, %s15
    %p12 = scmp.ge.s32.totalorder %s11, 4
    %s21 = sphi 0, %s23
    %s24 = sphi 0, %s21
    %s25 = sphi 0, %s24
    %s41 = sphi 0, %s25
    %s45 = sphi 0, %s45
    %s47 = sphi 0, %s45
    %s48 = sphi 0, %s47
    %s62 = sphi 0, %s48
    %s66 = sphi 0, %s66
    %s68 = sphi 0, %s66
    %s69 = sphi 0, %s68
    %s83 = sphi 0, %s69
    %s87 = sphi 0, %s87
    %s89 = sphi 0, %s87
    %s90 = sphi 0, %s89
    %s104 = sphi 0, %s90
    %s108 = sphi 0, %s108
    %s110 = sphi 0, %s108
    %s111 = sphi 0, %s110
    %s125 = sphi 0, %s111
    %s131 = sphi 0, %s133
    %s134 = sphi 0, %s131
    %s135 = sphi 0, %s134
    %s151 = sphi 0, %s135
  $region4: #{lit_forward.36} parent=0 // loop_header_branch
    %14 = sbr.rel (%p12) target = $region8
  $region5: #{lit_forward.36} parent=0 // loop_body
    %s16 = ssub.s32 %s11, 1
    %s17 = ssub.s32 %s11, 2
    %s18 = sadd.s32 %s11, 1
    %s19 = ssub.s32 %s11, %s18
    %p20 = scmp.eq.s32.totalorder %s19, 0
    %s22 = sadd.s32 %s21, 1
    %s23 = scalar_select %p20, %s21, %s22
    %p26 = pneg %p20
    %p27 = scmp.eq.s32.totalorder %s11, 1
    %p28 = por %p26, %p27
    %p29 = scmp.ne.s32.totalorder %s21, %s24
    %p30 = scmp.eq.s32.totalorder %s11, 0
    %p31 = por %p29, %p30
    %p32 = scmp.ne.s32.totalorder %s21, %s24
    %p33 = scmp.eq.s32.totalorder %s16, 1
    %p34 = por %p32, %p33
    %p35 = scmp.ne.s32.totalorder %s24, %s25
    %p36 = scmp.eq.s32.totalorder %s16, 0
    %p37 = por %p35, %p36
    %p38 = scmp.ne.s32.totalorder %s24, %s25
    %p39 = scmp.eq.s32.totalorder %s17, 1
    %p40 = por %p38, %p39
    %p42 = scmp.ne.s32.totalorder %s25, %s41
    %p43 = scmp.eq.s32.totalorder %s17, 0
    %p44 = por %p42, %p43
    %s46 = sadd.s32 %s45, 1
    %p49 = scmp.eq.s32.totalorder %s11, 1
    %p50 = scmp.ne.s32.totalorder %s45, %s47
    %p51 = scmp.eq.s32.totalorder %s11, 0
    %p52 = por %p50, %p51
    %p53 = scmp.ne.s32.totalorder %s45, %s47
    %p54 = scmp.eq.s32.totalorder %s16, 1
    %p55 = por %p53, %p54
    %p56 = scmp.ne.s32.totalorder %s47, %s48
    %p57 = scmp.eq.s32.totalorder %s16, 0
    %p58 = por %p56, %p57
    %p59 = scmp.ne.s32.totalorder %s47, %s48
    %p60 = scmp.eq.s32.totalorder %s17, 1
    %p61 = por %p59, %p60
    %p63 = scmp.ne.s32.totalorder %s48, %s62
    %p64 = scmp.eq.s32.totalorder %s17, 0
    %p65 = por %p63, %p64
    %s67 = sadd.s32 %s66, 1
    %p70 = scmp.eq.s32.totalorder %s11, 1
    %p71 = scmp.ne.s32.totalorder %s66, %s68
    %p72 = scmp.eq.s32.totalorder %s11, 0
    %p73 = por %p71, %p72
    %p74 = scmp.ne.s32.totalorder %s66, %s68
    %p75 = scmp.eq.s32.totalorder %s16, 1
    %p76 = por %p74, %p75
    %p77 = scmp.ne.s32.totalorder %s68, %s69
    %p78 = scmp.eq.s32.totalorder %s16, 0
    %p79 = por %p77, %p78
    %p80 = scmp.ne.s32.totalorder %s68, %s69
    %p81 = scmp.eq.s32.totalorder %s17, 1
    %p82 = por %p80, %p81
    %p84 = scmp.ne.s32.totalorder %s69, %s83
    %p85 = scmp.eq.s32.totalorder %s17, 0
    %p86 = por %p84, %p85
    %s88 = sadd.s32 %s87, 1
    %p91 = scmp.eq.s32.totalorder %s11, 1
    %p92 = scmp.ne.s32.totalorder %s87, %s89
    %p93 = scmp.eq.s32.totalorder %s11, 0
    %p94 = por %p92, %p93
    %p95 = scmp.ne.s32.totalorder %s87, %s89
    %p96 = scmp.eq.s32.totalorder %s16, 1
    %p97 = por %p95, %p96
    %p98 = scmp.ne.s32.totalorder %s89, %s90
    %p99 = scmp.eq.s32.totalorder %s16, 0
    %p100 = por %p98, %p99
    %p101 = scmp.ne.s32.totalorder %s89, %s90
    %p102 = scmp.eq.s32.totalorder %s17, 1
    %p103 = por %p101, %p102
    %p105 = scmp.ne.s32.totalorder %s90, %s104
    %p106 = scmp.eq.s32.totalorder %s17, 0
    %p107 = por %p105, %p106
    %s109 = sadd.s32 %s108, 1
    %p112 = scmp.eq.s32.totalorder %s11, 1
    %p113 = scmp.ne.s32.totalorder %s108, %s110
    %p114 = scmp.eq.s32.totalorder %s11, 0
    %p115 = por %p113, %p114
    %p116 = scmp.ne.s32.totalorder %s108, %s110
    %p117 = scmp.eq.s32.totalorder %s16, 1
    %p118 = por %p116, %p117
    %p119 = scmp.ne.s32.totalorder %s110, %s111
    %p120 = scmp.eq.s32.totalorder %s16, 0
    %p121 = por %p119, %p120
    %p122 = scmp.ne.s32.totalorder %s110, %s111
    %p123 = scmp.eq.s32.totalorder %s17, 1
    %p124 = por %p122, %p123
    %p126 = scmp.ne.s32.totalorder %s111, %s125
    %p127 = scmp.eq.s32.totalorder %s17, 0
    %p128 = por %p126, %p127
    %s129 = ssub.s32 %s11, %s18
    %p130 = scmp.eq.s32.totalorder %s129, 0
    %s132 = sadd.s32 %s131, 1
    %s133 = scalar_select %p130, %s131, %s132
    %p136 = pneg %p130
    %p137 = scmp.eq.s32.totalorder %s11, 1
    %p138 = por %p136, %p137
    %p139 = scmp.ne.s32.totalorder %s131, %s134
    %p140 = scmp.eq.s32.totalorder %s11, 0
    %p141 = por %p139, %p140
    %p142 = scmp.ne.s32.totalorder %s131, %s134
    %p143 = scmp.eq.s32.totalorder %s16, 1
    %p144 = por %p142, %p143
    %p145 = scmp.ne.s32.totalorder %s134, %s135
    %p146 = scmp.eq.s32.totalorder %s16, 0
    %p147 = por %p145, %p146
    %p148 = scmp.ne.s32.totalorder %s134, %s135
    %p149 = scmp.eq.s32.totalorder %s17, 1
    %p150 = por %p148, %p149
    %p152 = scmp.ne.s32.totalorder %s135, %s151
    %p153 = scmp.eq.s32.totalorder %s17, 0
    %p154 = por %p152, %p153
    %p155 = scmp.le.s32.totalorder 1, %s11
    %p156 = scmp.lt.s32.totalorder %s11, 3
    %p157 = pnand %p155, %p156
    %p158 = pneg %p157
    // Predicated region
    $region9: #{lit_forward.36} parent=5 // pred_check
      _
    $region10: #{lit_forward.36} parent=5 // pred_check_branch
      %160 = sbr.rel (%p157) target = $region12
    $region11: #{lit_forward.36} parent=5 // pred_region
      %s161 = ssub.s32 %s11, 1
      // Predicated region
      $region13: #{lit_forward.36} parent=11 // pred_check
        %p162 = pneg %p58
      $region14: #{lit_forward.36} parent=11 // pred_check_branch
        %164 = sbr.rel (%p162) target = $region16
      $region15: #{lit_forward.36} parent=11 // pred_region
        _
      $region16: #{lit_forward.36} parent=11 // pred_fallthru
        _
      // Predicated region
      $region17: #{lit_forward.36} parent=11 // pred_check
        %p165 = pneg %p79
      $region18: #{lit_forward.36} parent=11 // pred_check_branch
        %167 = sbr.rel (%p165) target = $region20
      $region19: #{lit_forward.36} parent=11 // pred_region
        _
      $region20: #{lit_forward.36} parent=11 // pred_fallthru
        _
      // Predicated region
      $region21: #{lit_forward.36} parent=11 // pred_check
        %p168 = pneg %p100
      $region22: #{lit_forward.36} parent=11 // pred_check_branch
        %170 = sbr.rel (%p168) target = $region24
      $region23: #{lit_forward.36} parent=11 // pred_region
        _
      $region24: #{lit_forward.36} parent=11 // pred_fallthru
        _
      // Predicated region
      $region25: #{lit_forward.36} parent=11 // pred_check
        %p171 = pneg %p121
      $region26: #{lit_forward.36} parent=11 // pred_check_branch
        %173 = sbr.rel (%p171) target = $region28
      $region27: #{lit_forward.36} parent=11 // pred_region
        _
      $region28: #{lit_forward.36} parent=11 // pred_fallthru
        _
    $region12: #{lit_forward.36} parent=5 // pred_fallthru
      _
    %p174 = scmp.lt.s32.totalorder %s11, 2
    // Predicated region
    $region29: #{lit_forward.36} parent=5 // pred_check
      %p175 = pneg %p174
    $region30: #{lit_forward.36} parent=5 // pred_check_branch
      %177 = sbr.rel (%p175) target = $region32
    $region31: #{lit_forward.36} parent=5 // pred_region
      // Predicated region
      $region33: #{lit_forward.36} parent=31 // pred_check
        %p178 = pneg %p31
      $region34: #{lit_forward.36} parent=31 // pred_check_branch
        %180 = sbr.rel (%p178) target = $region36
      $region35: #{lit_forward.36} parent=31 // pred_region
        %s181 = smul.u32 8, %s11
        %p182 = scmp.lt.s32.totalorder %s181, 15
        %s183 = scalar_select %p182, %s181, 15
        %s184 = smul.addr %s183, 8
        %s185 = scalar_lea.vmem %s0, %s184
        %s186 = smul.u32 8, %s11
      $region36: #{lit_forward.36} parent=31 // pred_fallthru
        _
    $region32: #{lit_forward.36} parent=5 // pred_fallthru
      _
    %p187 = scmp.le.s32.totalorder 1, %s11
    %p188 = scmp.lt.s32.totalorder %s11, 3
    %p189 = pnand %p187, %p188
    %p190 = pneg %p189
    // Predicated region
    $region37: #{lit_forward.36} parent=5 // pred_check
      _
    $region38: #{lit_forward.36} parent=5 // pred_check_branch
      %192 = sbr.rel (%p189) target = $region40
    $region39: #{lit_forward.36} parent=5 // pred_region
      %s193 = ssub.s32 %s11, 1
      %s194 = smul.u32 8, %s16
      %p195 = scmp.lt.s32.totalorder %s194, 15
      %s196 = scalar_select %p195, %s194, 15
      %s197 = smul.addr %s196, 8
      %s198 = scalar_lea.vmem %s0, %s197
      %p199 = pneg %p37
      %p200 = pneg %p34
      %p201 = pneg %p58
      %p202 = pneg %p55
      %p203 = pneg %p79
      %p204 = pneg %p76
      %p205 = pneg %p100
      %p206 = pneg %p97
      %p207 = pneg %p121
      %p208 = pneg %p118
      %p209 = pneg %p147
      %p210 = pneg %p144
      %s211 = smul.u32 8, %s16
      %p212 = scmp.lt.s32.totalorder %s211, 15
      %s213 = scalar_select %p212, %s211, 15
      %s214 = smul.addr %s213, 4
      %s215 = scalar_lea.vmem %s5, %s214
      %s216 = smul.u32 8, %s16
      %p217 = scmp.lt.s32.totalorder %s216, 15
      %s218 = scalar_select %p217, %s216, 15
      %s219 = smul.addr %s218, 8
      %s220 = scalar_lea.vmem %s0, %s219
      %s221 = smul.u32 8, %s16
      %s222 = smul.u32 8, %s16
      %p223 = scmp.lt.s32.totalorder %s222, 15
      %s224 = scalar_select %p223, %s222, 15
      %s225 = smul.addr %s224, 4
      %s226 = scalar_lea.vmem %s5, %s225
      %s227 = smul.u32 8, %s16
      %v229 = vld [vmem:[%s220] sm:$0xff]
      %v230 = vld [vmem:[%s220 + $0x8] sm:$0xff]
      %v231 = vld [vmem:[%s220 + $0x10] sm:$0xff]
      %v232 = vld [vmem:[%s220 + $0x18] sm:$0xff]
      %v233 = vld [vmem:[%s220 + $0x20] sm:$0xff]
      %v234 = vld [vmem:[%s220 + $0x28] sm:$0xff]
      %v235 = vld [vmem:[%s220 + $0x30] sm:$0xff]
      %v236 = vld [vmem:[%s220 + $0x38] sm:$0xff]
      %v237 = vpack.c.bf16 %v230, %v229
      %v238 = vpack.c.bf16 %v232, %v231
      %v239 = vpack.c.bf16 %v234, %v233
      %v240 = vpack.c.bf16 %v236, %v235
      %v241 = vld [vmem:[%s1] sm:$0xf]
      %v242 = vld [vmem:[%s1 + $0x4] sm:$0xf]
      %v243 = vld [vmem:[%s1 + $0x8] sm:$0xf]
      %v244 = vld [vmem:[%s1 + $0xc] sm:$0xf]
      %v245 = vld [vmem:[%s1 + $0x10] sm:$0xf]
      %v246 = vld [vmem:[%s1 + $0x14] sm:$0xf]
      %v247 = vld [vmem:[%s2] sm:$0x1]
      %v249 = vperm.slane %v247, 0
      %v257 = vunpack.c.l.b16 %v241
      %v258 = vunpack.c.l.b16 %v242
      %v259 = vunpack.c.l.b16 %v243
      %v260 = vunpack.c.l.b16 %v244
      %v261 = vunpack.c.l.b16 %v245
      %v262 = vunpack.c.l.b16 %v246
      %v263 = vpack.c.b16 %v258, %v257
      %v264 = vpack.c.b16 %v260, %v259
      %v265 = vpack.c.b16 %v262, %v261
      %vm269 = vcmask 392192
      %v271 = vsel %vm269, %v237, 0
      %v274 = vsel %vm269, %v238, 0
      %v277 = vsel %vm269, %v239, 0
      %v280 = vsel %vm269, %v240, 0
      %282 = vmatpush.bf16.msra.mxu0 0
      %283 = vmatpush.bf16.msra.mxu0 0
      %284 = vmatpush.bf16.msra.mxu0 0
      %285 = vmatpush.bf16.msra.mxu0 0
      %286 = vmatpush.bf16.msra.mxu0 0
      %287 = vmatpush.bf16.msra.mxu0 %v265
      %288 = vmatpush.bf16.msra.mxu0 %v264
      %289 = vmatpush.bf16.msra.mxu0 %v263
      %290 = vmatmul.bf16.gmra.mxu0 %v271
      %v291 = vpop.f32.mrf.mxu0
      %v292 = vadd.f32 %v249, %v291
      %v293 = vpop.f32.mrf.mxu0
      %v294 = vadd.f32 %v249, %v293
      %295 = vmatmul.bf16.gmra.mxu0 %v274
      %v296 = vpop.f32.mrf.mxu0
      %v297 = vadd.f32 %v249, %v296
      %v298 = vpop.f32.mrf.mxu0
      %v299 = vadd.f32 %v249, %v298
      %300 = vmatmul.bf16.gmra.mxu0 %v277
      %v301 = vpop.f32.mrf.mxu0
      %v302 = vadd.f32 %v249, %v301
      %v303 = vpop.f32.mrf.mxu0
      %v304 = vadd.f32 %v249, %v303
      %305 = vmatmul.bf16.gmra.mxu0 %v280
      %v306 = vpop.f32.mrf.mxu0
      %v307 = vadd.f32 %v249, %v306
      %v308 = vpop.f32.mrf.mxu0
      %v309 = vadd.f32 %v249, %v308
      %310 = vdwg.mxu0
      %vm311 = vcmask 130048
      %v312 = vsel %vm311, %v292, 0.0
      %313 = vadd.xlane.f32.xlu0 %v312
      %v314 = vpop.xlane.xlu0 %313
      %v315 = vsel %vm311, %v294, 0.0
      %316 = vadd.xlane.f32.xlu0 %v315
      %v317 = vpop.xlane.xlu0 %316
      %v318 = vsel %vm311, %v297, 0.0
      %319 = vadd.xlane.f32.xlu0 %v318
      %v320 = vpop.xlane.xlu0 %319
      %v321 = vsel %vm311, %v299, 0.0
      %322 = vadd.xlane.f32.xlu0 %v321
      %v323 = vpop.xlane.xlu0 %322
      %v324 = vsel %vm311, %v302, 0.0
      %325 = vadd.xlane.f32.xlu0 %v324
      %v326 = vpop.xlane.xlu0 %325
      %v327 = vsel %vm311, %v304, 0.0
      %328 = vadd.xlane.f32.xlu0 %v327
      %v329 = vpop.xlane.xlu0 %328
      %v330 = vsel %vm311, %v307, 0.0
      %331 = vadd.xlane.f32.xlu0 %v330
      %v332 = vpop.xlane.xlu0 %331
      %v333 = vsel %vm311, %v309, 0.0
      %334 = vadd.xlane.f32.xlu0 %v333
      %v335 = vpop.xlane.xlu0 %334
      %v336 = vrcp.pop 16.0
      %v337 = vmul.f32 16.0, %v336
      %v338 = vsub.f32 1.0, %v337
      %v339 = vmul.f32 %v336, %v338
      %v340 = vadd.f32 %v336, %v339
      %vm341 = vweird.f32 %v336
      %v342 = vsel %vm341, %v336, %v340
      %v343 = vmul.f32 %v314, %v342
      %v344 = vmul.f32 %v317, %v342
      %v345 = vmul.f32 %v320, %v342
      %v346 = vmul.f32 %v323, %v342
      %v347 = vmul.f32 %v326, %v342
      %v348 = vmul.f32 %v329, %v342
      %v349 = vmul.f32 %v332, %v342
      %v350 = vmul.f32 %v335, %v342
      %v351 = vsub.f32 %v292, %v343
      %v352 = vsub.f32 %v294, %v344
      %v353 = vsub.f32 %v297, %v345
      %v354 = vsub.f32 %v299, %v346
      %v355 = vsub.f32 %v302, %v347
      %v356 = vsub.f32 %v304, %v348
      %v357 = vsub.f32 %v307, %v349
      %v358 = vsub.f32 %v309, %v350
      %v359 = vmul.f32 %v351, %v351
      %v360 = vmul.f32 %v352, %v352
      %v361 = vmul.f32 %v353, %v353
      %v362 = vmul.f32 %v354, %v354
      %v363 = vmul.f32 %v355, %v355
      %v364 = vmul.f32 %v356, %v356
      %v365 = vmul.f32 %v357, %v357
      %v366 = vmul.f32 %v358, %v358
      %v367 = vsel %vm311, %v359, 0.0
      %368 = vadd.xlane.f32.xlu0 %v367
      %v369 = vpop.xlane.xlu0 %368
      %v370 = vsel %vm311, %v360, 0.0
      %371 = vadd.xlane.f32.xlu0 %v370
      %v372 = vpop.xlane.xlu0 %371
      %v373 = vsel %vm311, %v361, 0.0
      %374 = vadd.xlane.f32.xlu0 %v373
      %v375 = vpop.xlane.xlu0 %374
      %v376 = vsel %vm311, %v362, 0.0
      %377 = vadd.xlane.f32.xlu0 %v376
      %v378 = vpop.xlane.xlu0 %377
      %v379 = vsel %vm311, %v363, 0.0
      %380 = vadd.xlane.f32.xlu0 %v379
      %v381 = vpop.xlane.xlu0 %380
      %v382 = vsel %vm311, %v364, 0.0
      %383 = vadd.xlane.f32.xlu0 %v382
      %v384 = vpop.xlane.xlu0 %383
      %v385 = vsel %vm311, %v365, 0.0
      %386 = vadd.xlane.f32.xlu0 %v385
      %v387 = vpop.xlane.xlu0 %386
      %v388 = vsel %vm311, %v366, 0.0
      %389 = vadd.xlane.f32.xlu0 %v388
      %v390 = vpop.xlane.xlu0 %389
      %v391 = vmul.f32 %v369, %v342
      %v392 = vmul.f32 %v372, %v342
      %v393 = vmul.f32 %v375, %v342
      %v394 = vmul.f32 %v378, %v342
      %v395 = vmul.f32 %v381, %v342
      %v396 = vmul.f32 %v384, %v342
      %v397 = vmul.f32 %v387, %v342
      %v398 = vmul.f32 %v390, %v342
      %v399 = vadd.f32 %v391, 1e-05
      %v400 = vadd.f32 %v392, 1e-05
      %v401 = vadd.f32 %v393, 1e-05
      %v402 = vadd.f32 %v394, 1e-05
      %v403 = vadd.f32 %v395, 1e-05
      %v404 = vadd.f32 %v396, 1e-05
      %v405 = vadd.f32 %v397, 1e-05
      %v406 = vadd.f32 %v398, 1e-05
      %v407 = vrsqrt.pop %v399
      %v408 = vmul.f32 %v407, %v399
      %v409 = vmul.f32 %v408, %v407
      %v410 = vmul.f32 0.5, %v409
      %v411 = vsub.f32 1.5, %v410
      %v412 = vmul.f32 %v407, %v411
      %vm413 = vweird.f32 %v399
      %vm414 = vweird.f32 %v407
      %vm415 = vmor %vm413, %vm414
      %v416 = vsel %vm415, %v407, %v412
      %v417 = vrsqrt.pop %v400
      %v418 = vmul.f32 %v417, %v400
      %v419 = vmul.f32 %v418, %v417
      %v420 = vmul.f32 0.5, %v419
      %v421 = vsub.f32 1.5, %v420
      %v422 = vmul.f32 %v417, %v421
      %vm423 = vweird.f32 %v400
      %vm424 = vweird.f32 %v417
      %vm425 = vmor %vm423, %vm424
      %v426 = vsel %vm425, %v417, %v422
      %v427 = vrsqrt.pop %v401
      %v428 = vmul.f32 %v427, %v401
      %v429 = vmul.f32 %v428, %v427
      %v430 = vmul.f32 0.5, %v429
      %v431 = vsub.f32 1.5, %v430
      %v432 = vmul.f32 %v427, %v431
      %vm433 = vweird.f32 %v401
      %vm434 = vweird.f32 %v427
      %vm435 = vmor %vm433, %vm434
      %v436 = vsel %vm435, %v427, %v432
      %v437 = vrsqrt.pop %v402
      %v438 = vmul.f32 %v437, %v402
      %v439 = vmul.f32 %v438, %v437
      %v440 = vmul.f32 0.5, %v439
      %v441 = vsub.f32 1.5, %v440
      %v442 = vmul.f32 %v437, %v441
      %vm443 = vweird.f32 %v402
      %vm444 = vweird.f32 %v437
      %vm445 = vmor %vm443, %vm444
      %v446 = vsel %vm445, %v437, %v442
      %v447 = vrsqrt.pop %v403
      %v448 = vmul.f32 %v447, %v403
      %v449 = vmul.f32 %v448, %v447
      %v450 = vmul.f32 0.5, %v449
      %v451 = vsub.f32 1.5, %v450
      %v452 = vmul.f32 %v447, %v451
      %vm453 = vweird.f32 %v403
      %vm454 = vweird.f32 %v447
      %vm455 = vmor %vm453, %vm454
      %v456 = vsel %vm455, %v447, %v452
      %v457 = vrsqrt.pop %v404
      %v458 = vmul.f32 %v457, %v404
      %v459 = vmul.f32 %v458, %v457
      %v460 = vmul.f32 0.5, %v459
      %v461 = vsub.f32 1.5, %v460
      %v462 = vmul.f32 %v457, %v461
      %vm463 = vweird.f32 %v404
      %vm464 = vweird.f32 %v457
      %vm465 = vmor %vm463, %vm464
      %v466 = vsel %vm465, %v457, %v462
      %v467 = vrsqrt.pop %v405
      %v468 = vmul.f32 %v467, %v405
      %v469 = vmul.f32 %v468, %v467
      %v470 = vmul.f32 0.5, %v469
      %v471 = vsub.f32 1.5, %v470
      %v472 = vmul.f32 %v467, %v471
      %vm473 = vweird.f32 %v405
      %vm474 = vweird.f32 %v467
      %vm475 = vmor %vm473, %vm474
      %v476 = vsel %vm475, %v467, %v472
      %v477 = vrsqrt.pop %v406
      %v478 = vmul.f32 %v477, %v406
      %v479 = vmul.f32 %v478, %v477
      %v480 = vmul.f32 0.5, %v479
      %v481 = vsub.f32 1.5, %v480
      %v482 = vmul.f32 %v477, %v481
      %vm483 = vweird.f32 %v406
      %vm484 = vweird.f32 %v477
      %vm485 = vmor %vm483, %vm484
      %v486 = vsel %vm485, %v477, %v482
      %v487 = vmul.f32 %v351, %v416
      %v488 = vmul.f32 %v352, %v426
      %v489 = vmul.f32 %v353, %v436
      %v490 = vmul.f32 %v354, %v446
      %v491 = vmul.f32 %v355, %v456
      %v492 = vmul.f32 %v356, %v466
      %v493 = vmul.f32 %v357, %v476
      %v494 = vmul.f32 %v358, %v486
      %v495 = vld [vmem:[%s3] sm:$0x1]
      %v497 = vperm.slane %v495, 0
      %v499 = vmul.f32 %v487, %v497
      %v500 = vmul.f32 %v488, %v497
      %v501 = vmul.f32 %v489, %v497
      %v502 = vmul.f32 %v490, %v497
      %v503 = vmul.f32 %v491, %v497
      %v504 = vmul.f32 %v492, %v497
      %v505 = vmul.f32 %v493, %v497
      %v506 = vmul.f32 %v494, %v497
      %v507 = vld [vmem:[%s4] sm:$0x1]
      %v509 = vperm.slane %v507, 0
      %v511 = vadd.f32 %v499, %v509
      %v512 = vadd.f32 %v500, %v509
      %v513 = vadd.f32 %v501, %v509
      %v514 = vadd.f32 %v502, %v509
      %v515 = vadd.f32 %v503, %v509
      %v516 = vadd.f32 %v504, %v509
      %v517 = vadd.f32 %v505, %v509
      %v518 = vadd.f32 %v506, %v509
      %v519 = vpack.c.bf16 %v511, %v511
      %v520 = vpack.c.bf16 %v512, %v512
      %v521 = vpack.c.bf16 %v513, %v513
      %v522 = vpack.c.bf16 %v514, %v514
      %v523 = vpack.c.bf16 %v515, %v515
      %v524 = vpack.c.bf16 %v516, %v516
      %v525 = vpack.c.bf16 %v517, %v517
      %v526 = vpack.c.bf16 %v518, %v518
      %vm527 = vcmask 125952
      %528 = vst.msk [vmem:[%s226] sm:$0xf] %vm527, %v519
      %529 = vst.msk [vmem:[%s226 + $0x4] sm:$0xf] %vm527, %v520
      %530 = vst.msk [vmem:[%s226 + $0x8] sm:$0xf] %vm527, %v521
      %531 = vst.msk [vmem:[%s226 + $0xc] sm:$0xf] %vm527, %v522
      %532 = vst.msk [vmem:[%s226 + $0x10] sm:$0xf] %vm527, %v523
      %533 = vst.msk [vmem:[%s226 + $0x14] sm:$0xf] %vm527, %v524
      %534 = vst.msk [vmem:[%s226 + $0x18] sm:$0xf] %vm527, %v525
      %535 = vst.msk [vmem:[%s226 + $0x1c] sm:$0xf] %vm527, %v526
      %s536 = smul.u32 8, %s16
      %p537 = scmp.lt.s32.totalorder %s536, 15
      %s538 = scalar_select %p537, %s536, 15
      %s539 = smul.addr %s538, 4
      %s540 = scalar_lea.vmem %s5, %s539
      // Predicated region
      $region41: #{lit_forward.36} parent=39 // pred_check
        %p541 = pneg %p144
      $region42: #{lit_forward.36} parent=39 // pred_check_branch
        %543 = sbr.rel (%p541) target = $region44
      $region43: #{lit_forward.36} parent=39 // pred_region
        %s544 = smul.u32 8, %s16
      $region44: #{lit_forward.36} parent=39 // pred_fallthru
        _
    $region40: #{lit_forward.36} parent=5 // pred_fallthru
      _
    %p545 = scmp.le.s32.totalorder 2, %s11
    // Predicated region
    $region45: #{lit_forward.36} parent=5 // pred_check
      %p546 = pneg %p545
    $region46: #{lit_forward.36} parent=5 // pred_check_branch
      %548 = sbr.rel (%p546) target = $region48
    $region47: #{lit_forward.36} parent=5 // pred_region
      %s549 = ssub.s32 %s11, 2
      // Predicated region
      $region49: #{lit_forward.36} parent=47 // pred_check
        %p550 = pneg %p150
      $region50: #{lit_forward.36} parent=47 // pred_check_branch
        %552 = sbr.rel (%p550) target = $region52
      $region51: #{lit_forward.36} parent=47 // pred_region
        %s553 = smul.u32 8, %s17
        %p554 = scmp.lt.s32.totalorder %s553, 15
        %s555 = scalar_select %p554, %s553, 15
        %s556 = smul.addr %s555, 4
        %s557 = scalar_lea.vmem %s5, %s556
      $region52: #{lit_forward.36} parent=47 // pred_fallthru
        _
    $region48: #{lit_forward.36} parent=5 // pred_fallthru
      _
  $region6: #{lit_forward.36} parent=0 // loop_footer
    %s15 = sadd.s32 1, %s11
  $region7: #{lit_forward.36} parent=0 // loop_footer_branch
    %10 = sbr.rel target = $region3
  $region8: #{lit_forward.36} parent=0 // loop_exit
    _

// kernel: lit_forward.38
$region0: #{lit_forward.38}
  #allocation0 [shape = 'u32[]', space=smem, size = 0x4, offset = 0x4, fixed_abs, tag = 'smem constant byte address 0x4 - core index']
  #allocation1 [shape = 'u32[72,128]{1,0:T(1,128)}', space=vmem, size = 0x9000, scoped, tag = 'internal scratch']
  %s0 = inlined_call_operand.vmem [shape: bf16[128,64], index: 0, kind: input, shape index: {}]
  %s1 = inlined_call_operand.vmem [shape: bf16[64,16], index: 1, kind: input, shape index: {}]
  %s2 = inlined_call_operand.vmem [shape: f32[1,16], index: 2, kind: input, shape index: {}]
  %s3 = inlined_call_operand.vmem [shape: bf16[128,16], index: 3, kind: input, shape index: {}]
  %s4 = inlined_call_operand.vmem [shape: bf16[128,16], index: 4, kind: output, shape index: {}]
  %s5 = sld [smem:[#allocation0]]
  $region49: #{lit_forward.38} parent=0
    _
  %s7 = ssub.s32 1, %s5
  %s8 = scalar_select 0, %s7, %s5
  loop: start=0, step=1, limit=4
  $region2: #{lit_forward.38} parent=0 // loop_pre_header
    _
  $region3: #{lit_forward.38} parent=0 // loop_header
    %s10 = sphi 0, %s14
    %p11 = scmp.ge.s32.totalorder %s10, 4
    %s20 = sphi 0, %s22
    %s23 = sphi 0, %s20
    %s24 = sphi 0, %s23
    %s40 = sphi 0, %s24
    %s44 = sphi 0, %s44
    %s46 = sphi 0, %s44
    %s47 = sphi 0, %s46
    %s61 = sphi 0, %s47
    %s65 = sphi 0, %s65
    %s67 = sphi 0, %s65
    %s68 = sphi 0, %s67
    %s82 = sphi 0, %s68
    %s88 = sphi 0, %s90
    %s91 = sphi 0, %s88
    %s92 = sphi 0, %s91
    %s108 = sphi 0, %s92
    %s114 = sphi 0, %s116
    %s117 = sphi 0, %s114
    %s118 = sphi 0, %s117
    %s134 = sphi 0, %s118
  $region4: #{lit_forward.38} parent=0 // loop_header_branch
    %13 = sbr.rel (%p11) target = $region8
  $region5: #{lit_forward.38} parent=0 // loop_body
    %s15 = ssub.s32 %s10, 1
    %s16 = ssub.s32 %s10, 2
    %s17 = sadd.s32 %s10, 1
    %s18 = ssub.s32 %s10, %s17
    %p19 = scmp.eq.s32.totalorder %s18, 0
    %s21 = sadd.s32 %s20, 1
    %s22 = scalar_select %p19, %s20, %s21
    %p25 = pneg %p19
    %p26 = scmp.eq.s32.totalorder %s10, 1
    %p27 = por %p25, %p26
    %p28 = scmp.ne.s32.totalorder %s20, %s23
    %p29 = scmp.eq.s32.totalorder %s10, 0
    %p30 = por %p28, %p29
    %p31 = scmp.ne.s32.totalorder %s20, %s23
    %p32 = scmp.eq.s32.totalorder %s15, 1
    %p33 = por %p31, %p32
    %p34 = scmp.ne.s32.totalorder %s23, %s24
    %p35 = scmp.eq.s32.totalorder %s15, 0
    %p36 = por %p34, %p35
    %p37 = scmp.ne.s32.totalorder %s23, %s24
    %p38 = scmp.eq.s32.totalorder %s16, 1
    %p39 = por %p37, %p38
    %p41 = scmp.ne.s32.totalorder %s24, %s40
    %p42 = scmp.eq.s32.totalorder %s16, 0
    %p43 = por %p41, %p42
    %s45 = sadd.s32 %s44, 1
    %p48 = scmp.eq.s32.totalorder %s10, 1
    %p49 = scmp.ne.s32.totalorder %s44, %s46
    %p50 = scmp.eq.s32.totalorder %s10, 0
    %p51 = por %p49, %p50
    %p52 = scmp.ne.s32.totalorder %s44, %s46
    %p53 = scmp.eq.s32.totalorder %s15, 1
    %p54 = por %p52, %p53
    %p55 = scmp.ne.s32.totalorder %s46, %s47
    %p56 = scmp.eq.s32.totalorder %s15, 0
    %p57 = por %p55, %p56
    %p58 = scmp.ne.s32.totalorder %s46, %s47
    %p59 = scmp.eq.s32.totalorder %s16, 1
    %p60 = por %p58, %p59
    %p62 = scmp.ne.s32.totalorder %s47, %s61
    %p63 = scmp.eq.s32.totalorder %s16, 0
    %p64 = por %p62, %p63
    %s66 = sadd.s32 %s65, 1
    %p69 = scmp.eq.s32.totalorder %s10, 1
    %p70 = scmp.ne.s32.totalorder %s65, %s67
    %p71 = scmp.eq.s32.totalorder %s10, 0
    %p72 = por %p70, %p71
    %p73 = scmp.ne.s32.totalorder %s65, %s67
    %p74 = scmp.eq.s32.totalorder %s15, 1
    %p75 = por %p73, %p74
    %p76 = scmp.ne.s32.totalorder %s67, %s68
    %p77 = scmp.eq.s32.totalorder %s15, 0
    %p78 = por %p76, %p77
    %p79 = scmp.ne.s32.totalorder %s67, %s68
    %p80 = scmp.eq.s32.totalorder %s16, 1
    %p81 = por %p79, %p80
    %p83 = scmp.ne.s32.totalorder %s68, %s82
    %p84 = scmp.eq.s32.totalorder %s16, 0
    %p85 = por %p83, %p84
    %s86 = ssub.s32 %s10, %s17
    %p87 = scmp.eq.s32.totalorder %s86, 0
    %s89 = sadd.s32 %s88, 1
    %s90 = scalar_select %p87, %s88, %s89
    %p93 = pneg %p87
    %p94 = scmp.eq.s32.totalorder %s10, 1
    %p95 = por %p93, %p94
    %p96 = scmp.ne.s32.totalorder %s88, %s91
    %p97 = scmp.eq.s32.totalorder %s10, 0
    %p98 = por %p96, %p97
    %p99 = scmp.ne.s32.totalorder %s88, %s91
    %p100 = scmp.eq.s32.totalorder %s15, 1
    %p101 = por %p99, %p100
    %p102 = scmp.ne.s32.totalorder %s91, %s92
    %p103 = scmp.eq.s32.totalorder %s15, 0
    %p104 = por %p102, %p103
    %p105 = scmp.ne.s32.totalorder %s91, %s92
    %p106 = scmp.eq.s32.totalorder %s16, 1
    %p107 = por %p105, %p106
    %p109 = scmp.ne.s32.totalorder %s92, %s108
    %p110 = scmp.eq.s32.totalorder %s16, 0
    %p111 = por %p109, %p110
    %s112 = ssub.s32 %s10, %s17
    %p113 = scmp.eq.s32.totalorder %s112, 0
    %s115 = sadd.s32 %s114, 1
    %s116 = scalar_select %p113, %s114, %s115
    %p119 = pneg %p113
    %p120 = scmp.eq.s32.totalorder %s10, 1
    %p121 = por %p119, %p120
    %p122 = scmp.ne.s32.totalorder %s114, %s117
    %p123 = scmp.eq.s32.totalorder %s10, 0
    %p124 = por %p122, %p123
    %p125 = scmp.ne.s32.totalorder %s114, %s117
    %p126 = scmp.eq.s32.totalorder %s15, 1
    %p127 = por %p125, %p126
    %p128 = scmp.ne.s32.totalorder %s117, %s118
    %p129 = scmp.eq.s32.totalorder %s15, 0
    %p130 = por %p128, %p129
    %p131 = scmp.ne.s32.totalorder %s117, %s118
    %p132 = scmp.eq.s32.totalorder %s16, 1
    %p133 = por %p131, %p132
    %p135 = scmp.ne.s32.totalorder %s118, %s134
    %p136 = scmp.eq.s32.totalorder %s16, 0
    %p137 = por %p135, %p136
    %p138 = scmp.le.s32.totalorder 1, %s10
    %p139 = scmp.lt.s32.totalorder %s10, 3
    %p140 = pnand %p138, %p139
    %p141 = pneg %p140
    // Predicated region
    $region9: #{lit_forward.38} parent=5 // pred_check
      _
    $region10: #{lit_forward.38} parent=5 // pred_check_branch
      %143 = sbr.rel (%p140) target = $region12
    $region11: #{lit_forward.38} parent=5 // pred_region
      %s144 = ssub.s32 %s10, 1
      // Predicated region
      $region13: #{lit_forward.38} parent=11 // pred_check
        %p145 = pneg %p57
      $region14: #{lit_forward.38} parent=11 // pred_check_branch
        %147 = sbr.rel (%p145) target = $region16
      $region15: #{lit_forward.38} parent=11 // pred_region
        _
      $region16: #{lit_forward.38} parent=11 // pred_fallthru
        _
      // Predicated region
      $region17: #{lit_forward.38} parent=11 // pred_check
        %p148 = pneg %p78
      $region18: #{lit_forward.38} parent=11 // pred_check_branch
        %150 = sbr.rel (%p148) target = $region20
      $region19: #{lit_forward.38} parent=11 // pred_region
        _
      $region20: #{lit_forward.38} parent=11 // pred_fallthru
        _
    $region12: #{lit_forward.38} parent=5 // pred_fallthru
      _
    %p151 = scmp.lt.s32.totalorder %s10, 2
    // Predicated region
    $region21: #{lit_forward.38} parent=5 // pred_check
      %p152 = pneg %p151
    $region22: #{lit_forward.38} parent=5 // pred_check_branch
      %154 = sbr.rel (%p152) target = $region24
    $region23: #{lit_forward.38} parent=5 // pred_region
      // Predicated region
      $region25: #{lit_forward.38} parent=23 // pred_check
        %p155 = pneg %p30
      $region26: #{lit_forward.38} parent=23 // pred_check_branch
        %157 = sbr.rel (%p155) target = $region28
      $region27: #{lit_forward.38} parent=23 // pred_region
        %s158 = smul.u32 8, %s10
        %p159 = scmp.lt.s32.totalorder %s158, 15
        %s160 = scalar_select %p159, %s158, 15
        %s161 = smul.addr %s160, 4
        %s162 = scalar_lea.vmem %s0, %s161
        %s163 = smul.u32 8, %s10
      $region28: #{lit_forward.38} parent=23 // pred_fallthru
        _
      // Predicated region
      $region29: #{lit_forward.38} parent=23 // pred_check
        %p164 = pneg %p98
      $region30: #{lit_forward.38} parent=23 // pred_check_branch
        %166 = sbr.rel (%p164) target = $region32
      $region31: #{lit_forward.38} parent=23 // pred_region
        %s167 = smul.u32 8, %s10
        %p168 = scmp.lt.s32.totalorder %s167, 15
        %s169 = scalar_select %p168, %s167, 15
        %s170 = smul.addr %s169, 4
        %s171 = scalar_lea.vmem %s3, %s170
        %s172 = smul.u32 8, %s10
      $region32: #{lit_forward.38} parent=23 // pred_fallthru
        _
    $region24: #{lit_forward.38} parent=5 // pred_fallthru
      _
    %p173 = scmp.le.s32.totalorder 1, %s10
    %p174 = scmp.lt.s32.totalorder %s10, 3
    %p175 = pnand %p173, %p174
    %p176 = pneg %p175
    // Predicated region
    $region33: #{lit_forward.38} parent=5 // pred_check
      _
    $region34: #{lit_forward.38} parent=5 // pred_check_branch
      %178 = sbr.rel (%p175) target = $region36
    $region35: #{lit_forward.38} parent=5 // pred_region
      %s179 = ssub.s32 %s10, 1
      %s180 = smul.u32 8, %s15
      %p181 = scmp.lt.s32.totalorder %s180, 15
      %s182 = scalar_select %p181, %s180, 15
      %s183 = smul.addr %s182, 4
      %s184 = scalar_lea.vmem %s0, %s183
      %p185 = pneg %p36
      %p186 = pneg %p33
      %p187 = pneg %p57
      %p188 = pneg %p54
      %p189 = pneg %p78
      %p190 = pneg %p75
      %s191 = smul.u32 8, %s15
      %p192 = scmp.lt.s32.totalorder %s191, 15
      %s193 = scalar_select %p192, %s191, 15
      %s194 = smul.addr %s193, 4
      %s195 = scalar_lea.vmem %s3, %s194
      %p196 = pneg %p104
      %p197 = pneg %p101
      %p198 = pneg %p130
      %p199 = pneg %p127
      %s200 = smul.u32 8, %s15
      %p201 = scmp.lt.s32.totalorder %s200, 15
      %s202 = scalar_select %p201, %s200, 15
      %s203 = smul.addr %s202, 4
      %s204 = scalar_lea.vmem %s4, %s203
      %s205 = smul.u32 8, %s15
      %p206 = scmp.lt.s32.totalorder %s205, 15
      %s207 = scalar_select %p206, %s205, 15
      %s208 = smul.addr %s207, 4
      %s209 = scalar_lea.vmem %s0, %s208
      %s210 = smul.u32 8, %s15
      %s211 = smul.u32 8, %s15
      %p212 = scmp.lt.s32.totalorder %s211, 15
      %s213 = scalar_select %p212, %s211, 15
      %s214 = smul.addr %s213, 4
      %s215 = scalar_lea.vmem %s3, %s214
      %s216 = smul.u32 8, %s15
      %s217 = smul.u32 8, %s15
      %p218 = scmp.lt.s32.totalorder %s217, 15
      %s219 = scalar_select %p218, %s217, 15
      %s220 = smul.addr %s219, 4
      %s221 = scalar_lea.vmem %s4, %s220
      %s222 = smul.u32 8, %s15
      %v224 = vld [vmem:[%s209] sm:$0xf]
      %v225 = vld [vmem:[%s209 + $0x4] sm:$0xf]
      %v226 = vld [vmem:[%s209 + $0x8] sm:$0xf]
      %v227 = vld [vmem:[%s209 + $0xc] sm:$0xf]
      %v228 = vld [vmem:[%s209 + $0x10] sm:$0xf]
      %v229 = vld [vmem:[%s209 + $0x14] sm:$0xf]
      %v230 = vld [vmem:[%s209 + $0x18] sm:$0xf]
      %v231 = vld [vmem:[%s209 + $0x1c] sm:$0xf]
      %v232 = vld [vmem:[%s1] sm:$0xf]
      %v233 = vld [vmem:[%s1 + $0x4] sm:$0xf]
      %v234 = vld [vmem:[%s1 + $0x8] sm:$0xf]
      %v235 = vld [vmem:[%s1 + $0xc] sm:$0xf]
      %v236 = vld [vmem:[%s1 + $0x10] sm:$0xf]
      %v237 = vld [vmem:[%s1 + $0x14] sm:$0xf]
      %v238 = vld [vmem:[%s1 + $0x18] sm:$0xf]
      %v239 = vld [vmem:[%s1 + $0x1c] sm:$0xf]
      %v240 = vld [vmem:[%s2] sm:$0x1]
      %v242 = vperm.slane %v240, 0
      %v252 = vunpack.c.l.b16 %v224
      %v253 = vunpack.c.l.b16 %v225
      %v254 = vunpack.c.l.b16 %v226
      %v255 = vunpack.c.l.b16 %v227
      %v256 = vunpack.c.l.b16 %v228
      %v257 = vunpack.c.l.b16 %v229
      %v258 = vunpack.c.l.b16 %v230
      %v259 = vunpack.c.l.b16 %v231
      %v260 = vpack.c.b16 %v253, %v252
      %v261 = vpack.c.b16 %v255, %v254
      %v262 = vpack.c.b16 %v257, %v256
      %v263 = vpack.c.b16 %v259, %v258
      %v272 = vunpack.c.l.b16 %v232
      %v273 = vunpack.c.l.b16 %v233
      %v274 = vunpack.c.l.b16 %v234
      %v275 = vunpack.c.l.b16 %v235
      %v276 = vunpack.c.l.b16 %v236
      %v277 = vunpack.c.l.b16 %v237
      %v278 = vunpack.c.l.b16 %v238
      %v279 = vunpack.c.l.b16 %v239
      %v280 = vpack.c.b16 %v273, %v272
      %v281 = vpack.c.b16 %v275, %v274
      %v282 = vpack.c.b16 %v277, %v276
      %v283 = vpack.c.b16 %v279, %v278
      %vm288 = vcmask 523264
      %v290 = vsel %vm288, %v260, 0
      %v293 = vsel %vm288, %v261, 0
      %v296 = vsel %vm288, %v262, 0
      %v299 = vsel %vm288, %v263, 0
      %301 = vmatpush.bf16.msra.mxu0 0
      %302 = vmatpush.bf16.msra.mxu0 0
      %303 = vmatpush.bf16.msra.mxu0 0
      %304 = vmatpush.bf16.msra.mxu0 0
      %305 = vmatpush.bf16.msra.mxu0 %v283
      %306 = vmatpush.bf16.msra.mxu0 %v282
      %307 = vmatpush.bf16.msra.mxu0 %v281
      %308 = vmatpush.bf16.msra.mxu0 %v280
      %309 = vmatmul.bf16.gmra.mxu0 %v290
      %v310 = vpop.f32.mrf.mxu0
      %v311 = vadd.f32 %v242, %v310
      %v312 = vpop.f32.mrf.mxu0
      %v313 = vadd.f32 %v242, %v312
      %314 = vmatmul.bf16.gmra.mxu0 %v293
      %v315 = vpop.f32.mrf.mxu0
      %v316 = vadd.f32 %v242, %v315
      %v317 = vpop.f32.mrf.mxu0
      %v318 = vadd.f32 %v242, %v317
      %319 = vmatmul.bf16.gmra.mxu0 %v296
      %v320 = vpop.f32.mrf.mxu0
      %v321 = vadd.f32 %v242, %v320
      %v322 = vpop.f32.mrf.mxu0
      %v323 = vadd.f32 %v242, %v322
      %324 = vmatmul.bf16.gmra.mxu0 %v299
      %v325 = vpop.f32.mrf.mxu0
      %v326 = vadd.f32 %v242, %v325
      %v327 = vpop.f32.mrf.mxu0
      %v328 = vadd.f32 %v242, %v327
      %329 = vdwg.mxu0
      %v330 = vld [vmem:[%s215] sm:$0xf]
      %v331 = vld [vmem:[%s215 + $0x4] sm:$0xf]
      %v332 = vld [vmem:[%s215 + $0x8] sm:$0xf]
      %v333 = vld [vmem:[%s215 + $0xc] sm:$0xf]
      %v334 = vld [vmem:[%s215 + $0x10] sm:$0xf]
      %v335 = vld [vmem:[%s215 + $0x14] sm:$0xf]
      %v336 = vld [vmem:[%s215 + $0x18] sm:$0xf]
      %v337 = vld [vmem:[%s215 + $0x1c] sm:$0xf]
      %v338 = vunpack.c.l.bf16 %v330
      %v339 = vunpack.c.l.bf16 %v331
      %v340 = vunpack.c.l.bf16 %v332
      %v341 = vunpack.c.l.bf16 %v333
      %v342 = vunpack.c.l.bf16 %v334
      %v343 = vunpack.c.l.bf16 %v335
      %v344 = vunpack.c.l.bf16 %v336
      %v345 = vunpack.c.l.bf16 %v337
      %v346 = vadd.f32 %v311, %v338
      %v347 = vadd.f32 %v313, %v339
      %v348 = vadd.f32 %v316, %v340
      %v349 = vadd.f32 %v318, %v341
      %v350 = vadd.f32 %v321, %v342
      %v351 = vadd.f32 %v323, %v343
      %v352 = vadd.f32 %v326, %v344
      %v353 = vadd.f32 %v328, %v345
      %v354 = vpack.c.bf16 %v346, %v346
      %v355 = vpack.c.bf16 %v347, %v347
      %v356 = vpack.c.bf16 %v348, %v348
      %v357 = vpack.c.bf16 %v349, %v349
      %v358 = vpack.c.bf16 %v350, %v350
      %v359 = vpack.c.bf16 %v351, %v351
      %v360 = vpack.c.bf16 %v352, %v352
      %v361 = vpack.c.bf16 %v353, %v353
      %vm362 = vcmask 125952
      %363 = vst.msk [vmem:[%s221] sm:$0xf] %vm362, %v354
      %364 = vst.msk [vmem:[%s221 + $0x4] sm:$0xf] %vm362, %v355
      %365 = vst.msk [vmem:[%s221 + $0x8] sm:$0xf] %vm362, %v356
      %366 = vst.msk [vmem:[%s221 + $0xc] sm:$0xf] %vm362, %v357
      %367 = vst.msk [vmem:[%s221 + $0x10] sm:$0xf] %vm362, %v358
      %368 = vst.msk [vmem:[%s221 + $0x14] sm:$0xf] %vm362, %v359
      %369 = vst.msk [vmem:[%s221 + $0x18] sm:$0xf] %vm362, %v360
      %370 = vst.msk [vmem:[%s221 + $0x1c] sm:$0xf] %vm362, %v361
      %s371 = smul.u32 8, %s15
      %p372 = scmp.lt.s32.totalorder %s371, 15
      %s373 = scalar_select %p372, %s371, 15
      %s374 = smul.addr %s373, 4
      %s375 = scalar_lea.vmem %s4, %s374
      // Predicated region
      $region37: #{lit_forward.38} parent=35 // pred_check
        %p376 = pneg %p127
      $region38: #{lit_forward.38} parent=35 // pred_check_branch
        %378 = sbr.rel (%p376) target = $region40
      $region39: #{lit_forward.38} parent=35 // pred_region
        %s379 = smul.u32 8, %s15
      $region40: #{lit_forward.38} parent=35 // pred_fallthru
        _
    $region36: #{lit_forward.38} parent=5 // pred_fallthru
      _
    %p380 = scmp.le.s32.totalorder 2, %s10
    // Predicated region
    $region41: #{lit_forward.38} parent=5 // pred_check
      %p381 = pneg %p380
    $region42: #{lit_forward.38} parent=5 // pred_check_branch
      %383 = sbr.rel (%p381) target = $region44
    $region43: #{lit_forward.38} parent=5 // pred_region
      %s384 = ssub.s32 %s10, 2
      // Predicated region
      $region45: #{lit_forward.38} parent=43 // pred_check
        %p385 = pneg %p133
      $region46: #{lit_forward.38} parent=43 // pred_check_branch
        %387 = sbr.rel (%p385) target = $region48
      $region47: #{lit_forward.38} parent=43 // pred_region
        %s388 = smul.u32 8, %s16
        %p389 = scmp.lt.s32.totalorder %s388, 15
        %s390 = scalar_select %p389, %s388, 15
        %s391 = smul.addr %s390, 4
        %s392 = scalar_lea.vmem %s4, %s391
      $region48: #{lit_forward.38} parent=43 // pred_fallthru
        _
    $region44: #{lit_forward.38} parent=5 // pred_fallthru
      _
  $region6: #{lit_forward.38} parent=0 // loop_footer
    %s14 = sadd.s32 1, %s10
  $region7: #{lit_forward.38} parent=0 // loop_footer_branch
    %9 = sbr.rel target = $region3
  $region8: #{lit_forward.38} parent=0 // loop_exit
    _

// kernel: lit_forward.41
$region0: #{lit_forward.41}
  #allocation0 [shape = 'u32[]', space=smem, size = 0x4, offset = 0x4, fixed_abs, tag = 'smem constant byte address 0x4 - core index']
  #allocation1 [shape = 'u32[72,128]{1,0:T(1,128)}', space=vmem, size = 0x9000, scoped, tag = 'internal scratch']
  %s0 = inlined_call_operand.vmem [shape: bf16[32,64], index: 0, kind: input, shape index: {}]
  %s1 = inlined_call_operand.vmem [shape: bf16[64,8], index: 1, kind: input, shape index: {}]
  %s2 = inlined_call_operand.vmem [shape: f32[1,8], index: 2, kind: input, shape index: {}]
  %s3 = inlined_call_operand.vmem [shape: f32[32,8], index: 3, kind: output, shape index: {}]
  %s4 = sld [smem:[#allocation0]]
  $region45: #{lit_forward.41} parent=0
    _
  %s6 = ssub.s32 1, %s4
  %s7 = scalar_select 0, %s6, %s4
  loop: start=0, step=1, limit=4
  $region2: #{lit_forward.41} parent=0 // loop_pre_header
    _
  $region3: #{lit_forward.41} parent=0 // loop_header
    %s9 = sphi 0, %s13
    %p10 = scmp.ge.s32.totalorder %s9, 4
    %s19 = sphi 0, %s21
    %s22 = sphi 0, %s19
    %s23 = sphi 0, %s22
    %s39 = sphi 0, %s23
    %s43 = sphi 0, %s43
    %s45 = sphi 0, %s43
    %s46 = sphi 0, %s45
    %s60 = sphi 0, %s46
    %s64 = sphi 0, %s64
    %s66 = sphi 0, %s64
    %s67 = sphi 0, %s66
    %s81 = sphi 0, %s67
    %s87 = sphi 0, %s89
    %s90 = sphi 0, %s87
    %s91 = sphi 0, %s90
    %s107 = sphi 0, %s91
  $region4: #{lit_forward.41} parent=0 // loop_header_branch
    %12 = sbr.rel (%p10) target = $region8
  $region5: #{lit_forward.41} parent=0 // loop_body
    %s14 = ssub.s32 %s9, 1
    %s15 = ssub.s32 %s9, 2
    %s16 = sadd.s32 %s9, 1
    %s17 = ssub.s32 %s9, %s16
    %p18 = scmp.eq.s32.totalorder %s17, 0
    %s20 = sadd.s32 %s19, 1
    %s21 = scalar_select %p18, %s19, %s20
    %p24 = pneg %p18
    %p25 = scmp.eq.s32.totalorder %s9, 1
    %p26 = por %p24, %p25
    %p27 = scmp.ne.s32.totalorder %s19, %s22
    %p28 = scmp.eq.s32.totalorder %s9, 0
    %p29 = por %p27, %p28
    %p30 = scmp.ne.s32.totalorder %s19, %s22
    %p31 = scmp.eq.s32.totalorder %s14, 1
    %p32 = por %p30, %p31
    %p33 = scmp.ne.s32.totalorder %s22, %s23
    %p34 = scmp.eq.s32.totalorder %s14, 0
    %p35 = por %p33, %p34
    %p36 = scmp.ne.s32.totalorder %s22, %s23
    %p37 = scmp.eq.s32.totalorder %s15, 1
    %p38 = por %p36, %p37
    %p40 = scmp.ne.s32.totalorder %s23, %s39
    %p41 = scmp.eq.s32.totalorder %s15, 0
    %p42 = por %p40, %p41
    %s44 = sadd.s32 %s43, 1
    %p47 = scmp.eq.s32.totalorder %s9, 1
    %p48 = scmp.ne.s32.totalorder %s43, %s45
    %p49 = scmp.eq.s32.totalorder %s9, 0
    %p50 = por %p48, %p49
    %p51 = scmp.ne.s32.totalorder %s43, %s45
    %p52 = scmp.eq.s32.totalorder %s14, 1
    %p53 = por %p51, %p52
    %p54 = scmp.ne.s32.totalorder %s45, %s46
    %p55 = scmp.eq.s32.totalorder %s14, 0
    %p56 = por %p54, %p55
    %p57 = scmp.ne.s32.totalorder %s45, %s46
    %p58 = scmp.eq.s32.totalorder %s15, 1
    %p59 = por %p57, %p58
    %p61 = scmp.ne.s32.totalorder %s46, %s60
    %p62 = scmp.eq.s32.totalorder %s15, 0
    %p63 = por %p61, %p62
    %s65 = sadd.s32 %s64, 1
    %p68 = scmp.eq.s32.totalorder %s9, 1
    %p69 = scmp.ne.s32.totalorder %s64, %s66
    %p70 = scmp.eq.s32.totalorder %s9, 0
    %p71 = por %p69, %p70
    %p72 = scmp.ne.s32.totalorder %s64, %s66
    %p73 = scmp.eq.s32.totalorder %s14, 1
    %p74 = por %p72, %p73
    %p75 = scmp.ne.s32.totalorder %s66, %s67
    %p76 = scmp.eq.s32.totalorder %s14, 0
    %p77 = por %p75, %p76
    %p78 = scmp.ne.s32.totalorder %s66, %s67
    %p79 = scmp.eq.s32.totalorder %s15, 1
    %p80 = por %p78, %p79
    %p82 = scmp.ne.s32.totalorder %s67, %s81
    %p83 = scmp.eq.s32.totalorder %s15, 0
    %p84 = por %p82, %p83
    %s85 = ssub.s32 %s9, %s16
    %p86 = scmp.eq.s32.totalorder %s85, 0
    %s88 = sadd.s32 %s87, 1
    %s89 = scalar_select %p86, %s87, %s88
    %p92 = pneg %p86
    %p93 = scmp.eq.s32.totalorder %s9, 1
    %p94 = por %p92, %p93
    %p95 = scmp.ne.s32.totalorder %s87, %s90
    %p96 = scmp.eq.s32.totalorder %s9, 0
    %p97 = por %p95, %p96
    %p98 = scmp.ne.s32.totalorder %s87, %s90
    %p99 = scmp.eq.s32.totalorder %s14, 1
    %p100 = por %p98, %p99
    %p101 = scmp.ne.s32.totalorder %s90, %s91
    %p102 = scmp.eq.s32.totalorder %s14, 0
    %p103 = por %p101, %p102
    %p104 = scmp.ne.s32.totalorder %s90, %s91
    %p105 = scmp.eq.s32.totalorder %s15, 1
    %p106 = por %p104, %p105
    %p108 = scmp.ne.s32.totalorder %s91, %s107
    %p109 = scmp.eq.s32.totalorder %s15, 0
    %p110 = por %p108, %p109
    %p111 = scmp.le.s32.totalorder 1, %s9
    %p112 = scmp.lt.s32.totalorder %s9, 3
    %p113 = pnand %p111, %p112
    %p114 = pneg %p113
    // Predicated region
    $region9: #{lit_forward.41} parent=5 // pred_check
      _
    $region10: #{lit_forward.41} parent=5 // pred_check_branch
      %116 = sbr.rel (%p113) target = $region12
    $region11: #{lit_forward.41} parent=5 // pred_region
      %s117 = ssub.s32 %s9, 1
      // Predicated region
      $region13: #{lit_forward.41} parent=11 // pred_check
        %p118 = pneg %p56
      $region14: #{lit_forward.41} parent=11 // pred_check_branch
        %120 = sbr.rel (%p118) target = $region16
      $region15: #{lit_forward.41} parent=11 // pred_region
        _
      $region16: #{lit_forward.41} parent=11 // pred_fallthru
        _
      // Predicated region
      $region17: #{lit_forward.41} parent=11 // pred_check
        %p121 = pneg %p77
      $region18: #{lit_forward.41} parent=11 // pred_check_branch
        %123 = sbr.rel (%p121) target = $region20
      $region19: #{lit_forward.41} parent=11 // pred_region
        _
      $region20: #{lit_forward.41} parent=11 // pred_fallthru
        _
    $region12: #{lit_forward.41} parent=5 // pred_fallthru
      _
    %p124 = scmp.lt.s32.totalorder %s9, 2
    // Predicated region
    $region21: #{lit_forward.41} parent=5 // pred_check
      %p125 = pneg %p124
    $region22: #{lit_forward.41} parent=5 // pred_check_branch
      %127 = sbr.rel (%p125) target = $region24
    $region23: #{lit_forward.41} parent=5 // pred_region
      // Predicated region
      $region25: #{lit_forward.41} parent=23 // pred_check
        %p128 = pneg %p29
      $region26: #{lit_forward.41} parent=23 // pred_check_branch
        %130 = sbr.rel (%p128) target = $region28
      $region27: #{lit_forward.41} parent=23 // pred_region
        %s131 = smul.u32 2, %s9
        %p132 = scmp.lt.s32.totalorder %s131, 3
        %s133 = scalar_select %p132, %s131, 3
        %s134 = smul.addr %s133, 4
        %s135 = scalar_lea.vmem %s0, %s134
        %s136 = smul.u32 2, %s9
      $region28: #{lit_forward.41} parent=23 // pred_fallthru
        _
    $region24: #{lit_forward.41} parent=5 // pred_fallthru
      _
    %p137 = scmp.le.s32.totalorder 1, %s9
    %p138 = scmp.lt.s32.totalorder %s9, 3
    %p139 = pnand %p137, %p138
    %p140 = pneg %p139
    // Predicated region
    $region29: #{lit_forward.41} parent=5 // pred_check
      _
    $region30: #{lit_forward.41} parent=5 // pred_check_branch
      %142 = sbr.rel (%p139) target = $region32
    $region31: #{lit_forward.41} parent=5 // pred_region
      %s143 = ssub.s32 %s9, 1
      %s144 = smul.u32 2, %s14
      %p145 = scmp.lt.s32.totalorder %s144, 3
      %s146 = scalar_select %p145, %s144, 3
      %s147 = smul.addr %s146, 4
      %s148 = scalar_lea.vmem %s0, %s147
      %p149 = pneg %p35
      %p150 = pneg %p32
      %p151 = pneg %p56
      %p152 = pneg %p53
      %p153 = pneg %p77
      %p154 = pneg %p74
      %p155 = pneg %p103
      %p156 = pneg %p100
      %s157 = smul.u32 2, %s14
      %p158 = scmp.lt.s32.totalorder %s157, 3
      %s159 = scalar_select %p158, %s157, 3
      %s160 = smul.addr %s159, 8
      %s161 = scalar_lea.vmem %s3, %s160
      %s162 = smul.u32 2, %s14
      %p163 = scmp.lt.s32.totalorder %s162, 3
      %s164 = scalar_select %p163, %s162, 3
      %s165 = smul.addr %s164, 4
      %s166 = scalar_lea.vmem %s0, %s165
      %s167 = smul.u32 2, %s14
      %s168 = smul.u32 2, %s14
      %p169 = scmp.lt.s32.totalorder %s168, 3
      %s170 = scalar_select %p169, %s168, 3
      %s171 = smul.addr %s170, 8
      %s172 = scalar_lea.vmem %s3, %s171
      %s173 = smul.u32 2, %s14
      %v175 = vld [vmem:[%s166] sm:$0xf]
      %v176 = vld [vmem:[%s166 + $0x4] sm:$0xf]
      %v177 = vld [vmem:[%s1] sm:$0xf]
      %v178 = vld [vmem:[%s1 + $0x4] sm:$0xf]
      %v179 = vld [vmem:[%s1 + $0x8] sm:$0xf]
      %v180 = vld [vmem:[%s1 + $0xc] sm:$0xf]
      %v181 = vld [vmem:[%s1 + $0x10] sm:$0xf]
      %v182 = vld [vmem:[%s1 + $0x14] sm:$0xf]
      %v183 = vld [vmem:[%s1 + $0x18] sm:$0xf]
      %v184 = vld [vmem:[%s1 + $0x1c] sm:$0xf]
      %v185 = vld [vmem:[%s2] sm:$0x1]
      %v187 = vperm.slane %v185, 0
      %v191 = vunpack.c.l.b16 %v175
      %v192 = vunpack.c.l.b16 %v176
      %v193 = vpack.c.b16 %v192, %v191
      %v202 = vunpack.c.l.b16 %v177
      %v203 = vunpack.c.l.b16 %v178
      %v204 = vunpack.c.l.b16 %v179
      %v205 = vunpack.c.l.b16 %v180
      %v206 = vunpack.c.l.b16 %v181
      %v207 = vunpack.c.l.b16 %v182
      %v208 = vunpack.c.l.b16 %v183
      %v209 = vunpack.c.l.b16 %v184
      %v210 = vpack.c.b16 %v203, %v202
      %v211 = vpack.c.b16 %v205, %v204
      %v212 = vpack.c.b16 %v207, %v206
      %v213 = vpack.c.b16 %v209, %v208
      %vm218 = vcmask 523264
      %v220 = vsel %vm218, %v193, 0
      %222 = vmatpush.bf16.msra.mxu0 0
      %223 = vmatpush.bf16.msra.mxu0 0
      %224 = vmatpush.bf16.msra.mxu0 0
      %225 = vmatpush.bf16.msra.mxu0 0
      %226 = vmatpush.bf16.msra.mxu0 %v213
      %227 = vmatpush.bf16.msra.mxu0 %v212
      %228 = vmatpush.bf16.msra.mxu0 %v211
      %229 = vmatpush.bf16.msra.mxu0 %v210
      %230 = vmatmul.bf16.gmra.mxu0 %v220
      %v231 = vpop.f32.mrf.mxu0
      %v232 = vadd.f32 %v187, %v231
      %v233 = vpop.f32.mrf.mxu0
      %v234 = vadd.f32 %v187, %v233
      %235 = vdwg.mxu0
      %vm236 = vcmask 64512
      %237 = vst.msk [vmem:[%s172] sm:$0xff] %vm236, %v232
      %238 = vst.msk [vmem:[%s172 + $0x8] sm:$0xff] %vm236, %v234
      %s239 = smul.u32 2, %s14
      %p240 = scmp.lt.s32.totalorder %s239, 3
      %s241 = scalar_select %p240, %s239, 3
      %s242 = smul.addr %s241, 8
      %s243 = scalar_lea.vmem %s3, %s242
      // Predicated region
      $region33: #{lit_forward.41} parent=31 // pred_check
        %p244 = pneg %p100
      $region34: #{lit_forward.41} parent=31 // pred_check_branch
        %246 = sbr.rel (%p244) target = $region36
      $region35: #{lit_forward.41} parent=31 // pred_region
        %s247 = smul.u32 2, %s14
      $region36: #{lit_forward.41} parent=31 // pred_fallthru
        _
    $region32: #{lit_forward.41} parent=5 // pred_fallthru
      _
    %p248 = scmp.le.s32.totalorder 2, %s9
    // Predicated region
    $region37: #{lit_forward.41} parent=5 // pred_check
      %p249 = pneg %p248
    $region38: #{lit_forward.41} parent=5 // pred_check_branch
      %251 = sbr.rel (%p249) target = $region40
    $region39: #{lit_forward.41} parent=5 // pred_region
      %s252 = ssub.s32 %s9, 2
      // Predicated region
      $region41: #{lit_forward.41} parent=39 // pred_check
        %p253 = pneg %p106
      $region42: #{lit_forward.41} parent=39 // pred_check_branch
        %255 = sbr.rel (%p253) target = $region44
      $region43: #{lit_forward.41} parent=39 // pred_region
        %s256 = smul.u32 2, %s15
        %p257 = scmp.lt.s32.totalorder %s256, 3
        %s258 = scalar_select %p257, %s256, 3
        %s259 = smul.addr %s258, 8
        %s260 = scalar_lea.vmem %s3, %s259
      $region44: #{lit_forward.41} parent=39 // pred_fallthru
        _
    $region40: #{lit_forward.41} parent=5 // pred_fallthru
      _
  $region6: #{lit_forward.41} parent=0 // loop_footer
    %s13 = sadd.s32 1, %s9
  $region7: #{lit_forward.41} parent=0 // loop_footer_branch
    %8 = sbr.rel target = $region3
  $region8: #{lit_forward.41} parent=0 // loop_exit
    _

// kernel: lit_forward.42
$region0: #{lit_forward.42}
  #allocation0 [shape = 'u32[]', space=smem, size = 0x4, offset = 0x4, fixed_abs, tag = 'smem constant byte address 0x4 - core index']
  #allocation1 [shape = 'u32[72,128]{1,0:T(1,128)}', space=vmem, size = 0x9000, scoped, tag = 'internal scratch']
  %s0 = inlined_call_operand.vmem [shape: f32[32,64], index: 0, kind: input, shape index: {}]
  %s1 = inlined_call_operand.vmem [shape: bf16[64,32], index: 1, kind: input, shape index: {}]
  %s2 = inlined_call_operand.vmem [shape: f32[1,32], index: 2, kind: input, shape index: {}]
  %s3 = inlined_call_operand.vmem [shape: bf16[32,32], index: 3, kind: output, shape index: {}]
  %s4 = sld [smem:[#allocation0]]
  $region45: #{lit_forward.42} parent=0
    _
  %s6 = ssub.s32 1, %s4
  %s7 = scalar_select 0, %s6, %s4
  loop: start=0, step=1, limit=4
  $region2: #{lit_forward.42} parent=0 // loop_pre_header
    _
  $region3: #{lit_forward.42} parent=0 // loop_header
    %s9 = sphi 0, %s13
    %p10 = scmp.ge.s32.totalorder %s9, 4
    %s19 = sphi 0, %s21
    %s22 = sphi 0, %s19
    %s23 = sphi 0, %s22
    %s39 = sphi 0, %s23
    %s43 = sphi 0, %s43
    %s45 = sphi 0, %s43
    %s46 = sphi 0, %s45
    %s60 = sphi 0, %s46
    %s64 = sphi 0, %s64
    %s66 = sphi 0, %s64
    %s67 = sphi 0, %s66
    %s81 = sphi 0, %s67
    %s87 = sphi 0, %s89
    %s90 = sphi 0, %s87
    %s91 = sphi 0, %s90
    %s107 = sphi 0, %s91
  $region4: #{lit_forward.42} parent=0 // loop_header_branch
    %12 = sbr.rel (%p10) target = $region8
  $region5: #{lit_forward.42} parent=0 // loop_body
    %s14 = ssub.s32 %s9, 1
    %s15 = ssub.s32 %s9, 2
    %s16 = sadd.s32 %s9, 1
    %s17 = ssub.s32 %s9, %s16
    %p18 = scmp.eq.s32.totalorder %s17, 0
    %s20 = sadd.s32 %s19, 1
    %s21 = scalar_select %p18, %s19, %s20
    %p24 = pneg %p18
    %p25 = scmp.eq.s32.totalorder %s9, 1
    %p26 = por %p24, %p25
    %p27 = scmp.ne.s32.totalorder %s19, %s22
    %p28 = scmp.eq.s32.totalorder %s9, 0
    %p29 = por %p27, %p28
    %p30 = scmp.ne.s32.totalorder %s19, %s22
    %p31 = scmp.eq.s32.totalorder %s14, 1
    %p32 = por %p30, %p31
    %p33 = scmp.ne.s32.totalorder %s22, %s23
    %p34 = scmp.eq.s32.totalorder %s14, 0
    %p35 = por %p33, %p34
    %p36 = scmp.ne.s32.totalorder %s22, %s23
    %p37 = scmp.eq.s32.totalorder %s15, 1
    %p38 = por %p36, %p37
    %p40 = scmp.ne.s32.totalorder %s23, %s39
    %p41 = scmp.eq.s32.totalorder %s15, 0
    %p42 = por %p40, %p41
    %s44 = sadd.s32 %s43, 1
    %p47 = scmp.eq.s32.totalorder %s9, 1
    %p48 = scmp.ne.s32.totalorder %s43, %s45
    %p49 = scmp.eq.s32.totalorder %s9, 0
    %p50 = por %p48, %p49
    %p51 = scmp.ne.s32.totalorder %s43, %s45
    %p52 = scmp.eq.s32.totalorder %s14, 1
    %p53 = por %p51, %p52
    %p54 = scmp.ne.s32.totalorder %s45, %s46
    %p55 = scmp.eq.s32.totalorder %s14, 0
    %p56 = por %p54, %p55
    %p57 = scmp.ne.s32.totalorder %s45, %s46
    %p58 = scmp.eq.s32.totalorder %s15, 1
    %p59 = por %p57, %p58
    %p61 = scmp.ne.s32.totalorder %s46, %s60
    %p62 = scmp.eq.s32.totalorder %s15, 0
    %p63 = por %p61, %p62
    %s65 = sadd.s32 %s64, 1
    %p68 = scmp.eq.s32.totalorder %s9, 1
    %p69 = scmp.ne.s32.totalorder %s64, %s66
    %p70 = scmp.eq.s32.totalorder %s9, 0
    %p71 = por %p69, %p70
    %p72 = scmp.ne.s32.totalorder %s64, %s66
    %p73 = scmp.eq.s32.totalorder %s14, 1
    %p74 = por %p72, %p73
    %p75 = scmp.ne.s32.totalorder %s66, %s67
    %p76 = scmp.eq.s32.totalorder %s14, 0
    %p77 = por %p75, %p76
    %p78 = scmp.ne.s32.totalorder %s66, %s67
    %p79 = scmp.eq.s32.totalorder %s15, 1
    %p80 = por %p78, %p79
    %p82 = scmp.ne.s32.totalorder %s67, %s81
    %p83 = scmp.eq.s32.totalorder %s15, 0
    %p84 = por %p82, %p83
    %s85 = ssub.s32 %s9, %s16
    %p86 = scmp.eq.s32.totalorder %s85, 0
    %s88 = sadd.s32 %s87, 1
    %s89 = scalar_select %p86, %s87, %s88
    %p92 = pneg %p86
    %p93 = scmp.eq.s32.totalorder %s9, 1
    %p94 = por %p92, %p93
    %p95 = scmp.ne.s32.totalorder %s87, %s90
    %p96 = scmp.eq.s32.totalorder %s9, 0
    %p97 = por %p95, %p96
    %p98 = scmp.ne.s32.totalorder %s87, %s90
    %p99 = scmp.eq.s32.totalorder %s14, 1
    %p100 = por %p98, %p99
    %p101 = scmp.ne.s32.totalorder %s90, %s91
    %p102 = scmp.eq.s32.totalorder %s14, 0
    %p103 = por %p101, %p102
    %p104 = scmp.ne.s32.totalorder %s90, %s91
    %p105 = scmp.eq.s32.totalorder %s15, 1
    %p106 = por %p104, %p105
    %p108 = scmp.ne.s32.totalorder %s91, %s107
    %p109 = scmp.eq.s32.totalorder %s15, 0
    %p110 = por %p108, %p109
    %p111 = scmp.le.s32.totalorder 1, %s9
    %p112 = scmp.lt.s32.totalorder %s9, 3
    %p113 = pnand %p111, %p112
    %p114 = pneg %p113
    // Predicated region
    $region9: #{lit_forward.42} parent=5 // pred_check
      _
    $region10: #{lit_forward.42} parent=5 // pred_check_branch
      %116 = sbr.rel (%p113) target = $region12
    $region11: #{lit_forward.42} parent=5 // pred_region
      %s117 = ssub.s32 %s9, 1
      // Predicated region
      $region13: #{lit_forward.42} parent=11 // pred_check
        %p118 = pneg %p56
      $region14: #{lit_forward.42} parent=11 // pred_check_branch
        %120 = sbr.rel (%p118) target = $region16
      $region15: #{lit_forward.42} parent=11 // pred_region
        _
      $region16: #{lit_forward.42} parent=11 // pred_fallthru
        _
      // Predicated region
      $region17: #{lit_forward.42} parent=11 // pred_check
        %p121 = pneg %p77
      $region18: #{lit_forward.42} parent=11 // pred_check_branch
        %123 = sbr.rel (%p121) target = $region20
      $region19: #{lit_forward.42} parent=11 // pred_region
        _
      $region20: #{lit_forward.42} parent=11 // pred_fallthru
        _
    $region12: #{lit_forward.42} parent=5 // pred_fallthru
      _
    %p124 = scmp.lt.s32.totalorder %s9, 2
    // Predicated region
    $region21: #{lit_forward.42} parent=5 // pred_check
      %p125 = pneg %p124
    $region22: #{lit_forward.42} parent=5 // pred_check_branch
      %127 = sbr.rel (%p125) target = $region24
    $region23: #{lit_forward.42} parent=5 // pred_region
      // Predicated region
      $region25: #{lit_forward.42} parent=23 // pred_check
        %p128 = pneg %p29
      $region26: #{lit_forward.42} parent=23 // pred_check_branch
        %130 = sbr.rel (%p128) target = $region28
      $region27: #{lit_forward.42} parent=23 // pred_region
        %s131 = smul.u32 2, %s9
        %p132 = scmp.lt.s32.totalorder %s131, 3
        %s133 = scalar_select %p132, %s131, 3
        %s134 = smul.addr %s133, 8
        %s135 = scalar_lea.vmem %s0, %s134
        %s136 = smul.u32 2, %s9
      $region28: #{lit_forward.42} parent=23 // pred_fallthru
        _
    $region24: #{lit_forward.42} parent=5 // pred_fallthru
      _
    %p137 = scmp.le.s32.totalorder 1, %s9
    %p138 = scmp.lt.s32.totalorder %s9, 3
    %p139 = pnand %p137, %p138
    %p140 = pneg %p139
    // Predicated region
    $region29: #{lit_forward.42} parent=5 // pred_check
      _
    $region30: #{lit_forward.42} parent=5 // pred_check_branch
      %142 = sbr.rel (%p139) target = $region32
    $region31: #{lit_forward.42} parent=5 // pred_region
      %s143 = ssub.s32 %s9, 1
      %s144 = smul.u32 2, %s14
      %p145 = scmp.lt.s32.totalorder %s144, 3
      %s146 = scalar_select %p145, %s144, 3
      %s147 = smul.addr %s146, 8
      %s148 = scalar_lea.vmem %s0, %s147
      %p149 = pneg %p35
      %p150 = pneg %p32
      %p151 = pneg %p56
      %p152 = pneg %p53
      %p153 = pneg %p77
      %p154 = pneg %p74
      %p155 = pneg %p103
      %p156 = pneg %p100
      %s157 = smul.u32 2, %s14
      %p158 = scmp.lt.s32.totalorder %s157, 3
      %s159 = scalar_select %p158, %s157, 3
      %s160 = smul.addr %s159, 4
      %s161 = scalar_lea.vmem %s3, %s160
      %s162 = smul.u32 2, %s14
      %p163 = scmp.lt.s32.totalorder %s162, 3
      %s164 = scalar_select %p163, %s162, 3
      %s165 = smul.addr %s164, 8
      %s166 = scalar_lea.vmem %s0, %s165
      %s167 = smul.u32 2, %s14
      %s168 = smul.u32 2, %s14
      %p169 = scmp.lt.s32.totalorder %s168, 3
      %s170 = scalar_select %p169, %s168, 3
      %s171 = smul.addr %s170, 4
      %s172 = scalar_lea.vmem %s3, %s171
      %s173 = smul.u32 2, %s14
      %v175 = vld [vmem:[%s166] sm:$0xff]
      %v176 = vld [vmem:[%s166 + $0x8] sm:$0xff]
      %v177 = vpack.c.bf16 %v176, %v175
      %v178 = vld [vmem:[%s1] sm:$0xf]
      %v179 = vld [vmem:[%s1 + $0x4] sm:$0xf]
      %v180 = vld [vmem:[%s1 + $0x8] sm:$0xf]
      %v181 = vld [vmem:[%s1 + $0xc] sm:$0xf]
      %v182 = vld [vmem:[%s1 + $0x10] sm:$0xf]
      %v183 = vld [vmem:[%s1 + $0x14] sm:$0xf]
      %v184 = vld [vmem:[%s1 + $0x18] sm:$0xf]
      %v185 = vld [vmem:[%s1 + $0x1c] sm:$0xf]
      %v186 = vld [vmem:[%s2] sm:$0x1]
      %v188 = vperm.slane %v186, 0
      %v198 = vunpack.c.l.b16 %v178
      %v199 = vunpack.c.l.b16 %v179
      %v200 = vunpack.c.l.b16 %v180
      %v201 = vunpack.c.l.b16 %v181
      %v202 = vunpack.c.l.b16 %v182
      %v203 = vunpack.c.l.b16 %v183
      %v204 = vunpack.c.l.b16 %v184
      %v205 = vunpack.c.l.b16 %v185
      %v206 = vpack.c.b16 %v199, %v198
      %v207 = vpack.c.b16 %v201, %v200
      %v208 = vpack.c.b16 %v203, %v202
      %v209 = vpack.c.b16 %v205, %v204
      %vm214 = vcmask 523264
      %v216 = vsel %vm214, %v177, 0
      %218 = vmatpush.bf16.msra.mxu0 0
      %219 = vmatpush.bf16.msra.mxu0 0
      %220 = vmatpush.bf16.msra.mxu0 0
      %221 = vmatpush.bf16.msra.mxu0 0
      %222 = vmatpush.bf16.msra.mxu0 %v209
      %223 = vmatpush.bf16.msra.mxu0 %v208
      %224 = vmatpush.bf16.msra.mxu0 %v207
      %225 = vmatpush.bf16.msra.mxu0 %v206
      %226 = vmatmul.bf16.gmra.mxu0 %v216
      %v227 = vpop.f32.mrf.mxu0
      %v228 = vadd.f32 %v188, %v227
      %v229 = vpop.f32.mrf.mxu0
      %v230 = vadd.f32 %v188, %v229
      %231 = vdwg.mxu0
      %v232 = vmul.f32 %v228, 0.5
      %v233 = vmul.f32 %v230, 0.5
      %v234 = vmul.f32 %v228, 0.70710677
      %v235 = vmul.f32 %v230, 0.70710677
      %v236 = vmul.f32 %v234, %v234
      %v237 = vmin.f32 16.0, %v236
      %v238 = vmul.f32 %v237, 2.1237322e-06
      %v239 = vadd.f32 %v238, 0.00028619796
      %v240 = vmul.f32 %v237, %v239
      %v241 = vadd.f32 %v240, 0.0036580483
      %v242 = vmul.f32 %v237, %v241
      %v243 = vadd.f32 %v242, 0.05243302
      %v244 = vmul.f32 %v237, %v243
      %v245 = vadd.f32 %v244, 0.18741608
      %v246 = vmul.f32 %v237, %v245
      %v247 = vadd.f32 %v246, 1.1283791
      %v248 = vmul.f32 %v234, %v247
      %v249 = vmul.f32 %v237, 3.8918573e-05
      %v250 = vadd.f32 %v249, 0.001143296
      %v251 = vmul.f32 %v237, %v250
      %v252 = vadd.f32 %v251, 0.014752088
      %v253 = vmul.f32 %v237, %v252
      %v254 = vadd.f32 %v253, 0.112945676
      %v255 = vmul.f32 %v237, %v254
      %v256 = vadd.f32 %v255, 0.4994258
      %v257 = vmul.f32 %v237, %v256
      %v258 = vadd.f32 %v257, 1.0
      %v259 = vrcp.pop %v258
      %v260 = vmul.f32 %v258, %v259
      %v261 = vsub.f32 1.0, %v260
      %v262 = vmul.f32 %v259, %v261
      %v263 = vadd.f32 %v259, %v262
      %vm264 = vweird.f32 %v258
      %vm265 = vweird.f32 %v259
      %vm266 = vmor %vm264, %vm265
      %v267 = vsel %vm266, %v259, %v263
      %v268 = vand.u32 2147483647, %v258
      %vm269 = vcmp.eq.f32.partialorder %v268, 8.507059e+37
      %v270 = vand.u32 %v258, 2147483648
      %v271 = vor.u32 1.1754944e-38, %v270
      %v272 = vsel %vm269, %v271, %v267
      %v273 = vmul.f32 %v248, %v272
      %v274 = vmin.f32 %v273, 1.0
      %v275 = vmax.f32 %v274, -1.0
      %v276 = vmul.f32 %v235, %v235
      %v277 = vmin.f32 16.0, %v276
      %v278 = vmul.f32 %v277, 2.1237322e-06
      %v279 = vadd.f32 %v278, 0.00028619796
      %v280 = vmul.f32 %v277, %v279
      %v281 = vadd.f32 %v280, 0.0036580483
      %v282 = vmul.f32 %v277, %v281
      %v283 = vadd.f32 %v282, 0.05243302
      %v284 = vmul.f32 %v277, %v283
      %v285 = vadd.f32 %v284, 0.18741608
      %v286 = vmul.f32 %v277, %v285
      %v287 = vadd.f32 %v286, 1.1283791
      %v288 = vmul.f32 %v235, %v287
      %v289 = vmul.f32 %v277, 3.8918573e-05
      %v290 = vadd.f32 %v289, 0.001143296
      %v291 = vmul.f32 %v277, %v290
      %v292 = vadd.f32 %v291, 0.014752088
      %v293 = vmul.f32 %v277, %v292
      %v294 = vadd.f32 %v293, 0.112945676
      %v295 = vmul.f32 %v277, %v294
      %v296 = vadd.f32 %v295, 0.4994258
      %v297 = vmul.f32 %v277, %v296
      %v298 = vadd.f32 %v297, 1.0
      %v299 = vrcp.pop %v298
      %v300 = vmul.f32 %v298, %v299
      %v301 = vsub.f32 1.0, %v300
      %v302 = vmul.f32 %v299, %v301
      %v303 = vadd.f32 %v299, %v302
      %vm304 = vweird.f32 %v298
      %vm305 = vweird.f32 %v299
      %vm306 = vmor %vm304, %vm305
      %v307 = vsel %vm306, %v299, %v303
      %v308 = vand.u32 2147483647, %v298
      %vm309 = vcmp.eq.f32.partialorder %v308, 8.507059e+37
      %v310 = vand.u32 %v298, 2147483648
      %v311 = vor.u32 1.1754944e-38, %v310
      %v312 = vsel %vm309, %v311, %v307
      %v313 = vmul.f32 %v288, %v312
      %v314 = vmin.f32 %v313, 1.0
      %v315 = vmax.f32 %v314, -1.0
      %v316 = vadd.f32 %v275, 1.0
      %v317 = vadd.f32 %v315, 1.0
      %v318 = vmul.f32 %v232, %v316
      %v319 = vmul.f32 %v233, %v317
      %v320 = vpack.c.bf16 %v318, %v318
      %v321 = vpack.c.bf16 %v319, %v319
      %vm322 = vcmask 257024
      %323 = vst.msk [vmem:[%s172] sm:$0xf] %vm322, %v320
      %324 = vst.msk [vmem:[%s172 + $0x4] sm:$0xf] %vm322, %v321
      %s325 = smul.u32 2, %s14
      %p326 = scmp.lt.s32.totalorder %s325, 3
      %s327 = scalar_select %p326, %s325, 3
      %s328 = smul.addr %s327, 4
      %s329 = scalar_lea.vmem %s3, %s328
      // Predicated region
      $region33: #{lit_forward.42} parent=31 // pred_check
        %p330 = pneg %p100
      $region34: #{lit_forward.42} parent=31 // pred_check_branch
        %332 = sbr.rel (%p330) target = $region36
      $region35: #{lit_forward.42} parent=31 // pred_region
        %s333 = smul.u32 2, %s14
      $region36: #{lit_forward.42} parent=31 // pred_fallthru
        _
    $region32: #{lit_forward.42} parent=5 // pred_fallthru
      _
    %p334 = scmp.le.s32.totalorder 2, %s9
    // Predicated region
    $region37: #{lit_forward.42} parent=5 // pred_check
      %p335 = pneg %p334
    $region38: #{lit_forward.42} parent=5 // pred_check_branch
      %337 = sbr.rel (%p335) target = $region40
    $region39: #{lit_forward.42} parent=5 // pred_region
      %s338 = ssub.s32 %s9, 2
      // Predicated region
      $region41: #{lit_forward.42} parent=39 // pred_check
        %p339 = pneg %p106
      $region42: #{lit_forward.42} parent=39 // pred_check_branch
        %341 = sbr.rel (%p339) target = $region44
      $region43: #{lit_forward.42} parent=39 // pred_region
        %s342 = smul.u32 2, %s15
        %p343 = scmp.lt.s32.totalorder %s342, 3
        %s344 = scalar_select %p343, %s342, 3
        %s345 = smul.addr %s344, 4
        %s346 = scalar_lea.vmem %s3, %s345
      $region44: #{lit_forward.42} parent=39 // pred_fallthru
        _
    $region40: #{lit_forward.42} parent=5 // pred_fallthru
      _
  $region6: #{lit_forward.42} parent=0 // loop_footer
    %s13 = sadd.s32 1, %s9
  $region7: #{lit_forward.42} parent=0 // loop_footer_branch
    %8 = sbr.rel target = $region3
  $region8: #{lit_forward.42} parent=0 // loop_exit
    _

// kernel: lit_forward.43
$region0: #{lit_forward.43}
  #allocation0 [shape = 'u32[]', space=smem, size = 0x4, offset = 0x4, fixed_abs, tag = 'smem constant byte address 0x4 - core index']
  #allocation1 [shape = 'u32[72,128]{1,0:T(1,128)}', space=vmem, size = 0x9000, scoped, tag = 'internal scratch']
  %s0 = inlined_call_operand.vmem [shape: bf16[32,32], index: 0, kind: input, shape index: {}]
  %s1 = inlined_call_operand.vmem [shape: f32[1,32], index: 1, kind: input, shape index: {}]
  %s2 = inlined_call_operand.vmem [shape: f32[1,32], index: 2, kind: input, shape index: {}]
  %s3 = inlined_call_operand.vmem [shape: bf16[32,128], index: 3, kind: input, shape index: {}]
  %s4 = inlined_call_operand.vmem [shape: f32[1,128], index: 4, kind: input, shape index: {}]
  %s5 = inlined_call_operand.vmem [shape: bf16[32,128], index: 5, kind: output, shape index: {}]
  %s6 = sld [smem:[#allocation0]]
  $region53: #{lit_forward.43} parent=0
    _
  %s8 = ssub.s32 1, %s6
  %s9 = scalar_select 0, %s8, %s6
  loop: start=0, step=1, limit=4
  $region2: #{lit_forward.43} parent=0 // loop_pre_header
    _
  $region3: #{lit_forward.43} parent=0 // loop_header
    %s11 = sphi 0, %s15
    %p12 = scmp.ge.s32.totalorder %s11, 4
    %s21 = sphi 0, %s23
    %s24 = sphi 0, %s21
    %s25 = sphi 0, %s24
    %s41 = sphi 0, %s25
    %s45 = sphi 0, %s45
    %s47 = sphi 0, %s45
    %s48 = sphi 0, %s47
    %s62 = sphi 0, %s48
    %s66 = sphi 0, %s66
    %s68 = sphi 0, %s66
    %s69 = sphi 0, %s68
    %s83 = sphi 0, %s69
    %s87 = sphi 0, %s87
    %s89 = sphi 0, %s87
    %s90 = sphi 0, %s89
    %s104 = sphi 0, %s90
    %s108 = sphi 0, %s108
    %s110 = sphi 0, %s108
    %s111 = sphi 0, %s110
    %s125 = sphi 0, %s111
    %s131 = sphi 0, %s133
    %s134 = sphi 0, %s131
    %s135 = sphi 0, %s134
    %s151 = sphi 0, %s135
  $region4: #{lit_forward.43} parent=0 // loop_header_branch
    %14 = sbr.rel (%p12) target = $region8
  $region5: #{lit_forward.43} parent=0 // loop_body
    %s16 = ssub.s32 %s11, 1
    %s17 = ssub.s32 %s11, 2
    %s18 = sadd.s32 %s11, 1
    %s19 = ssub.s32 %s11, %s18
    %p20 = scmp.eq.s32.totalorder %s19, 0
    %s22 = sadd.s32 %s21, 1
    %s23 = scalar_select %p20, %s21, %s22
    %p26 = pneg %p20
    %p27 = scmp.eq.s32.totalorder %s11, 1
    %p28 = por %p26, %p27
    %p29 = scmp.ne.s32.totalorder %s21, %s24
    %p30 = scmp.eq.s32.totalorder %s11, 0
    %p31 = por %p29, %p30
    %p32 = scmp.ne.s32.totalorder %s21, %s24
    %p33 = scmp.eq.s32.totalorder %s16, 1
    %p34 = por %p32, %p33
    %p35 = scmp.ne.s32.totalorder %s24, %s25
    %p36 = scmp.eq.s32.totalorder %s16, 0
    %p37 = por %p35, %p36
    %p38 = scmp.ne.s32.totalorder %s24, %s25
    %p39 = scmp.eq.s32.totalorder %s17, 1
    %p40 = por %p38, %p39
    %p42 = scmp.ne.s32.totalorder %s25, %s41
    %p43 = scmp.eq.s32.totalorder %s17, 0
    %p44 = por %p42, %p43
    %s46 = sadd.s32 %s45, 1
    %p49 = scmp.eq.s32.totalorder %s11, 1
    %p50 = scmp.ne.s32.totalorder %s45, %s47
    %p51 = scmp.eq.s32.totalorder %s11, 0
    %p52 = por %p50, %p51
    %p53 = scmp.ne.s32.totalorder %s45, %s47
    %p54 = scmp.eq.s32.totalorder %s16, 1
    %p55 = por %p53, %p54
    %p56 = scmp.ne.s32.totalorder %s47, %s48
    %p57 = scmp.eq.s32.totalorder %s16, 0
    %p58 = por %p56, %p57
    %p59 = scmp.ne.s32.totalorder %s47, %s48
    %p60 = scmp.eq.s32.totalorder %s17, 1
    %p61 = por %p59, %p60
    %p63 = scmp.ne.s32.totalorder %s48, %s62
    %p64 = scmp.eq.s32.totalorder %s17, 0
    %p65 = por %p63, %p64
    %s67 = sadd.s32 %s66, 1
    %p70 = scmp.eq.s32.totalorder %s11, 1
    %p71 = scmp.ne.s32.totalorder %s66, %s68
    %p72 = scmp.eq.s32.totalorder %s11, 0
    %p73 = por %p71, %p72
    %p74 = scmp.ne.s32.totalorder %s66, %s68
    %p75 = scmp.eq.s32.totalorder %s16, 1
    %p76 = por %p74, %p75
    %p77 = scmp.ne.s32.totalorder %s68, %s69
    %p78 = scmp.eq.s32.totalorder %s16, 0
    %p79 = por %p77, %p78
    %p80 = scmp.ne.s32.totalorder %s68, %s69
    %p81 = scmp.eq.s32.totalorder %s17, 1
    %p82 = por %p80, %p81
    %p84 = scmp.ne.s32.totalorder %s69, %s83
    %p85 = scmp.eq.s32.totalorder %s17, 0
    %p86 = por %p84, %p85
    %s88 = sadd.s32 %s87, 1
    %p91 = scmp.eq.s32.totalorder %s11, 1
    %p92 = scmp.ne.s32.totalorder %s87, %s89
    %p93 = scmp.eq.s32.totalorder %s11, 0
    %p94 = por %p92, %p93
    %p95 = scmp.ne.s32.totalorder %s87, %s89
    %p96 = scmp.eq.s32.totalorder %s16, 1
    %p97 = por %p95, %p96
    %p98 = scmp.ne.s32.totalorder %s89, %s90
    %p99 = scmp.eq.s32.totalorder %s16, 0
    %p100 = por %p98, %p99
    %p101 = scmp.ne.s32.totalorder %s89, %s90
    %p102 = scmp.eq.s32.totalorder %s17, 1
    %p103 = por %p101, %p102
    %p105 = scmp.ne.s32.totalorder %s90, %s104
    %p106 = scmp.eq.s32.totalorder %s17, 0
    %p107 = por %p105, %p106
    %s109 = sadd.s32 %s108, 1
    %p112 = scmp.eq.s32.totalorder %s11, 1
    %p113 = scmp.ne.s32.totalorder %s108, %s110
    %p114 = scmp.eq.s32.totalorder %s11, 0
    %p115 = por %p113, %p114
    %p116 = scmp.ne.s32.totalorder %s108, %s110
    %p117 = scmp.eq.s32.totalorder %s16, 1
    %p118 = por %p116, %p117
    %p119 = scmp.ne.s32.totalorder %s110, %s111
    %p120 = scmp.eq.s32.totalorder %s16, 0
    %p121 = por %p119, %p120
    %p122 = scmp.ne.s32.totalorder %s110, %s111
    %p123 = scmp.eq.s32.totalorder %s17, 1
    %p124 = por %p122, %p123
    %p126 = scmp.ne.s32.totalorder %s111, %s125
    %p127 = scmp.eq.s32.totalorder %s17, 0
    %p128 = por %p126, %p127
    %s129 = ssub.s32 %s11, %s18
    %p130 = scmp.eq.s32.totalorder %s129, 0
    %s132 = sadd.s32 %s131, 1
    %s133 = scalar_select %p130, %s131, %s132
    %p136 = pneg %p130
    %p137 = scmp.eq.s32.totalorder %s11, 1
    %p138 = por %p136, %p137
    %p139 = scmp.ne.s32.totalorder %s131, %s134
    %p140 = scmp.eq.s32.totalorder %s11, 0
    %p141 = por %p139, %p140
    %p142 = scmp.ne.s32.totalorder %s131, %s134
    %p143 = scmp.eq.s32.totalorder %s16, 1
    %p144 = por %p142, %p143
    %p145 = scmp.ne.s32.totalorder %s134, %s135
    %p146 = scmp.eq.s32.totalorder %s16, 0
    %p147 = por %p145, %p146
    %p148 = scmp.ne.s32.totalorder %s134, %s135
    %p149 = scmp.eq.s32.totalorder %s17, 1
    %p150 = por %p148, %p149
    %p152 = scmp.ne.s32.totalorder %s135, %s151
    %p153 = scmp.eq.s32.totalorder %s17, 0
    %p154 = por %p152, %p153
    %p155 = scmp.le.s32.totalorder 1, %s11
    %p156 = scmp.lt.s32.totalorder %s11, 3
    %p157 = pnand %p155, %p156
    %p158 = pneg %p157
    // Predicated region
    $region9: #{lit_forward.43} parent=5 // pred_check
      _
    $region10: #{lit_forward.43} parent=5 // pred_check_branch
      %160 = sbr.rel (%p157) target = $region12
    $region11: #{lit_forward.43} parent=5 // pred_region
      %s161 = ssub.s32 %s11, 1
      // Predicated region
      $region13: #{lit_forward.43} parent=11 // pred_check
        %p162 = pneg %p58
      $region14: #{lit_forward.43} parent=11 // pred_check_branch
        %164 = sbr.rel (%p162) target = $region16
      $region15: #{lit_forward.43} parent=11 // pred_region
        _
      $region16: #{lit_forward.43} parent=11 // pred_fallthru
        _
      // Predicated region
      $region17: #{lit_forward.43} parent=11 // pred_check
        %p165 = pneg %p79
      $region18: #{lit_forward.43} parent=11 // pred_check_branch
        %167 = sbr.rel (%p165) target = $region20
      $region19: #{lit_forward.43} parent=11 // pred_region
        _
      $region20: #{lit_forward.43} parent=11 // pred_fallthru
        _
      // Predicated region
      $region21: #{lit_forward.43} parent=11 // pred_check
        %p168 = pneg %p100
      $region22: #{lit_forward.43} parent=11 // pred_check_branch
        %170 = sbr.rel (%p168) target = $region24
      $region23: #{lit_forward.43} parent=11 // pred_region
        _
      $region24: #{lit_forward.43} parent=11 // pred_fallthru
        _
      // Predicated region
      $region25: #{lit_forward.43} parent=11 // pred_check
        %p171 = pneg %p121
      $region26: #{lit_forward.43} parent=11 // pred_check_branch
        %173 = sbr.rel (%p171) target = $region28
      $region27: #{lit_forward.43} parent=11 // pred_region
        _
      $region28: #{lit_forward.43} parent=11 // pred_fallthru
        _
    $region12: #{lit_forward.43} parent=5 // pred_fallthru
      _
    %p174 = scmp.lt.s32.totalorder %s11, 2
    // Predicated region
    $region29: #{lit_forward.43} parent=5 // pred_check
      %p175 = pneg %p174
    $region30: #{lit_forward.43} parent=5 // pred_check_branch
      %177 = sbr.rel (%p175) target = $region32
    $region31: #{lit_forward.43} parent=5 // pred_region
      // Predicated region
      $region33: #{lit_forward.43} parent=31 // pred_check
        %p178 = pneg %p31
      $region34: #{lit_forward.43} parent=31 // pred_check_branch
        %180 = sbr.rel (%p178) target = $region36
      $region35: #{lit_forward.43} parent=31 // pred_region
        %s181 = smul.u32 2, %s11
        %p182 = scmp.lt.s32.totalorder %s181, 3
        %s183 = scalar_select %p182, %s181, 3
        %s184 = smul.addr %s183, 4
        %s185 = scalar_lea.vmem %s0, %s184
        %s186 = smul.u32 2, %s11
      $region36: #{lit_forward.43} parent=31 // pred_fallthru
        _
    $region32: #{lit_forward.43} parent=5 // pred_fallthru
      _
    %p187 = scmp.le.s32.totalorder 1, %s11
    %p188 = scmp.lt.s32.totalorder %s11, 3
    %p189 = pnand %p187, %p188
    %p190 = pneg %p189
    // Predicated region
    $region37: #{lit_forward.43} parent=5 // pred_check
      _
    $region38: #{lit_forward.43} parent=5 // pred_check_branch
      %192 = sbr.rel (%p189) target = $region40
    $region39: #{lit_forward.43} parent=5 // pred_region
      %s193 = ssub.s32 %s11, 1
      %s194 = smul.u32 2, %s16
      %p195 = scmp.lt.s32.totalorder %s194, 3
      %s196 = scalar_select %p195, %s194, 3
      %s197 = smul.addr %s196, 4
      %s198 = scalar_lea.vmem %s0, %s197
      %p199 = pneg %p37
      %p200 = pneg %p34
      %p201 = pneg %p58
      %p202 = pneg %p55
      %p203 = pneg %p79
      %p204 = pneg %p76
      %p205 = pneg %p100
      %p206 = pneg %p97
      %p207 = pneg %p121
      %p208 = pneg %p118
      %p209 = pneg %p147
      %p210 = pneg %p144
      %s211 = smul.u32 2, %s16
      %p212 = scmp.lt.s32.totalorder %s211, 3
      %s213 = scalar_select %p212, %s211, 3
      %s214 = smul.addr %s213, 4
      %s215 = scalar_lea.vmem %s5, %s214
      %s216 = smul.u32 2, %s16
      %p217 = scmp.lt.s32.totalorder %s216, 3
      %s218 = scalar_select %p217, %s216, 3
      %s219 = smul.addr %s218, 4
      %s220 = scalar_lea.vmem %s0, %s219
      %s221 = smul.u32 2, %s16
      %s222 = smul.u32 2, %s16
      %p223 = scmp.lt.s32.totalorder %s222, 3
      %s224 = scalar_select %p223, %s222, 3
      %s225 = smul.addr %s224, 4
      %s226 = scalar_lea.vmem %s5, %s225
      %s227 = smul.u32 2, %s16
      %v229 = vld [vmem:[%s220] sm:$0xf]
      %v230 = vld [vmem:[%s220 + $0x4] sm:$0xf]
      %v231 = vunpack.c.l.bf16 %v229
      %v232 = vunpack.c.l.bf16 %v230
      %vm233 = vcmask 261120
      %v234 = vsel %vm233, %v231, 0.0
      %235 = vadd.xlane.f32.xlu0 %v234
      %v236 = vpop.xlane.xlu0 %235
      %v237 = vsel %vm233, %v232, 0.0
      %238 = vadd.xlane.f32.xlu0 %v237
      %v239 = vpop.xlane.xlu0 %238
      %v240 = vrcp.pop 32.0
      %v241 = vmul.f32 32.0, %v240
      %v242 = vsub.f32 1.0, %v241
      %v243 = vmul.f32 %v240, %v242
      %v244 = vadd.f32 %v240, %v243
      %vm245 = vweird.f32 %v240
      %v246 = vsel %vm245, %v240, %v244
      %v247 = vmul.f32 %v236, %v246
      %v248 = vmul.f32 %v239, %v246
      %v249 = vsub.f32 %v231, %v247
      %v250 = vsub.f32 %v232, %v248
      %v251 = vmul.f32 %v249, %v249
      %v252 = vmul.f32 %v250, %v250
      %v253 = vsel %vm233, %v251, 0.0
      %254 = vadd.xlane.f32.xlu0 %v253
      %v255 = vpop.xlane.xlu0 %254
      %v256 = vsel %vm233, %v252, 0.0
      %257 = vadd.xlane.f32.xlu0 %v256
      %v258 = vpop.xlane.xlu0 %257
      %v259 = vmul.f32 %v255, %v246
      %v260 = vmul.f32 %v258, %v246
      %v261 = vadd.f32 %v259, 1e-05
      %v262 = vadd.f32 %v260, 1e-05
      %v263 = vrsqrt.pop %v261
      %v264 = vmul.f32 %v263, %v261
      %v265 = vmul.f32 %v264, %v263
      %v266 = vmul.f32 0.5, %v265
      %v267 = vsub.f32 1.5, %v266
      %v268 = vmul.f32 %v263, %v267
      %vm269 = vweird.f32 %v261
      %vm270 = vweird.f32 %v263
      %vm271 = vmor %vm269, %vm270
      %v272 = vsel %vm271, %v263, %v268
      %v273 = vrsqrt.pop %v262
      %v274 = vmul.f32 %v273, %v262
      %v275 = vmul.f32 %v274, %v273
      %v276 = vmul.f32 0.5, %v275
      %v277 = vsub.f32 1.5, %v276
      %v278 = vmul.f32 %v273, %v277
      %vm279 = vweird.f32 %v262
      %vm280 = vweird.f32 %v273
      %vm281 = vmor %vm279, %vm280
      %v282 = vsel %vm281, %v273, %v278
      %v283 = vmul.f32 %v249, %v272
      %v284 = vmul.f32 %v250, %v282
      %v285 = vld [vmem:[%s1] sm:$0x1]
      %v287 = vperm.slane %v285, 0
      %v289 = vmul.f32 %v283, %v287
      %v290 = vmul.f32 %v284, %v287
      %v291 = vld [vmem:[%s2] sm:$0x1]
      %v293 = vperm.slane %v291, 0
      %v295 = vadd.f32 %v289, %v293
      %v296 = vadd.f32 %v290, %v293
      %v297 = vpack.c.bf16 %v296, %v295
      %v298 = vld [vmem:[%s3] sm:$0xf]
      %v299 = vld [vmem:[%s3 + $0x4] sm:$0xf]
      %v300 = vld [vmem:[%s3 + $0x8] sm:$0xf]
      %v301 = vld [vmem:[%s3 + $0xc] sm:$0xf]
      %v302 = vld [vmem:[%s4] sm:$0x1]
      %v304 = vperm.slane %v302, 0
      %v310 = vunpack.c.l.b16 %v298
      %v311 = vunpack.c.l.b16 %v299
      %v312 = vunpack.c.l.b16 %v300
      %v313 = vunpack.c.l.b16 %v301
      %v314 = vpack.c.b16 %v311, %v310
      %v315 = vpack.c.b16 %v313, %v312
      %v319 = vsel %vm233, %v297, 0
      %321 = vmatpush.bf16.msra.mxu0 0
      %322 = vmatpush.bf16.msra.mxu0 0
      %323 = vmatpush.bf16.msra.mxu0 0
      %324 = vmatpush.bf16.msra.mxu0 0
      %325 = vmatpush.bf16.msra.mxu0 0
      %326 = vmatpush.bf16.msra.mxu0 0
      %327 = vmatpush.bf16.msra.mxu0 %v315
      %328 = vmatpush.bf16.msra.mxu0 %v314
      %329 = vmatmul.bf16.gmra.mxu0 %v319
      %v330 = vpop.f32.mrf.mxu0
      %v331 = vadd.f32 %v304, %v330
      %v332 = vpop.f32.mrf.mxu0
      %v333 = vadd.f32 %v304, %v332
      %334 = vdwg.mxu0
      %v335 = vmul.f32 %v331, 0.5
      %v336 = vmul.f32 %v333, 0.5
      %v337 = vmul.f32 %v331, 0.70710677
      %v338 = vmul.f32 %v333, 0.70710677
      %v339 = vmul.f32 %v337, %v337
      %v340 = vmin.f32 16.0, %v339
      %v341 = vmul.f32 %v340, 2.1237322e-06
      %v342 = vadd.f32 %v341, 0.00028619796
      %v343 = vmul.f32 %v340, %v342
      %v344 = vadd.f32 %v343, 0.0036580483
      %v345 = vmul.f32 %v340, %v344
      %v346 = vadd.f32 %v345, 0.05243302
      %v347 = vmul.f32 %v340, %v346
      %v348 = vadd.f32 %v347, 0.18741608
      %v349 = vmul.f32 %v340, %v348
      %v350 = vadd.f32 %v349, 1.1283791
      %v351 = vmul.f32 %v337, %v350
      %v352 = vmul.f32 %v340, 3.8918573e-05
      %v353 = vadd.f32 %v352, 0.001143296
      %v354 = vmul.f32 %v340, %v353
      %v355 = vadd.f32 %v354, 0.014752088
      %v356 = vmul.f32 %v340, %v355
      %v357 = vadd.f32 %v356, 0.112945676
      %v358 = vmul.f32 %v340, %v357
      %v359 = vadd.f32 %v358, 0.4994258
      %v360 = vmul.f32 %v340, %v359
      %v361 = vadd.f32 %v360, 1.0
      %v362 = vrcp.pop %v361
      %v363 = vmul.f32 %v361, %v362
      %v364 = vsub.f32 1.0, %v363
      %v365 = vmul.f32 %v362, %v364
      %v366 = vadd.f32 %v362, %v365
      %vm367 = vweird.f32 %v361
      %vm368 = vweird.f32 %v362
      %vm369 = vmor %vm367, %vm368
      %v370 = vsel %vm369, %v362, %v366
      %v371 = vand.u32 2147483647, %v361
      %vm372 = vcmp.eq.f32.partialorder %v371, 8.507059e+37
      %v373 = vand.u32 %v361, 2147483648
      %v374 = vor.u32 1.1754944e-38, %v373
      %v375 = vsel %vm372, %v374, %v370
      %v376 = vmul.f32 %v351, %v375
      %v377 = vmin.f32 %v376, 1.0
      %v378 = vmax.f32 %v377, -1.0
      %v379 = vmul.f32 %v338, %v338
      %v380 = vmin.f32 16.0, %v379
      %v381 = vmul.f32 %v380, 2.1237322e-06
      %v382 = vadd.f32 %v381, 0.00028619796
      %v383 = vmul.f32 %v380, %v382
      %v384 = vadd.f32 %v383, 0.0036580483
      %v385 = vmul.f32 %v380, %v384
      %v386 = vadd.f32 %v385, 0.05243302
      %v387 = vmul.f32 %v380, %v386
      %v388 = vadd.f32 %v387, 0.18741608
      %v389 = vmul.f32 %v380, %v388
      %v390 = vadd.f32 %v389, 1.1283791
      %v391 = vmul.f32 %v338, %v390
      %v392 = vmul.f32 %v380, 3.8918573e-05
      %v393 = vadd.f32 %v392, 0.001143296
      %v394 = vmul.f32 %v380, %v393
      %v395 = vadd.f32 %v394, 0.014752088
      %v396 = vmul.f32 %v380, %v395
      %v397 = vadd.f32 %v396, 0.112945676
      %v398 = vmul.f32 %v380, %v397
      %v399 = vadd.f32 %v398, 0.4994258
      %v400 = vmul.f32 %v380, %v399
      %v401 = vadd.f32 %v400, 1.0
      %v402 = vrcp.pop %v401
      %v403 = vmul.f32 %v401, %v402
      %v404 = vsub.f32 1.0, %v403
      %v405 = vmul.f32 %v402, %v404
      %v406 = vadd.f32 %v402, %v405
      %vm407 = vweird.f32 %v401
      %vm408 = vweird.f32 %v402
      %vm409 = vmor %vm407, %vm408
      %v410 = vsel %vm409, %v402, %v406
      %v411 = vand.u32 2147483647, %v401
      %vm412 = vcmp.eq.f32.partialorder %v411, 8.507059e+37
      %v413 = vand.u32 %v401, 2147483648
      %v414 = vor.u32 1.1754944e-38, %v413
      %v415 = vsel %vm412, %v414, %v410
      %v416 = vmul.f32 %v391, %v415
      %v417 = vmin.f32 %v416, 1.0
      %v418 = vmax.f32 %v417, -1.0
      %v419 = vadd.f32 %v378, 1.0
      %v420 = vadd.f32 %v418, 1.0
      %v421 = vmul.f32 %v335, %v419
      %v422 = vmul.f32 %v336, %v420
      %v423 = vpack.c.bf16 %v421, %v421
      %v424 = vpack.c.bf16 %v422, %v422
      %425 = vst [vmem:[%s226] sm:$0xf] %v423
      %426 = vst [vmem:[%s226 + $0x4] sm:$0xf] %v424
      %s427 = smul.u32 2, %s16
      %p428 = scmp.lt.s32.totalorder %s427, 3
      %s429 = scalar_select %p428, %s427, 3
      %s430 = smul.addr %s429, 4
      %s431 = scalar_lea.vmem %s5, %s430
      // Predicated region
      $region41: #{lit_forward.43} parent=39 // pred_check
        %p432 = pneg %p144
      $region42: #{lit_forward.43} parent=39 // pred_check_branch
        %434 = sbr.rel (%p432) target = $region44
      $region43: #{lit_forward.43} parent=39 // pred_region
        %s435 = smul.u32 2, %s16
      $region44: #{lit_forward.43} parent=39 // pred_fallthru
        _
    $region40: #{lit_forward.43} parent=5 // pred_fallthru
      _
    %p436 = scmp.le.s32.totalorder 2, %s11
    // Predicated region
    $region45: #{lit_forward.43} parent=5 // pred_check
      %p437 = pneg %p436
    $region46: #{lit_forward.43} parent=5 // pred_check_branch
      %439 = sbr.rel (%p437) target = $region48
    $region47: #{lit_forward.43} parent=5 // pred_region
      %s440 = ssub.s32 %s11, 2
      // Predicated region
      $region49: #{lit_forward.43} parent=47 // pred_check
        %p441 = pneg %p150
      $region50: #{lit_forward.43} parent=47 // pred_check_branch
        %443 = sbr.rel (%p441) target = $region52
      $region51: #{lit_forward.43} parent=47 // pred_region
        %s444 = smul.u32 2, %s17
        %p445 = scmp.lt.s32.totalorder %s444, 3
        %s446 = scalar_select %p445, %s444, 3
        %s447 = smul.addr %s446, 4
        %s448 = scalar_lea.vmem %s5, %s447
      $region52: #{lit_forward.43} parent=47 // pred_fallthru
        _
    $region48: #{lit_forward.43} parent=5 // pred_fallthru
      _
  $region6: #{lit_forward.43} parent=0 // loop_footer
    %s15 = sadd.s32 1, %s11
  $region7: #{lit_forward.43} parent=0 // loop_footer_branch
    %10 = sbr.rel target = $region3
  $region8: #{lit_forward.43} parent=0 // loop_exit
    _

// kernel: lit_forward.44
$region0: #{lit_forward.44}
  #allocation0 [shape = 'u32[]', space=smem, size = 0x4, offset = 0x4, fixed_abs, tag = 'smem constant byte address 0x4 - core index']
  #allocation1 [shape = 'u32[72,128]{1,0:T(1,128)}', space=vmem, size = 0x9000, scoped, tag = 'internal scratch']
  %s0 = inlined_call_operand.vmem [shape: bf16[32,128], index: 0, kind: input, shape index: {}]
  %s1 = inlined_call_operand.vmem [shape: bf16[128,32], index: 1, kind: input, shape index: {}]
  %s2 = inlined_call_operand.vmem [shape: f32[1,32], index: 2, kind: input, shape index: {}]
  %s3 = inlined_call_operand.vmem [shape: bf16[32,32], index: 3, kind: input, shape index: {}]
  %s4 = inlined_call_operand.vmem [shape: bf16[32,32], index: 4, kind: output, shape index: {}]
  %s5 = sld [smem:[#allocation0]]
  $region49: #{lit_forward.44} parent=0
    _
  %s7 = ssub.s32 1, %s5
  %s8 = scalar_select 0, %s7, %s5
  loop: start=0, step=1, limit=4
  $region2: #{lit_forward.44} parent=0 // loop_pre_header
    _
  $region3: #{lit_forward.44} parent=0 // loop_header
    %s10 = sphi 0, %s14
    %p11 = scmp.ge.s32.totalorder %s10, 4
    %s20 = sphi 0, %s22
    %s23 = sphi 0, %s20
    %s24 = sphi 0, %s23
    %s40 = sphi 0, %s24
    %s44 = sphi 0, %s44
    %s46 = sphi 0, %s44
    %s47 = sphi 0, %s46
    %s61 = sphi 0, %s47
    %s65 = sphi 0, %s65
    %s67 = sphi 0, %s65
    %s68 = sphi 0, %s67
    %s82 = sphi 0, %s68
    %s88 = sphi 0, %s90
    %s91 = sphi 0, %s88
    %s92 = sphi 0, %s91
    %s108 = sphi 0, %s92
    %s114 = sphi 0, %s116
    %s117 = sphi 0, %s114
    %s118 = sphi 0, %s117
    %s134 = sphi 0, %s118
  $region4: #{lit_forward.44} parent=0 // loop_header_branch
    %13 = sbr.rel (%p11) target = $region8
  $region5: #{lit_forward.44} parent=0 // loop_body
    %s15 = ssub.s32 %s10, 1
    %s16 = ssub.s32 %s10, 2
    %s17 = sadd.s32 %s10, 1
    %s18 = ssub.s32 %s10, %s17
    %p19 = scmp.eq.s32.totalorder %s18, 0
    %s21 = sadd.s32 %s20, 1
    %s22 = scalar_select %p19, %s20, %s21
    %p25 = pneg %p19
    %p26 = scmp.eq.s32.totalorder %s10, 1
    %p27 = por %p25, %p26
    %p28 = scmp.ne.s32.totalorder %s20, %s23
    %p29 = scmp.eq.s32.totalorder %s10, 0
    %p30 = por %p28, %p29
    %p31 = scmp.ne.s32.totalorder %s20, %s23
    %p32 = scmp.eq.s32.totalorder %s15, 1
    %p33 = por %p31, %p32
    %p34 = scmp.ne.s32.totalorder %s23, %s24
    %p35 = scmp.eq.s32.totalorder %s15, 0
    %p36 = por %p34, %p35
    %p37 = scmp.ne.s32.totalorder %s23, %s24
    %p38 = scmp.eq.s32.totalorder %s16, 1
    %p39 = por %p37, %p38
    %p41 = scmp.ne.s32.totalorder %s24, %s40
    %p42 = scmp.eq.s32.totalorder %s16, 0
    %p43 = por %p41, %p42
    %s45 = sadd.s32 %s44, 1
    %p48 = scmp.eq.s32.totalorder %s10, 1
    %p49 = scmp.ne.s32.totalorder %s44, %s46
    %p50 = scmp.eq.s32.totalorder %s10, 0
    %p51 = por %p49, %p50
    %p52 = scmp.ne.s32.totalorder %s44, %s46
    %p53 = scmp.eq.s32.totalorder %s15, 1
    %p54 = por %p52, %p53
    %p55 = scmp.ne.s32.totalorder %s46, %s47
    %p56 = scmp.eq.s32.totalorder %s15, 0
    %p57 = por %p55, %p56
    %p58 = scmp.ne.s32.totalorder %s46, %s47
    %p59 = scmp.eq.s32.totalorder %s16, 1
    %p60 = por %p58, %p59
    %p62 = scmp.ne.s32.totalorder %s47, %s61
    %p63 = scmp.eq.s32.totalorder %s16, 0
    %p64 = por %p62, %p63
    %s66 = sadd.s32 %s65, 1
    %p69 = scmp.eq.s32.totalorder %s10, 1
    %p70 = scmp.ne.s32.totalorder %s65, %s67
    %p71 = scmp.eq.s32.totalorder %s10, 0
    %p72 = por %p70, %p71
    %p73 = scmp.ne.s32.totalorder %s65, %s67
    %p74 = scmp.eq.s32.totalorder %s15, 1
    %p75 = por %p73, %p74
    %p76 = scmp.ne.s32.totalorder %s67, %s68
    %p77 = scmp.eq.s32.totalorder %s15, 0
    %p78 = por %p76, %p77
    %p79 = scmp.ne.s32.totalorder %s67, %s68
    %p80 = scmp.eq.s32.totalorder %s16, 1
    %p81 = por %p79, %p80
    %p83 = scmp.ne.s32.totalorder %s68, %s82
    %p84 = scmp.eq.s32.totalorder %s16, 0
    %p85 = por %p83, %p84
    %s86 = ssub.s32 %s10, %s17
    %p87 = scmp.eq.s32.totalorder %s86, 0
    %s89 = sadd.s32 %s88, 1
    %s90 = scalar_select %p87, %s88, %s89
    %p93 = pneg %p87
    %p94 = scmp.eq.s32.totalorder %s10, 1
    %p95 = por %p93, %p94
    %p96 = scmp.ne.s32.totalorder %s88, %s91
    %p97 = scmp.eq.s32.totalorder %s10, 0
    %p98 = por %p96, %p97
    %p99 = scmp.ne.s32.totalorder %s88, %s91
    %p100 = scmp.eq.s32.totalorder %s15, 1
    %p101 = por %p99, %p100
    %p102 = scmp.ne.s32.totalorder %s91, %s92
    %p103 = scmp.eq.s32.totalorder %s15, 0
    %p104 = por %p102, %p103
    %p105 = scmp.ne.s32.totalorder %s91, %s92
    %p106 = scmp.eq.s32.totalorder %s16, 1
    %p107 = por %p105, %p106
    %p109 = scmp.ne.s32.totalorder %s92, %s108
    %p110 = scmp.eq.s32.totalorder %s16, 0
    %p111 = por %p109, %p110
    %s112 = ssub.s32 %s10, %s17
    %p113 = scmp.eq.s32.totalorder %s112, 0
    %s115 = sadd.s32 %s114, 1
    %s116 = scalar_select %p113, %s114, %s115
    %p119 = pneg %p113
    %p120 = scmp.eq.s32.totalorder %s10, 1
    %p121 = por %p119, %p120
    %p122 = scmp.ne.s32.totalorder %s114, %s117
    %p123 = scmp.eq.s32.totalorder %s10, 0
    %p124 = por %p122, %p123
    %p125 = scmp.ne.s32.totalorder %s114, %s117
    %p126 = scmp.eq.s32.totalorder %s15, 1
    %p127 = por %p125, %p126
    %p128 = scmp.ne.s32.totalorder %s117, %s118
    %p129 = scmp.eq.s32.totalorder %s15, 0
    %p130 = por %p128, %p129
    %p131 = scmp.ne.s32.totalorder %s117, %s118
    %p132 = scmp.eq.s32.totalorder %s16, 1
    %p133 = por %p131, %p132
    %p135 = scmp.ne.s32.totalorder %s118, %s134
    %p136 = scmp.eq.s32.totalorder %s16, 0
    %p137 = por %p135, %p136
    %p138 = scmp.le.s32.totalorder 1, %s10
    %p139 = scmp.lt.s32.totalorder %s10, 3
    %p140 = pnand %p138, %p139
    %p141 = pneg %p140
    // Predicated region
    $region9: #{lit_forward.44} parent=5 // pred_check
      _
    $region10: #{lit_forward.44} parent=5 // pred_check_branch
      %143 = sbr.rel (%p140) target = $region12
    $region11: #{lit_forward.44} parent=5 // pred_region
      %s144 = ssub.s32 %s10, 1
      // Predicated region
      $region13: #{lit_forward.44} parent=11 // pred_check
        %p145 = pneg %p57
      $region14: #{lit_forward.44} parent=11 // pred_check_branch
        %147 = sbr.rel (%p145) target = $region16
      $region15: #{lit_forward.44} parent=11 // pred_region
        _
      $region16: #{lit_forward.44} parent=11 // pred_fallthru
        _
      // Predicated region
      $region17: #{lit_forward.44} parent=11 // pred_check
        %p148 = pneg %p78
      $region18: #{lit_forward.44} parent=11 // pred_check_branch
        %150 = sbr.rel (%p148) target = $region20
      $region19: #{lit_forward.44} parent=11 // pred_region
        _
      $region20: #{lit_forward.44} parent=11 // pred_fallthru
        _
    $region12: #{lit_forward.44} parent=5 // pred_fallthru
      _
    %p151 = scmp.lt.s32.totalorder %s10, 2
    // Predicated region
    $region21: #{lit_forward.44} parent=5 // pred_check
      %p152 = pneg %p151
    $region22: #{lit_forward.44} parent=5 // pred_check_branch
      %154 = sbr.rel (%p152) target = $region24
    $region23: #{lit_forward.44} parent=5 // pred_region
      // Predicated region
      $region25: #{lit_forward.44} parent=23 // pred_check
        %p155 = pneg %p30
      $region26: #{lit_forward.44} parent=23 // pred_check_branch
        %157 = sbr.rel (%p155) target = $region28
      $region27: #{lit_forward.44} parent=23 // pred_region
        %s158 = smul.u32 2, %s10
        %p159 = scmp.lt.s32.totalorder %s158, 3
        %s160 = scalar_select %p159, %s158, 3
        %s161 = smul.addr %s160, 4
        %s162 = scalar_lea.vmem %s0, %s161
        %s163 = smul.u32 2, %s10
      $region28: #{lit_forward.44} parent=23 // pred_fallthru
        _
      // Predicated region
      $region29: #{lit_forward.44} parent=23 // pred_check
        %p164 = pneg %p98
      $region30: #{lit_forward.44} parent=23 // pred_check_branch
        %166 = sbr.rel (%p164) target = $region32
      $region31: #{lit_forward.44} parent=23 // pred_region
        %s167 = smul.u32 2, %s10
        %p168 = scmp.lt.s32.totalorder %s167, 3
        %s169 = scalar_select %p168, %s167, 3
        %s170 = smul.addr %s169, 4
        %s171 = scalar_lea.vmem %s3, %s170
        %s172 = smul.u32 2, %s10
      $region32: #{lit_forward.44} parent=23 // pred_fallthru
        _
    $region24: #{lit_forward.44} parent=5 // pred_fallthru
      _
    %p173 = scmp.le.s32.totalorder 1, %s10
    %p174 = scmp.lt.s32.totalorder %s10, 3
    %p175 = pnand %p173, %p174
    %p176 = pneg %p175
    // Predicated region
    $region33: #{lit_forward.44} parent=5 // pred_check
      _
    $region34: #{lit_forward.44} parent=5 // pred_check_branch
      %178 = sbr.rel (%p175) target = $region36
    $region35: #{lit_forward.44} parent=5 // pred_region
      %s179 = ssub.s32 %s10, 1
      %s180 = smul.u32 2, %s15
      %p181 = scmp.lt.s32.totalorder %s180, 3
      %s182 = scalar_select %p181, %s180, 3
      %s183 = smul.addr %s182, 4
      %s184 = scalar_lea.vmem %s0, %s183
      %p185 = pneg %p36
      %p186 = pneg %p33
      %p187 = pneg %p57
      %p188 = pneg %p54
      %p189 = pneg %p78
      %p190 = pneg %p75
      %s191 = smul.u32 2, %s15
      %p192 = scmp.lt.s32.totalorder %s191, 3
      %s193 = scalar_select %p192, %s191, 3
      %s194 = smul.addr %s193, 4
      %s195 = scalar_lea.vmem %s3, %s194
      %p196 = pneg %p104
      %p197 = pneg %p101
      %p198 = pneg %p130
      %p199 = pneg %p127
      %s200 = smul.u32 2, %s15
      %p201 = scmp.lt.s32.totalorder %s200, 3
      %s202 = scalar_select %p201, %s200, 3
      %s203 = smul.addr %s202, 4
      %s204 = scalar_lea.vmem %s4, %s203
      %s205 = smul.u32 2, %s15
      %p206 = scmp.lt.s32.totalorder %s205, 3
      %s207 = scalar_select %p206, %s205, 3
      %s208 = smul.addr %s207, 4
      %s209 = scalar_lea.vmem %s0, %s208
      %s210 = smul.u32 2, %s15
      %s211 = smul.u32 2, %s15
      %p212 = scmp.lt.s32.totalorder %s211, 3
      %s213 = scalar_select %p212, %s211, 3
      %s214 = smul.addr %s213, 4
      %s215 = scalar_lea.vmem %s3, %s214
      %s216 = smul.u32 2, %s15
      %s217 = smul.u32 2, %s15
      %p218 = scmp.lt.s32.totalorder %s217, 3
      %s219 = scalar_select %p218, %s217, 3
      %s220 = smul.addr %s219, 4
      %s221 = scalar_lea.vmem %s4, %s220
      %s222 = smul.u32 2, %s15
      %v223 = vld [vmem:[%s209] sm:$0xf]
      %v224 = vld [vmem:[%s209 + $0x4] sm:$0xf]
      %v225 = vld [vmem:[%s1] sm:$0xf]
      %v226 = vld [vmem:[%s1 + $0x4] sm:$0xf]
      %v227 = vld [vmem:[%s1 + $0x8] sm:$0xf]
      %v228 = vld [vmem:[%s1 + $0xc] sm:$0xf]
      %v229 = vld [vmem:[%s1 + $0x10] sm:$0xf]
      %v230 = vld [vmem:[%s1 + $0x14] sm:$0xf]
      %v231 = vld [vmem:[%s1 + $0x18] sm:$0xf]
      %v232 = vld [vmem:[%s1 + $0x1c] sm:$0xf]
      %v233 = vld [vmem:[%s1 + $0x20] sm:$0xf]
      %v234 = vld [vmem:[%s1 + $0x24] sm:$0xf]
      %v235 = vld [vmem:[%s1 + $0x28] sm:$0xf]
      %v236 = vld [vmem:[%s1 + $0x2c] sm:$0xf]
      %v237 = vld [vmem:[%s1 + $0x30] sm:$0xf]
      %v238 = vld [vmem:[%s1 + $0x34] sm:$0xf]
      %v239 = vld [vmem:[%s1 + $0x38] sm:$0xf]
      %v240 = vld [vmem:[%s1 + $0x3c] sm:$0xf]
      %v241 = vld [vmem:[%s2] sm:$0x1]
      %v243 = vperm.slane %v241, 0
      %v247 = vunpack.c.l.b16 %v223
      %v248 = vunpack.c.l.b16 %v224
      %v249 = vpack.c.b16 %v248, %v247
      %v267 = vunpack.c.l.b16 %v225
      %v268 = vunpack.c.l.b16 %v226
      %v269 = vunpack.c.l.b16 %v227
      %v270 = vunpack.c.l.b16 %v228
      %v271 = vunpack.c.l.b16 %v229
      %v272 = vunpack.c.l.b16 %v230
      %v273 = vunpack.c.l.b16 %v231
      %v274 = vunpack.c.l.b16 %v232
      %v275 = vunpack.c.l.b16 %v233
      %v276 = vunpack.c.l.b16 %v234
      %v277 = vunpack.c.l.b16 %v235
      %v278 = vunpack.c.l.b16 %v236
      %v279 = vunpack.c.l.b16 %v237
      %v280 = vunpack.c.l.b16 %v238
      %v281 = vunpack.c.l.b16 %v239
      %v282 = vunpack.c.l.b16 %v240
      %v283 = vpack.c.b16 %v268, %v267
      %v284 = vpack.c.b16 %v270, %v269
      %v285 = vpack.c.b16 %v272, %v271
      %v286 = vpack.c.b16 %v274, %v273
      %v287 = vpack.c.b16 %v276, %v275
      %v288 = vpack.c.b16 %v278, %v277
      %v289 = vpack.c.b16 %v280, %v279
      %v290 = vpack.c.b16 %v282, %v281
      %299 = vmatpush.bf16.msra.mxu0 %v290
      %300 = vmatpush.bf16.msra.mxu0 %v289
      %301 = vmatpush.bf16.msra.mxu0 %v288
      %302 = vmatpush.bf16.msra.mxu0 %v287
      %303 = vmatpush.bf16.msra.mxu0 %v286
      %304 = vmatpush.bf16.msra.mxu0 %v285
      %305 = vmatpush.bf16.msra.mxu0 %v284
      %306 = vmatpush.bf16.msra.mxu0 %v283
      %307 = vmatmul.bf16.gmra.mxu0 %v249
      %v308 = vpop.f32.mrf.mxu0
      %v309 = vadd.f32 %v243, %v308
      %v310 = vpop.f32.mrf.mxu0
      %v311 = vadd.f32 %v243, %v310
      %312 = vdwg.mxu0
      %v313 = vld [vmem:[%s215] sm:$0xf]
      %v314 = vld [vmem:[%s215 + $0x4] sm:$0xf]
      %v315 = vunpack.c.l.bf16 %v313
      %v316 = vunpack.c.l.bf16 %v314
      %v317 = vadd.f32 %v309, %v315
      %v318 = vadd.f32 %v311, %v316
      %v319 = vpack.c.bf16 %v317, %v317
      %v320 = vpack.c.bf16 %v318, %v318
      %vm321 = vcmask 257024
      %322 = vst.msk [vmem:[%s221] sm:$0xf] %vm321, %v319
      %323 = vst.msk [vmem:[%s221 + $0x4] sm:$0xf] %vm321, %v320
      %s324 = smul.u32 2, %s15
      %p325 = scmp.lt.s32.totalorder %s324, 3
      %s326 = scalar_select %p325, %s324, 3
      %s327 = smul.addr %s326, 4
      %s328 = scalar_lea.vmem %s4, %s327
      // Predicated region
      $region37: #{lit_forward.44} parent=35 // pred_check
        %p329 = pneg %p127
      $region38: #{lit_forward.44} parent=35 // pred_check_branch
        %331 = sbr.rel (%p329) target = $region40
      $region39: #{lit_forward.44} parent=35 // pred_region
        %s332 = smul.u32 2, %s15
      $region40: #{lit_forward.44} parent=35 // pred_fallthru
        _
    $region36: #{lit_forward.44} parent=5 // pred_fallthru
      _
    %p333 = scmp.le.s32.totalorder 2, %s10
    // Predicated region
    $region41: #{lit_forward.44} parent=5 // pred_check
      %p334 = pneg %p333
    $region42: #{lit_forward.44} parent=5 // pred_check_branch
      %336 = sbr.rel (%p334) target = $region44
    $region43: #{lit_forward.44} parent=5 // pred_region
      %s337 = ssub.s32 %s10, 2
      // Predicated region
      $region45: #{lit_forward.44} parent=43 // pred_check
        %p338 = pneg %p133
      $region46: #{lit_forward.44} parent=43 // pred_check_branch
        %340 = sbr.rel (%p338) target = $region48
      $region47: #{lit_forward.44} parent=43 // pred_region
        %s341 = smul.u32 2, %s16
        %p342 = scmp.lt.s32.totalorder %s341, 3
        %s343 = scalar_select %p342, %s341, 3
        %s344 = smul.addr %s343, 4
        %s345 = scalar_lea.vmem %s4, %s344
      $region48: #{lit_forward.44} parent=43 // pred_fallthru
        _
    $region44: #{lit_forward.44} parent=5 // pred_fallthru
      _
  $region6: #{lit_forward.44} parent=0 // loop_footer
    %s14 = sadd.s32 1, %s10
  $region7: #{lit_forward.44} parent=0 // loop_footer_branch
    %9 = sbr.rel target = $region3
  $region8: #{lit_forward.44} parent=0 // loop_exit
    _

// kernel: lit_forward.47
$region0: #{lit_forward.47}
  #allocation0 [shape = 'u32[]', space=smem, size = 0x4, offset = 0x4, fixed_abs, tag = 'smem constant byte address 0x4 - core index']
  #allocation1 [shape = 'u32[72,128]{1,0:T(1,128)}', space=vmem, size = 0x9000, scoped, tag = 'internal scratch']
  %s0 = inlined_call_operand.vmem [shape: bf16[8,128], index: 0, kind: input, shape index: {}]
  %s1 = inlined_call_operand.vmem [shape: bf16[128,8], index: 1, kind: input, shape index: {}]
  %s2 = inlined_call_operand.vmem [shape: f32[1,8], index: 2, kind: input, shape index: {}]
  %s3 = inlined_call_operand.vmem [shape: f32[8,8], index: 3, kind: output, shape index: {}]
  %s4 = sld [smem:[#allocation0]]
  $region22: #{lit_forward.47} parent=0
    _
  %s6 = ssub.s32 1, %s4
  %s7 = scalar_select 0, %s6, %s4
  // Predicated region
  $region2: #{lit_forward.47} parent=0 // pred_check
    _
  $region3: #{lit_forward.47} parent=0 // pred_check_branch
    %9 = sbr.rel (0) target = $region5
  $region4: #{lit_forward.47} parent=0 // pred_region
    _
  $region5: #{lit_forward.47} parent=0 // pred_fallthru
    _
  // Predicated region
  $region6: #{lit_forward.47} parent=0 // pred_check
    _
  $region7: #{lit_forward.47} parent=0 // pred_check_branch
    %11 = sbr.rel (0) target = $region9
  $region8: #{lit_forward.47} parent=0 // pred_region
    _
  $region9: #{lit_forward.47} parent=0 // pred_fallthru
    _
  // Predicated region
  $region10: #{lit_forward.47} parent=0 // pred_check
    _
  $region11: #{lit_forward.47} parent=0 // pred_check_branch
    %13 = sbr.rel (0) target = $region13
  $region12: #{lit_forward.47} parent=0 // pred_region
    _
  $region13: #{lit_forward.47} parent=0 // pred_fallthru
    _
  %v14 = vld [vmem:[%s0] sm:$0xf]
  %v15 = vld [vmem:[%s1] sm:$0xf]
  %v16 = vld [vmem:[%s1 + $0x4] sm:$0xf]
  %v17 = vld [vmem:[%s1 + $0x8] sm:$0xf]
  %v18 = vld [vmem:[%s1 + $0xc] sm:$0xf]
  %v19 = vld [vmem:[%s1 + $0x10] sm:$0xf]
  %v20 = vld [vmem:[%s1 + $0x14] sm:$0xf]
  %v21 = vld [vmem:[%s1 + $0x18] sm:$0xf]
  %v22 = vld [vmem:[%s1 + $0x1c] sm:$0xf]
  %v23 = vld [vmem:[%s1 + $0x20] sm:$0xf]
  %v24 = vld [vmem:[%s1 + $0x24] sm:$0xf]
  %v25 = vld [vmem:[%s1 + $0x28] sm:$0xf]
  %v26 = vld [vmem:[%s1 + $0x2c] sm:$0xf]
  %v27 = vld [vmem:[%s1 + $0x30] sm:$0xf]
  %v28 = vld [vmem:[%s1 + $0x34] sm:$0xf]
  %v29 = vld [vmem:[%s1 + $0x38] sm:$0xf]
  %v30 = vld [vmem:[%s1 + $0x3c] sm:$0xf]
  %v31 = vld [vmem:[%s2] sm:$0x1]
  %v33 = vperm.slane %v31, 0
  %v51 = vunpack.c.l.b16 %v15
  %v52 = vunpack.c.l.b16 %v16
  %v53 = vunpack.c.l.b16 %v17
  %v54 = vunpack.c.l.b16 %v18
  %v55 = vunpack.c.l.b16 %v19
  %v56 = vunpack.c.l.b16 %v20
  %v57 = vunpack.c.l.b16 %v21
  %v58 = vunpack.c.l.b16 %v22
  %v59 = vunpack.c.l.b16 %v23
  %v60 = vunpack.c.l.b16 %v24
  %v61 = vunpack.c.l.b16 %v25
  %v62 = vunpack.c.l.b16 %v26
  %v63 = vunpack.c.l.b16 %v27
  %v64 = vunpack.c.l.b16 %v28
  %v65 = vunpack.c.l.b16 %v29
  %v66 = vunpack.c.l.b16 %v30
  %v67 = vpack.c.b16 %v52, %v51
  %v68 = vpack.c.b16 %v54, %v53
  %v69 = vpack.c.b16 %v56, %v55
  %v70 = vpack.c.b16 %v58, %v57
  %v71 = vpack.c.b16 %v60, %v59
  %v72 = vpack.c.b16 %v62, %v61
  %v73 = vpack.c.b16 %v64, %v63
  %v74 = vpack.c.b16 %v66, %v65
  %83 = vmatpush.bf16.msra.mxu0 %v74
  %84 = vmatpush.bf16.msra.mxu0 %v73
  %85 = vmatpush.bf16.msra.mxu0 %v72
  %86 = vmatpush.bf16.msra.mxu0 %v71
  %87 = vmatpush.bf16.msra.mxu0 %v70
  %88 = vmatpush.bf16.msra.mxu0 %v69
  %89 = vmatpush.bf16.msra.mxu0 %v68
  %90 = vmatpush.bf16.msra.mxu0 %v67
  %91 = vmatmul.bf16.gmra.mxu0 %v14
  %v92 = vpop.f32.mrf.mxu0
  %v93 = vadd.f32 %v33, %v92
  %v94 = vpop.f32.mrf.mxu0
  %95 = vdwg.mxu0
  %vm96 = vcmask 64512
  %97 = vst.msk [vmem:[%s3] sm:$0xff] %vm96, %v93
  // Predicated region
  $region14: #{lit_forward.47} parent=0 // pred_check
    _
  $region15: #{lit_forward.47} parent=0 // pred_check_branch
    %99 = sbr.rel (0) target = $region17
  $region16: #{lit_forward.47} parent=0 // pred_region
    _
  $region17: #{lit_forward.47} parent=0 // pred_fallthru
    _
  // Predicated region
  $region18: #{lit_forward.47} parent=0 // pred_check
    _
  $region19: #{lit_forward.47} parent=0 // pred_check_branch
    %101 = sbr.rel (0) target = $region21
  $region20: #{lit_forward.47} parent=0 // pred_region
    _
  $region21: #{lit_forward.47} parent=0 // pred_fallthru
    _

// kernel: lit_forward.48
$region0: #{lit_forward.48}
  #allocation0 [shape = 'u32[]', space=smem, size = 0x4, offset = 0x4, fixed_abs, tag = 'smem constant byte address 0x4 - core index']
  #allocation1 [shape = 'u32[72,128]{1,0:T(1,128)}', space=vmem, size = 0x9000, scoped, tag = 'internal scratch']
  %s0 = inlined_call_operand.vmem [shape: f32[8,128], index: 0, kind: input, shape index: {}]
  %s1 = inlined_call_operand.vmem [shape: bf16[128,64], index: 1, kind: input, shape index: {}]
  %s2 = inlined_call_operand.vmem [shape: f32[1,64], index: 2, kind: input, shape index: {}]
  %s3 = inlined_call_operand.vmem [shape: bf16[8,64], index: 3, kind: output, shape index: {}]
  %s4 = sld [smem:[#allocation0]]
  $region22: #{lit_forward.48} parent=0
    _
  %s6 = ssub.s32 1, %s4
  %s7 = scalar_select 0, %s6, %s4
  // Predicated region
  $region2: #{lit_forward.48} parent=0 // pred_check
    _
  $region3: #{lit_forward.48} parent=0 // pred_check_branch
    %9 = sbr.rel (0) target = $region5
  $region4: #{lit_forward.48} parent=0 // pred_region
    _
  $region5: #{lit_forward.48} parent=0 // pred_fallthru
    _
  // Predicated region
  $region6: #{lit_forward.48} parent=0 // pred_check
    _
  $region7: #{lit_forward.48} parent=0 // pred_check_branch
    %11 = sbr.rel (0) target = $region9
  $region8: #{lit_forward.48} parent=0 // pred_region
    _
  $region9: #{lit_forward.48} parent=0 // pred_fallthru
    _
  // Predicated region
  $region10: #{lit_forward.48} parent=0 // pred_check
    _
  $region11: #{lit_forward.48} parent=0 // pred_check_branch
    %13 = sbr.rel (0) target = $region13
  $region12: #{lit_forward.48} parent=0 // pred_region
    _
  $region13: #{lit_forward.48} parent=0 // pred_fallthru
    _
  %v14 = vld [vmem:[%s0] sm:$0xff]
  %v15 = vpack.c.bf16 %v14, %v14
  %v16 = vld [vmem:[%s1] sm:$0xf]
  %v17 = vld [vmem:[%s1 + $0x4] sm:$0xf]
  %v18 = vld [vmem:[%s1 + $0x8] sm:$0xf]
  %v19 = vld [vmem:[%s1 + $0xc] sm:$0xf]
  %v20 = vld [vmem:[%s1 + $0x10] sm:$0xf]
  %v21 = vld [vmem:[%s1 + $0x14] sm:$0xf]
  %v22 = vld [vmem:[%s1 + $0x18] sm:$0xf]
  %v23 = vld [vmem:[%s1 + $0x1c] sm:$0xf]
  %v24 = vld [vmem:[%s1 + $0x20] sm:$0xf]
  %v25 = vld [vmem:[%s1 + $0x24] sm:$0xf]
  %v26 = vld [vmem:[%s1 + $0x28] sm:$0xf]
  %v27 = vld [vmem:[%s1 + $0x2c] sm:$0xf]
  %v28 = vld [vmem:[%s1 + $0x30] sm:$0xf]
  %v29 = vld [vmem:[%s1 + $0x34] sm:$0xf]
  %v30 = vld [vmem:[%s1 + $0x38] sm:$0xf]
  %v31 = vld [vmem:[%s1 + $0x3c] sm:$0xf]
  %v32 = vld [vmem:[%s2] sm:$0x1]
  %v34 = vperm.slane %v32, 0
  %v52 = vunpack.c.l.b16 %v16
  %v53 = vunpack.c.l.b16 %v17
  %v54 = vunpack.c.l.b16 %v18
  %v55 = vunpack.c.l.b16 %v19
  %v56 = vunpack.c.l.b16 %v20
  %v57 = vunpack.c.l.b16 %v21
  %v58 = vunpack.c.l.b16 %v22
  %v59 = vunpack.c.l.b16 %v23
  %v60 = vunpack.c.l.b16 %v24
  %v61 = vunpack.c.l.b16 %v25
  %v62 = vunpack.c.l.b16 %v26
  %v63 = vunpack.c.l.b16 %v27
  %v64 = vunpack.c.l.b16 %v28
  %v65 = vunpack.c.l.b16 %v29
  %v66 = vunpack.c.l.b16 %v30
  %v67 = vunpack.c.l.b16 %v31
  %v68 = vpack.c.b16 %v53, %v52
  %v69 = vpack.c.b16 %v55, %v54
  %v70 = vpack.c.b16 %v57, %v56
  %v71 = vpack.c.b16 %v59, %v58
  %v72 = vpack.c.b16 %v61, %v60
  %v73 = vpack.c.b16 %v63, %v62
  %v74 = vpack.c.b16 %v65, %v64
  %v75 = vpack.c.b16 %v67, %v66
  %84 = vmatpush.bf16.msra.mxu0 %v75
  %85 = vmatpush.bf16.msra.mxu0 %v74
  %86 = vmatpush.bf16.msra.mxu0 %v73
  %87 = vmatpush.bf16.msra.mxu0 %v72
  %88 = vmatpush.bf16.msra.mxu0 %v71
  %89 = vmatpush.bf16.msra.mxu0 %v70
  %90 = vmatpush.bf16.msra.mxu0 %v69
  %91 = vmatpush.bf16.msra.mxu0 %v68
  %92 = vmatmul.bf16.gmra.mxu0 %v15
  %v93 = vpop.f32.mrf.mxu0
  %v94 = vadd.f32 %v34, %v93
  %v95 = vpop.f32.mrf.mxu0
  %96 = vdwg.mxu0
  %v97 = vmul.f32 %v94, 0.5
  %v98 = vmul.f32 %v94, 0.70710677
  %v99 = vmul.f32 %v98, %v98
  %v100 = vmin.f32 16.0, %v99
  %v101 = vmul.f32 %v100, 2.1237322e-06
  %v102 = vadd.f32 %v101, 0.00028619796
  %v103 = vmul.f32 %v100, %v102
  %v104 = vadd.f32 %v103, 0.0036580483
  %v105 = vmul.f32 %v100, %v104
  %v106 = vadd.f32 %v105, 0.05243302
  %v107 = vmul.f32 %v100, %v106
  %v108 = vadd.f32 %v107, 0.18741608
  %v109 = vmul.f32 %v100, %v108
  %v110 = vadd.f32 %v109, 1.1283791
  %v111 = vmul.f32 %v98, %v110
  %v112 = vmul.f32 %v100, 3.8918573e-05
  %v113 = vadd.f32 %v112, 0.001143296
  %v114 = vmul.f32 %v100, %v113
  %v115 = vadd.f32 %v114, 0.014752088
  %v116 = vmul.f32 %v100, %v115
  %v117 = vadd.f32 %v116, 0.112945676
  %v118 = vmul.f32 %v100, %v117
  %v119 = vadd.f32 %v118, 0.4994258
  %v120 = vmul.f32 %v100, %v119
  %v121 = vadd.f32 %v120, 1.0
  %v122 = vrcp.pop %v121
  %v123 = vmul.f32 %v121, %v122
  %v124 = vsub.f32 1.0, %v123
  %v125 = vmul.f32 %v122, %v124
  %v126 = vadd.f32 %v122, %v125
  %vm127 = vweird.f32 %v121
  %vm128 = vweird.f32 %v122
  %vm129 = vmor %vm127, %vm128
  %v130 = vsel %vm129, %v122, %v126
  %v131 = vand.u32 2147483647, %v121
  %vm132 = vcmp.eq.f32.partialorder %v131, 8.507059e+37
  %v133 = vand.u32 %v121, 2147483648
  %v134 = vor.u32 1.1754944e-38, %v133
  %v135 = vsel %vm132, %v134, %v130
  %v136 = vmul.f32 %v111, %v135
  %v137 = vmin.f32 %v136, 1.0
  %v138 = vmax.f32 %v137, -1.0
  %v139 = vadd.f32 %v138, 1.0
  %v140 = vmul.f32 %v97, %v139
  %v141 = vpack.c.bf16 %v140, %v140
  %vm142 = vcmask 519168
  %143 = vst.msk [vmem:[%s3] sm:$0xf] %vm142, %v141
  // Predicated region
  $region14: #{lit_forward.48} parent=0 // pred_check
    _
  $region15: #{lit_forward.48} parent=0 // pred_check_branch
    %145 = sbr.rel (0) target = $region17
  $region16: #{lit_forward.48} parent=0 // pred_region
    _
  $region17: #{lit_forward.48} parent=0 // pred_fallthru
    _
  // Predicated region
  $region18: #{lit_forward.48} parent=0 // pred_check
    _
  $region19: #{lit_forward.48} parent=0 // pred_check_branch
    %147 = sbr.rel (0) target = $region21
  $region20: #{lit_forward.48} parent=0 // pred_region
    _
  $region21: #{lit_forward.48} parent=0 // pred_fallthru
    _

// kernel: lit_forward.49
$region0: #{lit_forward.49}
  #allocation0 [shape = 'u32[]', space=smem, size = 0x4, offset = 0x4, fixed_abs, tag = 'smem constant byte address 0x4 - core index']
  #allocation1 [shape = 'u32[72,128]{1,0:T(1,128)}', space=vmem, size = 0x9000, scoped, tag = 'internal scratch']
  %s0 = inlined_call_operand.vmem [shape: bf16[8,64], index: 0, kind: input, shape index: {}]
  %s1 = inlined_call_operand.vmem [shape: f32[1,64], index: 1, kind: input, shape index: {}]
  %s2 = inlined_call_operand.vmem [shape: f32[1,64], index: 2, kind: input, shape index: {}]
  %s3 = inlined_call_operand.vmem [shape: bf16[64,192], index: 3, kind: input, shape index: {}]
  %s4 = inlined_call_operand.vmem [shape: f32[1,192], index: 4, kind: input, shape index: {}]
  %s5 = inlined_call_operand.vmem [shape: bf16[8,192], index: 5, kind: output, shape index: {}]
  %s6 = sld [smem:[#allocation0]]
  $region30: #{lit_forward.49} parent=0
    _
  %s8 = ssub.s32 1, %s6
  %s9 = scalar_select 0, %s8, %s6
  // Predicated region
  $region2: #{lit_forward.49} parent=0 // pred_check
    _
  $region3: #{lit_forward.49} parent=0 // pred_check_branch
    %11 = sbr.rel (0) target = $region5
  $region4: #{lit_forward.49} parent=0 // pred_region
    _
  $region5: #{lit_forward.49} parent=0 // pred_fallthru
    _
  // Predicated region
  $region6: #{lit_forward.49} parent=0 // pred_check
    _
  $region7: #{lit_forward.49} parent=0 // pred_check_branch
    %13 = sbr.rel (0) target = $region9
  $region8: #{lit_forward.49} parent=0 // pred_region
    _
  $region9: #{lit_forward.49} parent=0 // pred_fallthru
    _
  // Predicated region
  $region10: #{lit_forward.49} parent=0 // pred_check
    _
  $region11: #{lit_forward.49} parent=0 // pred_check_branch
    %15 = sbr.rel (0) target = $region13
  $region12: #{lit_forward.49} parent=0 // pred_region
    _
  $region13: #{lit_forward.49} parent=0 // pred_fallthru
    _
  // Predicated region
  $region14: #{lit_forward.49} parent=0 // pred_check
    _
  $region15: #{lit_forward.49} parent=0 // pred_check_branch
    %17 = sbr.rel (0) target = $region17
  $region16: #{lit_forward.49} parent=0 // pred_region
    _
  $region17: #{lit_forward.49} parent=0 // pred_fallthru
    _
  // Predicated region
  $region18: #{lit_forward.49} parent=0 // pred_check
    _
  $region19: #{lit_forward.49} parent=0 // pred_check_branch
    %19 = sbr.rel (0) target = $region21
  $region20: #{lit_forward.49} parent=0 // pred_region
    _
  $region21: #{lit_forward.49} parent=0 // pred_fallthru
    _
  %v21 = vld [vmem:[%s0] sm:$0xf]
  %v22 = vunpack.c.l.bf16 %v21
  %vm23 = vcmask 523264
  %v24 = vsel %vm23, %v22, 0.0
  %25 = vadd.xlane.f32.xlu0 %v24
  %v26 = vpop.xlane.xlu0 %25
  %v27 = vrcp.pop 64.0
  %v28 = vmul.f32 64.0, %v27
  %v29 = vsub.f32 1.0, %v28
  %v30 = vmul.f32 %v27, %v29
  %v31 = vadd.f32 %v27, %v30
  %vm32 = vweird.f32 %v27
  %v33 = vsel %vm32, %v27, %v31
  %v34 = vmul.f32 %v26, %v33
  %v35 = vsub.f32 %v22, %v34
  %v36 = vmul.f32 %v35, %v35
  %v37 = vsel %vm23, %v36, 0.0
  %38 = vadd.xlane.f32.xlu0 %v37
  %v39 = vpop.xlane.xlu0 %38
  %v40 = vmul.f32 %v39, %v33
  %v41 = vadd.f32 %v40, 1e-05
  %v42 = vrsqrt.pop %v41
  %v43 = vmul.f32 %v42, %v41
  %v44 = vmul.f32 %v43, %v42
  %v45 = vmul.f32 0.5, %v44
  %v46 = vsub.f32 1.5, %v45
  %v47 = vmul.f32 %v42, %v46
  %vm48 = vweird.f32 %v41
  %vm49 = vweird.f32 %v42
  %vm50 = vmor %vm48, %vm49
  %v51 = vsel %vm50, %v42, %v47
  %v52 = vmul.f32 %v35, %v51
  %v53 = vld [vmem:[%s1] sm:$0x1]
  %v55 = vperm.slane %v53, 0
  %v57 = vmul.f32 %v52, %v55
  %v58 = vld [vmem:[%s2] sm:$0x1]
  %v60 = vperm.slane %v58, 0
  %v62 = vadd.f32 %v57, %v60
  %v63 = vpack.c.bf16 %v62, %v62
  %v64 = vld [vmem:[%s3] sm:$0xff]
  %v65 = vld [vmem:[%s3 + $0x8] sm:$0xff]
  %v66 = vld [vmem:[%s3 + $0x10] sm:$0xff]
  %v67 = vld [vmem:[%s3 + $0x18] sm:$0xff]
  %v68 = vld [vmem:[%s3 + $0x20] sm:$0xff]
  %v69 = vld [vmem:[%s3 + $0x28] sm:$0xff]
  %v70 = vld [vmem:[%s3 + $0x30] sm:$0xff]
  %v71 = vld [vmem:[%s3 + $0x38] sm:$0xff]
  %v72 = vld [vmem:[%s4] sm:$0x3]
  %v74 = vperm.slane %v72, 0
  %v75 = vperm.slane %v72, 1
  %v86 = vunpack.c.l.b16 %v64
  %v87 = vunpack.c.h.b16 %v64
  %v88 = vunpack.c.l.b16 %v65
  %v89 = vunpack.c.h.b16 %v65
  %v90 = vunpack.c.l.b16 %v66
  %v91 = vunpack.c.h.b16 %v66
  %v92 = vunpack.c.l.b16 %v67
  %v93 = vunpack.c.h.b16 %v67
  %v94 = vunpack.c.l.b16 %v68
  %v95 = vunpack.c.h.b16 %v68
  %v96 = vunpack.c.l.b16 %v69
  %v97 = vunpack.c.h.b16 %v69
  %v98 = vunpack.c.l.b16 %v70
  %v99 = vunpack.c.h.b16 %v70
  %v100 = vunpack.c.l.b16 %v71
  %v101 = vunpack.c.h.b16 %v71
  %v102 = vpack.c.b16 %v88, %v86
  %v103 = vpack.c.b16 %v89, %v87
  %v104 = vpack.c.b16 %v92, %v90
  %v105 = vpack.c.b16 %v93, %v91
  %v106 = vpack.c.b16 %v96, %v94
  %v107 = vpack.c.b16 %v97, %v95
  %v108 = vpack.c.b16 %v100, %v98
  %v109 = vpack.c.b16 %v101, %v99
  %v119 = vsel %vm23, %v63, 0
  %121 = vmatpush.bf16.msra.mxu0 0
  %122 = vmatpush.bf16.msra.mxu0 0
  %123 = vmatpush.bf16.msra.mxu0 0
  %124 = vmatpush.bf16.msra.mxu0 0
  %125 = vmatpush.bf16.msra.mxu0 %v108
  %126 = vmatpush.bf16.msra.mxu0 %v106
  %127 = vmatpush.bf16.msra.mxu0 %v104
  %128 = vmatpush.bf16.msra.mxu0 %v102
  %129 = vmatmul.bf16.gmra.mxu0 %v119
  %v130 = vpop.f32.mrf.mxu0
  %v131 = vadd.f32 %v74, %v130
  %v132 = vpop.f32.mrf.mxu0
  %133 = vdwg.mxu0
  %134 = vmatpush.bf16.msra.mxu0 0
  %135 = vmatpush.bf16.msra.mxu0 0
  %136 = vmatpush.bf16.msra.mxu0 0
  %137 = vmatpush.bf16.msra.mxu0 0
  %138 = vmatpush.bf16.msra.mxu0 %v109
  %139 = vmatpush.bf16.msra.mxu0 %v107
  %140 = vmatpush.bf16.msra.mxu0 %v105
  %141 = vmatpush.bf16.msra.mxu0 %v103
  %142 = vmatmul.bf16.gmra.mxu0 %v119
  %v143 = vpop.f32.mrf.mxu0
  %v144 = vadd.f32 %v75, %v143
  %v145 = vpop.f32.mrf.mxu0
  %146 = vdwg.mxu0
  %v147 = vpack.c.bf16 %v144, %v131
  %vm148 = vcmask 1043456
  %vm149 = vcmask 523268
  %vm150 = vmor %vm149, %vm148
  %151 = vst.msk [vmem:[%s5] sm:$0xff] %vm150, %v147
  // Predicated region
  $region22: #{lit_forward.49} parent=0 // pred_check
    _
  $region23: #{lit_forward.49} parent=0 // pred_check_branch
    %153 = sbr.rel (0) target = $region25
  $region24: #{lit_forward.49} parent=0 // pred_region
    _
  $region25: #{lit_forward.49} parent=0 // pred_fallthru
    _
  // Predicated region
  $region26: #{lit_forward.49} parent=0 // pred_check
    _
  $region27: #{lit_forward.49} parent=0 // pred_check_branch
    %155 = sbr.rel (0) target = $region29
  $region28: #{lit_forward.49} parent=0 // pred_region
    _
  $region29: #{lit_forward.49} parent=0 // pred_fallthru
    _

// kernel: lit_forward.51
$region0: #{lit_forward.51}
  #allocation0 [shape = 'u32[]', space=smem, size = 0x4, offset = 0x4, fixed_abs, tag = 'smem constant byte address 0x4 - core index']
  #allocation1 [shape = 'u32[72,128]{1,0:T(1,128)}', space=vmem, size = 0x9000, scoped, tag = 'internal scratch']
  %s0 = inlined_call_operand.vmem [shape: bf16[8,64], index: 0, kind: input, shape index: {}]
  %s1 = inlined_call_operand.vmem [shape: bf16[64,64], index: 1, kind: input, shape index: {}]
  %s2 = inlined_call_operand.vmem [shape: f32[1,64], index: 2, kind: input, shape index: {}]
  %s3 = inlined_call_operand.vmem [shape: bf16[8,64], index: 3, kind: input, shape index: {}]
  %s4 = inlined_call_operand.vmem [shape: bf16[8,64], index: 4, kind: output, shape index: {}]
  %s5 = sld [smem:[#allocation0]]
  $region26: #{lit_forward.51} parent=0
    _
  %s7 = ssub.s32 1, %s5
  %s8 = scalar_select 0, %s7, %s5
  // Predicated region
  $region2: #{lit_forward.51} parent=0 // pred_check
    _
  $region3: #{lit_forward.51} parent=0 // pred_check_branch
    %10 = sbr.rel (0) target = $region5
  $region4: #{lit_forward.51} parent=0 // pred_region
    _
  $region5: #{lit_forward.51} parent=0 // pred_fallthru
    _
  // Predicated region
  $region6: #{lit_forward.51} parent=0 // pred_check
    _
  $region7: #{lit_forward.51} parent=0 // pred_check_branch
    %12 = sbr.rel (0) target = $region9
  $region8: #{lit_forward.51} parent=0 // pred_region
    _
  $region9: #{lit_forward.51} parent=0 // pred_fallthru
    _
  // Predicated region
  $region10: #{lit_forward.51} parent=0 // pred_check
    _
  $region11: #{lit_forward.51} parent=0 // pred_check_branch
    %14 = sbr.rel (0) target = $region13
  $region12: #{lit_forward.51} parent=0 // pred_region
    _
  $region13: #{lit_forward.51} parent=0 // pred_fallthru
    _
  // Predicated region
  $region14: #{lit_forward.51} parent=0 // pred_check
    _
  $region15: #{lit_forward.51} parent=0 // pred_check_branch
    %16 = sbr.rel (0) target = $region17
  $region16: #{lit_forward.51} parent=0 // pred_region
    _
  $region17: #{lit_forward.51} parent=0 // pred_fallthru
    _
  %v18 = vld [vmem:[%s0] sm:$0xf]
  %v19 = vld [vmem:[%s1] sm:$0xf]
  %v20 = vld [vmem:[%s1 + $0x4] sm:$0xf]
  %v21 = vld [vmem:[%s1 + $0x8] sm:$0xf]
  %v22 = vld [vmem:[%s1 + $0xc] sm:$0xf]
  %v23 = vld [vmem:[%s1 + $0x10] sm:$0xf]
  %v24 = vld [vmem:[%s1 + $0x14] sm:$0xf]
  %v25 = vld [vmem:[%s1 + $0x18] sm:$0xf]
  %v26 = vld [vmem:[%s1 + $0x1c] sm:$0xf]
  %v27 = vld [vmem:[%s2] sm:$0x1]
  %v29 = vperm.slane %v27, 0
  %v39 = vunpack.c.l.b16 %v19
  %v40 = vunpack.c.l.b16 %v20
  %v41 = vunpack.c.l.b16 %v21
  %v42 = vunpack.c.l.b16 %v22
  %v43 = vunpack.c.l.b16 %v23
  %v44 = vunpack.c.l.b16 %v24
  %v45 = vunpack.c.l.b16 %v25
  %v46 = vunpack.c.l.b16 %v26
  %v47 = vpack.c.b16 %v40, %v39
  %v48 = vpack.c.b16 %v42, %v41
  %v49 = vpack.c.b16 %v44, %v43
  %v50 = vpack.c.b16 %v46, %v45
  %vm55 = vcmask 523264
  %v57 = vsel %vm55, %v18, 0
  %59 = vmatpush.bf16.msra.mxu0 0
  %60 = vmatpush.bf16.msra.mxu0 0
  %61 = vmatpush.bf16.msra.mxu0 0
  %62 = vmatpush.bf16.msra.mxu0 0
  %63 = vmatpush.bf16.msra.mxu0 %v50
  %64 = vmatpush.bf16.msra.mxu0 %v49
  %65 = vmatpush.bf16.msra.mxu0 %v48
  %66 = vmatpush.bf16.msra.mxu0 %v47
  %67 = vmatmul.bf16.gmra.mxu0 %v57
  %v68 = vpop.f32.mrf.mxu0
  %v69 = vadd.f32 %v29, %v68
  %v70 = vpop.f32.mrf.mxu0
  %71 = vdwg.mxu0
  %v72 = vld [vmem:[%s3] sm:$0xf]
  %v73 = vunpack.c.l.bf16 %v72
  %v74 = vadd.f32 %v69, %v73
  %v75 = vpack.c.bf16 %v74, %v74
  %vm76 = vcmask 519168
  %77 = vst.msk [vmem:[%s4] sm:$0xf] %vm76, %v75
  // Predicated region
  $region18: #{lit_forward.51} parent=0 // pred_check
    _
  $region19: #{lit_forward.51} parent=0 // pred_check_branch
    %79 = sbr.rel (0) target = $region21
  $region20: #{lit_forward.51} parent=0 // pred_region
    _
  $region21: #{lit_forward.51} parent=0 // pred_fallthru
    _
  // Predicated region
  $region22: #{lit_forward.51} parent=0 // pred_check
    _
  $region23: #{lit_forward.51} parent=0 // pred_check_branch
    %81 = sbr.rel (0) target = $region25
  $region24: #{lit_forward.51} parent=0 // pred_region
    _
  $region25: #{lit_forward.51} parent=0 // pred_fallthru
    _

// kernel: lit_forward.50
$region0: #{lit_forward.50}
  #allocation0 [shape = 'u32[]', space=smem, size = 0x4, offset = 0x4, fixed_abs, tag = 'smem constant byte address 0x4 - core index']
  #allocation1 [shape = 'u32[72,128]{1,0:T(1,128)}', space=vmem, size = 0x9000, scoped, tag = 'internal scratch']
  %s0 = inlined_call_operand.vmem [shape: bf16[2,4,4,16], index: 0, kind: input, shape index: {}]
  %s1 = inlined_call_operand.vmem [shape: bf16[2,4,4,16], index: 1, kind: input, shape index: {}]
  %s2 = inlined_call_operand.vmem [shape: bf16[2,4,4,16], index: 2, kind: input, shape index: {}]
  %s3 = inlined_call_operand.vmem [shape: bf16[2,4,4,16], index: 3, kind: output, shape index: {}]
  %s4 = sld [smem:[#allocation0]]
  $region45: #{lit_forward.50} parent=0
    _
  %s6 = ssub.s32 1, %s4
  %s7 = scalar_select 0, %s6, %s4
  loop: start=0, step=1, limit=4
  $region2: #{lit_forward.50} parent=0 // loop_pre_header
    _
  $region3: #{lit_forward.50} parent=0 // loop_header
    %s9 = sphi 0, %s13
    %p10 = scmp.ge.s32.totalorder %s9, 4
    %s19 = sphi 0, %s21
    %s22 = sphi 0, %s19
    %s23 = sphi 0, %s22
    %s39 = sphi 0, %s23
    %s45 = sphi 0, %s47
    %s48 = sphi 0, %s45
    %s49 = sphi 0, %s48
    %s65 = sphi 0, %s49
    %s71 = sphi 0, %s73
    %s74 = sphi 0, %s71
    %s75 = sphi 0, %s74
    %s91 = sphi 0, %s75
    %s97 = sphi 0, %s99
    %s100 = sphi 0, %s97
    %s101 = sphi 0, %s100
    %s117 = sphi 0, %s101
  $region4: #{lit_forward.50} parent=0 // loop_header_branch
    %12 = sbr.rel (%p10) target = $region8
  $region5: #{lit_forward.50} parent=0 // loop_body
    %s14 = ssub.s32 %s9, 1
    %s15 = ssub.s32 %s9, 2
    %s16 = sadd.s32 %s9, 1
    %s17 = ssub.s32 %s9, %s16
    %p18 = scmp.eq.s32.totalorder %s17, 0
    %s20 = sadd.s32 %s19, 1
    %s21 = scalar_select %p18, %s19, %s20
    %p24 = pneg %p18
    %p25 = scmp.eq.s32.totalorder %s9, 1
    %p26 = por %p24, %p25
    %p27 = scmp.ne.s32.totalorder %s19, %s22
    %p28 = scmp.eq.s32.totalorder %s9, 0
    %p29 = por %p27, %p28
    %p30 = scmp.ne.s32.totalorder %s19, %s22
    %p31 = scmp.eq.s32.totalorder %s14, 1
    %p32 = por %p30, %p31
    %p33 = scmp.ne.s32.totalorder %s22, %s23
    %p34 = scmp.eq.s32.totalorder %s14, 0
    %p35 = por %p33, %p34
    %p36 = scmp.ne.s32.totalorder %s22, %s23
    %p37 = scmp.eq.s32.totalorder %s15, 1
    %p38 = por %p36, %p37
    %p40 = scmp.ne.s32.totalorder %s23, %s39
    %p41 = scmp.eq.s32.totalorder %s15, 0
    %p42 = por %p40, %p41
    %s43 = ssub.s32 %s9, %s16
    %p44 = scmp.eq.s32.totalorder %s43, 0
    %s46 = sadd.s32 %s45, 1
    %s47 = scalar_select %p44, %s45, %s46
    %p50 = pneg %p44
    %p51 = scmp.eq.s32.totalorder %s9, 1
    %p52 = por %p50, %p51
    %p53 = scmp.ne.s32.totalorder %s45, %s48
    %p54 = scmp.eq.s32.totalorder %s9, 0
    %p55 = por %p53, %p54
    %p56 = scmp.ne.s32.totalorder %s45, %s48
    %p57 = scmp.eq.s32.totalorder %s14, 1
    %p58 = por %p56, %p57
    %p59 = scmp.ne.s32.totalorder %s48, %s49
    %p60 = scmp.eq.s32.totalorder %s14, 0
    %p61 = por %p59, %p60
    %p62 = scmp.ne.s32.totalorder %s48, %s49
    %p63 = scmp.eq.s32.totalorder %s15, 1
    %p64 = por %p62, %p63
    %p66 = scmp.ne.s32.totalorder %s49, %s65
    %p67 = scmp.eq.s32.totalorder %s15, 0
    %p68 = por %p66, %p67
    %s69 = ssub.s32 %s9, %s16
    %p70 = scmp.eq.s32.totalorder %s69, 0
    %s72 = sadd.s32 %s71, 1
    %s73 = scalar_select %p70, %s71, %s72
    %p76 = pneg %p70
    %p77 = scmp.eq.s32.totalorder %s9, 1
    %p78 = por %p76, %p77
    %p79 = scmp.ne.s32.totalorder %s71, %s74
    %p80 = scmp.eq.s32.totalorder %s9, 0
    %p81 = por %p79, %p80
    %p82 = scmp.ne.s32.totalorder %s71, %s74
    %p83 = scmp.eq.s32.totalorder %s14, 1
    %p84 = por %p82, %p83
    %p85 = scmp.ne.s32.totalorder %s74, %s75
    %p86 = scmp.eq.s32.totalorder %s14, 0
    %p87 = por %p85, %p86
    %p88 = scmp.ne.s32.totalorder %s74, %s75
    %p89 = scmp.eq.s32.totalorder %s15, 1
    %p90 = por %p88, %p89
    %p92 = scmp.ne.s32.totalorder %s75, %s91
    %p93 = scmp.eq.s32.totalorder %s15, 0
    %p94 = por %p92, %p93
    %s95 = ssub.s32 %s9, %s16
    %p96 = scmp.eq.s32.totalorder %s95, 0
    %s98 = sadd.s32 %s97, 1
    %s99 = scalar_select %p96, %s97, %s98
    %p102 = pneg %p96
    %p103 = scmp.eq.s32.totalorder %s9, 1
    %p104 = por %p102, %p103
    %p105 = scmp.ne.s32.totalorder %s97, %s100
    %p106 = scmp.eq.s32.totalorder %s9, 0
    %p107 = por %p105, %p106
    %p108 = scmp.ne.s32.totalorder %s97, %s100
    %p109 = scmp.eq.s32.totalorder %s14, 1
    %p110 = por %p108, %p109
    %p111 = scmp.ne.s32.totalorder %s100, %s101
    %p112 = scmp.eq.s32.totalorder %s14, 0
    %p113 = por %p111, %p112
    %p114 = scmp.ne.s32.totalorder %s100, %s101
    %p115 = scmp.eq.s32.totalorder %s15, 1
    %p116 = por %p114, %p115
    %p118 = scmp.ne.s32.totalorder %s101, %s117
    %p119 = scmp.eq.s32.totalorder %s15, 0
    %p120 = por %p118, %p119
    %p121 = scmp.le.s32.totalorder 1, %s9
    %p122 = scmp.lt.s32.totalorder %s9, 3
    %p123 = pnand %p121, %p122
    %p124 = pneg %p123
    // Predicated region
    $region9: #{lit_forward.50} parent=5 // pred_check
      _
    $region10: #{lit_forward.50} parent=5 // pred_check_branch
      %126 = sbr.rel (%p123) target = $region12
    $region11: #{lit_forward.50} parent=5 // pred_region
      %s127 = ssub.s32 %s9, 1
    $region12: #{lit_forward.50} parent=5 // pred_fallthru
      _
    %p128 = scmp.lt.s32.totalorder %s9, 2
    // Predicated region
    $region13: #{lit_forward.50} parent=5 // pred_check
      %p129 = pneg %p128
    $region14: #{lit_forward.50} parent=5 // pred_check_branch
      %131 = sbr.rel (%p129) target = $region16
    $region15: #{lit_forward.50} parent=5 // pred_region
      // Predicated region
      $region17: #{lit_forward.50} parent=15 // pred_check
        %p132 = pneg %p29
      $region18: #{lit_forward.50} parent=15 // pred_check_branch
        %134 = sbr.rel (%p132) target = $region20
      $region19: #{lit_forward.50} parent=15 // pred_region
        %p135 = scmp.lt.s32.totalorder %s9, 1
        %s136 = scalar_select %p135, %s9, 1
        %s137 = smul.addr %s136, 4
        %s138 = smul.addr %s137, 2
        %s139 = scalar_lea.vmem %s0, %s138
      $region20: #{lit_forward.50} parent=15 // pred_fallthru
        _
      // Predicated region
      $region21: #{lit_forward.50} parent=15 // pred_check
        %p140 = pneg %p55
      $region22: #{lit_forward.50} parent=15 // pred_check_branch
        %142 = sbr.rel (%p140) target = $region24
      $region23: #{lit_forward.50} parent=15 // pred_region
        %p143 = scmp.lt.s32.totalorder %s9, 1
        %s144 = scalar_select %p143, %s9, 1
        %s145 = smul.addr %s144, 4
        %s146 = smul.addr %s145, 2
        %s147 = scalar_lea.vmem %s1, %s146
      $region24: #{lit_forward.50} parent=15 // pred_fallthru
        _
      // Predicated region
      $region25: #{lit_forward.50} parent=15 // pred_check
        %p148 = pneg %p81
      $region26: #{lit_forward.50} parent=15 // pred_check_branch
        %150 = sbr.rel (%p148) target = $region28
      $region27: #{lit_forward.50} parent=15 // pred_region
        %p151 = scmp.lt.s32.totalorder %s9, 1
        %s152 = scalar_select %p151, %s9, 1
        %s153 = smul.addr %s152, 4
        %s154 = smul.addr %s153, 2
        %s155 = scalar_lea.vmem %s2, %s154
      $region28: #{lit_forward.50} parent=15 // pred_fallthru
        _
    $region16: #{lit_forward.50} parent=5 // pred_fallthru
      _
    %p156 = scmp.le.s32.totalorder 1, %s9
    %p157 = scmp.lt.s32.totalorder %s9, 3
    %p158 = pnand %p156, %p157
    %p159 = pneg %p158
    // Predicated region
    $region29: #{lit_forward.50} parent=5 // pred_check
      _
    $region30: #{lit_forward.50} parent=5 // pred_check_branch
      %161 = sbr.rel (%p158) target = $region32
    $region31: #{lit_forward.50} parent=5 // pred_region
      %s162 = ssub.s32 %s9, 1
      %p163 = scmp.lt.s32.totalorder %s14, 1
      %s164 = scalar_select %p163, %s14, 1
      %s165 = smul.addr %s164, 4
      %s166 = smul.addr %s165, 2
      %s167 = scalar_lea.vmem %s0, %s166
      %p168 = pneg %p35
      %p169 = pneg %p32
      %p170 = scmp.lt.s32.totalorder %s14, 1
      %s171 = scalar_select %p170, %s14, 1
      %s172 = smul.addr %s171, 4
      %s173 = smul.addr %s172, 2
      %s174 = scalar_lea.vmem %s1, %s173
      %p175 = pneg %p61
      %p176 = pneg %p58
      %p177 = scmp.lt.s32.totalorder %s14, 1
      %s178 = scalar_select %p177, %s14, 1
      %s179 = smul.addr %s178, 4
      %s180 = smul.addr %s179, 2
      %s181 = scalar_lea.vmem %s2, %s180
      %p182 = pneg %p87
      %p183 = pneg %p84
      %p184 = pneg %p113
      %p185 = pneg %p110
      %p186 = scmp.lt.s32.totalorder %s14, 1
      %s187 = scalar_select %p186, %s14, 1
      %s188 = smul.addr %s187, 4
      %s189 = smul.addr %s188, 2
      %s190 = scalar_lea.vmem %s3, %s189
      %p191 = scmp.lt.s32.totalorder %s14, 1
      %s192 = scalar_select %p191, %s14, 1
      %s193 = smul.addr %s192, 4
      %s194 = smul.addr %s193, 2
      %s195 = scalar_lea.vmem %s0, %s194
      %p196 = scmp.lt.s32.totalorder %s14, 1
      %s197 = scalar_select %p196, %s14, 1
      %s198 = smul.addr %s197, 4
      %s199 = smul.addr %s198, 2
      %s200 = scalar_lea.vmem %s1, %s199
      %p201 = scmp.lt.s32.totalorder %s14, 1
      %s202 = scalar_select %p201, %s14, 1
      %s203 = smul.addr %s202, 4
      %s204 = smul.addr %s203, 2
      %s205 = scalar_lea.vmem %s2, %s204
      %p206 = scmp.lt.s32.totalorder %s14, 1
      %s207 = scalar_select %p206, %s14, 1
      %s208 = smul.addr %s207, 4
      %s209 = smul.addr %s208, 2
      %s210 = scalar_lea.vmem %s3, %s209
      %v212 = vld [vmem:[%s195] sm:$0x3]
      %v213 = vld [vmem:[%s195 + $0x2] sm:$0x3]
      %v214 = vld [vmem:[%s195 + $0x4] sm:$0x3]
      %v215 = vld [vmem:[%s195 + $0x6] sm:$0x3]
      %v216 = vunpack.c.l.bf16 %v212
      %v217 = vunpack.c.l.bf16 %v213
      %v218 = vunpack.c.l.bf16 %v214
      %v219 = vunpack.c.l.bf16 %v215
      %v220 = vmul.f32 %v216, 0.25
      %v221 = vmul.f32 %v217, 0.25
      %v222 = vmul.f32 %v218, 0.25
      %v223 = vmul.f32 %v219, 0.25
      %v224 = vpack.c.bf16 %v220, %v220
      %v225 = vpack.c.bf16 %v221, %v221
      %v226 = vpack.c.bf16 %v222, %v222
      %v227 = vpack.c.bf16 %v223, %v223
      %v228 = vld [vmem:[%s200] sm:$0x3]
      %v229 = vld [vmem:[%s200 + $0x2] sm:$0x3]
      %v230 = vld [vmem:[%s200 + $0x4] sm:$0x3]
      %v231 = vld [vmem:[%s200 + $0x6] sm:$0x3]
      %v232 = vld [vmem:[%s205] sm:$0x3]
      %v233 = vld [vmem:[%s205 + $0x2] sm:$0x3]
      %v234 = vld [vmem:[%s205 + $0x4] sm:$0x3]
      %v235 = vld [vmem:[%s205 + $0x6] sm:$0x3]
      %vm236 = vcmask 130048
      %v238 = vsel %vm236, %v224, 0
      %v241 = vsel %vm236, %v228, 0
      %243 = vmatpush.bf16.xpose.msra.mxu0 0
      %244 = vmatpush.bf16.xpose.msra.mxu0 0
      %245 = vmatpush.bf16.xpose.msra.mxu0 0
      %246 = vmatpush.bf16.xpose.msra.mxu0 0
      %247 = vmatpush.bf16.xpose.msra.mxu0 0
      %248 = vmatpush.bf16.xpose.msra.mxu0 0
      %249 = vmatpush.bf16.xpose.msra.mxu0 0
      %250 = vmatpush.bf16.xpose.msra.mxu0 %v241
      %251 = vmatmul.bf16.gmra.mxu0 %v238
      %v252 = vpop.f32.mrf.mxu0
      %v253 = vadd.f32 0.0, %v252
      %v254 = vpop.f32.mrf.mxu0
      %255 = vdwg.mxu0
      %v257 = vsel %vm236, %v225, 0
      %v260 = vsel %vm236, %v229, 0
      %262 = vmatpush.bf16.xpose.msra.mxu0 0
      %263 = vmatpush.bf16.xpose.msra.mxu0 0
      %264 = vmatpush.bf16.xpose.msra.mxu0 0
      %265 = vmatpush.bf16.xpose.msra.mxu0 0
      %266 = vmatpush.bf16.xpose.msra.mxu0 0
      %267 = vmatpush.bf16.xpose.msra.mxu0 0
      %268 = vmatpush.bf16.xpose.msra.mxu0 0
      %269 = vmatpush.bf16.xpose.msra.mxu0 %v260
      %270 = vmatmul.bf16.gmra.mxu0 %v257
      %v271 = vpop.f32.mrf.mxu0
      %v272 = vadd.f32 0.0, %v271
      %v273 = vpop.f32.mrf.mxu0
      %274 = vdwg.mxu0
      %v276 = vsel %vm236, %v226, 0
      %v279 = vsel %vm236, %v230, 0
      %281 = vmatpush.bf16.xpose.msra.mxu0 0
      %282 = vmatpush.bf16.xpose.msra.mxu0 0
      %283 = vmatpush.bf16.xpose.msra.mxu0 0
      %284 = vmatpush.bf16.xpose.msra.mxu0 0
      %285 = vmatpush.bf16.xpose.msra.mxu0 0
      %286 = vmatpush.bf16.xpose.msra.mxu0 0
      %287 = vmatpush.bf16.xpose.msra.mxu0 0
      %288 = vmatpush.bf16.xpose.msra.mxu0 %v279
      %289 = vmatmul.bf16.gmra.mxu0 %v276
      %v290 = vpop.f32.mrf.mxu0
      %v291 = vadd.f32 0.0, %v290
      %v292 = vpop.f32.mrf.mxu0
      %293 = vdwg.mxu0
      %v295 = vsel %vm236, %v227, 0
      %v298 = vsel %vm236, %v231, 0
      %300 = vmatpush.bf16.xpose.msra.mxu0 0
      %301 = vmatpush.bf16.xpose.msra.mxu0 0
      %302 = vmatpush.bf16.xpose.msra.mxu0 0
      %303 = vmatpush.bf16.xpose.msra.mxu0 0
      %304 = vmatpush.bf16.xpose.msra.mxu0 0
      %305 = vmatpush.bf16.xpose.msra.mxu0 0
      %306 = vmatpush.bf16.xpose.msra.mxu0 0
      %307 = vmatpush.bf16.xpose.msra.mxu0 %v298
      %308 = vmatmul.bf16.gmra.mxu0 %v295
      %v309 = vpop.f32.mrf.mxu0
      %v310 = vadd.f32 0.0, %v309
      %v311 = vpop.f32.mrf.mxu0
      %312 = vdwg.mxu0
      %vm313 = vcmask 27648
      %v314 = vsel %vm313, %v253, -inf
      %315 = vmax.xlane.f32.xlu0 %v314
      %v316 = vpop.xlane.xlu0 %315
      %v317 = vsel %vm313, %v272, -inf
      %318 = vmax.xlane.f32.xlu0 %v317
      %v319 = vpop.xlane.xlu0 %318
      %v320 = vsel %vm313, %v291, -inf
      %321 = vmax.xlane.f32.xlu0 %v320
      %v322 = vpop.xlane.xlu0 %321
      %v323 = vsel %vm313, %v310, -inf
      %324 = vmax.xlane.f32.xlu0 %v323
      %v325 = vpop.xlane.xlu0 %324
      %v326 = vsub.f32 %v253, %v316
      %v327 = vsub.f32 %v272, %v319
      %v328 = vsub.f32 %v291, %v322
      %v329 = vsub.f32 %v310, %v325
      %v330 = vmul.f32 %v326, 1.442695
      %v331 = vpow.pop %v330
      %v332 = vmul.f32 %v327, 1.442695
      %v333 = vpow.pop %v332
      %v334 = vmul.f32 %v328, 1.442695
      %v335 = vpow.pop %v334
      %v336 = vmul.f32 %v329, 1.442695
      %v337 = vpow.pop %v336
      %v338 = vsel %vm313, %v331, 0.0
      %339 = vadd.xlane.f32.xlu0 %v338
      %v340 = vpop.xlane.xlu0 %339
      %v341 = vsel %vm313, %v333, 0.0
      %342 = vadd.xlane.f32.xlu0 %v341
      %v343 = vpop.xlane.xlu0 %342
      %v344 = vsel %vm313, %v335, 0.0
      %345 = vadd.xlane.f32.xlu0 %v344
      %v346 = vpop.xlane.xlu0 %345
      %v347 = vsel %vm313, %v337, 0.0
      %348 = vadd.xlane.f32.xlu0 %v347
      %v349 = vpop.xlane.xlu0 %348
      %v350 = vrcp.pop %v340
      %v351 = vrcp.pop %v343
      %v352 = vrcp.pop %v346
      %v353 = vrcp.pop %v349
      %v354 = vmul.f32 %v331, %v350
      %v355 = vmul.f32 %v333, %v351
      %v356 = vmul.f32 %v335, %v352
      %v357 = vmul.f32 %v337, %v353
      %v358 = vpack.c.bf16 %v354, %v354
      %v359 = vpack.c.bf16 %v355, %v355
      %v360 = vpack.c.bf16 %v356, %v356
      %v361 = vpack.c.bf16 %v357, %v357
      %vm362 = vcmask 31744
      %v364 = vsel %vm362, %v358, 0
      %vm366 = vcmask 1041408
      %v368 = vsel %vm366, %v232, 0
      %370 = vmatpush.bf16.msra.mxu0 0
      %371 = vmatpush.bf16.msra.mxu0 0
      %372 = vmatpush.bf16.msra.mxu0 0
      %373 = vmatpush.bf16.msra.mxu0 0
      %374 = vmatpush.bf16.msra.mxu0 0
      %375 = vmatpush.bf16.msra.mxu0 0
      %376 = vmatpush.bf16.msra.mxu0 0
      %377 = vmatpush.bf16.msra.mxu0 %v368
      %378 = vmatmul.bf16.gmra.mxu0 %v364
      %v379 = vpop.f32.mrf.mxu0
      %v380 = vadd.f32 0.0, %v379
      %v381 = vpop.f32.mrf.mxu0
      %382 = vdwg.mxu0
      %v384 = vsel %vm362, %v359, 0
      %v387 = vsel %vm366, %v233, 0
      %389 = vmatpush.bf16.msra.mxu0 0
      %390 = vmatpush.bf16.msra.mxu0 0
      %391 = vmatpush.bf16.msra.mxu0 0
      %392 = vmatpush.bf16.msra.mxu0 0
      %393 = vmatpush.bf16.msra.mxu0 0
      %394 = vmatpush.bf16.msra.mxu0 0
      %395 = vmatpush.bf16.msra.mxu0 0
      %396 = vmatpush.bf16.msra.mxu0 %v387
      %397 = vmatmul.bf16.gmra.mxu0 %v384
      %v398 = vpop.f32.mrf.mxu0
      %v399 = vadd.f32 0.0, %v398
      %v400 = vpop.f32.mrf.mxu0
      %401 = vdwg.mxu0
      %v403 = vsel %vm362, %v360, 0
      %v406 = vsel %vm366, %v234, 0
      %408 = vmatpush.bf16.msra.mxu0 0
      %409 = vmatpush.bf16.msra.mxu0 0
      %410 = vmatpush.bf16.msra.mxu0 0
      %411 = vmatpush.bf16.msra.mxu0 0
      %412 = vmatpush.bf16.msra.mxu0 0
      %413 = vmatpush.bf16.msra.mxu0 0
      %414 = vmatpush.bf16.msra.mxu0 0
      %415 = vmatpush.bf16.msra.mxu0 %v406
      %416 = vmatmul.bf16.gmra.mxu0 %v403
      %v417 = vpop.f32.mrf.mxu0
      %v418 = vadd.f32 0.0, %v417
      %v419 = vpop.f32.mrf.mxu0
      %420 = vdwg.mxu0
      %v422 = vsel %vm362, %v361, 0
      %v425 = vsel %vm366, %v235, 0
      %427 = vmatpush.bf16.msra.mxu0 0
      %428 = vmatpush.bf16.msra.mxu0 0
      %429 = vmatpush.bf16.msra.mxu0 0
      %430 = vmatpush.bf16.msra.mxu0 0
      %431 = vmatpush.bf16.msra.mxu0 0
      %432 = vmatpush.bf16.msra.mxu0 0
      %433 = vmatpush.bf16.msra.mxu0 0
      %434 = vmatpush.bf16.msra.mxu0 %v425
      %435 = vmatmul.bf16.gmra.mxu0 %v422
      %v436 = vpop.f32.mrf.mxu0
      %v437 = vadd.f32 0.0, %v436
      %v438 = vpop.f32.mrf.mxu0
      %439 = vdwg.mxu0
      %v440 = vpack.c.bf16 %v380, %v380
      %v441 = vpack.c.bf16 %v399, %v399
      %v442 = vpack.c.bf16 %v418, %v418
      %v443 = vpack.c.bf16 %v437, %v437
      %vm444 = vcmask 123904
      %445 = vst.msk [vmem:[%s210] sm:$0x3] %vm444, %v440
      %446 = vst.msk [vmem:[%s210 + $0x2] sm:$0x3] %vm444, %v441
      %447 = vst.msk [vmem:[%s210 + $0x4] sm:$0x3] %vm444, %v442
      %448 = vst.msk [vmem:[%s210 + $0x6] sm:$0x3] %vm444, %v443
      %p449 = scmp.lt.s32.totalorder %s14, 1
      %s450 = scalar_select %p449, %s14, 1
      %s451 = smul.addr %s450, 4
      %s452 = smul.addr %s451, 2
      %s453 = scalar_lea.vmem %s3, %s452
      // Predicated region
      $region33: #{lit_forward.50} parent=31 // pred_check
        %p454 = pneg %p110
      $region34: #{lit_forward.50} parent=31 // pred_check_branch
        %456 = sbr.rel (%p454) target = $region36
      $region35: #{lit_forward.50} parent=31 // pred_region
        _
      $region36: #{lit_forward.50} parent=31 // pred_fallthru
        _
    $region32: #{lit_forward.50} parent=5 // pred_fallthru
      _
    %p457 = scmp.le.s32.totalorder 2, %s9
    // Predicated region
    $region37: #{lit_forward.50} parent=5 // pred_check
      %p458 = pneg %p457
    $region38: #{lit_forward.50} parent=5 // pred_check_branch
      %460 = sbr.rel (%p458) target = $region40
    $region39: #{lit_forward.50} parent=5 // pred_region
      %s461 = ssub.s32 %s9, 2
      // Predicated region
      $region41: #{lit_forward.50} parent=39 // pred_check
        %p462 = pneg %p116
      $region42: #{lit_forward.50} parent=39 // pred_check_branch
        %464 = sbr.rel (%p462) target = $region44
      $region43: #{lit_forward.50} parent=39 // pred_region
        %p465 = scmp.lt.s32.totalorder %s15, 1
        %s466 = scalar_select %p465, %s15, 1
        %s467 = smul.addr %s466, 4
        %s468 = smul.addr %s467, 2
        %s469 = scalar_lea.vmem %s3, %s468
      $region44: #{lit_forward.50} parent=39 // pred_fallthru
        _
    $region40: #{lit_forward.50} parent=5 // pred_fallthru
      _
  $region6: #{lit_forward.50} parent=0 // loop_footer
    %s13 = sadd.s32 1, %s9
  $region7: #{lit_forward.50} parent=0 // loop_footer_branch
    %8 = sbr.rel target = $region3
  $region8: #{lit_forward.50} parent=0 // loop_exit
    _

// kernel: lit_forward.52
$region0: #{lit_forward.52}
  #allocation0 [shape = 'u32[]', space=smem, size = 0x4, offset = 0x4, fixed_abs, tag = 'smem constant byte address 0x4 - core index']
  #allocation1 [shape = 'u32[72,128]{1,0:T(1,128)}', space=vmem, size = 0x9000, scoped, tag = 'internal scratch']
  %s0 = inlined_call_operand.vmem [shape: bf16[8,64], index: 0, kind: input, shape index: {}]
  %s1 = inlined_call_operand.vmem [shape: f32[1,64], index: 1, kind: input, shape index: {}]
  %s2 = inlined_call_operand.vmem [shape: f32[1,64], index: 2, kind: input, shape index: {}]
  %s3 = inlined_call_operand.vmem [shape: bf16[64,256], index: 3, kind: input, shape index: {}]
  %s4 = inlined_call_operand.vmem [shape: f32[1,256], index: 4, kind: input, shape index: {}]
  %s5 = inlined_call_operand.vmem [shape: bf16[8,256], index: 5, kind: output, shape index: {}]
  %s6 = sld [smem:[#allocation0]]
  $region30: #{lit_forward.52} parent=0
    _
  %s8 = ssub.s32 1, %s6
  %s9 = scalar_select 0, %s8, %s6
  // Predicated region
  $region2: #{lit_forward.52} parent=0 // pred_check
    _
  $region3: #{lit_forward.52} parent=0 // pred_check_branch
    %11 = sbr.rel (0) target = $region5
  $region4: #{lit_forward.52} parent=0 // pred_region
    _
  $region5: #{lit_forward.52} parent=0 // pred_fallthru
    _
  // Predicated region
  $region6: #{lit_forward.52} parent=0 // pred_check
    _
  $region7: #{lit_forward.52} parent=0 // pred_check_branch
    %13 = sbr.rel (0) target = $region9
  $region8: #{lit_forward.52} parent=0 // pred_region
    _
  $region9: #{lit_forward.52} parent=0 // pred_fallthru
    _
  // Predicated region
  $region10: #{lit_forward.52} parent=0 // pred_check
    _
  $region11: #{lit_forward.52} parent=0 // pred_check_branch
    %15 = sbr.rel (0) target = $region13
  $region12: #{lit_forward.52} parent=0 // pred_region
    _
  $region13: #{lit_forward.52} parent=0 // pred_fallthru
    _
  // Predicated region
  $region14: #{lit_forward.52} parent=0 // pred_check
    _
  $region15: #{lit_forward.52} parent=0 // pred_check_branch
    %17 = sbr.rel (0) target = $region17
  $region16: #{lit_forward.52} parent=0 // pred_region
    _
  $region17: #{lit_forward.52} parent=0 // pred_fallthru
    _
  // Predicated region
  $region18: #{lit_forward.52} parent=0 // pred_check
    _
  $region19: #{lit_forward.52} parent=0 // pred_check_branch
    %19 = sbr.rel (0) target = $region21
  $region20: #{lit_forward.52} parent=0 // pred_region
    _
  $region21: #{lit_forward.52} parent=0 // pred_fallthru
    _
  %v21 = vld [vmem:[%s0] sm:$0xf]
  %v22 = vunpack.c.l.bf16 %v21
  %vm23 = vcmask 523264
  %v24 = vsel %vm23, %v22, 0.0
  %25 = vadd.xlane.f32.xlu0 %v24
  %v26 = vpop.xlane.xlu0 %25
  %v27 = vrcp.pop 64.0
  %v28 = vmul.f32 64.0, %v27
  %v29 = vsub.f32 1.0, %v28
  %v30 = vmul.f32 %v27, %v29
  %v31 = vadd.f32 %v27, %v30
  %vm32 = vweird.f32 %v27
  %v33 = vsel %vm32, %v27, %v31
  %v34 = vmul.f32 %v26, %v33
  %v35 = vsub.f32 %v22, %v34
  %v36 = vmul.f32 %v35, %v35
  %v37 = vsel %vm23, %v36, 0.0
  %38 = vadd.xlane.f32.xlu0 %v37
  %v39 = vpop.xlane.xlu0 %38
  %v40 = vmul.f32 %v39, %v33
  %v41 = vadd.f32 %v40, 1e-05
  %v42 = vrsqrt.pop %v41
  %v43 = vmul.f32 %v42, %v41
  %v44 = vmul.f32 %v43, %v42
  %v45 = vmul.f32 0.5, %v44
  %v46 = vsub.f32 1.5, %v45
  %v47 = vmul.f32 %v42, %v46
  %vm48 = vweird.f32 %v41
  %vm49 = vweird.f32 %v42
  %vm50 = vmor %vm48, %vm49
  %v51 = vsel %vm50, %v42, %v47
  %v52 = vmul.f32 %v35, %v51
  %v53 = vld [vmem:[%s1] sm:$0x1]
  %v55 = vperm.slane %v53, 0
  %v57 = vmul.f32 %v52, %v55
  %v58 = vld [vmem:[%s2] sm:$0x1]
  %v60 = vperm.slane %v58, 0
  %v62 = vadd.f32 %v57, %v60
  %v63 = vpack.c.bf16 %v62, %v62
  %v64 = vld [vmem:[%s3] sm:$0xff]
  %v65 = vld [vmem:[%s3 + $0x8] sm:$0xff]
  %v66 = vld [vmem:[%s3 + $0x10] sm:$0xff]
  %v67 = vld [vmem:[%s3 + $0x18] sm:$0xff]
  %v68 = vld [vmem:[%s3 + $0x20] sm:$0xff]
  %v69 = vld [vmem:[%s3 + $0x28] sm:$0xff]
  %v70 = vld [vmem:[%s3 + $0x30] sm:$0xff]
  %v71 = vld [vmem:[%s3 + $0x38] sm:$0xff]
  %v72 = vld [vmem:[%s4] sm:$0x3]
  %v74 = vperm.slane %v72, 0
  %v75 = vperm.slane %v72, 1
  %v86 = vunpack.c.l.b16 %v64
  %v87 = vunpack.c.h.b16 %v64
  %v88 = vunpack.c.l.b16 %v65
  %v89 = vunpack.c.h.b16 %v65
  %v90 = vunpack.c.l.b16 %v66
  %v91 = vunpack.c.h.b16 %v66
  %v92 = vunpack.c.l.b16 %v67
  %v93 = vunpack.c.h.b16 %v67
  %v94 = vunpack.c.l.b16 %v68
  %v95 = vunpack.c.h.b16 %v68
  %v96 = vunpack.c.l.b16 %v69
  %v97 = vunpack.c.h.b16 %v69
  %v98 = vunpack.c.l.b16 %v70
  %v99 = vunpack.c.h.b16 %v70
  %v100 = vunpack.c.l.b16 %v71
  %v101 = vunpack.c.h.b16 %v71
  %v102 = vpack.c.b16 %v88, %v86
  %v103 = vpack.c.b16 %v89, %v87
  %v104 = vpack.c.b16 %v92, %v90
  %v105 = vpack.c.b16 %v93, %v91
  %v106 = vpack.c.b16 %v96, %v94
  %v107 = vpack.c.b16 %v97, %v95
  %v108 = vpack.c.b16 %v100, %v98
  %v109 = vpack.c.b16 %v101, %v99
  %v119 = vsel %vm23, %v63, 0
  %121 = vmatpush.bf16.msra.mxu0 0
  %122 = vmatpush.bf16.msra.mxu0 0
  %123 = vmatpush.bf16.msra.mxu0 0
  %124 = vmatpush.bf16.msra.mxu0 0
  %125 = vmatpush.bf16.msra.mxu0 %v108
  %126 = vmatpush.bf16.msra.mxu0 %v106
  %127 = vmatpush.bf16.msra.mxu0 %v104
  %128 = vmatpush.bf16.msra.mxu0 %v102
  %129 = vmatmul.bf16.gmra.mxu0 %v119
  %v130 = vpop.f32.mrf.mxu0
  %v131 = vadd.f32 %v74, %v130
  %v132 = vpop.f32.mrf.mxu0
  %133 = vdwg.mxu0
  %134 = vmatpush.bf16.msra.mxu0 0
  %135 = vmatpush.bf16.msra.mxu0 0
  %136 = vmatpush.bf16.msra.mxu0 0
  %137 = vmatpush.bf16.msra.mxu0 0
  %138 = vmatpush.bf16.msra.mxu0 %v109
  %139 = vmatpush.bf16.msra.mxu0 %v107
  %140 = vmatpush.bf16.msra.mxu0 %v105
  %141 = vmatpush.bf16.msra.mxu0 %v103
  %142 = vmatmul.bf16.gmra.mxu0 %v119
  %v143 = vpop.f32.mrf.mxu0
  %v144 = vadd.f32 %v75, %v143
  %v145 = vpop.f32.mrf.mxu0
  %146 = vdwg.mxu0
  %v147 = vmul.f32 %v131, 0.5
  %v148 = vmul.f32 %v144, 0.5
  %v149 = vmul.f32 %v131, 0.70710677
  %v150 = vmul.f32 %v144, 0.70710677
  %v151 = vmul.f32 %v149, %v149
  %v152 = vmin.f32 16.0, %v151
  %v153 = vmul.f32 %v152, 2.1237322e-06
  %v154 = vadd.f32 %v153, 0.00028619796
  %v155 = vmul.f32 %v152, %v154
  %v156 = vadd.f32 %v155, 0.0036580483
  %v157 = vmul.f32 %v152, %v156
  %v158 = vadd.f32 %v157, 0.05243302
  %v159 = vmul.f32 %v152, %v158
  %v160 = vadd.f32 %v159, 0.18741608
  %v161 = vmul.f32 %v152, %v160
  %v162 = vadd.f32 %v161, 1.1283791
  %v163 = vmul.f32 %v149, %v162
  %v164 = vmul.f32 %v152, 3.8918573e-05
  %v165 = vadd.f32 %v164, 0.001143296
  %v166 = vmul.f32 %v152, %v165
  %v167 = vadd.f32 %v166, 0.014752088
  %v168 = vmul.f32 %v152, %v167
  %v169 = vadd.f32 %v168, 0.112945676
  %v170 = vmul.f32 %v152, %v169
  %v171 = vadd.f32 %v170, 0.4994258
  %v172 = vmul.f32 %v152, %v171
  %v173 = vadd.f32 %v172, 1.0
  %v174 = vrcp.pop %v173
  %v175 = vmul.f32 %v173, %v174
  %v176 = vsub.f32 1.0, %v175
  %v177 = vmul.f32 %v174, %v176
  %v178 = vadd.f32 %v174, %v177
  %vm179 = vweird.f32 %v173
  %vm180 = vweird.f32 %v174
  %vm181 = vmor %vm179, %vm180
  %v182 = vsel %vm181, %v174, %v178
  %v183 = vand.u32 2147483647, %v173
  %vm184 = vcmp.eq.f32.partialorder %v183, 8.507059e+37
  %v185 = vand.u32 %v173, 2147483648
  %v186 = vor.u32 1.1754944e-38, %v185
  %v187 = vsel %vm184, %v186, %v182
  %v188 = vmul.f32 %v163, %v187
  %v189 = vmin.f32 %v188, 1.0
  %v190 = vmax.f32 %v189, -1.0
  %v191 = vmul.f32 %v150, %v150
  %v192 = vmin.f32 16.0, %v191
  %v193 = vmul.f32 %v192, 2.1237322e-06
  %v194 = vadd.f32 %v193, 0.00028619796
  %v195 = vmul.f32 %v192, %v194
  %v196 = vadd.f32 %v195, 0.0036580483
  %v197 = vmul.f32 %v192, %v196
  %v198 = vadd.f32 %v197, 0.05243302
  %v199 = vmul.f32 %v192, %v198
  %v200 = vadd.f32 %v199, 0.18741608
  %v201 = vmul.f32 %v192, %v200
  %v202 = vadd.f32 %v201, 1.1283791
  %v203 = vmul.f32 %v150, %v202
  %v204 = vmul.f32 %v192, 3.8918573e-05
  %v205 = vadd.f32 %v204, 0.001143296
  %v206 = vmul.f32 %v192, %v205
  %v207 = vadd.f32 %v206, 0.014752088
  %v208 = vmul.f32 %v192, %v207
  %v209 = vadd.f32 %v208, 0.112945676
  %v210 = vmul.f32 %v192, %v209
  %v211 = vadd.f32 %v210, 0.4994258
  %v212 = vmul.f32 %v192, %v211
  %v213 = vadd.f32 %v212, 1.0
  %v214 = vrcp.pop %v213
  %v215 = vmul.f32 %v213, %v214
  %v216 = vsub.f32 1.0, %v215
  %v217 = vmul.f32 %v214, %v216
  %v218 = vadd.f32 %v214, %v217
  %vm219 = vweird.f32 %v213
  %vm220 = vweird.f32 %v214
  %vm221 = vmor %vm219, %vm220
  %v222 = vsel %vm221, %v214, %v218
  %v223 = vand.u32 2147483647, %v213
  %vm224 = vcmp.eq.f32.partialorder %v223, 8.507059e+37
  %v225 = vand.u32 %v213, 2147483648
  %v226 = vor.u32 1.1754944e-38, %v225
  %v227 = vsel %vm224, %v226, %v222
  %v228 = vmul.f32 %v203, %v227
  %v229 = vmin.f32 %v228, 1.0
  %v230 = vmax.f32 %v229, -1.0
  %v231 = vadd.f32 %v190, 1.0
  %v232 = vadd.f32 %v230, 1.0
  %v233 = vmul.f32 %v147, %v231
  %v234 = vmul.f32 %v148, %v232
  %v235 = vpack.c.bf16 %v234, %v233
  %236 = vst [vmem:[%s5] sm:$0xff] %v235
  // Predicated region
  $region22: #{lit_forward.52} parent=0 // pred_check
    _
  $region23: #{lit_forward.52} parent=0 // pred_check_branch
    %238 = sbr.rel (0) target = $region25
  $region24: #{lit_forward.52} parent=0 // pred_region
    _
  $region25: #{lit_forward.52} parent=0 // pred_fallthru
    _
  // Predicated region
  $region26: #{lit_forward.52} parent=0 // pred_check
    _
  $region27: #{lit_forward.52} parent=0 // pred_check_branch
    %240 = sbr.rel (0) target = $region29
  $region28: #{lit_forward.52} parent=0 // pred_region
    _
  $region29: #{lit_forward.52} parent=0 // pred_fallthru
    _

// kernel: lit_forward.53
$region0: #{lit_forward.53}
  #allocation0 [shape = 'u32[]', space=smem, size = 0x4, offset = 0x4, fixed_abs, tag = 'smem constant byte address 0x4 - core index']
  #allocation1 [shape = 'u32[72,128]{1,0:T(1,128)}', space=vmem, size = 0x9000, scoped, tag = 'internal scratch']
  %s0 = inlined_call_operand.vmem [shape: bf16[8,256], index: 0, kind: input, shape index: {}]
  %s1 = inlined_call_operand.vmem [shape: bf16[256,64], index: 1, kind: input, shape index: {}]
  %s2 = inlined_call_operand.vmem [shape: f32[1,64], index: 2, kind: input, shape index: {}]
  %s3 = inlined_call_operand.vmem [shape: bf16[8,64], index: 3, kind: input, shape index: {}]
  %s4 = inlined_call_operand.vmem [shape: bf16[8,64], index: 4, kind: output, shape index: {}]
  %s5 = sld [smem:[#allocation0]]
  $region26: #{lit_forward.53} parent=0
    _
  %s7 = ssub.s32 1, %s5
  %s8 = scalar_select 0, %s7, %s5
  // Predicated region
  $region2: #{lit_forward.53} parent=0 // pred_check
    _
  $region3: #{lit_forward.53} parent=0 // pred_check_branch
    %10 = sbr.rel (0) target = $region5
  $region4: #{lit_forward.53} parent=0 // pred_region
    _
  $region5: #{lit_forward.53} parent=0 // pred_fallthru
    _
  // Predicated region
  $region6: #{lit_forward.53} parent=0 // pred_check
    _
  $region7: #{lit_forward.53} parent=0 // pred_check_branch
    %12 = sbr.rel (0) target = $region9
  $region8: #{lit_forward.53} parent=0 // pred_region
    _
  $region9: #{lit_forward.53} parent=0 // pred_fallthru
    _
  // Predicated region
  $region10: #{lit_forward.53} parent=0 // pred_check
    _
  $region11: #{lit_forward.53} parent=0 // pred_check_branch
    %14 = sbr.rel (0) target = $region13
  $region12: #{lit_forward.53} parent=0 // pred_region
    _
  $region13: #{lit_forward.53} parent=0 // pred_fallthru
    _
  // Predicated region
  $region14: #{lit_forward.53} parent=0 // pred_check
    _
  $region15: #{lit_forward.53} parent=0 // pred_check_branch
    %16 = sbr.rel (0) target = $region17
  $region16: #{lit_forward.53} parent=0 // pred_region
    _
  $region17: #{lit_forward.53} parent=0 // pred_fallthru
    _
  %v17 = vld [vmem:[%s0] sm:$0xff]
  %v18 = vld [vmem:[%s1] sm:$0xf]
  %v19 = vld [vmem:[%s1 + $0x4] sm:$0xf]
  %v20 = vld [vmem:[%s1 + $0x8] sm:$0xf]
  %v21 = vld [vmem:[%s1 + $0xc] sm:$0xf]
  %v22 = vld [vmem:[%s1 + $0x10] sm:$0xf]
  %v23 = vld [vmem:[%s1 + $0x14] sm:$0xf]
  %v24 = vld [vmem:[%s1 + $0x18] sm:$0xf]
  %v25 = vld [vmem:[%s1 + $0x1c] sm:$0xf]
  %v26 = vld [vmem:[%s1 + $0x20] sm:$0xf]
  %v27 = vld [vmem:[%s1 + $0x24] sm:$0xf]
  %v28 = vld [vmem:[%s1 + $0x28] sm:$0xf]
  %v29 = vld [vmem:[%s1 + $0x2c] sm:$0xf]
  %v30 = vld [vmem:[%s1 + $0x30] sm:$0xf]
  %v31 = vld [vmem:[%s1 + $0x34] sm:$0xf]
  %v32 = vld [vmem:[%s1 + $0x38] sm:$0xf]
  %v33 = vld [vmem:[%s1 + $0x3c] sm:$0xf]
  %v34 = vld [vmem:[%s1 + $0x40] sm:$0xf]
  %v35 = vld [vmem:[%s1 + $0x44] sm:$0xf]
  %v36 = vld [vmem:[%s1 + $0x48] sm:$0xf]
  %v37 = vld [vmem:[%s1 + $0x4c] sm:$0xf]
  %v38 = vld [vmem:[%s1 + $0x50] sm:$0xf]
  %v39 = vld [vmem:[%s1 + $0x54] sm:$0xf]
  %v40 = vld [vmem:[%s1 + $0x58] sm:$0xf]
  %v41 = vld [vmem:[%s1 + $0x5c] sm:$0xf]
  %v42 = vld [vmem:[%s1 + $0x60] sm:$0xf]
  %v43 = vld [vmem:[%s1 + $0x64] sm:$0xf]
  %v44 = vld [vmem:[%s1 + $0x68] sm:$0xf]
  %v45 = vld [vmem:[%s1 + $0x6c] sm:$0xf]
  %v46 = vld [vmem:[%s1 + $0x70] sm:$0xf]
  %v47 = vld [vmem:[%s1 + $0x74] sm:$0xf]
  %v48 = vld [vmem:[%s1 + $0x78] sm:$0xf]
  %v49 = vld [vmem:[%s1 + $0x7c] sm:$0xf]
  %v50 = vld [vmem:[%s2] sm:$0x1]
  %v52 = vperm.slane %v50, 0
  %v55 = vunpack.c.l.b16 %v17
  %v56 = vunpack.c.h.b16 %v17
  %v57 = vpack.c.b16 %v55, %v55
  %v58 = vpack.c.b16 %v56, %v56
  %v93 = vunpack.c.l.b16 %v18
  %v94 = vunpack.c.l.b16 %v19
  %v95 = vunpack.c.l.b16 %v20
  %v96 = vunpack.c.l.b16 %v21
  %v97 = vunpack.c.l.b16 %v22
  %v98 = vunpack.c.l.b16 %v23
  %v99 = vunpack.c.l.b16 %v24
  %v100 = vunpack.c.l.b16 %v25
  %v101 = vunpack.c.l.b16 %v26
  %v102 = vunpack.c.l.b16 %v27
  %v103 = vunpack.c.l.b16 %v28
  %v104 = vunpack.c.l.b16 %v29
  %v105 = vunpack.c.l.b16 %v30
  %v106 = vunpack.c.l.b16 %v31
  %v107 = vunpack.c.l.b16 %v32
  %v108 = vunpack.c.l.b16 %v33
  %v109 = vunpack.c.l.b16 %v34
  %v110 = vunpack.c.l.b16 %v35
  %v111 = vunpack.c.l.b16 %v36
  %v112 = vunpack.c.l.b16 %v37
  %v113 = vunpack.c.l.b16 %v38
  %v114 = vunpack.c.l.b16 %v39
  %v115 = vunpack.c.l.b16 %v40
  %v116 = vunpack.c.l.b16 %v41
  %v117 = vunpack.c.l.b16 %v42
  %v118 = vunpack.c.l.b16 %v43
  %v119 = vunpack.c.l.b16 %v44
  %v120 = vunpack.c.l.b16 %v45
  %v121 = vunpack.c.l.b16 %v46
  %v122 = vunpack.c.l.b16 %v47
  %v123 = vunpack.c.l.b16 %v48
  %v124 = vunpack.c.l.b16 %v49
  %v125 = vpack.c.b16 %v94, %v93
  %v126 = vpack.c.b16 %v96, %v95
  %v127 = vpack.c.b16 %v98, %v97
  %v128 = vpack.c.b16 %v100, %v99
  %v129 = vpack.c.b16 %v102, %v101
  %v130 = vpack.c.b16 %v104, %v103
  %v131 = vpack.c.b16 %v106, %v105
  %v132 = vpack.c.b16 %v108, %v107
  %v133 = vpack.c.b16 %v110, %v109
  %v134 = vpack.c.b16 %v112, %v111
  %v135 = vpack.c.b16 %v114, %v113
  %v136 = vpack.c.b16 %v116, %v115
  %v137 = vpack.c.b16 %v118, %v117
  %v138 = vpack.c.b16 %v120, %v119
  %v139 = vpack.c.b16 %v122, %v121
  %v140 = vpack.c.b16 %v124, %v123
  %157 = vmatpush.bf16.msra.mxu0 %v132
  %158 = vmatpush.bf16.msra.mxu0 %v131
  %159 = vmatpush.bf16.msra.mxu0 %v130
  %160 = vmatpush.bf16.msra.mxu0 %v129
  %161 = vmatpush.bf16.msra.mxu0 %v128
  %162 = vmatpush.bf16.msra.mxu0 %v127
  %163 = vmatpush.bf16.msra.mxu0 %v126
  %164 = vmatpush.bf16.msra.mxu0 %v125
  %165 = vmatmul.bf16.gmra.mxu0 %v57
  %v166 = vpop.f32.mrf.mxu0
  %v167 = vadd.f32 %v52, %v166
  %v168 = vpop.f32.mrf.mxu0
  %169 = vdwg.mxu0
  %170 = vmatpush.bf16.msra.mxu0 %v140
  %171 = vmatpush.bf16.msra.mxu0 %v139
  %172 = vmatpush.bf16.msra.mxu0 %v138
  %173 = vmatpush.bf16.msra.mxu0 %v137
  %174 = vmatpush.bf16.msra.mxu0 %v136
  %175 = vmatpush.bf16.msra.mxu0 %v135
  %176 = vmatpush.bf16.msra.mxu0 %v134
  %177 = vmatpush.bf16.msra.mxu0 %v133
  %178 = vmatmul.bf16.gmra.mxu0 %v58
  %v179 = vpop.f32.mrf.mxu0
  %v180 = vadd.f32 %v167, %v179
  %v181 = vpop.f32.mrf.mxu0
  %182 = vdwg.mxu0
  %v183 = vld [vmem:[%s3] sm:$0xf]
  %v184 = vunpack.c.l.bf16 %v183
  %v185 = vadd.f32 %v180, %v184
  %v186 = vpack.c.bf16 %v185, %v185
  %vm187 = vcmask 519168
  %188 = vst.msk [vmem:[%s4] sm:$0xf] %vm187, %v186
  // Predicated region
  $region18: #{lit_forward.53} parent=0 // pred_check
    _
  $region19: #{lit_forward.53} parent=0 // pred_check_branch
    %190 = sbr.rel (0) target = $region21
  $region20: #{lit_forward.53} parent=0 // pred_region
    _
  $region21: #{lit_forward.53} parent=0 // pred_fallthru
    _
  // Predicated region
  $region22: #{lit_forward.53} parent=0 // pred_check
    _
  $region23: #{lit_forward.53} parent=0 // pred_check_branch
    %192 = sbr.rel (0) target = $region25
  $region24: #{lit_forward.53} parent=0 // pred_region
    _
  $region25: #{lit_forward.53} parent=0 // pred_fallthru
    _

// kernel: lit_forward.59
$region0: #{lit_forward.59}
  #allocation0 [shape = 'u32[]', space=smem, size = 0x4, offset = 0x4, fixed_abs, tag = 'smem constant byte address 0x4 - core index']
  #allocation1 [shape = 'u32[72,128]{1,0:T(1,128)}', space=vmem, size = 0x9000, scoped, tag = 'internal scratch']
  %s0 = inlined_call_operand.vmem [shape: bf16[2,256], index: 0, kind: input, shape index: {}]
  %s1 = inlined_call_operand.vmem [shape: bf16[256,8], index: 1, kind: input, shape index: {}]
  %s2 = inlined_call_operand.vmem [shape: f32[1,8], index: 2, kind: input, shape index: {}]
  %s3 = inlined_call_operand.vmem [shape: f32[2,8], index: 3, kind: output, shape index: {}]
  %s4 = sld [smem:[#allocation0]]
  $region22: #{lit_forward.59} parent=0
    _
  %s6 = ssub.s32 1, %s4
  %s7 = scalar_select 0, %s6, %s4
  // Predicated region
  $region2: #{lit_forward.59} parent=0 // pred_check
    _
  $region3: #{lit_forward.59} parent=0 // pred_check_branch
    %9 = sbr.rel (0) target = $region5
  $region4: #{lit_forward.59} parent=0 // pred_region
    _
  $region5: #{lit_forward.59} parent=0 // pred_fallthru
    _
  // Predicated region
  $region6: #{lit_forward.59} parent=0 // pred_check
    _
  $region7: #{lit_forward.59} parent=0 // pred_check_branch
    %11 = sbr.rel (0) target = $region9
  $region8: #{lit_forward.59} parent=0 // pred_region
    _
  $region9: #{lit_forward.59} parent=0 // pred_fallthru
    _
  // Predicated region
  $region10: #{lit_forward.59} parent=0 // pred_check
    _
  $region11: #{lit_forward.59} parent=0 // pred_check_branch
    %13 = sbr.rel (0) target = $region13
  $region12: #{lit_forward.59} parent=0 // pred_region
    _
  $region13: #{lit_forward.59} parent=0 // pred_fallthru
    _
  %v14 = vld [vmem:[%s0] sm:$0x3]
  %v15 = vld [vmem:[%s1] sm:$0xf]
  %v16 = vld [vmem:[%s1 + $0x4] sm:$0xf]
  %v17 = vld [vmem:[%s1 + $0x8] sm:$0xf]
  %v18 = vld [vmem:[%s1 + $0xc] sm:$0xf]
  %v19 = vld [vmem:[%s1 + $0x10] sm:$0xf]
  %v20 = vld [vmem:[%s1 + $0x14] sm:$0xf]
  %v21 = vld [vmem:[%s1 + $0x18] sm:$0xf]
  %v22 = vld [vmem:[%s1 + $0x1c] sm:$0xf]
  %v23 = vld [vmem:[%s1 + $0x20] sm:$0xf]
  %v24 = vld [vmem:[%s1 + $0x24] sm:$0xf]
  %v25 = vld [vmem:[%s1 + $0x28] sm:$0xf]
  %v26 = vld [vmem:[%s1 + $0x2c] sm:$0xf]
  %v27 = vld [vmem:[%s1 + $0x30] sm:$0xf]
  %v28 = vld [vmem:[%s1 + $0x34] sm:$0xf]
  %v29 = vld [vmem:[%s1 + $0x38] sm:$0xf]
  %v30 = vld [vmem:[%s1 + $0x3c] sm:$0xf]
  %v31 = vld [vmem:[%s1 + $0x40] sm:$0xf]
  %v32 = vld [vmem:[%s1 + $0x44] sm:$0xf]
  %v33 = vld [vmem:[%s1 + $0x48] sm:$0xf]
  %v34 = vld [vmem:[%s1 + $0x4c] sm:$0xf]
  %v35 = vld [vmem:[%s1 + $0x50] sm:$0xf]
  %v36 = vld [vmem:[%s1 + $0x54] sm:$0xf]
  %v37 = vld [vmem:[%s1 + $0x58] sm:$0xf]
  %v38 = vld [vmem:[%s1 + $0x5c] sm:$0xf]
  %v39 = vld [vmem:[%s1 + $0x60] sm:$0xf]
  %v40 = vld [vmem:[%s1 + $0x64] sm:$0xf]
  %v41 = vld [vmem:[%s1 + $0x68] sm:$0xf]
  %v42 = vld [vmem:[%s1 + $0x6c] sm:$0xf]
  %v43 = vld [vmem:[%s1 + $0x70] sm:$0xf]
  %v44 = vld [vmem:[%s1 + $0x74] sm:$0xf]
  %v45 = vld [vmem:[%s1 + $0x78] sm:$0xf]
  %v46 = vld [vmem:[%s1 + $0x7c] sm:$0xf]
  %v47 = vld [vmem:[%s2] sm:$0x1]
  %v49 = vperm.slane %v47, 0
  %52 = vst [vmem:[#allocation1] ss:$9 sm:$0xff] %v14
  %v53 = vld [vmem:[#allocation1] sm:$0xff]
  %v54 = vld [vmem:[#allocation1 + $0x9] sm:$0xff]
  %v89 = vunpack.c.l.b16 %v15
  %v90 = vunpack.c.l.b16 %v16
  %v91 = vunpack.c.l.b16 %v17
  %v92 = vunpack.c.l.b16 %v18
  %v93 = vunpack.c.l.b16 %v19
  %v94 = vunpack.c.l.b16 %v20
  %v95 = vunpack.c.l.b16 %v21
  %v96 = vunpack.c.l.b16 %v22
  %v97 = vunpack.c.l.b16 %v23
  %v98 = vunpack.c.l.b16 %v24
  %v99 = vunpack.c.l.b16 %v25
  %v100 = vunpack.c.l.b16 %v26
  %v101 = vunpack.c.l.b16 %v27
  %v102 = vunpack.c.l.b16 %v28
  %v103 = vunpack.c.l.b16 %v29
  %v104 = vunpack.c.l.b16 %v30
  %v105 = vunpack.c.l.b16 %v31
  %v106 = vunpack.c.l.b16 %v32
  %v107 = vunpack.c.l.b16 %v33
  %v108 = vunpack.c.l.b16 %v34
  %v109 = vunpack.c.l.b16 %v35
  %v110 = vunpack.c.l.b16 %v36
  %v111 = vunpack.c.l.b16 %v37
  %v112 = vunpack.c.l.b16 %v38
  %v113 = vunpack.c.l.b16 %v39
  %v114 = vunpack.c.l.b16 %v40
  %v115 = vunpack.c.l.b16 %v41
  %v116 = vunpack.c.l.b16 %v42
  %v117 = vunpack.c.l.b16 %v43
  %v118 = vunpack.c.l.b16 %v44
  %v119 = vunpack.c.l.b16 %v45
  %v120 = vunpack.c.l.b16 %v46
  %v121 = vpack.c.b16 %v90, %v89
  %v122 = vpack.c.b16 %v92, %v91
  %v123 = vpack.c.b16 %v94, %v93
  %v124 = vpack.c.b16 %v96, %v95
  %v125 = vpack.c.b16 %v98, %v97
  %v126 = vpack.c.b16 %v100, %v99
  %v127 = vpack.c.b16 %v102, %v101
  %v128 = vpack.c.b16 %v104, %v103
  %v129 = vpack.c.b16 %v106, %v105
  %v130 = vpack.c.b16 %v108, %v107
  %v131 = vpack.c.b16 %v110, %v109
  %v132 = vpack.c.b16 %v112, %v111
  %v133 = vpack.c.b16 %v114, %v113
  %v134 = vpack.c.b16 %v116, %v115
  %v135 = vpack.c.b16 %v118, %v117
  %v136 = vpack.c.b16 %v120, %v119
  %153 = vmatpush.bf16.msra.mxu0 %v128
  %154 = vmatpush.bf16.msra.mxu0 %v127
  %155 = vmatpush.bf16.msra.mxu0 %v126
  %156 = vmatpush.bf16.msra.mxu0 %v125
  %157 = vmatpush.bf16.msra.mxu0 %v124
  %158 = vmatpush.bf16.msra.mxu0 %v123
  %159 = vmatpush.bf16.msra.mxu0 %v122
  %160 = vmatpush.bf16.msra.mxu0 %v121
  %161 = vmatmul.bf16.gmra.mxu0 %v53
  %v162 = vpop.f32.mrf.mxu0
  %v163 = vadd.f32 %v49, %v162
  %v164 = vpop.f32.mrf.mxu0
  %165 = vdwg.mxu0
  %166 = vmatpush.bf16.msra.mxu0 %v136
  %167 = vmatpush.bf16.msra.mxu0 %v135
  %168 = vmatpush.bf16.msra.mxu0 %v134
  %169 = vmatpush.bf16.msra.mxu0 %v133
  %170 = vmatpush.bf16.msra.mxu0 %v132
  %171 = vmatpush.bf16.msra.mxu0 %v131
  %172 = vmatpush.bf16.msra.mxu0 %v130
  %173 = vmatpush.bf16.msra.mxu0 %v129
  %174 = vmatmul.bf16.gmra.mxu0 %v54
  %v175 = vpop.f32.mrf.mxu0
  %v176 = vadd.f32 %v163, %v175
  %v177 = vpop.f32.mrf.mxu0
  %178 = vdwg.mxu0
  %vm179 = vcmask 58368
  %180 = vst.msk [vmem:[%s3] sm:$0x3] %vm179, %v176
  // Predicated region
  $region14: #{lit_forward.59} parent=0 // pred_check
    _
  $region15: #{lit_forward.59} parent=0 // pred_check_branch
    %182 = sbr.rel (0) target = $region17
  $region16: #{lit_forward.59} parent=0 // pred_region
    _
  $region17: #{lit_forward.59} parent=0 // pred_fallthru
    _
  // Predicated region
  $region18: #{lit_forward.59} parent=0 // pred_check
    _
  $region19: #{lit_forward.59} parent=0 // pred_check_branch
    %184 = sbr.rel (0) target = $region21
  $region20: #{lit_forward.59} parent=0 // pred_region
    _
  $region21: #{lit_forward.59} parent=0 // pred_fallthru
    _

// kernel: lit_forward.60
$region0: #{lit_forward.60}
  #allocation0 [shape = 'u32[]', space=smem, size = 0x4, offset = 0x4, fixed_abs, tag = 'smem constant byte address 0x4 - core index']
  #allocation1 [shape = 'u32[72,128]{1,0:T(1,128)}', space=vmem, size = 0x9000, scoped, tag = 'internal scratch']
  %s0 = inlined_call_operand.vmem [shape: f32[2,256], index: 0, kind: input, shape index: {}]
  %s1 = inlined_call_operand.vmem [shape: bf16[256,128], index: 1, kind: input, shape index: {}]
  %s2 = inlined_call_operand.vmem [shape: f32[1,128], index: 2, kind: input, shape index: {}]
  %s3 = inlined_call_operand.vmem [shape: bf16[2,128], index: 3, kind: output, shape index: {}]
  %s4 = sld [smem:[#allocation0]]
  $region22: #{lit_forward.60} parent=0
    _
  %s6 = ssub.s32 1, %s4
  %s7 = scalar_select 0, %s6, %s4
  // Predicated region
  $region2: #{lit_forward.60} parent=0 // pred_check
    _
  $region3: #{lit_forward.60} parent=0 // pred_check_branch
    %9 = sbr.rel (0) target = $region5
  $region4: #{lit_forward.60} parent=0 // pred_region
    _
  $region5: #{lit_forward.60} parent=0 // pred_fallthru
    _
  // Predicated region
  $region6: #{lit_forward.60} parent=0 // pred_check
    _
  $region7: #{lit_forward.60} parent=0 // pred_check_branch
    %11 = sbr.rel (0) target = $region9
  $region8: #{lit_forward.60} parent=0 // pred_region
    _
  $region9: #{lit_forward.60} parent=0 // pred_fallthru
    _
  // Predicated region
  $region10: #{lit_forward.60} parent=0 // pred_check
    _
  $region11: #{lit_forward.60} parent=0 // pred_check_branch
    %13 = sbr.rel (0) target = $region13
  $region12: #{lit_forward.60} parent=0 // pred_region
    _
  $region13: #{lit_forward.60} parent=0 // pred_fallthru
    _
  %v14 = vld [vmem:[%s0] sm:$0xf]
  %16 = vst [vmem:[#allocation1] ss:$4 sm:$0xff] %v14
  %v17 = vld.sshfl [vmem:[#allocation1] sm:$0xff pattern:$0x73625140]
  %v18 = vld.sshfl [vmem:[#allocation1 + $0x8] sm:$0xff pattern:$0x73625140]
  %v21 = vpack.c.bf16 %v17, %v17
  %v22 = vpack.c.bf16 %v18, %v18
  %v23 = vld [vmem:[%s1] sm:$0xf]
  %v24 = vld [vmem:[%s1 + $0x4] sm:$0xf]
  %v25 = vld [vmem:[%s1 + $0x8] sm:$0xf]
  %v26 = vld [vmem:[%s1 + $0xc] sm:$0xf]
  %v27 = vld [vmem:[%s1 + $0x10] sm:$0xf]
  %v28 = vld [vmem:[%s1 + $0x14] sm:$0xf]
  %v29 = vld [vmem:[%s1 + $0x18] sm:$0xf]
  %v30 = vld [vmem:[%s1 + $0x1c] sm:$0xf]
  %v31 = vld [vmem:[%s1 + $0x20] sm:$0xf]
  %v32 = vld [vmem:[%s1 + $0x24] sm:$0xf]
  %v33 = vld [vmem:[%s1 + $0x28] sm:$0xf]
  %v34 = vld [vmem:[%s1 + $0x2c] sm:$0xf]
  %v35 = vld [vmem:[%s1 + $0x30] sm:$0xf]
  %v36 = vld [vmem:[%s1 + $0x34] sm:$0xf]
  %v37 = vld [vmem:[%s1 + $0x38] sm:$0xf]
  %v38 = vld [vmem:[%s1 + $0x3c] sm:$0xf]
  %v39 = vld [vmem:[%s1 + $0x40] sm:$0xf]
  %v40 = vld [vmem:[%s1 + $0x44] sm:$0xf]
  %v41 = vld [vmem:[%s1 + $0x48] sm:$0xf]
  %v42 = vld [vmem:[%s1 + $0x4c] sm:$0xf]
  %v43 = vld [vmem:[%s1 + $0x50] sm:$0xf]
  %v44 = vld [vmem:[%s1 + $0x54] sm:$0xf]
  %v45 = vld [vmem:[%s1 + $0x58] sm:$0xf]
  %v46 = vld [vmem:[%s1 + $0x5c] sm:$0xf]
  %v47 = vld [vmem:[%s1 + $0x60] sm:$0xf]
  %v48 = vld [vmem:[%s1 + $0x64] sm:$0xf]
  %v49 = vld [vmem:[%s1 + $0x68] sm:$0xf]
  %v50 = vld [vmem:[%s1 + $0x6c] sm:$0xf]
  %v51 = vld [vmem:[%s1 + $0x70] sm:$0xf]
  %v52 = vld [vmem:[%s1 + $0x74] sm:$0xf]
  %v53 = vld [vmem:[%s1 + $0x78] sm:$0xf]
  %v54 = vld [vmem:[%s1 + $0x7c] sm:$0xf]
  %v55 = vld [vmem:[%s2] sm:$0x1]
  %v57 = vperm.slane %v55, 0
  %v91 = vunpack.c.l.b16 %v23
  %v92 = vunpack.c.l.b16 %v24
  %v93 = vunpack.c.l.b16 %v25
  %v94 = vunpack.c.l.b16 %v26
  %v95 = vunpack.c.l.b16 %v27
  %v96 = vunpack.c.l.b16 %v28
  %v97 = vunpack.c.l.b16 %v29
  %v98 = vunpack.c.l.b16 %v30
  %v99 = vunpack.c.l.b16 %v31
  %v100 = vunpack.c.l.b16 %v32
  %v101 = vunpack.c.l.b16 %v33
  %v102 = vunpack.c.l.b16 %v34
  %v103 = vunpack.c.l.b16 %v35
  %v104 = vunpack.c.l.b16 %v36
  %v105 = vunpack.c.l.b16 %v37
  %v106 = vunpack.c.l.b16 %v38
  %v107 = vunpack.c.l.b16 %v39
  %v108 = vunpack.c.l.b16 %v40
  %v109 = vunpack.c.l.b16 %v41
  %v110 = vunpack.c.l.b16 %v42
  %v111 = vunpack.c.l.b16 %v43
  %v112 = vunpack.c.l.b16 %v44
  %v113 = vunpack.c.l.b16 %v45
  %v114 = vunpack.c.l.b16 %v46
  %v115 = vunpack.c.l.b16 %v47
  %v116 = vunpack.c.l.b16 %v48
  %v117 = vunpack.c.l.b16 %v49
  %v118 = vunpack.c.l.b16 %v50
  %v119 = vunpack.c.l.b16 %v51
  %v120 = vunpack.c.l.b16 %v52
  %v121 = vunpack.c.l.b16 %v53
  %v122 = vunpack.c.l.b16 %v54
  %v123 = vpack.c.b16 %v92, %v91
  %v124 = vpack.c.b16 %v94, %v93
  %v125 = vpack.c.b16 %v96, %v95
  %v126 = vpack.c.b16 %v98, %v97
  %v127 = vpack.c.b16 %v100, %v99
  %v128 = vpack.c.b16 %v102, %v101
  %v129 = vpack.c.b16 %v104, %v103
  %v130 = vpack.c.b16 %v106, %v105
  %v131 = vpack.c.b16 %v108, %v107
  %v132 = vpack.c.b16 %v110, %v109
  %v133 = vpack.c.b16 %v112, %v111
  %v134 = vpack.c.b16 %v114, %v113
  %v135 = vpack.c.b16 %v116, %v115
  %v136 = vpack.c.b16 %v118, %v117
  %v137 = vpack.c.b16 %v120, %v119
  %v138 = vpack.c.b16 %v122, %v121
  %155 = vmatpush.bf16.msra.mxu0 %v130
  %156 = vmatpush.bf16.msra.mxu0 %v129
  %157 = vmatpush.bf16.msra.mxu0 %v128
  %158 = vmatpush.bf16.msra.mxu0 %v127
  %159 = vmatpush.bf16.msra.mxu0 %v126
  %160 = vmatpush.bf16.msra.mxu0 %v125
  %161 = vmatpush.bf16.msra.mxu0 %v124
  %162 = vmatpush.bf16.msra.mxu0 %v123
  %163 = vmatmul.bf16.gmra.mxu0 %v21
  %v164 = vpop.f32.mrf.mxu0
  %v165 = vadd.f32 %v57, %v164
  %v166 = vpop.f32.mrf.mxu0
  %167 = vdwg.mxu0
  %168 = vmatpush.bf16.msra.mxu0 %v138
  %169 = vmatpush.bf16.msra.mxu0 %v137
  %170 = vmatpush.bf16.msra.mxu0 %v136
  %171 = vmatpush.bf16.msra.mxu0 %v135
  %172 = vmatpush.bf16.msra.mxu0 %v134
  %173 = vmatpush.bf16.msra.mxu0 %v133
  %174 = vmatpush.bf16.msra.mxu0 %v132
  %175 = vmatpush.bf16.msra.mxu0 %v131
  %176 = vmatmul.bf16.gmra.mxu0 %v22
  %v177 = vpop.f32.mrf.mxu0
  %v178 = vadd.f32 %v165, %v177
  %v179 = vpop.f32.mrf.mxu0
  %180 = vdwg.mxu0
  %v181 = vmul.f32 %v178, 0.5
  %v182 = vmul.f32 %v178, 0.70710677
  %v183 = vmul.f32 %v182, %v182
  %v184 = vmin.f32 16.0, %v183
  %v185 = vmul.f32 %v184, 2.1237322e-06
  %v186 = vadd.f32 %v185, 0.00028619796
  %v187 = vmul.f32 %v184, %v186
  %v188 = vadd.f32 %v187, 0.0036580483
  %v189 = vmul.f32 %v184, %v188
  %v190 = vadd.f32 %v189, 0.05243302
  %v191 = vmul.f32 %v184, %v190
  %v192 = vadd.f32 %v191, 0.18741608
  %v193 = vmul.f32 %v184, %v192
  %v194 = vadd.f32 %v193, 1.1283791
  %v195 = vmul.f32 %v182, %v194
  %v196 = vmul.f32 %v184, 3.8918573e-05
  %v197 = vadd.f32 %v196, 0.001143296
  %v198 = vmul.f32 %v184, %v197
  %v199 = vadd.f32 %v198, 0.014752088
  %v200 = vmul.f32 %v184, %v199
  %v201 = vadd.f32 %v200, 0.112945676
  %v202 = vmul.f32 %v184, %v201
  %v203 = vadd.f32 %v202, 0.4994258
  %v204 = vmul.f32 %v184, %v203
  %v205 = vadd.f32 %v204, 1.0
  %v206 = vrcp.pop %v205
  %v207 = vmul.f32 %v205, %v206
  %v208 = vsub.f32 1.0, %v207
  %v209 = vmul.f32 %v206, %v208
  %v210 = vadd.f32 %v206, %v209
  %vm211 = vweird.f32 %v205
  %vm212 = vweird.f32 %v206
  %vm213 = vmor %vm211, %vm212
  %v214 = vsel %vm213, %v206, %v210
  %v215 = vand.u32 2147483647, %v205
  %vm216 = vcmp.eq.f32.partialorder %v215, 8.507059e+37
  %v217 = vand.u32 %v205, 2147483648
  %v218 = vor.u32 1.1754944e-38, %v217
  %v219 = vsel %vm216, %v218, %v214
  %v220 = vmul.f32 %v195, %v219
  %v221 = vmin.f32 %v220, 1.0
  %v222 = vmax.f32 %v221, -1.0
  %v223 = vadd.f32 %v222, 1.0
  %v224 = vmul.f32 %v181, %v223
  %v225 = vpack.c.bf16 %v224, %v224
  %226 = vst [vmem:[%s3] sm:$0x1] %v225
  // Predicated region
  $region14: #{lit_forward.60} parent=0 // pred_check
    _
  $region15: #{lit_forward.60} parent=0 // pred_check_branch
    %228 = sbr.rel (0) target = $region17
  $region16: #{lit_forward.60} parent=0 // pred_region
    _
  $region17: #{lit_forward.60} parent=0 // pred_fallthru
    _
  // Predicated region
  $region18: #{lit_forward.60} parent=0 // pred_check
    _
  $region19: #{lit_forward.60} parent=0 // pred_check_branch
    %230 = sbr.rel (0) target = $region21
  $region20: #{lit_forward.60} parent=0 // pred_region
    _
  $region21: #{lit_forward.60} parent=0 // pred_fallthru
    _

// kernel: lit_forward.61
$region0: #{lit_forward.61}
  #allocation0 [shape = 'u32[]', space=smem, size = 0x4, offset = 0x4, fixed_abs, tag = 'smem constant byte address 0x4 - core index']
  #allocation1 [shape = 'u32[72,128]{1,0:T(1,128)}', space=vmem, size = 0x9000, scoped, tag = 'internal scratch']
  %s0 = inlined_call_operand.vmem [shape: bf16[4,128], index: 0, kind: input, shape index: {}]
  %s1 = inlined_call_operand.vmem [shape: f32[1,128], index: 1, kind: input, shape index: {}]
  %s2 = inlined_call_operand.vmem [shape: f32[1,128], index: 2, kind: input, shape index: {}]
  %s3 = inlined_call_operand.vmem [shape: bf16[128,384], index: 3, kind: input, shape index: {}]
  %s4 = inlined_call_operand.vmem [shape: f32[1,384], index: 4, kind: input, shape index: {}]
  %s5 = inlined_call_operand.vmem [shape: bf16[4,384], index: 5, kind: output, shape index: {}]
  %s6 = sld [smem:[#allocation0]]
  $region30: #{lit_forward.61} parent=0
    _
  %s8 = ssub.s32 1, %s6
  %s9 = scalar_select 0, %s8, %s6
  // Predicated region
  $region2: #{lit_forward.61} parent=0 // pred_check
    _
  $region3: #{lit_forward.61} parent=0 // pred_check_branch
    %11 = sbr.rel (0) target = $region5
  $region4: #{lit_forward.61} parent=0 // pred_region
    _
  $region5: #{lit_forward.61} parent=0 // pred_fallthru
    _
  // Predicated region
  $region6: #{lit_forward.61} parent=0 // pred_check
    _
  $region7: #{lit_forward.61} parent=0 // pred_check_branch
    %13 = sbr.rel (0) target = $region9
  $region8: #{lit_forward.61} parent=0 // pred_region
    _
  $region9: #{lit_forward.61} parent=0 // pred_fallthru
    _
  // Predicated region
  $region10: #{lit_forward.61} parent=0 // pred_check
    _
  $region11: #{lit_forward.61} parent=0 // pred_check_branch
    %15 = sbr.rel (0) target = $region13
  $region12: #{lit_forward.61} parent=0 // pred_region
    _
  $region13: #{lit_forward.61} parent=0 // pred_fallthru
    _
  // Predicated region
  $region14: #{lit_forward.61} parent=0 // pred_check
    _
  $region15: #{lit_forward.61} parent=0 // pred_check_branch
    %17 = sbr.rel (0) target = $region17
  $region16: #{lit_forward.61} parent=0 // pred_region
    _
  $region17: #{lit_forward.61} parent=0 // pred_fallthru
    _
  // Predicated region
  $region18: #{lit_forward.61} parent=0 // pred_check
    _
  $region19: #{lit_forward.61} parent=0 // pred_check_branch
    %19 = sbr.rel (0) target = $region21
  $region20: #{lit_forward.61} parent=0 // pred_region
    _
  $region21: #{lit_forward.61} parent=0 // pred_fallthru
    _
  %v20 = vld [vmem:[%s0] sm:$0x3]
  %v21 = vunpack.c.l.bf16 %v20
  %vm22 = vcmask 1043456
  %v23 = vsel %vm22, %v21, 0.0
  %24 = vadd.xlane.f32.xlu0 %v23
  %v25 = vpop.xlane.xlu0 %24
  %v26 = vrcp.pop 128.0
  %v27 = vmul.f32 128.0, %v26
  %v28 = vsub.f32 1.0, %v27
  %v29 = vmul.f32 %v26, %v28
  %v30 = vadd.f32 %v26, %v29
  %vm31 = vweird.f32 %v26
  %v32 = vsel %vm31, %v26, %v30
  %v33 = vmul.f32 %v25, %v32
  %v34 = vsub.f32 %v21, %v33
  %v35 = vmul.f32 %v34, %v34
  %v36 = vsel %vm22, %v35, 0.0
  %37 = vadd.xlane.f32.xlu0 %v36
  %v38 = vpop.xlane.xlu0 %37
  %v39 = vmul.f32 %v38, %v32
  %v40 = vadd.f32 %v39, 1e-05
  %v41 = vrsqrt.pop %v40
  %v42 = vmul.f32 %v41, %v40
  %v43 = vmul.f32 %v42, %v41
  %v44 = vmul.f32 0.5, %v43
  %v45 = vsub.f32 1.5, %v44
  %v46 = vmul.f32 %v41, %v45
  %vm47 = vweird.f32 %v40
  %vm48 = vweird.f32 %v41
  %vm49 = vmor %vm47, %vm48
  %v50 = vsel %vm49, %v41, %v46
  %v51 = vmul.f32 %v34, %v50
  %v52 = vld [vmem:[%s1] sm:$0x1]
  %v54 = vperm.slane %v52, 0
  %v56 = vmul.f32 %v51, %v54
  %v57 = vld [vmem:[%s2] sm:$0x1]
  %v59 = vperm.slane %v57, 0
  %v61 = vadd.f32 %v56, %v59
  %v62 = vpack.c.bf16 %v61, %v61
  %v63 = vld [vmem:[%s3] sm:$0xff]
  %v64 = vld [vmem:[%s3 + $0x8] sm:$0xf]
  %v65 = vld [vmem:[%s3 + $0xc] sm:$0xff]
  %v66 = vld [vmem:[%s3 + $0x14] sm:$0xf]
  %v67 = vld [vmem:[%s3 + $0x18] sm:$0xff]
  %v68 = vld [vmem:[%s3 + $0x20] sm:$0xf]
  %v69 = vld [vmem:[%s3 + $0x24] sm:$0xff]
  %v70 = vld [vmem:[%s3 + $0x2c] sm:$0xf]
  %v71 = vld [vmem:[%s3 + $0x30] sm:$0xff]
  %v72 = vld [vmem:[%s3 + $0x38] sm:$0xf]
  %v73 = vld [vmem:[%s3 + $0x3c] sm:$0xff]
  %v74 = vld [vmem:[%s3 + $0x44] sm:$0xf]
  %v75 = vld [vmem:[%s3 + $0x48] sm:$0xff]
  %v76 = vld [vmem:[%s3 + $0x50] sm:$0xf]
  %v77 = vld [vmem:[%s3 + $0x54] sm:$0xff]
  %v78 = vld [vmem:[%s3 + $0x5c] sm:$0xf]
  %v79 = vld [vmem:[%s3 + $0x60] sm:$0xff]
  %v80 = vld [vmem:[%s3 + $0x68] sm:$0xf]
  %v81 = vld [vmem:[%s3 + $0x6c] sm:$0xff]
  %v82 = vld [vmem:[%s3 + $0x74] sm:$0xf]
  %v83 = vld [vmem:[%s3 + $0x78] sm:$0xff]
  %v84 = vld [vmem:[%s3 + $0x80] sm:$0xf]
  %v85 = vld [vmem:[%s3 + $0x84] sm:$0xff]
  %v86 = vld [vmem:[%s3 + $0x8c] sm:$0xf]
  %v87 = vld [vmem:[%s3 + $0x90] sm:$0xff]
  %v88 = vld [vmem:[%s3 + $0x98] sm:$0xf]
  %v89 = vld [vmem:[%s3 + $0x9c] sm:$0xff]
  %v90 = vld [vmem:[%s3 + $0xa4] sm:$0xf]
  %v91 = vld [vmem:[%s3 + $0xa8] sm:$0xff]
  %v92 = vld [vmem:[%s3 + $0xb0] sm:$0xf]
  %v93 = vld [vmem:[%s3 + $0xb4] sm:$0xff]
  %v94 = vld [vmem:[%s3 + $0xbc] sm:$0xf]
  %v95 = vld [vmem:[%s4] sm:$0x7]
  %v97 = vperm.slane %v95, 0
  %v98 = vperm.slane %v95, 1
  %v99 = vperm.slane %v95, 2
  %v135 = vunpack.c.l.b16 %v63
  %v136 = vunpack.c.h.b16 %v63
  %v137 = vunpack.c.l.b16 %v64
  %v138 = vunpack.c.l.b16 %v65
  %v139 = vunpack.c.h.b16 %v65
  %v140 = vunpack.c.l.b16 %v66
  %v141 = vunpack.c.l.b16 %v67
  %v142 = vunpack.c.h.b16 %v67
  %v143 = vunpack.c.l.b16 %v68
  %v144 = vunpack.c.l.b16 %v69
  %v145 = vunpack.c.h.b16 %v69
  %v146 = vunpack.c.l.b16 %v70
  %v147 = vunpack.c.l.b16 %v71
  %v148 = vunpack.c.h.b16 %v71
  %v149 = vunpack.c.l.b16 %v72
  %v150 = vunpack.c.l.b16 %v73
  %v151 = vunpack.c.h.b16 %v73
  %v152 = vunpack.c.l.b16 %v74
  %v153 = vunpack.c.l.b16 %v75
  %v154 = vunpack.c.h.b16 %v75
  %v155 = vunpack.c.l.b16 %v76
  %v156 = vunpack.c.l.b16 %v77
  %v157 = vunpack.c.h.b16 %v77
  %v158 = vunpack.c.l.b16 %v78
  %v159 = vunpack.c.l.b16 %v79
  %v160 = vunpack.c.h.b16 %v79
  %v161 = vunpack.c.l.b16 %v80
  %v162 = vunpack.c.l.b16 %v81
  %v163 = vunpack.c.h.b16 %v81
  %v164 = vunpack.c.l.b16 %v82
  %v165 = vunpack.c.l.b16 %v83
  %v166 = vunpack.c.h.b16 %v83
  %v167 = vunpack.c.l.b16 %v84
  %v168 = vunpack.c.l.b16 %v85
  %v169 = vunpack.c.h.b16 %v85
  %v170 = vunpack.c.l.b16 %v86
  %v171 = vunpack.c.l.b16 %v87
  %v172 = vunpack.c.h.b16 %v87
  %v173 = vunpack.c.l.b16 %v88
  %v174 = vunpack.c.l.b16 %v89
  %v175 = vunpack.c.h.b16 %v89
  %v176 = vunpack.c.l.b16 %v90
  %v177 = vunpack.c.l.b16 %v91
  %v178 = vunpack.c.h.b16 %v91
  %v179 = vunpack.c.l.b16 %v92
  %v180 = vunpack.c.l.b16 %v93
  %v181 = vunpack.c.h.b16 %v93
  %v182 = vunpack.c.l.b16 %v94
  %v183 = vpack.c.b16 %v138, %v135
  %v184 = vpack.c.b16 %v139, %v136
  %v185 = vpack.c.b16 %v140, %v137
  %v186 = vpack.c.b16 %v144, %v141
  %v187 = vpack.c.b16 %v145, %v142
  %v188 = vpack.c.b16 %v146, %v143
  %v189 = vpack.c.b16 %v150, %v147
  %v190 = vpack.c.b16 %v151, %v148
  %v191 = vpack.c.b16 %v152, %v149
  %v192 = vpack.c.b16 %v156, %v153
  %v193 = vpack.c.b16 %v157, %v154
  %v194 = vpack.c.b16 %v158, %v155
  %v195 = vpack.c.b16 %v162, %v159
  %v196 = vpack.c.b16 %v163, %v160
  %v197 = vpack.c.b16 %v164, %v161
  %v198 = vpack.c.b16 %v168, %v165
  %v199 = vpack.c.b16 %v169, %v166
  %v200 = vpack.c.b16 %v170, %v167
  %v201 = vpack.c.b16 %v174, %v171
  %v202 = vpack.c.b16 %v175, %v172
  %v203 = vpack.c.b16 %v176, %v173
  %v204 = vpack.c.b16 %v180, %v177
  %v205 = vpack.c.b16 %v181, %v178
  %v206 = vpack.c.b16 %v182, %v179
  %231 = vmatpush.bf16.msra.mxu0 %v204
  %232 = vmatpush.bf16.msra.mxu0 %v201
  %233 = vmatpush.bf16.msra.mxu0 %v198
  %234 = vmatpush.bf16.msra.mxu0 %v195
  %235 = vmatpush.bf16.msra.mxu0 %v192
  %236 = vmatpush.bf16.msra.mxu0 %v189
  %237 = vmatpush.bf16.msra.mxu0 %v186
  %238 = vmatpush.bf16.msra.mxu0 %v183
  %239 = vmatmul.bf16.gmra.mxu0 %v62
  %v240 = vpop.f32.mrf.mxu0
  %v241 = vadd.f32 %v97, %v240
  %v242 = vpop.f32.mrf.mxu0
  %243 = vdwg.mxu0
  %244 = vmatpush.bf16.msra.mxu0 %v205
  %245 = vmatpush.bf16.msra.mxu0 %v202
  %246 = vmatpush.bf16.msra.mxu0 %v199
  %247 = vmatpush.bf16.msra.mxu0 %v196
  %248 = vmatpush.bf16.msra.mxu0 %v193
  %249 = vmatpush.bf16.msra.mxu0 %v190
  %250 = vmatpush.bf16.msra.mxu0 %v187
  %251 = vmatpush.bf16.msra.mxu0 %v184
  %252 = vmatmul.bf16.gmra.mxu0 %v62
  %v253 = vpop.f32.mrf.mxu0
  %v254 = vadd.f32 %v98, %v253
  %v255 = vpop.f32.mrf.mxu0
  %256 = vdwg.mxu0
  %257 = vmatpush.bf16.msra.mxu0 %v206
  %258 = vmatpush.bf16.msra.mxu0 %v203
  %259 = vmatpush.bf16.msra.mxu0 %v200
  %260 = vmatpush.bf16.msra.mxu0 %v197
  %261 = vmatpush.bf16.msra.mxu0 %v194
  %262 = vmatpush.bf16.msra.mxu0 %v191
  %263 = vmatpush.bf16.msra.mxu0 %v188
  %264 = vmatpush.bf16.msra.mxu0 %v185
  %265 = vmatmul.bf16.gmra.mxu0 %v62
  %v266 = vpop.f32.mrf.mxu0
  %v267 = vadd.f32 %v99, %v266
  %v268 = vpop.f32.mrf.mxu0
  %269 = vdwg.mxu0
  %v270 = vpack.c.bf16 %v254, %v241
  %v271 = vpack.c.bf16 %v267, %v267
  %v274 = vrot.slane %v270, 2
  %v275 = vrot.slane %v271, 4
  %v276 = vrot.slane %v271, 6
  %vm277 = vcmask 1041408
  %v280 = vsel %vm277, %v270, %v274
  %vm281 = vcmask 1045508
  %v284 = vsel %vm281, %v275, %v276
  %v285 = vsel %vm22, %v280, %v284
  %287 = vst [vmem:[%s5] sm:$0x3f] %v285
  // Predicated region
  $region22: #{lit_forward.61} parent=0 // pred_check
    _
  $region23: #{lit_forward.61} parent=0 // pred_check_branch
    %289 = sbr.rel (0) target = $region25
  $region24: #{lit_forward.61} parent=0 // pred_region
    _
  $region25: #{lit_forward.61} parent=0 // pred_fallthru
    _
  // Predicated region
  $region26: #{lit_forward.61} parent=0 // pred_check
    _
  $region27: #{lit_forward.61} parent=0 // pred_check_branch
    %291 = sbr.rel (0) target = $region29
  $region28: #{lit_forward.61} parent=0 // pred_region
    _
  $region29: #{lit_forward.61} parent=0 // pred_fallthru
    _

// kernel: lit_forward.63
$region0: #{lit_forward.63}
  #allocation0 [shape = 'u32[]', space=smem, size = 0x4, offset = 0x4, fixed_abs, tag = 'smem constant byte address 0x4 - core index']
  #allocation1 [shape = 'u32[72,128]{1,0:T(1,128)}', space=vmem, size = 0x9000, scoped, tag = 'internal scratch']
  %s0 = inlined_call_operand.vmem [shape: bf16[4,128], index: 0, kind: input, shape index: {}]
  %s1 = inlined_call_operand.vmem [shape: bf16[128,128], index: 1, kind: input, shape index: {}]
  %s2 = inlined_call_operand.vmem [shape: f32[1,128], index: 2, kind: input, shape index: {}]
  %s3 = inlined_call_operand.vmem [shape: bf16[4,128], index: 3, kind: input, shape index: {}]
  %s4 = inlined_call_operand.vmem [shape: bf16[4,128], index: 4, kind: output, shape index: {}]
  %s5 = sld [smem:[#allocation0]]
  $region26: #{lit_forward.63} parent=0
    _
  %s7 = ssub.s32 1, %s5
  %s8 = scalar_select 0, %s7, %s5
  // Predicated region
  $region2: #{lit_forward.63} parent=0 // pred_check
    _
  $region3: #{lit_forward.63} parent=0 // pred_check_branch
    %10 = sbr.rel (0) target = $region5
  $region4: #{lit_forward.63} parent=0 // pred_region
    _
  $region5: #{lit_forward.63} parent=0 // pred_fallthru
    _
  // Predicated region
  $region6: #{lit_forward.63} parent=0 // pred_check
    _
  $region7: #{lit_forward.63} parent=0 // pred_check_branch
    %12 = sbr.rel (0) target = $region9
  $region8: #{lit_forward.63} parent=0 // pred_region
    _
  $region9: #{lit_forward.63} parent=0 // pred_fallthru
    _
  // Predicated region
  $region10: #{lit_forward.63} parent=0 // pred_check
    _
  $region11: #{lit_forward.63} parent=0 // pred_check_branch
    %14 = sbr.rel (0) target = $region13
  $region12: #{lit_forward.63} parent=0 // pred_region
    _
  $region13: #{lit_forward.63} parent=0 // pred_fallthru
    _
  // Predicated region
  $region14: #{lit_forward.63} parent=0 // pred_check
    _
  $region15: #{lit_forward.63} parent=0 // pred_check_branch
    %16 = sbr.rel (0) target = $region17
  $region16: #{lit_forward.63} parent=0 // pred_region
    _
  $region17: #{lit_forward.63} parent=0 // pred_fallthru
    _
  %v17 = vld [vmem:[%s0] sm:$0x3]
  %v18 = vld [vmem:[%s1] sm:$0xf]
  %v19 = vld [vmem:[%s1 + $0x4] sm:$0xf]
  %v20 = vld [vmem:[%s1 + $0x8] sm:$0xf]
  %v21 = vld [vmem:[%s1 + $0xc] sm:$0xf]
  %v22 = vld [vmem:[%s1 + $0x10] sm:$0xf]
  %v23 = vld [vmem:[%s1 + $0x14] sm:$0xf]
  %v24 = vld [vmem:[%s1 + $0x18] sm:$0xf]
  %v25 = vld [vmem:[%s1 + $0x1c] sm:$0xf]
  %v26 = vld [vmem:[%s1 + $0x20] sm:$0xf]
  %v27 = vld [vmem:[%s1 + $0x24] sm:$0xf]
  %v28 = vld [vmem:[%s1 + $0x28] sm:$0xf]
  %v29 = vld [vmem:[%s1 + $0x2c] sm:$0xf]
  %v30 = vld [vmem:[%s1 + $0x30] sm:$0xf]
  %v31 = vld [vmem:[%s1 + $0x34] sm:$0xf]
  %v32 = vld [vmem:[%s1 + $0x38] sm:$0xf]
  %v33 = vld [vmem:[%s1 + $0x3c] sm:$0xf]
  %v34 = vld [vmem:[%s2] sm:$0x1]
  %v36 = vperm.slane %v34, 0
  %v54 = vunpack.c.l.b16 %v18
  %v55 = vunpack.c.l.b16 %v19
  %v56 = vunpack.c.l.b16 %v20
  %v57 = vunpack.c.l.b16 %v21
  %v58 = vunpack.c.l.b16 %v22
  %v59 = vunpack.c.l.b16 %v23
  %v60 = vunpack.c.l.b16 %v24
  %v61 = vunpack.c.l.b16 %v25
  %v62 = vunpack.c.l.b16 %v26
  %v63 = vunpack.c.l.b16 %v27
  %v64 = vunpack.c.l.b16 %v28
  %v65 = vunpack.c.l.b16 %v29
  %v66 = vunpack.c.l.b16 %v30
  %v67 = vunpack.c.l.b16 %v31
  %v68 = vunpack.c.l.b16 %v32
  %v69 = vunpack.c.l.b16 %v33
  %v70 = vpack.c.b16 %v55, %v54
  %v71 = vpack.c.b16 %v57, %v56
  %v72 = vpack.c.b16 %v59, %v58
  %v73 = vpack.c.b16 %v61, %v60
  %v74 = vpack.c.b16 %v63, %v62
  %v75 = vpack.c.b16 %v65, %v64
  %v76 = vpack.c.b16 %v67, %v66
  %v77 = vpack.c.b16 %v69, %v68
  %86 = vmatpush.bf16.msra.mxu0 %v77
  %87 = vmatpush.bf16.msra.mxu0 %v76
  %88 = vmatpush.bf16.msra.mxu0 %v75
  %89 = vmatpush.bf16.msra.mxu0 %v74
  %90 = vmatpush.bf16.msra.mxu0 %v73
  %91 = vmatpush.bf16.msra.mxu0 %v72
  %92 = vmatpush.bf16.msra.mxu0 %v71
  %93 = vmatpush.bf16.msra.mxu0 %v70
  %94 = vmatmul.bf16.gmra.mxu0 %v17
  %v95 = vpop.f32.mrf.mxu0
  %v96 = vadd.f32 %v36, %v95
  %v97 = vpop.f32.mrf.mxu0
  %98 = vdwg.mxu0
  %v99 = vld [vmem:[%s3] sm:$0x3]
  %v100 = vunpack.c.l.bf16 %v99
  %v101 = vadd.f32 %v96, %v100
  %v102 = vpack.c.bf16 %v101, %v101
  %103 = vst [vmem:[%s4] sm:$0x3] %v102
  // Predicated region
  $region18: #{lit_forward.63} parent=0 // pred_check
    _
  $region19: #{lit_forward.63} parent=0 // pred_check_branch
    %105 = sbr.rel (0) target = $region21
  $region20: #{lit_forward.63} parent=0 // pred_region
    _
  $region21: #{lit_forward.63} parent=0 // pred_fallthru
    _
  // Predicated region
  $region22: #{lit_forward.63} parent=0 // pred_check
    _
  $region23: #{lit_forward.63} parent=0 // pred_check_branch
    %107 = sbr.rel (0) target = $region25
  $region24: #{lit_forward.63} parent=0 // pred_region
    _
  $region25: #{lit_forward.63} parent=0 // pred_fallthru
    _

// kernel: lit_forward.62
$region0: #{lit_forward.62}
  #allocation0 [shape = 'u32[]', space=smem, size = 0x4, offset = 0x4, fixed_abs, tag = 'smem constant byte address 0x4 - core index']
  #allocation1 [shape = 'u32[72,128]{1,0:T(1,128)}', space=vmem, size = 0x9000, scoped, tag = 'internal scratch']
  %s0 = inlined_call_operand.vmem [shape: bf16[2,8,2,16], index: 0, kind: input, shape index: {}]
  %s1 = inlined_call_operand.vmem [shape: bf16[2,8,2,16], index: 1, kind: input, shape index: {}]
  %s2 = inlined_call_operand.vmem [shape: bf16[2,8,2,16], index: 2, kind: input, shape index: {}]
  %s3 = inlined_call_operand.vmem [shape: bf16[2,8,2,16], index: 3, kind: output, shape index: {}]
  %s4 = sld [smem:[#allocation0]]
  $region45: #{lit_forward.62} parent=0
    _
  %s6 = ssub.s32 1, %s4
  %s7 = scalar_select 0, %s6, %s4
  loop: start=0, step=1, limit=4
  $region2: #{lit_forward.62} parent=0 // loop_pre_header
    _
  $region3: #{lit_forward.62} parent=0 // loop_header
    %s9 = sphi 0, %s13
    %p10 = scmp.ge.s32.totalorder %s9, 4
    %s19 = sphi 0, %s21
    %s22 = sphi 0, %s19
    %s23 = sphi 0, %s22
    %s39 = sphi 0, %s23
    %s45 = sphi 0, %s47
    %s48 = sphi 0, %s45
    %s49 = sphi 0, %s48
    %s65 = sphi 0, %s49
    %s71 = sphi 0, %s73
    %s74 = sphi 0, %s71
    %s75 = sphi 0, %s74
    %s91 = sphi 0, %s75
    %s97 = sphi 0, %s99
    %s100 = sphi 0, %s97
    %s101 = sphi 0, %s100
    %s117 = sphi 0, %s101
  $region4: #{lit_forward.62} parent=0 // loop_header_branch
    %12 = sbr.rel (%p10) target = $region8
  $region5: #{lit_forward.62} parent=0 // loop_body
    %s14 = ssub.s32 %s9, 1
    %s15 = ssub.s32 %s9, 2
    %s16 = sadd.s32 %s9, 1
    %s17 = ssub.s32 %s9, %s16
    %p18 = scmp.eq.s32.totalorder %s17, 0
    %s20 = sadd.s32 %s19, 1
    %s21 = scalar_select %p18, %s19, %s20
    %p24 = pneg %p18
    %p25 = scmp.eq.s32.totalorder %s9, 1
    %p26 = por %p24, %p25
    %p27 = scmp.ne.s32.totalorder %s19, %s22
    %p28 = scmp.eq.s32.totalorder %s9, 0
    %p29 = por %p27, %p28
    %p30 = scmp.ne.s32.totalorder %s19, %s22
    %p31 = scmp.eq.s32.totalorder %s14, 1
    %p32 = por %p30, %p31
    %p33 = scmp.ne.s32.totalorder %s22, %s23
    %p34 = scmp.eq.s32.totalorder %s14, 0
    %p35 = por %p33, %p34
    %p36 = scmp.ne.s32.totalorder %s22, %s23
    %p37 = scmp.eq.s32.totalorder %s15, 1
    %p38 = por %p36, %p37
    %p40 = scmp.ne.s32.totalorder %s23, %s39
    %p41 = scmp.eq.s32.totalorder %s15, 0
    %p42 = por %p40, %p41
    %s43 = ssub.s32 %s9, %s16
    %p44 = scmp.eq.s32.totalorder %s43, 0
    %s46 = sadd.s32 %s45, 1
    %s47 = scalar_select %p44, %s45, %s46
    %p50 = pneg %p44
    %p51 = scmp.eq.s32.totalorder %s9, 1
    %p52 = por %p50, %p51
    %p53 = scmp.ne.s32.totalorder %s45, %s48
    %p54 = scmp.eq.s32.totalorder %s9, 0
    %p55 = por %p53, %p54
    %p56 = scmp.ne.s32.totalorder %s45, %s48
    %p57 = scmp.eq.s32.totalorder %s14, 1
    %p58 = por %p56, %p57
    %p59 = scmp.ne.s32.totalorder %s48, %s49
    %p60 = scmp.eq.s32.totalorder %s14, 0
    %p61 = por %p59, %p60
    %p62 = scmp.ne.s32.totalorder %s48, %s49
    %p63 = scmp.eq.s32.totalorder %s15, 1
    %p64 = por %p62, %p63
    %p66 = scmp.ne.s32.totalorder %s49, %s65
    %p67 = scmp.eq.s32.totalorder %s15, 0
    %p68 = por %p66, %p67
    %s69 = ssub.s32 %s9, %s16
    %p70 = scmp.eq.s32.totalorder %s69, 0
    %s72 = sadd.s32 %s71, 1
    %s73 = scalar_select %p70, %s71, %s72
    %p76 = pneg %p70
    %p77 = scmp.eq.s32.totalorder %s9, 1
    %p78 = por %p76, %p77
    %p79 = scmp.ne.s32.totalorder %s71, %s74
    %p80 = scmp.eq.s32.totalorder %s9, 0
    %p81 = por %p79, %p80
    %p82 = scmp.ne.s32.totalorder %s71, %s74
    %p83 = scmp.eq.s32.totalorder %s14, 1
    %p84 = por %p82, %p83
    %p85 = scmp.ne.s32.totalorder %s74, %s75
    %p86 = scmp.eq.s32.totalorder %s14, 0
    %p87 = por %p85, %p86
    %p88 = scmp.ne.s32.totalorder %s74, %s75
    %p89 = scmp.eq.s32.totalorder %s15, 1
    %p90 = por %p88, %p89
    %p92 = scmp.ne.s32.totalorder %s75, %s91
    %p93 = scmp.eq.s32.totalorder %s15, 0
    %p94 = por %p92, %p93
    %s95 = ssub.s32 %s9, %s16
    %p96 = scmp.eq.s32.totalorder %s95, 0
    %s98 = sadd.s32 %s97, 1
    %s99 = scalar_select %p96, %s97, %s98
    %p102 = pneg %p96
    %p103 = scmp.eq.s32.totalorder %s9, 1
    %p104 = por %p102, %p103
    %p105 = scmp.ne.s32.totalorder %s97, %s100
    %p106 = scmp.eq.s32.totalorder %s9, 0
    %p107 = por %p105, %p106
    %p108 = scmp.ne.s32.totalorder %s97, %s100
    %p109 = scmp.eq.s32.totalorder %s14, 1
    %p110 = por %p108, %p109
    %p111 = scmp.ne.s32.totalorder %s100, %s101
    %p112 = scmp.eq.s32.totalorder %s14, 0
    %p113 = por %p111, %p112
    %p114 = scmp.ne.s32.totalorder %s100, %s101
    %p115 = scmp.eq.s32.totalorder %s15, 1
    %p116 = por %p114, %p115
    %p118 = scmp.ne.s32.totalorder %s101, %s117
    %p119 = scmp.eq.s32.totalorder %s15, 0
    %p120 = por %p118, %p119
    %p121 = scmp.le.s32.totalorder 1, %s9
    %p122 = scmp.lt.s32.totalorder %s9, 3
    %p123 = pnand %p121, %p122
    %p124 = pneg %p123
    // Predicated region
    $region9: #{lit_forward.62} parent=5 // pred_check
      _
    $region10: #{lit_forward.62} parent=5 // pred_check_branch
      %126 = sbr.rel (%p123) target = $region12
    $region11: #{lit_forward.62} parent=5 // pred_region
      %s127 = ssub.s32 %s9, 1
    $region12: #{lit_forward.62} parent=5 // pred_fallthru
      _
    %p128 = scmp.lt.s32.totalorder %s9, 2
    // Predicated region
    $region13: #{lit_forward.62} parent=5 // pred_check
      %p129 = pneg %p128
    $region14: #{lit_forward.62} parent=5 // pred_check_branch
      %131 = sbr.rel (%p129) target = $region16
    $region15: #{lit_forward.62} parent=5 // pred_region
      // Predicated region
      $region17: #{lit_forward.62} parent=15 // pred_check
        %p132 = pneg %p29
      $region18: #{lit_forward.62} parent=15 // pred_check_branch
        %134 = sbr.rel (%p132) target = $region20
      $region19: #{lit_forward.62} parent=15 // pred_region
        %p135 = scmp.lt.s32.totalorder %s9, 1
        %s136 = scalar_select %p135, %s9, 1
        %s137 = smul.addr %s136, 8
        %s138 = scalar_lea.vmem %s0, %s137
      $region20: #{lit_forward.62} parent=15 // pred_fallthru
        _
      // Predicated region
      $region21: #{lit_forward.62} parent=15 // pred_check
        %p139 = pneg %p55
      $region22: #{lit_forward.62} parent=15 // pred_check_branch
        %141 = sbr.rel (%p139) target = $region24
      $region23: #{lit_forward.62} parent=15 // pred_region
        %p142 = scmp.lt.s32.totalorder %s9, 1
        %s143 = scalar_select %p142, %s9, 1
        %s144 = smul.addr %s143, 8
        %s145 = scalar_lea.vmem %s1, %s144
      $region24: #{lit_forward.62} parent=15 // pred_fallthru
        _
      // Predicated region
      $region25: #{lit_forward.62} parent=15 // pred_check
        %p146 = pneg %p81
      $region26: #{lit_forward.62} parent=15 // pred_check_branch
        %148 = sbr.rel (%p146) target = $region28
      $region27: #{lit_forward.62} parent=15 // pred_region
        %p149 = scmp.lt.s32.totalorder %s9, 1
        %s150 = scalar_select %p149, %s9, 1
        %s151 = smul.addr %s150, 8
        %s152 = scalar_lea.vmem %s2, %s151
      $region28: #{lit_forward.62} parent=15 // pred_fallthru
        _
    $region16: #{lit_forward.62} parent=5 // pred_fallthru
      _
    %p153 = scmp.le.s32.totalorder 1, %s9
    %p154 = scmp.lt.s32.totalorder %s9, 3
    %p155 = pnand %p153, %p154
    %p156 = pneg %p155
    // Predicated region
    $region29: #{lit_forward.62} parent=5 // pred_check
      _
    $region30: #{lit_forward.62} parent=5 // pred_check_branch
      %158 = sbr.rel (%p155) target = $region32
    $region31: #{lit_forward.62} parent=5 // pred_region
      %s159 = ssub.s32 %s9, 1
      %p160 = scmp.lt.s32.totalorder %s14, 1
      %s161 = scalar_select %p160, %s14, 1
      %s162 = smul.addr %s161, 8
      %s163 = scalar_lea.vmem %s0, %s162
      %p164 = pneg %p35
      %p165 = pneg %p32
      %p166 = scmp.lt.s32.totalorder %s14, 1
      %s167 = scalar_select %p166, %s14, 1
      %s168 = smul.addr %s167, 8
      %s169 = scalar_lea.vmem %s1, %s168
      %p170 = pneg %p61
      %p171 = pneg %p58
      %p172 = scmp.lt.s32.totalorder %s14, 1
      %s173 = scalar_select %p172, %s14, 1
      %s174 = smul.addr %s173, 8
      %s175 = scalar_lea.vmem %s2, %s174
      %p176 = pneg %p87
      %p177 = pneg %p84
      %p178 = pneg %p113
      %p179 = pneg %p110
      %p180 = scmp.lt.s32.totalorder %s14, 1
      %s181 = scalar_select %p180, %s14, 1
      %s182 = smul.addr %s181, 8
      %s183 = scalar_lea.vmem %s3, %s182
      %p184 = scmp.lt.s32.totalorder %s14, 1
      %s185 = scalar_select %p184, %s14, 1
      %s186 = smul.addr %s185, 8
      %s187 = scalar_lea.vmem %s0, %s186
      %p188 = scmp.lt.s32.totalorder %s14, 1
      %s189 = scalar_select %p188, %s14, 1
      %s190 = smul.addr %s189, 8
      %s191 = scalar_lea.vmem %s1, %s190
      %p192 = scmp.lt.s32.totalorder %s14, 1
      %s193 = scalar_select %p192, %s14, 1
      %s194 = smul.addr %s193, 8
      %s195 = scalar_lea.vmem %s2, %s194
      %p196 = scmp.lt.s32.totalorder %s14, 1
      %s197 = scalar_select %p196, %s14, 1
      %s198 = smul.addr %s197, 8
      %s199 = scalar_lea.vmem %s3, %s198
      %v201 = vld [vmem:[%s187] sm:$0x1]
      %v202 = vld [vmem:[%s187 + $0x1] sm:$0x1]
      %v203 = vld [vmem:[%s187 + $0x2] sm:$0x1]
      %v204 = vld [vmem:[%s187 + $0x3] sm:$0x1]
      %v205 = vld [vmem:[%s187 + $0x4] sm:$0x1]
      %v206 = vld [vmem:[%s187 + $0x5] sm:$0x1]
      %v207 = vld [vmem:[%s187 + $0x6] sm:$0x1]
      %v208 = vld [vmem:[%s187 + $0x7] sm:$0x1]
      %v209 = vunpack.c.l.bf16 %v201
      %v210 = vunpack.c.l.bf16 %v202
      %v211 = vunpack.c.l.bf16 %v203
      %v212 = vunpack.c.l.bf16 %v204
      %v213 = vunpack.c.l.bf16 %v205
      %v214 = vunpack.c.l.bf16 %v206
      %v215 = vunpack.c.l.bf16 %v207
      %v216 = vunpack.c.l.bf16 %v208
      %v217 = vmul.f32 %v209, 0.25
      %v218 = vmul.f32 %v210, 0.25
      %v219 = vmul.f32 %v211, 0.25
      %v220 = vmul.f32 %v212, 0.25
      %v221 = vmul.f32 %v213, 0.25
      %v222 = vmul.f32 %v214, 0.25
      %v223 = vmul.f32 %v215, 0.25
      %v224 = vmul.f32 %v216, 0.25
      %v225 = vpack.c.bf16 %v217, %v217
      %v226 = vpack.c.bf16 %v218, %v218
      %v227 = vpack.c.bf16 %v219, %v219
      %v228 = vpack.c.bf16 %v220, %v220
      %v229 = vpack.c.bf16 %v221, %v221
      %v230 = vpack.c.bf16 %v222, %v222
      %v231 = vpack.c.bf16 %v223, %v223
      %v232 = vpack.c.bf16 %v224, %v224
      %v233 = vld [vmem:[%s191] sm:$0x1]
      %v234 = vld [vmem:[%s191 + $0x1] sm:$0x1]
      %v235 = vld [vmem:[%s191 + $0x2] sm:$0x1]
      %v236 = vld [vmem:[%s191 + $0x3] sm:$0x1]
      %v237 = vld [vmem:[%s191 + $0x4] sm:$0x1]
      %v238 = vld [vmem:[%s191 + $0x5] sm:$0x1]
      %v239 = vld [vmem:[%s191 + $0x6] sm:$0x1]
      %v240 = vld [vmem:[%s191 + $0x7] sm:$0x1]
      %v241 = vld [vmem:[%s195] sm:$0x1]
      %v242 = vld [vmem:[%s195 + $0x1] sm:$0x1]
      %v243 = vld [vmem:[%s195 + $0x2] sm:$0x1]
      %v244 = vld [vmem:[%s195 + $0x3] sm:$0x1]
      %v245 = vld [vmem:[%s195 + $0x4] sm:$0x1]
      %v246 = vld [vmem:[%s195 + $0x5] sm:$0x1]
      %v247 = vld [vmem:[%s195 + $0x6] sm:$0x1]
      %v248 = vld [vmem:[%s195 + $0x7] sm:$0x1]
      %vm249 = vcmask 130048
      %v251 = vsel %vm249, %v225, 0
      %v254 = vsel %vm249, %v233, 0
      %256 = vmatpush.bf16.xpose.msra.mxu0 0
      %257 = vmatpush.bf16.xpose.msra.mxu0 0
      %258 = vmatpush.bf16.xpose.msra.mxu0 0
      %259 = vmatpush.bf16.xpose.msra.mxu0 0
      %260 = vmatpush.bf16.xpose.msra.mxu0 0
      %261 = vmatpush.bf16.xpose.msra.mxu0 0
      %262 = vmatpush.bf16.xpose.msra.mxu0 0
      %263 = vmatpush.bf16.xpose.msra.mxu0 %v254
      %264 = vmatmul.bf16.gmra.mxu0 %v251
      %v265 = vpop.f32.mrf.mxu0
      %v266 = vadd.f32 0.0, %v265
      %v267 = vpop.f32.mrf.mxu0
      %268 = vdwg.mxu0
      %v270 = vsel %vm249, %v226, 0
      %v273 = vsel %vm249, %v234, 0
      %275 = vmatpush.bf16.xpose.msra.mxu0 0
      %276 = vmatpush.bf16.xpose.msra.mxu0 0
      %277 = vmatpush.bf16.xpose.msra.mxu0 0
      %278 = vmatpush.bf16.xpose.msra.mxu0 0
      %279 = vmatpush.bf16.xpose.msra.mxu0 0
      %280 = vmatpush.bf16.xpose.msra.mxu0 0
      %281 = vmatpush.bf16.xpose.msra.mxu0 0
      %282 = vmatpush.bf16.xpose.msra.mxu0 %v273
      %283 = vmatmul.bf16.gmra.mxu0 %v270
      %v284 = vpop.f32.mrf.mxu0
      %v285 = vadd.f32 0.0, %v284
      %v286 = vpop.f32.mrf.mxu0
      %287 = vdwg.mxu0
      %v289 = vsel %vm249, %v227, 0
      %v292 = vsel %vm249, %v235, 0
      %294 = vmatpush.bf16.xpose.msra.mxu0 0
      %295 = vmatpush.bf16.xpose.msra.mxu0 0
      %296 = vmatpush.bf16.xpose.msra.mxu0 0
      %297 = vmatpush.bf16.xpose.msra.mxu0 0
      %298 = vmatpush.bf16.xpose.msra.mxu0 0
      %299 = vmatpush.bf16.xpose.msra.mxu0 0
      %300 = vmatpush.bf16.xpose.msra.mxu0 0
      %301 = vmatpush.bf16.xpose.msra.mxu0 %v292
      %302 = vmatmul.bf16.gmra.mxu0 %v289
      %v303 = vpop.f32.mrf.mxu0
      %v304 = vadd.f32 0.0, %v303
      %v305 = vpop.f32.mrf.mxu0
      %306 = vdwg.mxu0
      %v308 = vsel %vm249, %v228, 0
      %v311 = vsel %vm249, %v236, 0
      %313 = vmatpush.bf16.xpose.msra.mxu0 0
      %314 = vmatpush.bf16.xpose.msra.mxu0 0
      %315 = vmatpush.bf16.xpose.msra.mxu0 0
      %316 = vmatpush.bf16.xpose.msra.mxu0 0
      %317 = vmatpush.bf16.xpose.msra.mxu0 0
      %318 = vmatpush.bf16.xpose.msra.mxu0 0
      %319 = vmatpush.bf16.xpose.msra.mxu0 0
      %320 = vmatpush.bf16.xpose.msra.mxu0 %v311
      %321 = vmatmul.bf16.gmra.mxu0 %v308
      %v322 = vpop.f32.mrf.mxu0
      %v323 = vadd.f32 0.0, %v322
      %v324 = vpop.f32.mrf.mxu0
      %325 = vdwg.mxu0
      %v327 = vsel %vm249, %v229, 0
      %v330 = vsel %vm249, %v237, 0
      %332 = vmatpush.bf16.xpose.msra.mxu0 0
      %333 = vmatpush.bf16.xpose.msra.mxu0 0
      %334 = vmatpush.bf16.xpose.msra.mxu0 0
      %335 = vmatpush.bf16.xpose.msra.mxu0 0
      %336 = vmatpush.bf16.xpose.msra.mxu0 0
      %337 = vmatpush.bf16.xpose.msra.mxu0 0
      %338 = vmatpush.bf16.xpose.msra.mxu0 0
      %339 = vmatpush.bf16.xpose.msra.mxu0 %v330
      %340 = vmatmul.bf16.gmra.mxu0 %v327
      %v341 = vpop.f32.mrf.mxu0
      %v342 = vadd.f32 0.0, %v341
      %v343 = vpop.f32.mrf.mxu0
      %344 = vdwg.mxu0
      %v346 = vsel %vm249, %v230, 0
      %v349 = vsel %vm249, %v238, 0
      %351 = vmatpush.bf16.xpose.msra.mxu0 0
      %352 = vmatpush.bf16.xpose.msra.mxu0 0
      %353 = vmatpush.bf16.xpose.msra.mxu0 0
      %354 = vmatpush.bf16.xpose.msra.mxu0 0
      %355 = vmatpush.bf16.xpose.msra.mxu0 0
      %356 = vmatpush.bf16.xpose.msra.mxu0 0
      %357 = vmatpush.bf16.xpose.msra.mxu0 0
      %358 = vmatpush.bf16.xpose.msra.mxu0 %v349
      %359 = vmatmul.bf16.gmra.mxu0 %v346
      %v360 = vpop.f32.mrf.mxu0
      %v361 = vadd.f32 0.0, %v360
      %v362 = vpop.f32.mrf.mxu0
      %363 = vdwg.mxu0
      %v365 = vsel %vm249, %v231, 0
      %v368 = vsel %vm249, %v239, 0
      %370 = vmatpush.bf16.xpose.msra.mxu0 0
      %371 = vmatpush.bf16.xpose.msra.mxu0 0
      %372 = vmatpush.bf16.xpose.msra.mxu0 0
      %373 = vmatpush.bf16.xpose.msra.mxu0 0
      %374 = vmatpush.bf16.xpose.msra.mxu0 0
      %375 = vmatpush.bf16.xpose.msra.mxu0 0
      %376 = vmatpush.bf16.xpose.msra.mxu0 0
      %377 = vmatpush.bf16.xpose.msra.mxu0 %v368
      %378 = vmatmul.bf16.gmra.mxu0 %v365
      %v379 = vpop.f32.mrf.mxu0
      %v380 = vadd.f32 0.0, %v379
      %v381 = vpop.f32.mrf.mxu0
      %382 = vdwg.mxu0
      %v384 = vsel %vm249, %v232, 0
      %v387 = vsel %vm249, %v240, 0
      %389 = vmatpush.bf16.xpose.msra.mxu0 0
      %390 = vmatpush.bf16.xpose.msra.mxu0 0
      %391 = vmatpush.bf16.xpose.msra.mxu0 0
      %392 = vmatpush.bf16.xpose.msra.mxu0 0
      %393 = vmatpush.bf16.xpose.msra.mxu0 0
      %394 = vmatpush.bf16.xpose.msra.mxu0 0
      %395 = vmatpush.bf16.xpose.msra.mxu0 0
      %396 = vmatpush.bf16.xpose.msra.mxu0 %v387
      %397 = vmatmul.bf16.gmra.mxu0 %v384
      %v398 = vpop.f32.mrf.mxu0
      %v399 = vadd.f32 0.0, %v398
      %v400 = vpop.f32.mrf.mxu0
      %401 = vdwg.mxu0
      %vm402 = vcmask 9216
      %v403 = vsel %vm402, %v266, -inf
      %404 = vmax.xlane.f32.xlu0 %v403
      %v405 = vpop.xlane.xlu0 %404
      %v406 = vsel %vm402, %v285, -inf
      %407 = vmax.xlane.f32.xlu0 %v406
      %v408 = vpop.xlane.xlu0 %407
      %v409 = vsel %vm402, %v304, -inf
      %410 = vmax.xlane.f32.xlu0 %v409
      %v411 = vpop.xlane.xlu0 %410
      %v412 = vsel %vm402, %v323, -inf
      %413 = vmax.xlane.f32.xlu0 %v412
      %v414 = vpop.xlane.xlu0 %413
      %v415 = vsel %vm402, %v342, -inf
      %416 = vmax.xlane.f32.xlu0 %v415
      %v417 = vpop.xlane.xlu0 %416
      %v418 = vsel %vm402, %v361, -inf
      %419 = vmax.xlane.f32.xlu0 %v418
      %v420 = vpop.xlane.xlu0 %419
      %v421 = vsel %vm402, %v380, -inf
      %422 = vmax.xlane.f32.xlu0 %v421
      %v423 = vpop.xlane.xlu0 %422
      %v424 = vsel %vm402, %v399, -inf
      %425 = vmax.xlane.f32.xlu0 %v424
      %v426 = vpop.xlane.xlu0 %425
      %v427 = vsub.f32 %v266, %v405
      %v428 = vsub.f32 %v285, %v408
      %v429 = vsub.f32 %v304, %v411
      %v430 = vsub.f32 %v323, %v414
      %v431 = vsub.f32 %v342, %v417
      %v432 = vsub.f32 %v361, %v420
      %v433 = vsub.f32 %v380, %v423
      %v434 = vsub.f32 %v399, %v426
      %v435 = vmul.f32 %v427, 1.442695
      %v436 = vpow.pop %v435
      %v437 = vmul.f32 %v428, 1.442695
      %v438 = vpow.pop %v437
      %v439 = vmul.f32 %v429, 1.442695
      %v440 = vpow.pop %v439
      %v441 = vmul.f32 %v430, 1.442695
      %v442 = vpow.pop %v441
      %v443 = vmul.f32 %v431, 1.442695
      %v444 = vpow.pop %v443
      %v445 = vmul.f32 %v432, 1.442695
      %v446 = vpow.pop %v445
      %v447 = vmul.f32 %v433, 1.442695
      %v448 = vpow.pop %v447
      %v449 = vmul.f32 %v434, 1.442695
      %v450 = vpow.pop %v449
      %v451 = vsel %vm402, %v436, 0.0
      %452 = vadd.xlane.f32.xlu0 %v451
      %v453 = vpop.xlane.xlu0 %452
      %v454 = vsel %vm402, %v438, 0.0
      %455 = vadd.xlane.f32.xlu0 %v454
      %v456 = vpop.xlane.xlu0 %455
      %v457 = vsel %vm402, %v440, 0.0
      %458 = vadd.xlane.f32.xlu0 %v457
      %v459 = vpop.xlane.xlu0 %458
      %v460 = vsel %vm402, %v442, 0.0
      %461 = vadd.xlane.f32.xlu0 %v460
      %v462 = vpop.xlane.xlu0 %461
      %v463 = vsel %vm402, %v444, 0.0
      %464 = vadd.xlane.f32.xlu0 %v463
      %v465 = vpop.xlane.xlu0 %464
      %v466 = vsel %vm402, %v446, 0.0
      %467 = vadd.xlane.f32.xlu0 %v466
      %v468 = vpop.xlane.xlu0 %467
      %v469 = vsel %vm402, %v448, 0.0
      %470 = vadd.xlane.f32.xlu0 %v469
      %v471 = vpop.xlane.xlu0 %470
      %v472 = vsel %vm402, %v450, 0.0
      %473 = vadd.xlane.f32.xlu0 %v472
      %v474 = vpop.xlane.xlu0 %473
      %v475 = vrcp.pop %v453
      %v476 = vrcp.pop %v456
      %v477 = vrcp.pop %v459
      %v478 = vrcp.pop %v462
      %v479 = vrcp.pop %v465
      %v480 = vrcp.pop %v468
      %v481 = vrcp.pop %v471
      %v482 = vrcp.pop %v474
      %v483 = vmul.f32 %v436, %v475
      %v484 = vmul.f32 %v438, %v476
      %v485 = vmul.f32 %v440, %v477
      %v486 = vmul.f32 %v442, %v478
      %v487 = vmul.f32 %v444, %v479
      %v488 = vmul.f32 %v446, %v480
      %v489 = vmul.f32 %v448, %v481
      %v490 = vmul.f32 %v450, %v482
      %v491 = vpack.c.bf16 %v483, %v483
      %v492 = vpack.c.bf16 %v484, %v484
      %v493 = vpack.c.bf16 %v485, %v485
      %v494 = vpack.c.bf16 %v486, %v486
      %v495 = vpack.c.bf16 %v487, %v487
      %v496 = vpack.c.bf16 %v488, %v488
      %v497 = vpack.c.bf16 %v489, %v489
      %v498 = vpack.c.bf16 %v490, %v490
      %vm499 = vcmask 15360
      %v501 = vsel %vm499, %v491, 0
      %vm503 = vcmask 1040384
      %v505 = vsel %vm503, %v241, 0
      %507 = vmatpush.bf16.msra.mxu0 0
      %508 = vmatpush.bf16.msra.mxu0 0
      %509 = vmatpush.bf16.msra.mxu0 0
      %510 = vmatpush.bf16.msra.mxu0 0
      %511 = vmatpush.bf16.msra.mxu0 0
      %512 = vmatpush.bf16.msra.mxu0 0
      %513 = vmatpush.bf16.msra.mxu0 0
      %514 = vmatpush.bf16.msra.mxu0 %v505
      %515 = vmatmul.bf16.gmra.mxu0 %v501
      %v516 = vpop.f32.mrf.mxu0
      %v517 = vadd.f32 0.0, %v516
      %v518 = vpop.f32.mrf.mxu0
      %519 = vdwg.mxu0
      %v521 = vsel %vm499, %v492, 0
      %v524 = vsel %vm503, %v242, 0
      %526 = vmatpush.bf16.msra.mxu0 0
      %527 = vmatpush.bf16.msra.mxu0 0
      %528 = vmatpush.bf16.msra.mxu0 0
      %529 = vmatpush.bf16.msra.mxu0 0
      %530 = vmatpush.bf16.msra.mxu0 0
      %531 = vmatpush.bf16.msra.mxu0 0
      %532 = vmatpush.bf16.msra.mxu0 0
      %533 = vmatpush.bf16.msra.mxu0 %v524
      %534 = vmatmul.bf16.gmra.mxu0 %v521
      %v535 = vpop.f32.mrf.mxu0
      %v536 = vadd.f32 0.0, %v535
      %v537 = vpop.f32.mrf.mxu0
      %538 = vdwg.mxu0
      %v540 = vsel %vm499, %v493, 0
      %v543 = vsel %vm503, %v243, 0
      %545 = vmatpush.bf16.msra.mxu0 0
      %546 = vmatpush.bf16.msra.mxu0 0
      %547 = vmatpush.bf16.msra.mxu0 0
      %548 = vmatpush.bf16.msra.mxu0 0
      %549 = vmatpush.bf16.msra.mxu0 0
      %550 = vmatpush.bf16.msra.mxu0 0
      %551 = vmatpush.bf16.msra.mxu0 0
      %552 = vmatpush.bf16.msra.mxu0 %v543
      %553 = vmatmul.bf16.gmra.mxu0 %v540
      %v554 = vpop.f32.mrf.mxu0
      %v555 = vadd.f32 0.0, %v554
      %v556 = vpop.f32.mrf.mxu0
      %557 = vdwg.mxu0
      %v559 = vsel %vm499, %v494, 0
      %v562 = vsel %vm503, %v244, 0
      %564 = vmatpush.bf16.msra.mxu0 0
      %565 = vmatpush.bf16.msra.mxu0 0
      %566 = vmatpush.bf16.msra.mxu0 0
      %567 = vmatpush.bf16.msra.mxu0 0
      %568 = vmatpush.bf16.msra.mxu0 0
      %569 = vmatpush.bf16.msra.mxu0 0
      %570 = vmatpush.bf16.msra.mxu0 0
      %571 = vmatpush.bf16.msra.mxu0 %v562
      %572 = vmatmul.bf16.gmra.mxu0 %v559
      %v573 = vpop.f32.mrf.mxu0
      %v574 = vadd.f32 0.0, %v573
      %v575 = vpop.f32.mrf.mxu0
      %576 = vdwg.mxu0
      %v578 = vsel %vm499, %v495, 0
      %v581 = vsel %vm503, %v245, 0
      %583 = vmatpush.bf16.msra.mxu0 0
      %584 = vmatpush.bf16.msra.mxu0 0
      %585 = vmatpush.bf16.msra.mxu0 0
      %586 = vmatpush.bf16.msra.mxu0 0
      %587 = vmatpush.bf16.msra.mxu0 0
      %588 = vmatpush.bf16.msra.mxu0 0
      %589 = vmatpush.bf16.msra.mxu0 0
      %590 = vmatpush.bf16.msra.mxu0 %v581
      %591 = vmatmul.bf16.gmra.mxu0 %v578
      %v592 = vpop.f32.mrf.mxu0
      %v593 = vadd.f32 0.0, %v592
      %v594 = vpop.f32.mrf.mxu0
      %595 = vdwg.mxu0
      %v597 = vsel %vm499, %v496, 0
      %v600 = vsel %vm503, %v246, 0
      %602 = vmatpush.bf16.msra.mxu0 0
      %603 = vmatpush.bf16.msra.mxu0 0
      %604 = vmatpush.bf16.msra.mxu0 0
      %605 = vmatpush.bf16.msra.mxu0 0
      %606 = vmatpush.bf16.msra.mxu0 0
      %607 = vmatpush.bf16.msra.mxu0 0
      %608 = vmatpush.bf16.msra.mxu0 0
      %609 = vmatpush.bf16.msra.mxu0 %v600
      %610 = vmatmul.bf16.gmra.mxu0 %v597
      %v611 = vpop.f32.mrf.mxu0
      %v612 = vadd.f32 0.0, %v611
      %v613 = vpop.f32.mrf.mxu0
      %614 = vdwg.mxu0
      %v616 = vsel %vm499, %v497, 0
      %v619 = vsel %vm503, %v247, 0
      %621 = vmatpush.bf16.msra.mxu0 0
      %622 = vmatpush.bf16.msra.mxu0 0
      %623 = vmatpush.bf16.msra.mxu0 0
      %624 = vmatpush.bf16.msra.mxu0 0
      %625 = vmatpush.bf16.msra.mxu0 0
      %626 = vmatpush.bf16.msra.mxu0 0
      %627 = vmatpush.bf16.msra.mxu0 0
      %628 = vmatpush.bf16.msra.mxu0 %v619
      %629 = vmatmul.bf16.gmra.mxu0 %v616
      %v630 = vpop.f32.mrf.mxu0
      %v631 = vadd.f32 0.0, %v630
      %v632 = vpop.f32.mrf.mxu0
      %633 = vdwg.mxu0
      %v635 = vsel %vm499, %v498, 0
      %v638 = vsel %vm503, %v248, 0
      %640 = vmatpush.bf16.msra.mxu0 0
      %641 = vmatpush.bf16.msra.mxu0 0
      %642 = vmatpush.bf16.msra.mxu0 0
      %643 = vmatpush.bf16.msra.mxu0 0
      %644 = vmatpush.bf16.msra.mxu0 0
      %645 = vmatpush.bf16.msra.mxu0 0
      %646 = vmatpush.bf16.msra.mxu0 0
      %647 = vmatpush.bf16.msra.mxu0 %v638
      %648 = vmatmul.bf16.gmra.mxu0 %v635
      %v649 = vpop.f32.mrf.mxu0
      %v650 = vadd.f32 0.0, %v649
      %v651 = vpop.f32.mrf.mxu0
      %652 = vdwg.mxu0
      %v653 = vpack.c.bf16 %v517, %v517
      %v654 = vpack.c.bf16 %v536, %v536
      %v655 = vpack.c.bf16 %v555, %v555
      %v656 = vpack.c.bf16 %v574, %v574
      %v657 = vpack.c.bf16 %v593, %v593
      %v658 = vpack.c.bf16 %v612, %v612
      %v659 = vpack.c.bf16 %v631, %v631
      %v660 = vpack.c.bf16 %v650, %v650
      %vm661 = vcmask 122880
      %662 = vst.msk [vmem:[%s199] sm:$0x1] %vm661, %v653
      %663 = vst.msk [vmem:[%s199 + $0x1] sm:$0x1] %vm661, %v654
      %664 = vst.msk [vmem:[%s199 + $0x2] sm:$0x1] %vm661, %v655
      %665 = vst.msk [vmem:[%s199 + $0x3] sm:$0x1] %vm661, %v656
      %666 = vst.msk [vmem:[%s199 + $0x4] sm:$0x1] %vm661, %v657
      %667 = vst.msk [vmem:[%s199 + $0x5] sm:$0x1] %vm661, %v658
      %668 = vst.msk [vmem:[%s199 + $0x6] sm:$0x1] %vm661, %v659
      %669 = vst.msk [vmem:[%s199 + $0x7] sm:$0x1] %vm661, %v660
      %p670 = scmp.lt.s32.totalorder %s14, 1
      %s671 = scalar_select %p670, %s14, 1
      %s672 = smul.addr %s671, 8
      %s673 = scalar_lea.vmem %s3, %s672
      // Predicated region
      $region33: #{lit_forward.62} parent=31 // pred_check
        %p674 = pneg %p110
      $region34: #{lit_forward.62} parent=31 // pred_check_branch
        %676 = sbr.rel (%p674) target = $region36
      $region35: #{lit_forward.62} parent=31 // pred_region
        _
      $region36: #{lit_forward.62} parent=31 // pred_fallthru
        _
    $region32: #{lit_forward.62} parent=5 // pred_fallthru
      _
    %p677 = scmp.le.s32.totalorder 2, %s9
    // Predicated region
    $region37: #{lit_forward.62} parent=5 // pred_check
      %p678 = pneg %p677
    $region38: #{lit_forward.62} parent=5 // pred_check_branch
      %680 = sbr.rel (%p678) target = $region40
    $region39: #{lit_forward.62} parent=5 // pred_region
      %s681 = ssub.s32 %s9, 2
      // Predicated region
      $region41: #{lit_forward.62} parent=39 // pred_check
        %p682 = pneg %p116
      $region42: #{lit_forward.62} parent=39 // pred_check_branch
        %684 = sbr.rel (%p682) target = $region44
      $region43: #{lit_forward.62} parent=39 // pred_region
        %p685 = scmp.lt.s32.totalorder %s15, 1
        %s686 = scalar_select %p685, %s15, 1
        %s687 = smul.addr %s686, 8
        %s688 = scalar_lea.vmem %s3, %s687
      $region44: #{lit_forward.62} parent=39 // pred_fallthru
        _
    $region40: #{lit_forward.62} parent=5 // pred_fallthru
      _
  $region6: #{lit_forward.62} parent=0 // loop_footer
    %s13 = sadd.s32 1, %s9
  $region7: #{lit_forward.62} parent=0 // loop_footer_branch
    %8 = sbr.rel target = $region3
  $region8: #{lit_forward.62} parent=0 // loop_exit
    _

// kernel: lit_forward.64
$region0: #{lit_forward.64}
  #allocation0 [shape = 'u32[]', space=smem, size = 0x4, offset = 0x4, fixed_abs, tag = 'smem constant byte address 0x4 - core index']
  #allocation1 [shape = 'u32[72,128]{1,0:T(1,128)}', space=vmem, size = 0x9000, scoped, tag = 'internal scratch']
  %s0 = inlined_call_operand.vmem [shape: bf16[4,128], index: 0, kind: input, shape index: {}]
  %s1 = inlined_call_operand.vmem [shape: f32[1,128], index: 1, kind: input, shape index: {}]
  %s2 = inlined_call_operand.vmem [shape: f32[1,128], index: 2, kind: input, shape index: {}]
  %s3 = inlined_call_operand.vmem [shape: bf16[128,512], index: 3, kind: input, shape index: {}]
  %s4 = inlined_call_operand.vmem [shape: f32[1,512], index: 4, kind: input, shape index: {}]
  %s5 = inlined_call_operand.vmem [shape: bf16[4,512], index: 5, kind: output, shape index: {}]
  %s6 = sld [smem:[#allocation0]]
  $region30: #{lit_forward.64} parent=0
    _
  %s8 = ssub.s32 1, %s6
  %s9 = scalar_select 0, %s8, %s6
  // Predicated region
  $region2: #{lit_forward.64} parent=0 // pred_check
    _
  $region3: #{lit_forward.64} parent=0 // pred_check_branch
    %11 = sbr.rel (0) target = $region5
  $region4: #{lit_forward.64} parent=0 // pred_region
    _
  $region5: #{lit_forward.64} parent=0 // pred_fallthru
    _
  // Predicated region
  $region6: #{lit_forward.64} parent=0 // pred_check
    _
  $region7: #{lit_forward.64} parent=0 // pred_check_branch
    %13 = sbr.rel (0) target = $region9
  $region8: #{lit_forward.64} parent=0 // pred_region
    _
  $region9: #{lit_forward.64} parent=0 // pred_fallthru
    _
  // Predicated region
  $region10: #{lit_forward.64} parent=0 // pred_check
    _
  $region11: #{lit_forward.64} parent=0 // pred_check_branch
    %15 = sbr.rel (0) target = $region13
  $region12: #{lit_forward.64} parent=0 // pred_region
    _
  $region13: #{lit_forward.64} parent=0 // pred_fallthru
    _
  // Predicated region
  $region14: #{lit_forward.64} parent=0 // pred_check
    _
  $region15: #{lit_forward.64} parent=0 // pred_check_branch
    %17 = sbr.rel (0) target = $region17
  $region16: #{lit_forward.64} parent=0 // pred_region
    _
  $region17: #{lit_forward.64} parent=0 // pred_fallthru
    _
  // Predicated region
  $region18: #{lit_forward.64} parent=0 // pred_check
    _
  $region19: #{lit_forward.64} parent=0 // pred_check_branch
    %19 = sbr.rel (0) target = $region21
  $region20: #{lit_forward.64} parent=0 // pred_region
    _
  $region21: #{lit_forward.64} parent=0 // pred_fallthru
    _
  %v20 = vld [vmem:[%s0] sm:$0x3]
  %v21 = vunpack.c.l.bf16 %v20
  %vm22 = vcmask 1043456
  %v23 = vsel %vm22, %v21, 0.0
  %24 = vadd.xlane.f32.xlu0 %v23
  %v25 = vpop.xlane.xlu0 %24
  %v26 = vrcp.pop 128.0
  %v27 = vmul.f32 128.0, %v26
  %v28 = vsub.f32 1.0, %v27
  %v29 = vmul.f32 %v26, %v28
  %v30 = vadd.f32 %v26, %v29
  %vm31 = vweird.f32 %v26
  %v32 = vsel %vm31, %v26, %v30
  %v33 = vmul.f32 %v25, %v32
  %v34 = vsub.f32 %v21, %v33
  %v35 = vmul.f32 %v34, %v34
  %v36 = vsel %vm22, %v35, 0.0
  %37 = vadd.xlane.f32.xlu0 %v36
  %v38 = vpop.xlane.xlu0 %37
  %v39 = vmul.f32 %v38, %v32
  %v40 = vadd.f32 %v39, 1e-05
  %v41 = vrsqrt.pop %v40
  %v42 = vmul.f32 %v41, %v40
  %v43 = vmul.f32 %v42, %v41
  %v44 = vmul.f32 0.5, %v43
  %v45 = vsub.f32 1.5, %v44
  %v46 = vmul.f32 %v41, %v45
  %vm47 = vweird.f32 %v40
  %vm48 = vweird.f32 %v41
  %vm49 = vmor %vm47, %vm48
  %v50 = vsel %vm49, %v41, %v46
  %v51 = vmul.f32 %v34, %v50
  %v52 = vld [vmem:[%s1] sm:$0x1]
  %v54 = vperm.slane %v52, 0
  %v56 = vmul.f32 %v51, %v54
  %v57 = vld [vmem:[%s2] sm:$0x1]
  %v59 = vperm.slane %v57, 0
  %v61 = vadd.f32 %v56, %v59
  %v62 = vpack.c.bf16 %v61, %v61
  %v63 = vld [vmem:[%s3] sm:$0xff]
  %v64 = vld [vmem:[%s3 + $0x8] sm:$0xff]
  %v65 = vld [vmem:[%s3 + $0x10] sm:$0xff]
  %v66 = vld [vmem:[%s3 + $0x18] sm:$0xff]
  %v67 = vld [vmem:[%s3 + $0x20] sm:$0xff]
  %v68 = vld [vmem:[%s3 + $0x28] sm:$0xff]
  %v69 = vld [vmem:[%s3 + $0x30] sm:$0xff]
  %v70 = vld [vmem:[%s3 + $0x38] sm:$0xff]
  %v71 = vld [vmem:[%s3 + $0x40] sm:$0xff]
  %v72 = vld [vmem:[%s3 + $0x48] sm:$0xff]
  %v73 = vld [vmem:[%s3 + $0x50] sm:$0xff]
  %v74 = vld [vmem:[%s3 + $0x58] sm:$0xff]
  %v75 = vld [vmem:[%s3 + $0x60] sm:$0xff]
  %v76 = vld [vmem:[%s3 + $0x68] sm:$0xff]
  %v77 = vld [vmem:[%s3 + $0x70] sm:$0xff]
  %v78 = vld [vmem:[%s3 + $0x78] sm:$0xff]
  %v79 = vld [vmem:[%s3 + $0x80] sm:$0xff]
  %v80 = vld [vmem:[%s3 + $0x88] sm:$0xff]
  %v81 = vld [vmem:[%s3 + $0x90] sm:$0xff]
  %v82 = vld [vmem:[%s3 + $0x98] sm:$0xff]
  %v83 = vld [vmem:[%s3 + $0xa0] sm:$0xff]
  %v84 = vld [vmem:[%s3 + $0xa8] sm:$0xff]
  %v85 = vld [vmem:[%s3 + $0xb0] sm:$0xff]
  %v86 = vld [vmem:[%s3 + $0xb8] sm:$0xff]
  %v87 = vld [vmem:[%s3 + $0xc0] sm:$0xff]
  %v88 = vld [vmem:[%s3 + $0xc8] sm:$0xff]
  %v89 = vld [vmem:[%s3 + $0xd0] sm:$0xff]
  %v90 = vld [vmem:[%s3 + $0xd8] sm:$0xff]
  %v91 = vld [vmem:[%s3 + $0xe0] sm:$0xff]
  %v92 = vld [vmem:[%s3 + $0xe8] sm:$0xff]
  %v93 = vld [vmem:[%s3 + $0xf0] sm:$0xff]
  %v94 = vld [vmem:[%s3 + $0xf8] sm:$0xff]
  %v95 = vld [vmem:[%s4] sm:$0xf]
  %v97 = vperm.slane %v95, 0
  %v98 = vperm.slane %v95, 1
  %v99 = vperm.slane %v95, 2
  %v100 = vperm.slane %v95, 3
  %v137 = vunpack.c.l.b16 %v63
  %v138 = vunpack.c.h.b16 %v63
  %v139 = vunpack.c.l.b16 %v64
  %v140 = vunpack.c.h.b16 %v64
  %v141 = vunpack.c.l.b16 %v65
  %v142 = vunpack.c.h.b16 %v65
  %v143 = vunpack.c.l.b16 %v66
  %v144 = vunpack.c.h.b16 %v66
  %v145 = vunpack.c.l.b16 %v67
  %v146 = vunpack.c.h.b16 %v67
  %v147 = vunpack.c.l.b16 %v68
  %v148 = vunpack.c.h.b16 %v68
  %v149 = vunpack.c.l.b16 %v69
  %v150 = vunpack.c.h.b16 %v69
  %v151 = vunpack.c.l.b16 %v70
  %v152 = vunpack.c.h.b16 %v70
  %v153 = vunpack.c.l.b16 %v71
  %v154 = vunpack.c.h.b16 %v71
  %v155 = vunpack.c.l.b16 %v72
  %v156 = vunpack.c.h.b16 %v72
  %v157 = vunpack.c.l.b16 %v73
  %v158 = vunpack.c.h.b16 %v73
  %v159 = vunpack.c.l.b16 %v74
  %v160 = vunpack.c.h.b16 %v74
  %v161 = vunpack.c.l.b16 %v75
  %v162 = vunpack.c.h.b16 %v75
  %v163 = vunpack.c.l.b16 %v76
  %v164 = vunpack.c.h.b16 %v76
  %v165 = vunpack.c.l.b16 %v77
  %v166 = vunpack.c.h.b16 %v77
  %v167 = vunpack.c.l.b16 %v78
  %v168 = vunpack.c.h.b16 %v78
  %v169 = vunpack.c.l.b16 %v79
  %v170 = vunpack.c.h.b16 %v79
  %v171 = vunpack.c.l.b16 %v80
  %v172 = vunpack.c.h.b16 %v80
  %v173 = vunpack.c.l.b16 %v81
  %v174 = vunpack.c.h.b16 %v81
  %v175 = vunpack.c.l.b16 %v82
  %v176 = vunpack.c.h.b16 %v82
  %v177 = vunpack.c.l.b16 %v83
  %v178 = vunpack.c.h.b16 %v83
  %v179 = vunpack.c.l.b16 %v84
  %v180 = vunpack.c.h.b16 %v84
  %v181 = vunpack.c.l.b16 %v85
  %v182 = vunpack.c.h.b16 %v85
  %v183 = vunpack.c.l.b16 %v86
  %v184 = vunpack.c.h.b16 %v86
  %v185 = vunpack.c.l.b16 %v87
  %v186 = vunpack.c.h.b16 %v87
  %v187 = vunpack.c.l.b16 %v88
  %v188 = vunpack.c.h.b16 %v88
  %v189 = vunpack.c.l.b16 %v89
  %v190 = vunpack.c.h.b16 %v89
  %v191 = vunpack.c.l.b16 %v90
  %v192 = vunpack.c.h.b16 %v90
  %v193 = vunpack.c.l.b16 %v91
  %v194 = vunpack.c.h.b16 %v91
  %v195 = vunpack.c.l.b16 %v92
  %v196 = vunpack.c.h.b16 %v92
  %v197 = vunpack.c.l.b16 %v93
  %v198 = vunpack.c.h.b16 %v93
  %v199 = vunpack.c.l.b16 %v94
  %v200 = vunpack.c.h.b16 %v94
  %v201 = vpack.c.b16 %v141, %v137
  %v202 = vpack.c.b16 %v142, %v138
  %v203 = vpack.c.b16 %v143, %v139
  %v204 = vpack.c.b16 %v144, %v140
  %v205 = vpack.c.b16 %v149, %v145
  %v206 = vpack.c.b16 %v150, %v146
  %v207 = vpack.c.b16 %v151, %v147
  %v208 = vpack.c.b16 %v152, %v148
  %v209 = vpack.c.b16 %v157, %v153
  %v210 = vpack.c.b16 %v158, %v154
  %v211 = vpack.c.b16 %v159, %v155
  %v212 = vpack.c.b16 %v160, %v156
  %v213 = vpack.c.b16 %v165, %v161
  %v214 = vpack.c.b16 %v166, %v162
  %v215 = vpack.c.b16 %v167, %v163
  %v216 = vpack.c.b16 %v168, %v164
  %v217 = vpack.c.b16 %v173, %v169
  %v218 = vpack.c.b16 %v174, %v170
  %v219 = vpack.c.b16 %v175, %v171
  %v220 = vpack.c.b16 %v176, %v172
  %v221 = vpack.c.b16 %v181, %v177
  %v222 = vpack.c.b16 %v182, %v178
  %v223 = vpack.c.b16 %v183, %v179
  %v224 = vpack.c.b16 %v184, %v180
  %v225 = vpack.c.b16 %v189, %v185
  %v226 = vpack.c.b16 %v190, %v186
  %v227 = vpack.c.b16 %v191, %v187
  %v228 = vpack.c.b16 %v192, %v188
  %v229 = vpack.c.b16 %v197, %v193
  %v230 = vpack.c.b16 %v198, %v194
  %v231 = vpack.c.b16 %v199, %v195
  %v232 = vpack.c.b16 %v200, %v196
  %265 = vmatpush.bf16.msra.mxu0 %v229
  %266 = vmatpush.bf16.msra.mxu0 %v225
  %267 = vmatpush.bf16.msra.mxu0 %v221
  %268 = vmatpush.bf16.msra.mxu0 %v217
  %269 = vmatpush.bf16.msra.mxu0 %v213
  %270 = vmatpush.bf16.msra.mxu0 %v209
  %271 = vmatpush.bf16.msra.mxu0 %v205
  %272 = vmatpush.bf16.msra.mxu0 %v201
  %273 = vmatmul.bf16.gmra.mxu0 %v62
  %v274 = vpop.f32.mrf.mxu0
  %v275 = vadd.f32 %v97, %v274
  %v276 = vpop.f32.mrf.mxu0
  %277 = vdwg.mxu0
  %278 = vmatpush.bf16.msra.mxu0 %v230
  %279 = vmatpush.bf16.msra.mxu0 %v226
  %280 = vmatpush.bf16.msra.mxu0 %v222
  %281 = vmatpush.bf16.msra.mxu0 %v218
  %282 = vmatpush.bf16.msra.mxu0 %v214
  %283 = vmatpush.bf16.msra.mxu0 %v210
  %284 = vmatpush.bf16.msra.mxu0 %v206
  %285 = vmatpush.bf16.msra.mxu0 %v202
  %286 = vmatmul.bf16.gmra.mxu0 %v62
  %v287 = vpop.f32.mrf.mxu0
  %v288 = vadd.f32 %v98, %v287
  %v289 = vpop.f32.mrf.mxu0
  %290 = vdwg.mxu0
  %291 = vmatpush.bf16.msra.mxu0 %v231
  %292 = vmatpush.bf16.msra.mxu0 %v227
  %293 = vmatpush.bf16.msra.mxu0 %v223
  %294 = vmatpush.bf16.msra.mxu0 %v219
  %295 = vmatpush.bf16.msra.mxu0 %v215
  %296 = vmatpush.bf16.msra.mxu0 %v211
  %297 = vmatpush.bf16.msra.mxu0 %v207
  %298 = vmatpush.bf16.msra.mxu0 %v203
  %299 = vmatmul.bf16.gmra.mxu0 %v62
  %v300 = vpop.f32.mrf.mxu0
  %v301 = vadd.f32 %v99, %v300
  %v302 = vpop.f32.mrf.mxu0
  %303 = vdwg.mxu0
  %304 = vmatpush.bf16.msra.mxu0 %v232
  %305 = vmatpush.bf16.msra.mxu0 %v228
  %306 = vmatpush.bf16.msra.mxu0 %v224
  %307 = vmatpush.bf16.msra.mxu0 %v220
  %308 = vmatpush.bf16.msra.mxu0 %v216
  %309 = vmatpush.bf16.msra.mxu0 %v212
  %310 = vmatpush.bf16.msra.mxu0 %v208
  %311 = vmatpush.bf16.msra.mxu0 %v204
  %312 = vmatmul.bf16.gmra.mxu0 %v62
  %v313 = vpop.f32.mrf.mxu0
  %v314 = vadd.f32 %v100, %v313
  %v315 = vpop.f32.mrf.mxu0
  %316 = vdwg.mxu0
  %v317 = vmul.f32 %v275, 0.5
  %v318 = vmul.f32 %v288, 0.5
  %v319 = vmul.f32 %v301, 0.5
  %v320 = vmul.f32 %v314, 0.5
  %v321 = vmul.f32 %v275, 0.70710677
  %v322 = vmul.f32 %v288, 0.70710677
  %v323 = vmul.f32 %v301, 0.70710677
  %v324 = vmul.f32 %v314, 0.70710677
  %v325 = vmul.f32 %v321, %v321
  %v326 = vmin.f32 16.0, %v325
  %v327 = vmul.f32 %v326, 2.1237322e-06
  %v328 = vadd.f32 %v327, 0.00028619796
  %v329 = vmul.f32 %v326, %v328
  %v330 = vadd.f32 %v329, 0.0036580483
  %v331 = vmul.f32 %v326, %v330
  %v332 = vadd.f32 %v331, 0.05243302
  %v333 = vmul.f32 %v326, %v332
  %v334 = vadd.f32 %v333, 0.18741608
  %v335 = vmul.f32 %v326, %v334
  %v336 = vadd.f32 %v335, 1.1283791
  %v337 = vmul.f32 %v321, %v336
  %v338 = vmul.f32 %v326, 3.8918573e-05
  %v339 = vadd.f32 %v338, 0.001143296
  %v340 = vmul.f32 %v326, %v339
  %v341 = vadd.f32 %v340, 0.014752088
  %v342 = vmul.f32 %v326, %v341
  %v343 = vadd.f32 %v342, 0.112945676
  %v344 = vmul.f32 %v326, %v343
  %v345 = vadd.f32 %v344, 0.4994258
  %v346 = vmul.f32 %v326, %v345
  %v347 = vadd.f32 %v346, 1.0
  %v348 = vrcp.pop %v347
  %v349 = vmul.f32 %v347, %v348
  %v350 = vsub.f32 1.0, %v349
  %v351 = vmul.f32 %v348, %v350
  %v352 = vadd.f32 %v348, %v351
  %vm353 = vweird.f32 %v347
  %vm354 = vweird.f32 %v348
  %vm355 = vmor %vm353, %vm354
  %v356 = vsel %vm355, %v348, %v352
  %v357 = vand.u32 2147483647, %v347
  %vm358 = vcmp.eq.f32.partialorder %v357, 8.507059e+37
  %v359 = vand.u32 %v347, 2147483648
  %v360 = vor.u32 1.1754944e-38, %v359
  %v361 = vsel %vm358, %v360, %v356
  %v362 = vmul.f32 %v337, %v361
  %v363 = vmin.f32 %v362, 1.0
  %v364 = vmax.f32 %v363, -1.0
  %v365 = vmul.f32 %v322, %v322
  %v366 = vmin.f32 16.0, %v365
  %v367 = vmul.f32 %v366, 2.1237322e-06
  %v368 = vadd.f32 %v367, 0.00028619796
  %v369 = vmul.f32 %v366, %v368
  %v370 = vadd.f32 %v369, 0.0036580483
  %v371 = vmul.f32 %v366, %v370
  %v372 = vadd.f32 %v371, 0.05243302
  %v373 = vmul.f32 %v366, %v372
  %v374 = vadd.f32 %v373, 0.18741608
  %v375 = vmul.f32 %v366, %v374
  %v376 = vadd.f32 %v375, 1.1283791
  %v377 = vmul.f32 %v322, %v376
  %v378 = vmul.f32 %v366, 3.8918573e-05
  %v379 = vadd.f32 %v378, 0.001143296
  %v380 = vmul.f32 %v366, %v379
  %v381 = vadd.f32 %v380, 0.014752088
  %v382 = vmul.f32 %v366, %v381
  %v383 = vadd.f32 %v382, 0.112945676
  %v384 = vmul.f32 %v366, %v383
  %v385 = vadd.f32 %v384, 0.4994258
  %v386 = vmul.f32 %v366, %v385
  %v387 = vadd.f32 %v386, 1.0
  %v388 = vrcp.pop %v387
  %v389 = vmul.f32 %v387, %v388
  %v390 = vsub.f32 1.0, %v389
  %v391 = vmul.f32 %v388, %v390
  %v392 = vadd.f32 %v388, %v391
  %vm393 = vweird.f32 %v387
  %vm394 = vweird.f32 %v388
  %vm395 = vmor %vm393, %vm394
  %v396 = vsel %vm395, %v388, %v392
  %v397 = vand.u32 2147483647, %v387
  %vm398 = vcmp.eq.f32.partialorder %v397, 8.507059e+37
  %v399 = vand.u32 %v387, 2147483648
  %v400 = vor.u32 1.1754944e-38, %v399
  %v401 = vsel %vm398, %v400, %v396
  %v402 = vmul.f32 %v377, %v401
  %v403 = vmin.f32 %v402, 1.0
  %v404 = vmax.f32 %v403, -1.0
  %v405 = vmul.f32 %v323, %v323
  %v406 = vmin.f32 16.0, %v405
  %v407 = vmul.f32 %v406, 2.1237322e-06
  %v408 = vadd.f32 %v407, 0.00028619796
  %v409 = vmul.f32 %v406, %v408
  %v410 = vadd.f32 %v409, 0.0036580483
  %v411 = vmul.f32 %v406, %v410
  %v412 = vadd.f32 %v411, 0.05243302
  %v413 = vmul.f32 %v406, %v412
  %v414 = vadd.f32 %v413, 0.18741608
  %v415 = vmul.f32 %v406, %v414
  %v416 = vadd.f32 %v415, 1.1283791
  %v417 = vmul.f32 %v323, %v416
  %v418 = vmul.f32 %v406, 3.8918573e-05
  %v419 = vadd.f32 %v418, 0.001143296
  %v420 = vmul.f32 %v406, %v419
  %v421 = vadd.f32 %v420, 0.014752088
  %v422 = vmul.f32 %v406, %v421
  %v423 = vadd.f32 %v422, 0.112945676
  %v424 = vmul.f32 %v406, %v423
  %v425 = vadd.f32 %v424, 0.4994258
  %v426 = vmul.f32 %v406, %v425
  %v427 = vadd.f32 %v426, 1.0
  %v428 = vrcp.pop %v427
  %v429 = vmul.f32 %v427, %v428
  %v430 = vsub.f32 1.0, %v429
  %v431 = vmul.f32 %v428, %v430
  %v432 = vadd.f32 %v428, %v431
  %vm433 = vweird.f32 %v427
  %vm434 = vweird.f32 %v428
  %vm435 = vmor %vm433, %vm434
  %v436 = vsel %vm435, %v428, %v432
  %v437 = vand.u32 2147483647, %v427
  %vm438 = vcmp.eq.f32.partialorder %v437, 8.507059e+37
  %v439 = vand.u32 %v427, 2147483648
  %v440 = vor.u32 1.1754944e-38, %v439
  %v441 = vsel %vm438, %v440, %v436
  %v442 = vmul.f32 %v417, %v441
  %v443 = vmin.f32 %v442, 1.0
  %v444 = vmax.f32 %v443, -1.0
  %v445 = vmul.f32 %v324, %v324
  %v446 = vmin.f32 16.0, %v445
  %v447 = vmul.f32 %v446, 2.1237322e-06
  %v448 = vadd.f32 %v447, 0.00028619796
  %v449 = vmul.f32 %v446, %v448
  %v450 = vadd.f32 %v449, 0.0036580483
  %v451 = vmul.f32 %v446, %v450
  %v452 = vadd.f32 %v451, 0.05243302
  %v453 = vmul.f32 %v446, %v452
  %v454 = vadd.f32 %v453, 0.18741608
  %v455 = vmul.f32 %v446, %v454
  %v456 = vadd.f32 %v455, 1.1283791
  %v457 = vmul.f32 %v324, %v456
  %v458 = vmul.f32 %v446, 3.8918573e-05
  %v459 = vadd.f32 %v458, 0.001143296
  %v460 = vmul.f32 %v446, %v459
  %v461 = vadd.f32 %v460, 0.014752088
  %v462 = vmul.f32 %v446, %v461
  %v463 = vadd.f32 %v462, 0.112945676
  %v464 = vmul.f32 %v446, %v463
  %v465 = vadd.f32 %v464, 0.4994258
  %v466 = vmul.f32 %v446, %v465
  %v467 = vadd.f32 %v466, 1.0
  %v468 = vrcp.pop %v467
  %v469 = vmul.f32 %v467, %v468
  %v470 = vsub.f32 1.0, %v469
  %v471 = vmul.f32 %v468, %v470
  %v472 = vadd.f32 %v468, %v471
  %vm473 = vweird.f32 %v467
  %vm474 = vweird.f32 %v468
  %vm475 = vmor %vm473, %vm474
  %v476 = vsel %vm475, %v468, %v472
  %v477 = vand.u32 2147483647, %v467
  %vm478 = vcmp.eq.f32.partialorder %v477, 8.507059e+37
  %v479 = vand.u32 %v467, 2147483648
  %v480 = vor.u32 1.1754944e-38, %v479
  %v481 = vsel %vm478, %v480, %v476
  %v482 = vmul.f32 %v457, %v481
  %v483 = vmin.f32 %v482, 1.0
  %v484 = vmax.f32 %v483, -1.0
  %v485 = vadd.f32 %v364, 1.0
  %v486 = vadd.f32 %v404, 1.0
  %v487 = vadd.f32 %v444, 1.0
  %v488 = vadd.f32 %v484, 1.0
  %v489 = vmul.f32 %v317, %v485
  %v490 = vmul.f32 %v318, %v486
  %v491 = vmul.f32 %v319, %v487
  %v492 = vmul.f32 %v320, %v488
  %v493 = vpack.c.bf16 %v490, %v489
  %v494 = vpack.c.bf16 %v492, %v491
  %v497 = vrot.slane %v493, 2
  %v498 = vrot.slane %v494, 4
  %v499 = vrot.slane %v494, 6
  %vm500 = vcmask 1041408
  %v503 = vsel %vm500, %v493, %v497
  %vm504 = vcmask 1045508
  %v507 = vsel %vm504, %v498, %v499
  %v508 = vsel %vm22, %v503, %v507
  %510 = vst [vmem:[%s5] sm:$0xff] %v508
  // Predicated region
  $region22: #{lit_forward.64} parent=0 // pred_check
    _
  $region23: #{lit_forward.64} parent=0 // pred_check_branch
    %512 = sbr.rel (0) target = $region25
  $region24: #{lit_forward.64} parent=0 // pred_region
    _
  $region25: #{lit_forward.64} parent=0 // pred_fallthru
    _
  // Predicated region
  $region26: #{lit_forward.64} parent=0 // pred_check
    _
  $region27: #{lit_forward.64} parent=0 // pred_check_branch
    %514 = sbr.rel (0) target = $region29
  $region28: #{lit_forward.64} parent=0 // pred_region
    _
  $region29: #{lit_forward.64} parent=0 // pred_fallthru
    _

// kernel: lit_forward.65
$region0: #{lit_forward.65}
  #allocation0 [shape = 'u32[]', space=smem, size = 0x4, offset = 0x4, fixed_abs, tag = 'smem constant byte address 0x4 - core index']
  #allocation1 [shape = 'u32[72,128]{1,0:T(1,128)}', space=vmem, size = 0x9000, scoped, tag = 'internal scratch']
  %s0 = inlined_call_operand.vmem [shape: bf16[4,512], index: 0, kind: input, shape index: {}]
  %s1 = inlined_call_operand.vmem [shape: bf16[512,128], index: 1, kind: input, shape index: {}]
  %s2 = inlined_call_operand.vmem [shape: f32[1,128], index: 2, kind: input, shape index: {}]
  %s3 = inlined_call_operand.vmem [shape: bf16[4,128], index: 3, kind: input, shape index: {}]
  %s4 = inlined_call_operand.vmem [shape: bf16[4,128], index: 4, kind: output, shape index: {}]
  %s5 = sld [smem:[#allocation0]]
  $region26: #{lit_forward.65} parent=0
    _
  %s7 = ssub.s32 1, %s5
  %s8 = scalar_select 0, %s7, %s5
  // Predicated region
  $region2: #{lit_forward.65} parent=0 // pred_check
    _
  $region3: #{lit_forward.65} parent=0 // pred_check_branch
    %10 = sbr.rel (0) target = $region5
  $region4: #{lit_forward.65} parent=0 // pred_region
    _
  $region5: #{lit_forward.65} parent=0 // pred_fallthru
    _
  // Predicated region
  $region6: #{lit_forward.65} parent=0 // pred_check
    _
  $region7: #{lit_forward.65} parent=0 // pred_check_branch
    %12 = sbr.rel (0) target = $region9
  $region8: #{lit_forward.65} parent=0 // pred_region
    _
  $region9: #{lit_forward.65} parent=0 // pred_fallthru
    _
  // Predicated region
  $region10: #{lit_forward.65} parent=0 // pred_check
    _
  $region11: #{lit_forward.65} parent=0 // pred_check_branch
    %14 = sbr.rel (0) target = $region13
  $region12: #{lit_forward.65} parent=0 // pred_region
    _
  $region13: #{lit_forward.65} parent=0 // pred_fallthru
    _
  // Predicated region
  $region14: #{lit_forward.65} parent=0 // pred_check
    _
  $region15: #{lit_forward.65} parent=0 // pred_check_branch
    %16 = sbr.rel (0) target = $region17
  $region16: #{lit_forward.65} parent=0 // pred_region
    _
  $region17: #{lit_forward.65} parent=0 // pred_fallthru
    _
  %v17 = vld [vmem:[%s0] sm:$0xff]
  %v18 = vld [vmem:[%s1] sm:$0xf]
  %v19 = vld [vmem:[%s1 + $0x4] sm:$0xf]
  %v20 = vld [vmem:[%s1 + $0x8] sm:$0xf]
  %v21 = vld [vmem:[%s1 + $0xc] sm:$0xf]
  %v22 = vld [vmem:[%s1 + $0x10] sm:$0xf]
  %v23 = vld [vmem:[%s1 + $0x14] sm:$0xf]
  %v24 = vld [vmem:[%s1 + $0x18] sm:$0xf]
  %v25 = vld [vmem:[%s1 + $0x1c] sm:$0xf]
  %v26 = vld [vmem:[%s1 + $0x20] sm:$0xf]
  %v27 = vld [vmem:[%s1 + $0x24] sm:$0xf]
  %v28 = vld [vmem:[%s1 + $0x28] sm:$0xf]
  %v29 = vld [vmem:[%s1 + $0x2c] sm:$0xf]
  %v30 = vld [vmem:[%s1 + $0x30] sm:$0xf]
  %v31 = vld [vmem:[%s1 + $0x34] sm:$0xf]
  %v32 = vld [vmem:[%s1 + $0x38] sm:$0xf]
  %v33 = vld [vmem:[%s1 + $0x3c] sm:$0xf]
  %v34 = vld [vmem:[%s1 + $0x40] sm:$0xf]
  %v35 = vld [vmem:[%s1 + $0x44] sm:$0xf]
  %v36 = vld [vmem:[%s1 + $0x48] sm:$0xf]
  %v37 = vld [vmem:[%s1 + $0x4c] sm:$0xf]
  %v38 = vld [vmem:[%s1 + $0x50] sm:$0xf]
  %v39 = vld [vmem:[%s1 + $0x54] sm:$0xf]
  %v40 = vld [vmem:[%s1 + $0x58] sm:$0xf]
  %v41 = vld [vmem:[%s1 + $0x5c] sm:$0xf]
  %v42 = vld [vmem:[%s1 + $0x60] sm:$0xf]
  %v43 = vld [vmem:[%s1 + $0x64] sm:$0xf]
  %v44 = vld [vmem:[%s1 + $0x68] sm:$0xf]
  %v45 = vld [vmem:[%s1 + $0x6c] sm:$0xf]
  %v46 = vld [vmem:[%s1 + $0x70] sm:$0xf]
  %v47 = vld [vmem:[%s1 + $0x74] sm:$0xf]
  %v48 = vld [vmem:[%s1 + $0x78] sm:$0xf]
  %v49 = vld [vmem:[%s1 + $0x7c] sm:$0xf]
  %v50 = vld [vmem:[%s1 + $0x80] sm:$0xf]
  %v51 = vld [vmem:[%s1 + $0x84] sm:$0xf]
  %v52 = vld [vmem:[%s1 + $0x88] sm:$0xf]
  %v53 = vld [vmem:[%s1 + $0x8c] sm:$0xf]
  %v54 = vld [vmem:[%s1 + $0x90] sm:$0xf]
  %v55 = vld [vmem:[%s1 + $0x94] sm:$0xf]
  %v56 = vld [vmem:[%s1 + $0x98] sm:$0xf]
  %v57 = vld [vmem:[%s1 + $0x9c] sm:$0xf]
  %v58 = vld [vmem:[%s1 + $0xa0] sm:$0xf]
  %v59 = vld [vmem:[%s1 + $0xa4] sm:$0xf]
  %v60 = vld [vmem:[%s1 + $0xa8] sm:$0xf]
  %v61 = vld [vmem:[%s1 + $0xac] sm:$0xf]
  %v62 = vld [vmem:[%s1 + $0xb0] sm:$0xf]
  %v63 = vld [vmem:[%s1 + $0xb4] sm:$0xf]
  %v64 = vld [vmem:[%s1 + $0xb8] sm:$0xf]
  %v65 = vld [vmem:[%s1 + $0xbc] sm:$0xf]
  %v66 = vld [vmem:[%s1 + $0xc0] sm:$0xf]
  %v67 = vld [vmem:[%s1 + $0xc4] sm:$0xf]
  %v68 = vld [vmem:[%s1 + $0xc8] sm:$0xf]
  %v69 = vld [vmem:[%s1 + $0xcc] sm:$0xf]
  %v70 = vld [vmem:[%s1 + $0xd0] sm:$0xf]
  %v71 = vld [vmem:[%s1 + $0xd4] sm:$0xf]
  %v72 = vld [vmem:[%s1 + $0xd8] sm:$0xf]
  %v73 = vld [vmem:[%s1 + $0xdc] sm:$0xf]
  %v74 = vld [vmem:[%s1 + $0xe0] sm:$0xf]
  %v75 = vld [vmem:[%s1 + $0xe4] sm:$0xf]
  %v76 = vld [vmem:[%s1 + $0xe8] sm:$0xf]
  %v77 = vld [vmem:[%s1 + $0xec] sm:$0xf]
  %v78 = vld [vmem:[%s1 + $0xf0] sm:$0xf]
  %v79 = vld [vmem:[%s1 + $0xf4] sm:$0xf]
  %v80 = vld [vmem:[%s1 + $0xf8] sm:$0xf]
  %v81 = vld [vmem:[%s1 + $0xfc] sm:$0xf]
  %v82 = vld [vmem:[%s2] sm:$0x1]
  %v84 = vperm.slane %v82, 0
  %87 = vst [vmem:[#allocation1] ss:$4 sm:$0xff] %v17
  %v88 = vld.sshfl [vmem:[#allocation1] sm:$0xff pattern:$0x73625140]
  %v89 = vld.sshfl [vmem:[#allocation1 + $0x8] sm:$0xff pattern:$0x73625140]
  %v90 = vld.sshfl [vmem:[#allocation1 + $0x10] sm:$0xff pattern:$0x73625140]
  %v91 = vld.sshfl [vmem:[#allocation1 + $0x18] sm:$0xff pattern:$0x73625140]
  %v160 = vunpack.c.l.b16 %v18
  %v161 = vunpack.c.l.b16 %v19
  %v162 = vunpack.c.l.b16 %v20
  %v163 = vunpack.c.l.b16 %v21
  %v164 = vunpack.c.l.b16 %v22
  %v165 = vunpack.c.l.b16 %v23
  %v166 = vunpack.c.l.b16 %v24
  %v167 = vunpack.c.l.b16 %v25
  %v168 = vunpack.c.l.b16 %v26
  %v169 = vunpack.c.l.b16 %v27
  %v170 = vunpack.c.l.b16 %v28
  %v171 = vunpack.c.l.b16 %v29
  %v172 = vunpack.c.l.b16 %v30
  %v173 = vunpack.c.l.b16 %v31
  %v174 = vunpack.c.l.b16 %v32
  %v175 = vunpack.c.l.b16 %v33
  %v176 = vunpack.c.l.b16 %v34
  %v177 = vunpack.c.l.b16 %v35
  %v178 = vunpack.c.l.b16 %v36
  %v179 = vunpack.c.l.b16 %v37
  %v180 = vunpack.c.l.b16 %v38
  %v181 = vunpack.c.l.b16 %v39
  %v182 = vunpack.c.l.b16 %v40
  %v183 = vunpack.c.l.b16 %v41
  %v184 = vunpack.c.l.b16 %v42
  %v185 = vunpack.c.l.b16 %v43
  %v186 = vunpack.c.l.b16 %v44
  %v187 = vunpack.c.l.b16 %v45
  %v188 = vunpack.c.l.b16 %v46
  %v189 = vunpack.c.l.b16 %v47
  %v190 = vunpack.c.l.b16 %v48
  %v191 = vunpack.c.l.b16 %v49
  %v192 = vunpack.c.l.b16 %v50
  %v193 = vunpack.c.l.b16 %v51
  %v194 = vunpack.c.l.b16 %v52
  %v195 = vunpack.c.l.b16 %v53
  %v196 = vunpack.c.l.b16 %v54
  %v197 = vunpack.c.l.b16 %v55
  %v198 = vunpack.c.l.b16 %v56
  %v199 = vunpack.c.l.b16 %v57
  %v200 = vunpack.c.l.b16 %v58
  %v201 = vunpack.c.l.b16 %v59
  %v202 = vunpack.c.l.b16 %v60
  %v203 = vunpack.c.l.b16 %v61
  %v204 = vunpack.c.l.b16 %v62
  %v205 = vunpack.c.l.b16 %v63
  %v206 = vunpack.c.l.b16 %v64
  %v207 = vunpack.c.l.b16 %v65
  %v208 = vunpack.c.l.b16 %v66
  %v209 = vunpack.c.l.b16 %v67
  %v210 = vunpack.c.l.b16 %v68
  %v211 = vunpack.c.l.b16 %v69
  %v212 = vunpack.c.l.b16 %v70
  %v213 = vunpack.c.l.b16 %v71
  %v214 = vunpack.c.l.b16 %v72
  %v215 = vunpack.c.l.b16 %v73
  %v216 = vunpack.c.l.b16 %v74
  %v217 = vunpack.c.l.b16 %v75
  %v218 = vunpack.c.l.b16 %v76
  %v219 = vunpack.c.l.b16 %v77
  %v220 = vunpack.c.l.b16 %v78
  %v221 = vunpack.c.l.b16 %v79
  %v222 = vunpack.c.l.b16 %v80
  %v223 = vunpack.c.l.b16 %v81
  %v224 = vpack.c.b16 %v161, %v160
  %v225 = vpack.c.b16 %v163, %v162
  %v226 = vpack.c.b16 %v165, %v164
  %v227 = vpack.c.b16 %v167, %v166
  %v228 = vpack.c.b16 %v169, %v168
  %v229 = vpack.c.b16 %v171, %v170
  %v230 = vpack.c.b16 %v173, %v172
  %v231 = vpack.c.b16 %v175, %v174
  %v232 = vpack.c.b16 %v177, %v176
  %v233 = vpack.c.b16 %v179, %v178
  %v234 = vpack.c.b16 %v181, %v180
  %v235 = vpack.c.b16 %v183, %v182
  %v236 = vpack.c.b16 %v185, %v184
  %v237 = vpack.c.b16 %v187, %v186
  %v238 = vpack.c.b16 %v189, %v188
  %v239 = vpack.c.b16 %v191, %v190
  %v240 = vpack.c.b16 %v193, %v192
  %v241 = vpack.c.b16 %v195, %v194
  %v242 = vpack.c.b16 %v197, %v196
  %v243 = vpack.c.b16 %v199, %v198
  %v244 = vpack.c.b16 %v201, %v200
  %v245 = vpack.c.b16 %v203, %v202
  %v246 = vpack.c.b16 %v205, %v204
  %v247 = vpack.c.b16 %v207, %v206
  %v248 = vpack.c.b16 %v209, %v208
  %v249 = vpack.c.b16 %v211, %v210
  %v250 = vpack.c.b16 %v213, %v212
  %v251 = vpack.c.b16 %v215, %v214
  %v252 = vpack.c.b16 %v217, %v216
  %v253 = vpack.c.b16 %v219, %v218
  %v254 = vpack.c.b16 %v221, %v220
  %v255 = vpack.c.b16 %v223, %v222
  %288 = vmatpush.bf16.msra.mxu0 %v231
  %289 = vmatpush.bf16.msra.mxu0 %v230
  %290 = vmatpush.bf16.msra.mxu0 %v229
  %291 = vmatpush.bf16.msra.mxu0 %v228
  %292 = vmatpush.bf16.msra.mxu0 %v227
  %293 = vmatpush.bf16.msra.mxu0 %v226
  %294 = vmatpush.bf16.msra.mxu0 %v225
  %295 = vmatpush.bf16.msra.mxu0 %v224
  %296 = vmatmul.bf16.gmra.mxu0 %v88
  %v297 = vpop.f32.mrf.mxu0
  %v298 = vadd.f32 %v84, %v297
  %v299 = vpop.f32.mrf.mxu0
  %300 = vdwg.mxu0
  %301 = vmatpush.bf16.msra.mxu0 %v239
  %302 = vmatpush.bf16.msra.mxu0 %v238
  %303 = vmatpush.bf16.msra.mxu0 %v237
  %304 = vmatpush.bf16.msra.mxu0 %v236
  %305 = vmatpush.bf16.msra.mxu0 %v235
  %306 = vmatpush.bf16.msra.mxu0 %v234
  %307 = vmatpush.bf16.msra.mxu0 %v233
  %308 = vmatpush.bf16.msra.mxu0 %v232
  %309 = vmatmul.bf16.gmra.mxu0 %v89
  %v310 = vpop.f32.mrf.mxu0
  %v311 = vadd.f32 %v298, %v310
  %v312 = vpop.f32.mrf.mxu0
  %313 = vdwg.mxu0
  %314 = vmatpush.bf16.msra.mxu0 %v247
  %315 = vmatpush.bf16.msra.mxu0 %v246
  %316 = vmatpush.bf16.msra.mxu0 %v245
  %317 = vmatpush.bf16.msra.mxu0 %v244
  %318 = vmatpush.bf16.msra.mxu0 %v243
  %319 = vmatpush.bf16.msra.mxu0 %v242
  %320 = vmatpush.bf16.msra.mxu0 %v241
  %321 = vmatpush.bf16.msra.mxu0 %v240
  %322 = vmatmul.bf16.gmra.mxu0 %v90
  %v323 = vpop.f32.mrf.mxu0
  %v324 = vadd.f32 %v311, %v323
  %v325 = vpop.f32.mrf.mxu0
  %326 = vdwg.mxu0
  %327 = vmatpush.bf16.msra.mxu0 %v255
  %328 = vmatpush.bf16.msra.mxu0 %v254
  %329 = vmatpush.bf16.msra.mxu0 %v253
  %330 = vmatpush.bf16.msra.mxu0 %v252
  %331 = vmatpush.bf16.msra.mxu0 %v251
  %332 = vmatpush.bf16.msra.mxu0 %v250
  %333 = vmatpush.bf16.msra.mxu0 %v249
  %334 = vmatpush.bf16.msra.mxu0 %v248
  %335 = vmatmul.bf16.gmra.mxu0 %v91
  %v336 = vpop.f32.mrf.mxu0
  %v337 = vadd.f32 %v324, %v336
  %v338 = vpop.f32.mrf.mxu0
  %339 = vdwg.mxu0
  %v340 = vld [vmem:[%s3] sm:$0x3]
  %v341 = vunpack.c.l.bf16 %v340
  %v342 = vadd.f32 %v337, %v341
  %v343 = vpack.c.bf16 %v342, %v342
  %344 = vst [vmem:[%s4] sm:$0x3] %v343
  // Predicated region
  $region18: #{lit_forward.65} parent=0 // pred_check
    _
  $region19: #{lit_forward.65} parent=0 // pred_check_branch
    %346 = sbr.rel (0) target = $region21
  $region20: #{lit_forward.65} parent=0 // pred_region
    _
  $region21: #{lit_forward.65} parent=0 // pred_fallthru
    _
  // Predicated region
  $region22: #{lit_forward.65} parent=0 // pred_check
    _
  $region23: #{lit_forward.65} parent=0 // pred_check_branch
    %348 = sbr.rel (0) target = $region25
  $region24: #{lit_forward.65} parent=0 // pred_region
    _
  $region25: #{lit_forward.65} parent=0 // pred_fallthru
    _

// kernel: lit_forward.71
$region0: #{lit_forward.71}
  #allocation0 [shape = 'u32[]', space=smem, size = 0x4, offset = 0x4, fixed_abs, tag = 'smem constant byte address 0x4 - core index']
  #allocation1 [shape = 'u32[72,128]{1,0:T(1,128)}', space=vmem, size = 0x9000, scoped, tag = 'internal scratch']
  %s0 = inlined_call_operand.vmem [shape: bf16[2,128], index: 0, kind: input, shape index: {}]
  %s1 = inlined_call_operand.vmem [shape: f32[1,128], index: 1, kind: input, shape index: {}]
  %s2 = inlined_call_operand.vmem [shape: f32[1,128], index: 2, kind: input, shape index: {}]
  %s3 = inlined_call_operand.vmem [shape: bf16[128,10], index: 3, kind: input, shape index: {}]
  %s4 = inlined_call_operand.vmem [shape: f32[1,10], index: 4, kind: input, shape index: {}]
  %s5 = inlined_call_operand.hbm [shape: f32[2,10], index: 5, kind: output, shape index: {}]
  %s6 = sld [smem:[#allocation0]]
  $region30: #{lit_forward.71} parent=0
    _
  %s8 = ssub.s32 1, %s6
  %s9 = scalar_select 0, %s8, %s6
  $region1: #{lit_forward.71} parent=0
    #allocation2 [shape = 'u8[1024]{0}', space=vmem, size = 0x400, scoped, tag = 'output window, operand 0, single buffered']
    #allocation3 [shape = 's32[1]{0}', space=sflag, size = 0x4, scoped, tag = 'scoped memory for lit_forward.71']
    %10 = vsyncpa [#allocation3], 0
    // Predicated region
    $region2: #{lit_forward.71} parent=1 // pred_check
      _
    $region3: #{lit_forward.71} parent=1 // pred_check_branch
      %12 = sbr.rel (0) target = $region5
    $region4: #{lit_forward.71} parent=1 // pred_region
      _
    $region5: #{lit_forward.71} parent=1 // pred_fallthru
      _
    // Predicated region
    $region6: #{lit_forward.71} parent=1 // pred_check
      _
    $region7: #{lit_forward.71} parent=1 // pred_check_branch
      %14 = sbr.rel (0) target = $region9
    $region8: #{lit_forward.71} parent=1 // pred_region
      _
    $region9: #{lit_forward.71} parent=1 // pred_fallthru
      _
    // Predicated region
    $region10: #{lit_forward.71} parent=1 // pred_check
      _
    $region11: #{lit_forward.71} parent=1 // pred_check_branch
      %16 = sbr.rel (0) target = $region13
    $region12: #{lit_forward.71} parent=1 // pred_region
      _
    $region13: #{lit_forward.71} parent=1 // pred_fallthru
      _
    // Predicated region
    $region14: #{lit_forward.71} parent=1 // pred_check
      _
    $region15: #{lit_forward.71} parent=1 // pred_check_branch
      %18 = sbr.rel (0) target = $region17
    $region16: #{lit_forward.71} parent=1 // pred_region
      _
    $region17: #{lit_forward.71} parent=1 // pred_fallthru
      _
    // Predicated region
    $region18: #{lit_forward.71} parent=1 // pred_check
      _
    $region19: #{lit_forward.71} parent=1 // pred_check_branch
      %20 = sbr.rel (0) target = $region21
    $region20: #{lit_forward.71} parent=1 // pred_region
      _
    $region21: #{lit_forward.71} parent=1 // pred_fallthru
      _
    %v21 = vld [vmem:[%s0] sm:$0x1]
    %v22 = vunpack.c.l.bf16 %v21
    %vm23 = vcmask 1041408
    %v24 = vsel %vm23, %v22, 0.0
    %25 = vadd.xlane.f32.xlu0 %v24
    %v26 = vpop.xlane.xlu0 %25
    %v27 = vrcp.pop 128.0
    %v28 = vmul.f32 128.0, %v27
    %v29 = vsub.f32 1.0, %v28
    %v30 = vmul.f32 %v27, %v29
    %v31 = vadd.f32 %v27, %v30
    %vm32 = vweird.f32 %v27
    %v33 = vsel %vm32, %v27, %v31
    %v34 = vmul.f32 %v26, %v33
    %v35 = vsub.f32 %v22, %v34
    %v36 = vmul.f32 %v35, %v35
    %v37 = vsel %vm23, %v36, 0.0
    %38 = vadd.xlane.f32.xlu0 %v37
    %v39 = vpop.xlane.xlu0 %38
    %v40 = vmul.f32 %v39, %v33
    %v41 = vadd.f32 %v40, 1e-05
    %v42 = vrsqrt.pop %v41
    %v43 = vmul.f32 %v42, %v41
    %v44 = vmul.f32 %v43, %v42
    %v45 = vmul.f32 0.5, %v44
    %v46 = vsub.f32 1.5, %v45
    %v47 = vmul.f32 %v42, %v46
    %vm48 = vweird.f32 %v41
    %vm49 = vweird.f32 %v42
    %vm50 = vmor %vm48, %vm49
    %v51 = vsel %vm50, %v42, %v47
    %v52 = vmul.f32 %v35, %v51
    %v53 = vld [vmem:[%s1] sm:$0x1]
    %v55 = vperm.slane %v53, 0
    %v57 = vmul.f32 %v52, %v55
    %v58 = vld [vmem:[%s2] sm:$0x1]
    %v60 = vperm.slane %v58, 0
    %v62 = vadd.f32 %v57, %v60
    %v63 = vpack.c.bf16 %v62, %v62
    %v64 = vld [vmem:[%s3] sm:$0xf]
    %v65 = vld [vmem:[%s3 + $0x4] sm:$0xf]
    %v66 = vld [vmem:[%s3 + $0x8] sm:$0xf]
    %v67 = vld [vmem:[%s3 + $0xc] sm:$0xf]
    %v68 = vld [vmem:[%s3 + $0x10] sm:$0xf]
    %v69 = vld [vmem:[%s3 + $0x14] sm:$0xf]
    %v70 = vld [vmem:[%s3 + $0x18] sm:$0xf]
    %v71 = vld [vmem:[%s3 + $0x1c] sm:$0xf]
    %v72 = vld [vmem:[%s3 + $0x20] sm:$0xf]
    %v73 = vld [vmem:[%s3 + $0x24] sm:$0xf]
    %v74 = vld [vmem:[%s3 + $0x28] sm:$0xf]
    %v75 = vld [vmem:[%s3 + $0x2c] sm:$0xf]
    %v76 = vld [vmem:[%s3 + $0x30] sm:$0xf]
    %v77 = vld [vmem:[%s3 + $0x34] sm:$0xf]
    %v78 = vld [vmem:[%s3 + $0x38] sm:$0xf]
    %v79 = vld [vmem:[%s3 + $0x3c] sm:$0xf]
    %v80 = vld [vmem:[%s4] sm:$0x1]
    %v82 = vperm.slane %v80, 0
    %v100 = vunpack.c.l.b16 %v64
    %v101 = vunpack.c.l.b16 %v65
    %v102 = vunpack.c.l.b16 %v66
    %v103 = vunpack.c.l.b16 %v67
    %v104 = vunpack.c.l.b16 %v68
    %v105 = vunpack.c.l.b16 %v69
    %v106 = vunpack.c.l.b16 %v70
    %v107 = vunpack.c.l.b16 %v71
    %v108 = vunpack.c.l.b16 %v72
    %v109 = vunpack.c.l.b16 %v73
    %v110 = vunpack.c.l.b16 %v74
    %v111 = vunpack.c.l.b16 %v75
    %v112 = vunpack.c.l.b16 %v76
    %v113 = vunpack.c.l.b16 %v77
    %v114 = vunpack.c.l.b16 %v78
    %v115 = vunpack.c.l.b16 %v79
    %v116 = vpack.c.b16 %v101, %v100
    %v117 = vpack.c.b16 %v103, %v102
    %v118 = vpack.c.b16 %v105, %v104
    %v119 = vpack.c.b16 %v107, %v106
    %v120 = vpack.c.b16 %v109, %v108
    %v121 = vpack.c.b16 %v111, %v110
    %v122 = vpack.c.b16 %v113, %v112
    %v123 = vpack.c.b16 %v115, %v114
    %132 = vmatpush.bf16.msra.mxu0 %v123
    %133 = vmatpush.bf16.msra.mxu0 %v122
    %134 = vmatpush.bf16.msra.mxu0 %v121
    %135 = vmatpush.bf16.msra.mxu0 %v120
    %136 = vmatpush.bf16.msra.mxu0 %v119
    %137 = vmatpush.bf16.msra.mxu0 %v118
    %138 = vmatpush.bf16.msra.mxu0 %v117
    %139 = vmatpush.bf16.msra.mxu0 %v116
    %140 = vmatmul.bf16.gmra.mxu0 %v63
    %v141 = vpop.f32.mrf.mxu0
    %v142 = vadd.f32 %v82, %v141
    %v143 = vpop.f32.mrf.mxu0
    %144 = vdwg.mxu0
    %vm145 = vcmask 74752
    %146 = vst.msk [vmem:[#allocation2] sm:$0x3] %vm145, %v142
    // Predicated region
    $region22: #{lit_forward.71} parent=1 // pred_check
      _
    $region23: #{lit_forward.71} parent=1 // pred_check_branch
      %148 = sbr.rel (0) target = $region25
    $region24: #{lit_forward.71} parent=1 // pred_region
      %150 = vsyncadd [#allocation3], 0
      %s152 = sshll.u32 [#allocation2], 4
      %s153 = int_to_ptr.vmem [resolvable:$true] %s152
      %s154 = sshll.u32 %s5, 4
      %s155 = int_to_ptr.hbm [resolvable:$true] %s154
      %157 = dma.vmem_to_hbm [thread:$0]  %s153, 32, %s155, [#allocation3]
    $region25: #{lit_forward.71} parent=1 // pred_fallthru
      _
    // Predicated region
    $region26: #{lit_forward.71} parent=1 // pred_check
      _
    $region27: #{lit_forward.71} parent=1 // pred_check_branch
      %159 = sbr.rel (0) target = $region29
    $region28: #{lit_forward.71} parent=1 // pred_region
      %161 = dma.done [#allocation3], 32
    $region29: #{lit_forward.71} parent=1 // pred_fallthru
      _
    %162 = vsyncpa [#allocation3], 1

</llo_original>
